<compile_context>
chip_gen: v7x
topology: tpu7x:2x2x1
jax: 0.10.0
libtpu: 0.0.40
codegen_flags: <defaults>
</compile_context>

<pallas_src>
import random
import numpy as np
import jax
import jax.numpy as jnp
from jax import lax
from jax.experimental import pallas as pl
from jax.experimental.pallas import tpu as pltpu

F32 = jnp.float32
BF16 = jnp.bfloat16


# ----------------------------------------------------------------------------- kernel

def _gru_hidden_step(gi, h, whh_ref, bhn_ref):
    """GRU cell where the input-side projection gi = x @ W_ih + b (r/z hidden biases folded
    in) is already computed.  whh: [H, 3H] bf16 (gates r,z,n fused along N), bhn: [1, H] f32
    (b_hh of the n gate, applied inside the r*(...) term)."""
    H = h.shape[-1]
    gh = jnp.dot(h.astype(BF16), whh_ref[...], preferred_element_type=F32)    # [B, 3H]
    r = jax.nn.sigmoid(gi[:, :H] + gh[:, :H])
    z = jax.nn.sigmoid(gi[:, H:2 * H] + gh[:, H:2 * H])
    n = jnp.tanh(gi[:, 2 * H:] + r * (gh[:, 2 * H:] + bhn_ref[...]))
    return (1.0 - z) * n + z * h


def seq2seq_kernel(
        tf_ref,                      # SMEM [T] int32 teacher-forcing flags
        trg_ref,                     # VMEM [T, Bp, 1] int32 target token ids
        emb_src_ref,                 # VMEM [L*Bp, E] bf16 pre-gathered source embeddings
        wihf_ref, whhf_ref, brznf_ref, bhnf_ref,     # fwd encoder GRU (gate-fused, bias-folded)
        wihb_ref, whhb_ref, brznb_ref, bhnb_ref,     # bwd encoder GRU
        fcwf_ref, fcwb_ref, fcb_ref,                 # enc->dec hidden fc (split, no concat)
        dec_emb_ref,                                 # [Vp, E] bf16
        attn_wh_ref, attn_wef_ref, attn_web_ref, attn_b_ref, v_ref,
        wih_e_ref, wih_cf_ref, wih_cb_ref, whh_dec_ref, brznd_ref, bhnd_ref,
        fcw_h_ref, fcw_wf_ref, fcw_wb_ref, fcw_e_ref, fcb_out_ref,
        out_hbm_ref,                                 # HBM [T, Bp, Vp] f32 (pl.ANY, DMA-streamed)
        hf_scr, hb_scr, enc_f_scr, enc_b_scr,
        gi_f_scr, gi_b_scr, eterm_scr, h_scr, oh_scr,
        pred_buf, out_sem):
    L, Bp, H = enc_f_scr.shape
    T = trg_ref.shape[0]
    D = h_scr.shape[-1]
    Vp = oh_scr.shape[-1]

    def out_copy(slot, t):
        return pltpu.make_async_copy(pred_buf.at[slot], out_hbm_ref.at[t], out_sem.at[slot])

    # -------- encoder --------
    # Input-side projections hoisted out of the recurrence: two big matmuls over all L
    # timesteps replace 2*L tiny per-step matmuls.
    x2d = emb_src_ref[...]                                                    # [L*Bp, E] bf16
    gi_f_scr[...] = (jnp.dot(x2d, wihf_ref[...], preferred_element_type=F32)
                     + brznf_ref[...]).reshape(L, Bp, 3 * H)
    gi_b_scr[...] = (jnp.dot(x2d, wihb_ref[...], preferred_element_type=F32)
                     + brznb_ref[...]).reshape(L, Bp, 3 * H)

    hf_scr[...] = jnp.zeros(hf_scr.shape, F32)
    hb_scr[...] = jnp.zeros(hb_scr.shape, F32)

    # Fully unrolled (L static); fwd/bwd directions interleaved so the two independent
    # recurrences co-issue across MXU/VPU/EUP slots on one TensorCore.
    for t in range(L):
        s = L - 1 - t
        hf = _gru_hidden_step(gi_f_scr[t], hf_scr[...], whhf_ref, bhnf_ref)
        hb = _gru_hidden_step(gi_b_scr[s], hb_scr[...], whhb_ref, bhnb_ref)
        enc_f_scr[t] = hf
        enc_b_scr[s] = hb
        hf_scr[...] = hf
        hb_scr[...] = hb

    # hidden0 = tanh(h_fwd @ W_f + h_bwd @ W_b + b)   (split matmuls, no lane concat)
    h_scr[...] = jnp.tanh(
        jnp.dot(hf_scr[...].astype(BF16), fcwf_ref[...], preferred_element_type=F32)
        + jnp.dot(hb_scr[...].astype(BF16), fcwb_ref[...], preferred_element_type=F32)
        + fcb_ref[...])

    # -------- decoder prep: loop-invariant attention term kept in explicit VMEM scratch ----
    ef2d = enc_f_scr[...].reshape(L * Bp, H).astype(BF16)
    eb2d = enc_b_scr[...].reshape(L * Bp, H).astype(BF16)
    eterm_scr[...] = (jnp.dot(ef2d, attn_wef_ref[...], preferred_element_type=F32)
                      + jnp.dot(eb2d, attn_web_ref[...], preferred_element_type=F32)
                      + attn_b_ref[...]).reshape(L, Bp, D)

    v_b = v_ref[...][None]                                       # [1, 1, D] (hoisted broadcast)
    iota = lax.broadcasted_iota(jnp.int32, (Bp, Vp), 1)

    # Row 0 of the outputs stays zero (torch.zeros semantics); streamed to HBM like the rest.
    pred_buf[0] = jnp.zeros((Bp, Vp), F32)
    out_copy(0, 0).start()

    # output = trg[0, :]  (one-hot carry built in-kernel from token ids; no [T,B,Vp] input)
    oh_scr[...] = (iota == trg_ref[0]).astype(F32)

    # -------- decoder time loop (fully unrolled, T static) --------
    for t in range(1, T):
        slot = t % 2

        h = h_scr[...]                                                         # [Bp, D]
        embedded = jnp.dot(oh_scr[...].astype(BF16), dec_emb_ref[...],
                           preferred_element_type=F32)                         # [Bp, E]

        # Bahdanau attention: softmax_l( v . tanh(W_h h + W_e enc_l + b) )
        hterm = jnp.dot(h.astype(BF16), attn_wh_ref[...], preferred_element_type=F32)
        energy = jnp.tanh(hterm[None] + eterm_scr[...])                        # [L, Bp, D]
        score = jnp.sum(energy * v_b, axis=-1, keepdims=True)                  # [L, Bp, 1]
        m = jnp.max(score, axis=0, keepdims=True)
        e = jnp.exp(score - m)
        # exact divide (not approx reciprocal): keeps greedy top-1 parity on the
        # autoregressive path (review correctness concern).
        a = e / jnp.sum(e, axis=0, keepdims=True)                              # [L, Bp, 1]
        wf = jnp.sum(a * enc_f_scr[...], axis=0)                               # [Bp, H]
        wb = jnp.sum(a * enc_b_scr[...], axis=0)                               # [Bp, H]

        # GRU cell: gates fused along 3D, operands via separate matmuls (no per-step concat)
        gi = (jnp.dot(embedded.astype(BF16), wih_e_ref[...], preferred_element_type=F32)
              + jnp.dot(wf.astype(BF16), wih_cf_ref[...], preferred_element_type=F32)
              + jnp.dot(wb.astype(BF16), wih_cb_ref[...], preferred_element_type=F32)
              + brznd_ref[...])
        h_new = _gru_hidden_step(gi, h, whh_dec_ref, bhnd_ref)                 # [Bp, D]

        # logits = fc_out(hidden, weighted, embedded); Vp = 128 lane-dense, split matmuls
        pred = (jnp.dot(h_new.astype(BF16), fcw_h_ref[...], preferred_element_type=F32)
                + jnp.dot(wf.astype(BF16), fcw_wf_ref[...], preferred_element_type=F32)
                + jnp.dot(wb.astype(BF16), fcw_wb_ref[...], preferred_element_type=F32)
                + jnp.dot(embedded.astype(BF16), fcw_e_ref[...], preferred_element_type=F32)
                + fcb_out_ref[...])                                            # [Bp, Vp]

        if t >= 2:                      # slot must be free before reuse (DMA from step t-2)
            out_copy(slot, t - 2).wait()
        pred_buf[slot] = pred
        out_copy(slot, t).start()       # writeback rides the DMA slot, hidden behind compute

        # Next input token: teacher forcing vs greedy top-1, gated so TF steps skip the
        # argmax/one-hot work (padded vocab lanes carry a -1e30 bias, never selected).
        @pl.when(tf_ref[t] != 0)
        def _():
            oh_scr[...] = (iota == trg_ref[t]).astype(F32)

        @pl.when(tf_ref[t] == 0)
        def _():
            maxv = jnp.max(pred, axis=1, keepdims=True)
            top1 = jnp.min(jnp.where(pred == maxv, iota, Vp), axis=1, keepdims=True)
            oh_scr[...] = (iota == top1).astype(F32)

        h_scr[...] = h_new

    # Drain the outstanding output DMAs before the kernel returns.
    for t in range(max(0, T - 2), T):
        out_copy(t % 2, t).wait()


# ----------------------------------------------------------------------------- wrappers

def prepare_kernel_params(p):
    """Re-pack PyTorch-layout weights into fused / split / lane-padded bf16 layouts."""
    H, D = p['enc_hid'], p['dec_hid']
    V, E = p['dec_emb'].shape
    Vp = ((V + 127) // 128) * 128                       # lane-dense padded vocab
    stack = lambda w: jnp.concatenate([w[0], w[1], w[2]], axis=-1)    # (3,In,H) -> (In,3H)
    bf = lambda w: w.astype(BF16)

    def fold_bias(bih, bhh):
        # r/z gates: input+hidden biases folded into the gi bias; n gate keeps b_hh separate
        # (it sits inside the r*(...) term).
        return jnp.concatenate([bih[0] + bhh[0], bih[1] + bhh[1], bih[2]], axis=-1), bhh[2]

    brznf, bhnf = fold_bias(p['bihf'], p['bhhf'])
    brznb, bhnb = fold_bias(p['bihb'], p['bhhb'])
    brznd, bhnd = fold_bias(p['bih'], p['bhh'])

    wih_c3 = stack(p['wih_c'])                          # [2H, 3D]
    fcw_w = p['fcw_w']                                  # [2H, V]
    pad_v = lambda w: jnp.pad(w, ((0, 0), (0, Vp - V)))

    return dict(
        Vp=Vp,
        wihf=bf(stack(p['wihf'])), whhf=bf(stack(p['whhf'])), brznf=brznf, bhnf=bhnf,
        wihb=bf(stack(p['wihb'])), whhb=bf(stack(p['whhb'])), brznb=brznb, bhnb=bhnb,
        fcwf=bf(p['fcw_f']), fcwb=bf(p['fcw_b']), fcb=p['fcb'],
        dec_emb=bf(jnp.pad(p['dec_emb'], ((0, Vp - V), (0, 0)))),
        attn_wh=bf(p['attn_wh']), attn_wef=bf(p['attn_we'][:H]), attn_web=bf(p['attn_we'][H:]),
        attn_b=p['attn_b'], v=p['v'],
        wih_e=bf(stack(p['wih_e'])), wih_cf=bf(wih_c3[:H]), wih_cb=bf(wih_c3[H:]),
        whh_dec=bf(stack(p['whh'])), brznd=brznd, bhnd=bhnd,
        fcw_h=bf(pad_v(p['fcw_h'])), fcw_wf=bf(pad_v(fcw_w[:H])), fcw_wb=bf(pad_v(fcw_w[H:])),
        fcw_e=bf(pad_v(p['fcw_e'])),
        # padded vocab columns get a huge negative bias so greedy top-1 never picks them
        fcb_out=jnp.pad(p['fcb_out'], ((0, 0), (0, Vp - V)), constant_values=-1e30),
    )


def seq2seq_forward(src, trg, params, tf_flags):
    kp = prepare_kernel_params(params)
    V, E = params['dec_emb'].shape
    Vp = kp['Vp']
    H, D = params['enc_hid'], params['dec_hid']
    L, B = src.shape
    T = trg.shape[0]
    Bp = ((B + 7) // 8) * 8                              # sublane-dense batch (pad rows ignored)

    emb_src = jnp.take(params['enc_emb'], src, axis=0)                       # [L, B, E] gather glue
    emb_src = jnp.pad(emb_src, ((0, 0), (0, Bp - B), (0, 0)))
    emb_src2d = emb_src.reshape(L * Bp, E).astype(BF16)                      # MXU operand: bf16
    trg_ids = jnp.pad(trg, ((0, 0), (0, Bp - B)))[:, :, None].astype(jnp.int32)  # [T, Bp, 1]

    vmem = lambda: pl.BlockSpec(memory_space=pltpu.MemorySpace.VMEM)
    smem = pl.BlockSpec(memory_space=pltpu.MemorySpace.SMEM)

    args = (tf_flags, trg_ids, emb_src2d,
            kp['wihf'], kp['whhf'], kp['brznf'], kp['bhnf'],
            kp['wihb'], kp['whhb'], kp['brznb'], kp['bhnb'],
            kp['fcwf'], kp['fcwb'], kp['fcb'],
            kp['dec_emb'],
            kp['attn_wh'], kp['attn_wef'], kp['attn_web'], kp['attn_b'], kp['v'],
            kp['wih_e'], kp['wih_cf'], kp['wih_cb'], kp['whh_dec'], kp['brznd'], kp['bhnd'],
            kp['fcw_h'], kp['fcw_wf'], kp['fcw_wb'], kp['fcw_e'], kp['fcb_out'])

    scratch = [
        pltpu.VMEM((Bp, H), F32), pltpu.VMEM((Bp, H), F32),                  # hf, hb
        pltpu.VMEM((L, Bp, H), F32), pltpu.VMEM((L, Bp, H), F32),            # enc_f, enc_b
        pltpu.VMEM((L, Bp, 3 * H), F32), pltpu.VMEM((L, Bp, 3 * H), F32),    # hoisted gi_f, gi_b
        pltpu.VMEM((L, Bp, D), F32),                                         # eterm
        pltpu.VMEM((Bp, D), F32),                                            # decoder hidden
        pltpu.VMEM((Bp, Vp), F32),                                           # one-hot carry
        pltpu.VMEM((2, Bp, Vp), F32),                                        # output staging
        pltpu.SemaphoreType.DMA((2,)),
    ]

    # VMEM limit sized from the actual resident footprint (+ headroom for tile padding).
    in_bytes = sum(int(np.prod(a.shape)) * a.dtype.itemsize for a in args[1:])
    scratch_bytes = 4 * (2 * Bp * H + 2 * L * Bp * H + 2 * L * Bp * 3 * H
                         + L * Bp * D + Bp * D + Bp * Vp + 2 * Bp * Vp)
    vmem_limit = int(min(100 * 1024 * 1024, 2 * (in_bytes + scratch_bytes) + (8 << 20)))

    flops = int(2 * L * Bp * (E + H) * 6 * H                                  # encoder (both dirs)
                + 2 * Bp * 2 * H * D + 2 * L * Bp * 2 * H * D                 # init fc + enc attn term
                + (T - 1) * 2 * Bp * (Vp * E + D * D + (E + 2 * H) * 3 * D + D * 3 * D
                                      + (D + 2 * H + E) * Vp))
    transcendentals = int(2 * L * Bp * 3 * H + (T - 1) * Bp * (L * D + L + 3 * D))
    out_bytes = T * Bp * Vp * 4

    out = pl.pallas_call(
        seq2seq_kernel,
        out_shape=jax.ShapeDtypeStruct((T, Bp, Vp), F32),
        in_specs=[smem] + [vmem() for _ in range(len(args) - 1)],
        out_specs=pl.BlockSpec(memory_space=pl.ANY),          # streamed to HBM via manual DMA
        scratch_shapes=scratch,
        compiler_params=pltpu.CompilerParams(vmem_limit_bytes=vmem_limit),
        cost_estimate=pl.CostEstimate(flops=flops, transcendentals=transcendentals,
                                      bytes_accessed=in_bytes + out_bytes),
    )(*args)
    return out[:, :B, :V]


# ----------------------------------------------------------------------------- params & reference

def init_params(key, src_vocab, trg_vocab, emb, enc_hid, dec_hid):
    H, D, E = enc_hid, dec_hid, emb
    ks = jax.random.split(key, 26)
    w = lambda k, shape, s=0.1: jax.random.normal(k, shape, dtype=F32) * s
    return dict(
        enc_hid=H, dec_hid=D,
        enc_emb=w(ks[0], (src_vocab, E), 1.0),
        wihf=w(ks[1], (3, E, H)), whhf=w(ks[2], (3, H, H)),
        bihf=w(ks[3], (3, 1, H)), bhhf=w(ks[4], (3, 1, H)),
        wihb=w(ks[5], (3, E, H)), whhb=w(ks[6], (3, H, H)),
        bihb=w(ks[7], (3, 1, H)), bhhb=w(ks[8], (3, 1, H)),
        fcw_f=w(ks[9], (H, D)), fcw_b=w(ks[10], (H, D)), fcb=w(ks[11], (1, D)),
        dec_emb=w(ks[12], (trg_vocab, E), 1.0),
        attn_wh=w(ks[13], (D, D)), attn_we=w(ks[14], (2 * H, D)),
        attn_b=w(ks[15], (1, D)), v=w(ks[16], (1, D)),
        wih_e=w(ks[17], (3, E, D)), wih_c=w(ks[18], (3, 2 * H, D)),
        whh=w(ks[19], (3, D, D)), bih=w(ks[20], (3, 1, D)), bhh=w(ks[21], (3, 1, D)),
        fcw_h=w(ks[22], (D, trg_vocab)), fcw_w=w(ks[23], (2 * H, trg_vocab)),
        fcw_e=w(ks[24], (E, trg_vocab)), fcb_out=w(ks[25], (1, trg_vocab)),
    )


def _bd(a, b):
    """bf16-operand matmul with f32 accumulation, mirroring the kernel's MXU usage."""
    return jnp.dot(a.astype(BF16), b.astype(BF16), preferred_element_type=F32)


def ref_forward(src, trg, p, tf_flags):
    L, B = src.shape
    T = trg.shape[0]
    H, D = p['enc_hid'], p['dec_hid']
    V = p['dec_emb'].shape[0]
    emb_src = jnp.take(p['enc_emb'], src, axis=0)

    def gru(gi, h, whh, bhh):
        gh = [_bd(h, whh[i]) + bhh[i] for i in range(3)]
        r = jax.nn.sigmoid(gi[0] + gh[0])
        z = jax.nn.sigmoid(gi[1] + gh[1])
        n = jnp.tanh(gi[2] + r * gh[2])
        return (1.0 - z) * n + z * h

    hf = jnp.zeros((B, H), F32)
    hb = jnp.zeros((B, H), F32)
    fouts, bouts = [], [None] * L
    for t in range(L):
        gi = [_bd(emb_src[t], p['wihf'][i]) + p['bihf'][i] for i in range(3)]
        hf = gru(gi, hf, p['whhf'], p['bhhf'])
        fouts.append(hf)
    for t in range(L - 1, -1, -1):
        gi = [_bd(emb_src[t], p['wihb'][i]) + p['bihb'][i] for i in range(3)]
        hb = gru(gi, hb, p['whhb'], p['bhhb'])
        bouts[t] = hb
    enc_f = jnp.stack(fouts, 0)
    enc_b = jnp.stack(bouts, 0)
    h = jnp.tanh(_bd(hf, p['fcw_f']) + _bd(hb, p['fcw_b']) + p['fcb'])

    eterm = (_bd(enc_f.reshape(L * B, H), p['attn_we'][:H])
             + _bd(enc_b.reshape(L * B, H), p['attn_we'][H:])).reshape(L, B, D) + p['attn_b'][None]

    outputs = np.zeros((T, B, V), np.float32)
    oh = jax.nn.one_hot(trg[0], V, dtype=F32)
    for t in range(1, T):
        embedded = _bd(oh, p['dec_emb'])
        hterm = _bd(h, p['attn_wh'])
        energy = jnp.tanh(hterm[None] + eterm)
        score = jnp.sum(energy * p['v'][None], axis=-1)
        a = jax.nn.softmax(score, axis=0)
        wf = jnp.sum(a[:, :, None] * enc_f, axis=0)
        wb = jnp.sum(a[:, :, None] * enc_b, axis=0)
        gi = [_bd(embedded, p['wih_e'][i]) + _bd(wf, p['wih_c'][i][:H])
              + _bd(wb, p['wih_c'][i][H:]) + p['bih'][i] for i in range(3)]
        h_new = gru(gi, h, p['whh'], p['bhh'])
        pred = (_bd(h_new, p['fcw_h']) + _bd(wf, p['fcw_w'][:H]) + _bd(wb, p['fcw_w'][H:])
                + _bd(embedded, p['fcw_e']) + p['fcb_out'])
        outputs[t] = np.asarray(pred)
        top1 = jnp.argmax(pred, axis=1)
        oh = jax.nn.one_hot(trg[t] if tf_flags[t] else top1, V, dtype=F32)
        h = h_new
    return jnp.asarray(outputs)


# ----------------------------------------------------------------------------- main

if __name__ == "__main__":
    SRC_VOCAB, TRG_VOCAB = 20, 24
    EMB, ENC_HID, DEC_HID = 32, 32, 32
    SRC_LEN, TRG_LEN, BATCH = 6, 5, 2
    TEACHER_FORCING_RATIO = 0.5

    key = jax.random.PRNGKey(0)
    k_par, k_src, k_trg = jax.random.split(key, 3)
    params = init_params(k_par, SRC_VOCAB, TRG_VOCAB, EMB, ENC_HID, DEC_HID)
    src = jax.random.randint(k_src, (SRC_LEN, BATCH), 0, SRC_VOCAB, dtype=jnp.int32)
    trg = jax.random.randint(k_trg, (TRG_LEN, BATCH), 0, TRG_VOCAB, dtype=jnp.int32)

    # Reproduce `random.random() < teacher_forcing_ratio` deterministically on the host
    # and pass the per-step decisions into the kernel as SMEM flags.
    rng = random.Random(0)
    tf_np = np.zeros((TRG_LEN,), np.int32)
    for t in range(1, TRG_LEN):
        tf_np[t] = 1 if rng.random() < TEACHER_FORCING_RATIO else 0
    tf_flags = jnp.asarray(tf_np)

    outputs = seq2seq_forward(src, trg, params, tf_flags)
    outputs = jax.block_until_ready(outputs)

    ref = ref_forward(src, trg, params, tf_np)
    err = float(np.max(np.abs(np.asarray(outputs) - np.asarray(ref))))
    assert outputs.shape == (TRG_LEN, BATCH, TRG_VOCAB)
    # kernel and reference both use bf16 MXU operands with f32 accumulation; tolerance covers
    # reassociation + transcendental-implementation differences
    assert np.allclose(np.asarray(outputs), np.asarray(ref), atol=1e-2, rtol=1e-2), err
    print("KERNEL_OK")
</pallas_src>

<mosaic_0001>
module attributes {stable_mosaic.version = 11 : i64} {
  func.func @seq2seq_kernel(%arg0: memref<5xi32, #tpu.memory_space<smem>>, %arg1: memref<5x8x1xi32, #tpu.memory_space<vmem>>, %arg2: memref<48x32xbf16, #tpu.memory_space<vmem>>, %arg3: memref<32x96xbf16, #tpu.memory_space<vmem>>, %arg4: memref<32x96xbf16, #tpu.memory_space<vmem>>, %arg5: memref<1x96xf32, #tpu.memory_space<vmem>>, %arg6: memref<1x32xf32, #tpu.memory_space<vmem>>, %arg7: memref<32x96xbf16, #tpu.memory_space<vmem>>, %arg8: memref<32x96xbf16, #tpu.memory_space<vmem>>, %arg9: memref<1x96xf32, #tpu.memory_space<vmem>>, %arg10: memref<1x32xf32, #tpu.memory_space<vmem>>, %arg11: memref<32x32xbf16, #tpu.memory_space<vmem>>, %arg12: memref<32x32xbf16, #tpu.memory_space<vmem>>, %arg13: memref<1x32xf32, #tpu.memory_space<vmem>>, %arg14: memref<128x32xbf16, #tpu.memory_space<vmem>>, %arg15: memref<32x32xbf16, #tpu.memory_space<vmem>>, %arg16: memref<32x32xbf16, #tpu.memory_space<vmem>>, %arg17: memref<32x32xbf16, #tpu.memory_space<vmem>>, %arg18: memref<1x32xf32, #tpu.memory_space<vmem>>, %arg19: memref<1x32xf32, #tpu.memory_space<vmem>>, %arg20: memref<32x96xbf16, #tpu.memory_space<vmem>>, %arg21: memref<32x96xbf16, #tpu.memory_space<vmem>>, %arg22: memref<32x96xbf16, #tpu.memory_space<vmem>>, %arg23: memref<32x96xbf16, #tpu.memory_space<vmem>>, %arg24: memref<1x96xf32, #tpu.memory_space<vmem>>, %arg25: memref<1x32xf32, #tpu.memory_space<vmem>>, %arg26: memref<32x128xbf16, #tpu.memory_space<vmem>>, %arg27: memref<32x128xbf16, #tpu.memory_space<vmem>>, %arg28: memref<32x128xbf16, #tpu.memory_space<vmem>>, %arg29: memref<32x128xbf16, #tpu.memory_space<vmem>>, %arg30: memref<1x128xf32, #tpu.memory_space<vmem>>, %arg31: memref<5x8x128xf32, #tpu.memory_space<any>>, %arg32: memref<8x32xf32, #tpu.memory_space<vmem>>, %arg33: memref<8x32xf32, #tpu.memory_space<vmem>>, %arg34: memref<6x8x32xf32, #tpu.memory_space<vmem>>, %arg35: memref<6x8x32xf32, #tpu.memory_space<vmem>>, %arg36: memref<6x8x96xf32, #tpu.memory_space<vmem>>, %arg37: memref<6x8x96xf32, #tpu.memory_space<vmem>>, %arg38: memref<6x8x32xf32, #tpu.memory_space<vmem>>, %arg39: memref<8x32xf32, #tpu.memory_space<vmem>>, %arg40: memref<8x128xf32, #tpu.memory_space<vmem>>, %arg41: memref<2x8x128xf32, #tpu.memory_space<vmem>>, %arg42: memref<2x!tpu.dma_semaphore, #tpu.memory_space<semaphore_mem>>) attributes {dimension_semantics = [], scalar_prefetch = 0 : i64, scratch_operands = 11 : i64, tpu.core_type = #tpu.core_type<tc>} {
    %c0 = arith.constant 0 : index
    %c0_0 = arith.constant 0 : index
    %0 = vector.load %arg2[%c0, %c0_0] : memref<48x32xbf16, #tpu.memory_space<vmem>>, vector<48x32xbf16>
    %c0_1 = arith.constant 0 : index
    %c0_2 = arith.constant 0 : index
    %1 = vector.load %arg3[%c0_1, %c0_2] : memref<32x96xbf16, #tpu.memory_space<vmem>>, vector<32x96xbf16>
    %cst = arith.constant dense<0.000000e+00> : vector<48x96xf32>
    %2 = tpu.matmul %0, %1, %cst {dimension_numbers = #tpu.dot_dimension_numbers<[1], [0], [0], [1], [0, 0, 1, 1], [], []>} : vector<48x32xbf16>, vector<32x96xbf16>, vector<48x96xf32> -> vector<48x96xf32>
    %c0_3 = arith.constant 0 : index
    %c0_4 = arith.constant 0 : index
    %3 = vector.load %arg5[%c0_3, %c0_4] : memref<1x96xf32, #tpu.memory_space<vmem>>, vector<1x96xf32>
    %4 = vector.broadcast %3 : vector<1x96xf32> to vector<48x96xf32>
    %5 = arith.addf %2, %4 : vector<48x96xf32>
    %6 = vector.shape_cast %5 : vector<48x96xf32> to vector<6x8x96xf32>
    %c0_5 = arith.constant 0 : index
    %c0_6 = arith.constant 0 : index
    %c0_7 = arith.constant 0 : index
    %7 = vector.load %arg36[%c0_5, %c0_6, %c0_7] : memref<6x8x96xf32, #tpu.memory_space<vmem>>, vector<6x8x96xf32>
    tpu.vector_store %arg36[%c0_5, %c0_6, %c0_7], %6 {strides = array<i32>} : memref<6x8x96xf32, #tpu.memory_space<vmem>>, vector<6x8x96xf32>,
    %c0_8 = arith.constant 0 : index
    %c0_9 = arith.constant 0 : index
    %8 = vector.load %arg7[%c0_8, %c0_9] : memref<32x96xbf16, #tpu.memory_space<vmem>>, vector<32x96xbf16>
    %cst_10 = arith.constant dense<0.000000e+00> : vector<48x96xf32>
    %9 = tpu.matmul %0, %8, %cst_10 {dimension_numbers = #tpu.dot_dimension_numbers<[1], [0], [0], [1], [0, 0, 1, 1], [], []>} : vector<48x32xbf16>, vector<32x96xbf16>, vector<48x96xf32> -> vector<48x96xf32>
    %c0_11 = arith.constant 0 : index
    %c0_12 = arith.constant 0 : index
    %10 = vector.load %arg9[%c0_11, %c0_12] : memref<1x96xf32, #tpu.memory_space<vmem>>, vector<1x96xf32>
    %11 = vector.broadcast %10 : vector<1x96xf32> to vector<48x96xf32>
    %12 = arith.addf %9, %11 : vector<48x96xf32>
    %13 = vector.shape_cast %12 : vector<48x96xf32> to vector<6x8x96xf32>
    %c0_13 = arith.constant 0 : index
    %c0_14 = arith.constant 0 : index
    %c0_15 = arith.constant 0 : index
    %14 = vector.load %arg37[%c0_13, %c0_14, %c0_15] : memref<6x8x96xf32, #tpu.memory_space<vmem>>, vector<6x8x96xf32>
    tpu.vector_store %arg37[%c0_13, %c0_14, %c0_15], %13 {strides = array<i32>} : memref<6x8x96xf32, #tpu.memory_space<vmem>>, vector<6x8x96xf32>,
    %cst_16 = arith.constant 0.000000e+00 : f32
    %15 = vector.broadcast %cst_16 : f32 to vector<8x32xf32>
    %c0_17 = arith.constant 0 : index
    %c0_18 = arith.constant 0 : index
    %16 = vector.load %arg32[%c0_17, %c0_18] : memref<8x32xf32, #tpu.memory_space<vmem>>, vector<8x32xf32>
    tpu.vector_store %arg32[%c0_17, %c0_18], %15 {strides = array<i32>} : memref<8x32xf32, #tpu.memory_space<vmem>>, vector<8x32xf32>,
    %cst_19 = arith.constant 0.000000e+00 : f32
    %17 = vector.broadcast %cst_19 : f32 to vector<8x32xf32>
    %c0_20 = arith.constant 0 : index
    %c0_21 = arith.constant 0 : index
    %18 = vector.load %arg33[%c0_20, %c0_21] : memref<8x32xf32, #tpu.memory_space<vmem>>, vector<8x32xf32>
    tpu.vector_store %arg33[%c0_20, %c0_21], %17 {strides = array<i32>} : memref<8x32xf32, #tpu.memory_space<vmem>>, vector<8x32xf32>,
    %c0_22 = arith.constant 0 : index
    %c0_23 = arith.constant 0 : index
    %c0_24 = arith.constant 0 : index
    %19 = vector.load %arg36[%c0_22, %c0_23, %c0_24] : memref<6x8x96xf32, #tpu.memory_space<vmem>>, vector<1x8x96xf32>
    %20 = vector.shape_cast %19 : vector<1x8x96xf32> to vector<8x96xf32>
    %c0_25 = arith.constant 0 : index
    %c0_26 = arith.constant 0 : index
    %21 = vector.load %arg32[%c0_25, %c0_26] : memref<8x32xf32, #tpu.memory_space<vmem>>, vector<8x32xf32>
    %22 = arith.truncf %21 : vector<8x32xf32> to vector<8x32xbf16>
    %c0_27 = arith.constant 0 : index
    %c0_28 = arith.constant 0 : index
    %23 = vector.load %arg4[%c0_27, %c0_28] : memref<32x96xbf16, #tpu.memory_space<vmem>>, vector<32x96xbf16>
    %cst_29 = arith.constant dense<0.000000e+00> : vector<8x96xf32>
    %24 = tpu.matmul %22, %23, %cst_29 {dimension_numbers = #tpu.dot_dimension_numbers<[1], [0], [0], [1], [0, 0, 1, 1], [], []>} : vector<8x32xbf16>, vector<32x96xbf16>, vector<8x96xf32> -> vector<8x96xf32>
    %25 = vector.extract_strided_slice %20 {offsets = [0, 0], sizes = [8, 32], strides = [1, 1]} : vector<8x96xf32> to vector<8x32xf32>
    %26 = vector.extract_strided_slice %24 {offsets = [0, 0], sizes = [8, 32], strides = [1, 1]} : vector<8x96xf32> to vector<8x32xf32>
    %27 = arith.addf %25, %26 : vector<8x32xf32>
    %28 = arith.negf %27 : vector<8x32xf32>
    %29 = math.exp %28 : vector<8x32xf32>
    %cst_30 = arith.constant 1.000000e+00 : f32
    %30 = vector.broadcast %cst_30 : f32 to vector<8x32xf32>
    %31 = arith.addf %30, %29 : vector<8x32xf32>
    %32 = arith.divf %30, %31 : vector<8x32xf32>
    %33 = vector.extract_strided_slice %20 {offsets = [0, 32], sizes = [8, 32], strides = [1, 1]} : vector<8x96xf32> to vector<8x32xf32>
    %34 = vector.extract_strided_slice %24 {offsets = [0, 32], sizes = [8, 32], strides = [1, 1]} : vector<8x96xf32> to vector<8x32xf32>
    %35 = arith.addf %33, %34 : vector<8x32xf32>
    %36 = arith.negf %35 : vector<8x32xf32>
    %37 = math.exp %36 : vector<8x32xf32>
    %cst_31 = arith.constant 1.000000e+00 : f32
    %38 = vector.broadcast %cst_31 : f32 to vector<8x32xf32>
    %39 = arith.addf %38, %37 : vector<8x32xf32>
    %40 = arith.divf %38, %39 : vector<8x32xf32>
    %41 = vector.extract_strided_slice %20 {offsets = [0, 64], sizes = [8, 32], strides = [1, 1]} : vector<8x96xf32> to vector<8x32xf32>
    %42 = vector.extract_strided_slice %24 {offsets = [0, 64], sizes = [8, 32], strides = [1, 1]} : vector<8x96xf32> to vector<8x32xf32>
    %c0_32 = arith.constant 0 : index
    %c0_33 = arith.constant 0 : index
    %43 = vector.load %arg6[%c0_32, %c0_33] : memref<1x32xf32, #tpu.memory_space<vmem>>, vector<1x32xf32>
    %44 = vector.broadcast %43 : vector<1x32xf32> to vector<8x32xf32>
    %45 = arith.addf %42, %44 : vector<8x32xf32>
    %46 = arith.mulf %32, %45 : vector<8x32xf32>
    %47 = arith.addf %41, %46 : vector<8x32xf32>
    %48 = math.tanh %47 : vector<8x32xf32>
    %cst_34 = arith.constant 1.000000e+00 : f32
    %49 = vector.broadcast %cst_34 : f32 to vector<8x32xf32>
    %50 = arith.subf %49, %40 : vector<8x32xf32>
    %51 = arith.mulf %50, %48 : vector<8x32xf32>
    %52 = arith.mulf %40, %21 : vector<8x32xf32>
    %53 = arith.addf %51, %52 : vector<8x32xf32>
    %c5 = arith.constant 5 : index
    %c0_35 = arith.constant 0 : index
    %c0_36 = arith.constant 0 : index
    %54 = vector.load %arg37[%c5, %c0_35, %c0_36] : memref<6x8x96xf32, #tpu.memory_space<vmem>>, vector<1x8x96xf32>
    %55 = vector.shape_cast %54 : vector<1x8x96xf32> to vector<8x96xf32>
    %c0_37 = arith.constant 0 : index
    %c0_38 = arith.constant 0 : index
    %56 = vector.load %arg33[%c0_37, %c0_38] : memref<8x32xf32, #tpu.memory_space<vmem>>, vector<8x32xf32>
    %57 = arith.truncf %56 : vector<8x32xf32> to vector<8x32xbf16>
    %c0_39 = arith.constant 0 : index
    %c0_40 = arith.constant 0 : index
    %58 = vector.load %arg8[%c0_39, %c0_40] : memref<32x96xbf16, #tpu.memory_space<vmem>>, vector<32x96xbf16>
    %cst_41 = arith.constant dense<0.000000e+00> : vector<8x96xf32>
    %59 = tpu.matmul %57, %58, %cst_41 {dimension_numbers = #tpu.dot_dimension_numbers<[1], [0], [0], [1], [0, 0, 1, 1], [], []>} : vector<8x32xbf16>, vector<32x96xbf16>, vector<8x96xf32> -> vector<8x96xf32>
    %60 = vector.extract_strided_slice %55 {offsets = [0, 0], sizes = [8, 32], strides = [1, 1]} : vector<8x96xf32> to vector<8x32xf32>
    %61 = vector.extract_strided_slice %59 {offsets = [0, 0], sizes = [8, 32], strides = [1, 1]} : vector<8x96xf32> to vector<8x32xf32>
    %62 = arith.addf %60, %61 : vector<8x32xf32>
    %63 = arith.negf %62 : vector<8x32xf32>
    %64 = math.exp %63 : vector<8x32xf32>
    %cst_42 = arith.constant 1.000000e+00 : f32
    %65 = vector.broadcast %cst_42 : f32 to vector<8x32xf32>
    %66 = arith.addf %65, %64 : vector<8x32xf32>
    %67 = arith.divf %65, %66 : vector<8x32xf32>
    %68 = vector.extract_strided_slice %55 {offsets = [0, 32], sizes = [8, 32], strides = [1, 1]} : vector<8x96xf32> to vector<8x32xf32>
    %69 = vector.extract_strided_slice %59 {offsets = [0, 32], sizes = [8, 32], strides = [1, 1]} : vector<8x96xf32> to vector<8x32xf32>
    %70 = arith.addf %68, %69 : vector<8x32xf32>
    %71 = arith.negf %70 : vector<8x32xf32>
    %72 = math.exp %71 : vector<8x32xf32>
    %cst_43 = arith.constant 1.000000e+00 : f32
    %73 = vector.broadcast %cst_43 : f32 to vector<8x32xf32>
    %74 = arith.addf %73, %72 : vector<8x32xf32>
    %75 = arith.divf %73, %74 : vector<8x32xf32>
    %76 = vector.extract_strided_slice %55 {offsets = [0, 64], sizes = [8, 32], strides = [1, 1]} : vector<8x96xf32> to vector<8x32xf32>
    %77 = vector.extract_strided_slice %59 {offsets = [0, 64], sizes = [8, 32], strides = [1, 1]} : vector<8x96xf32> to vector<8x32xf32>
    %c0_44 = arith.constant 0 : index
    %c0_45 = arith.constant 0 : index
    %78 = vector.load %arg10[%c0_44, %c0_45] : memref<1x32xf32, #tpu.memory_space<vmem>>, vector<1x32xf32>
    %79 = vector.broadcast %78 : vector<1x32xf32> to vector<8x32xf32>
    %80 = arith.addf %77, %79 : vector<8x32xf32>
    %81 = arith.mulf %67, %80 : vector<8x32xf32>
    %82 = arith.addf %76, %81 : vector<8x32xf32>
    %83 = math.tanh %82 : vector<8x32xf32>
    %cst_46 = arith.constant 1.000000e+00 : f32
    %84 = vector.broadcast %cst_46 : f32 to vector<8x32xf32>
    %85 = arith.subf %84, %75 : vector<8x32xf32>
    %86 = arith.mulf %85, %83 : vector<8x32xf32>
    %87 = arith.mulf %75, %56 : vector<8x32xf32>
    %88 = arith.addf %86, %87 : vector<8x32xf32>
    %c0_47 = arith.constant 0 : index
    %c0_48 = arith.constant 0 : index
    %c0_49 = arith.constant 0 : index
    %89 = vector.load %arg34[%c0_47, %c0_48, %c0_49] : memref<6x8x32xf32, #tpu.memory_space<vmem>>, vector<1x8x32xf32>
    %90 = vector.shape_cast %89 : vector<1x8x32xf32> to vector<8x32xf32>
    %91 = vector.shape_cast %53 : vector<8x32xf32> to vector<1x8x32xf32>
    tpu.vector_store %arg34[%c0_47, %c0_48, %c0_49], %91 {strides = array<i32>} : memref<6x8x32xf32, #tpu.memory_space<vmem>>, vector<1x8x32xf32>,
    %c5_50 = arith.constant 5 : index
    %c0_51 = arith.constant 0 : index
    %c0_52 = arith.constant 0 : index
    %92 = vector.load %arg35[%c5_50, %c0_51, %c0_52] : memref<6x8x32xf32, #tpu.memory_space<vmem>>, vector<1x8x32xf32>
    %93 = vector.shape_cast %92 : vector<1x8x32xf32> to vector<8x32xf32>
    %94 = vector.shape_cast %88 : vector<8x32xf32> to vector<1x8x32xf32>
    tpu.vector_store %arg35[%c5_50, %c0_51, %c0_52], %94 {strides = array<i32>} : memref<6x8x32xf32, #tpu.memory_space<vmem>>, vector<1x8x32xf32>,
    %c0_53 = arith.constant 0 : index
    %c0_54 = arith.constant 0 : index
    %95 = vector.load %arg32[%c0_53, %c0_54] : memref<8x32xf32, #tpu.memory_space<vmem>>, vector<8x32xf32>
    tpu.vector_store %arg32[%c0_53, %c0_54], %53 {strides = array<i32>} : memref<8x32xf32, #tpu.memory_space<vmem>>, vector<8x32xf32>,
    %c0_55 = arith.constant 0 : index
    %c0_56 = arith.constant 0 : index
    %96 = vector.load %arg33[%c0_55, %c0_56] : memref<8x32xf32, #tpu.memory_space<vmem>>, vector<8x32xf32>
    tpu.vector_store %arg33[%c0_55, %c0_56], %88 {strides = array<i32>} : memref<8x32xf32, #tpu.memory_space<vmem>>, vector<8x32xf32>,
    %c1 = arith.constant 1 : index
    %c0_57 = arith.constant 0 : index
    %c0_58 = arith.constant 0 : index
    %97 = vector.load %arg36[%c1, %c0_57, %c0_58] : memref<6x8x96xf32, #tpu.memory_space<vmem>>, vector<1x8x96xf32>
    %98 = vector.shape_cast %97 : vector<1x8x96xf32> to vector<8x96xf32>
    %c0_59 = arith.constant 0 : index
    %c0_60 = arith.constant 0 : index
    %99 = vector.load %arg32[%c0_59, %c0_60] : memref<8x32xf32, #tpu.memory_space<vmem>>, vector<8x32xf32>
    %100 = arith.truncf %99 : vector<8x32xf32> to vector<8x32xbf16>
    %c0_61 = arith.constant 0 : index
    %c0_62 = arith.constant 0 : index
    %101 = vector.load %arg4[%c0_61, %c0_62] : memref<32x96xbf16, #tpu.memory_space<vmem>>, vector<32x96xbf16>
    %cst_63 = arith.constant dense<0.000000e+00> : vector<8x96xf32>
    %102 = tpu.matmul %100, %101, %cst_63 {dimension_numbers = #tpu.dot_dimension_numbers<[1], [0], [0], [1], [0, 0, 1, 1], [], []>} : vector<8x32xbf16>, vector<32x96xbf16>, vector<8x96xf32> -> vector<8x96xf32>
    %103 = vector.extract_strided_slice %98 {offsets = [0, 0], sizes = [8, 32], strides = [1, 1]} : vector<8x96xf32> to vector<8x32xf32>
    %104 = vector.extract_strided_slice %102 {offsets = [0, 0], sizes = [8, 32], strides = [1, 1]} : vector<8x96xf32> to vector<8x32xf32>
    %105 = arith.addf %103, %104 : vector<8x32xf32>
    %106 = arith.negf %105 : vector<8x32xf32>
    %107 = math.exp %106 : vector<8x32xf32>
    %cst_64 = arith.constant 1.000000e+00 : f32
    %108 = vector.broadcast %cst_64 : f32 to vector<8x32xf32>
    %109 = arith.addf %108, %107 : vector<8x32xf32>
    %110 = arith.divf %108, %109 : vector<8x32xf32>
    %111 = vector.extract_strided_slice %98 {offsets = [0, 32], sizes = [8, 32], strides = [1, 1]} : vector<8x96xf32> to vector<8x32xf32>
    %112 = vector.extract_strided_slice %102 {offsets = [0, 32], sizes = [8, 32], strides = [1, 1]} : vector<8x96xf32> to vector<8x32xf32>
    %113 = arith.addf %111, %112 : vector<8x32xf32>
    %114 = arith.negf %113 : vector<8x32xf32>
    %115 = math.exp %114 : vector<8x32xf32>
    %cst_65 = arith.constant 1.000000e+00 : f32
    %116 = vector.broadcast %cst_65 : f32 to vector<8x32xf32>
    %117 = arith.addf %116, %115 : vector<8x32xf32>
    %118 = arith.divf %116, %117 : vector<8x32xf32>
    %119 = vector.extract_strided_slice %98 {offsets = [0, 64], sizes = [8, 32], strides = [1, 1]} : vector<8x96xf32> to vector<8x32xf32>
    %120 = vector.extract_strided_slice %102 {offsets = [0, 64], sizes = [8, 32], strides = [1, 1]} : vector<8x96xf32> to vector<8x32xf32>
    %c0_66 = arith.constant 0 : index
    %c0_67 = arith.constant 0 : index
    %121 = vector.load %arg6[%c0_66, %c0_67] : memref<1x32xf32, #tpu.memory_space<vmem>>, vector<1x32xf32>
    %122 = vector.broadcast %121 : vector<1x32xf32> to vector<8x32xf32>
    %123 = arith.addf %120, %122 : vector<8x32xf32>
    %124 = arith.mulf %110, %123 : vector<8x32xf32>
    %125 = arith.addf %119, %124 : vector<8x32xf32>
    %126 = math.tanh %125 : vector<8x32xf32>
    %cst_68 = arith.constant 1.000000e+00 : f32
    %127 = vector.broadcast %cst_68 : f32 to vector<8x32xf32>
    %128 = arith.subf %127, %118 : vector<8x32xf32>
    %129 = arith.mulf %128, %126 : vector<8x32xf32>
    %130 = arith.mulf %118, %99 : vector<8x32xf32>
    %131 = arith.addf %129, %130 : vector<8x32xf32>
    %c4 = arith.constant 4 : index
    %c0_69 = arith.constant 0 : index
    %c0_70 = arith.constant 0 : index
    %132 = vector.load %arg37[%c4, %c0_69, %c0_70] : memref<6x8x96xf32, #tpu.memory_space<vmem>>, vector<1x8x96xf32>
    %133 = vector.shape_cast %132 : vector<1x8x96xf32> to vector<8x96xf32>
    %c0_71 = arith.constant 0 : index
    %c0_72 = arith.constant 0 : index
    %134 = vector.load %arg33[%c0_71, %c0_72] : memref<8x32xf32, #tpu.memory_space<vmem>>, vector<8x32xf32>
    %135 = arith.truncf %134 : vector<8x32xf32> to vector<8x32xbf16>
    %c0_73 = arith.constant 0 : index
    %c0_74 = arith.constant 0 : index
    %136 = vector.load %arg8[%c0_73, %c0_74] : memref<32x96xbf16, #tpu.memory_space<vmem>>, vector<32x96xbf16>
    %cst_75 = arith.constant dense<0.000000e+00> : vector<8x96xf32>
    %137 = tpu.matmul %135, %136, %cst_75 {dimension_numbers = #tpu.dot_dimension_numbers<[1], [0], [0], [1], [0, 0, 1, 1], [], []>} : vector<8x32xbf16>, vector<32x96xbf16>, vector<8x96xf32> -> vector<8x96xf32>
    %138 = vector.extract_strided_slice %133 {offsets = [0, 0], sizes = [8, 32], strides = [1, 1]} : vector<8x96xf32> to vector<8x32xf32>
    %139 = vector.extract_strided_slice %137 {offsets = [0, 0], sizes = [8, 32], strides = [1, 1]} : vector<8x96xf32> to vector<8x32xf32>
    %140 = arith.addf %138, %139 : vector<8x32xf32>
    %141 = arith.negf %140 : vector<8x32xf32>
    %142 = math.exp %141 : vector<8x32xf32>
    %cst_76 = arith.constant 1.000000e+00 : f32
    %143 = vector.broadcast %cst_76 : f32 to vector<8x32xf32>
    %144 = arith.addf %143, %142 : vector<8x32xf32>
    %145 = arith.divf %143, %144 : vector<8x32xf32>
    %146 = vector.extract_strided_slice %133 {offsets = [0, 32], sizes = [8, 32], strides = [1, 1]} : vector<8x96xf32> to vector<8x32xf32>
    %147 = vector.extract_strided_slice %137 {offsets = [0, 32], sizes = [8, 32], strides = [1, 1]} : vector<8x96xf32> to vector<8x32xf32>
    %148 = arith.addf %146, %147 : vector<8x32xf32>
    %149 = arith.negf %148 : vector<8x32xf32>
    %150 = math.exp %149 : vector<8x32xf32>
    %cst_77 = arith.constant 1.000000e+00 : f32
    %151 = vector.broadcast %cst_77 : f32 to vector<8x32xf32>
    %152 = arith.addf %151, %150 : vector<8x32xf32>
    %153 = arith.divf %151, %152 : vector<8x32xf32>
    %154 = vector.extract_strided_slice %133 {offsets = [0, 64], sizes = [8, 32], strides = [1, 1]} : vector<8x96xf32> to vector<8x32xf32>
    %155 = vector.extract_strided_slice %137 {offsets = [0, 64], sizes = [8, 32], strides = [1, 1]} : vector<8x96xf32> to vector<8x32xf32>
    %c0_78 = arith.constant 0 : index
    %c0_79 = arith.constant 0 : index
    %156 = vector.load %arg10[%c0_78, %c0_79] : memref<1x32xf32, #tpu.memory_space<vmem>>, vector<1x32xf32>
    %157 = vector.broadcast %156 : vector<1x32xf32> to vector<8x32xf32>
    %158 = arith.addf %155, %157 : vector<8x32xf32>
    %159 = arith.mulf %145, %158 : vector<8x32xf32>
    %160 = arith.addf %154, %159 : vector<8x32xf32>
    %161 = math.tanh %160 : vector<8x32xf32>
    %cst_80 = arith.constant 1.000000e+00 : f32
    %162 = vector.broadcast %cst_80 : f32 to vector<8x32xf32>
    %163 = arith.subf %162, %153 : vector<8x32xf32>
    %164 = arith.mulf %163, %161 : vector<8x32xf32>
    %165 = arith.mulf %153, %134 : vector<8x32xf32>
    %166 = arith.addf %164, %165 : vector<8x32xf32>
    %c1_81 = arith.constant 1 : index
    %c0_82 = arith.constant 0 : index
    %c0_83 = arith.constant 0 : index
    %167 = vector.load %arg34[%c1_81, %c0_82, %c0_83] : memref<6x8x32xf32, #tpu.memory_space<vmem>>, vector<1x8x32xf32>
    %168 = vector.shape_cast %167 : vector<1x8x32xf32> to vector<8x32xf32>
    %169 = vector.shape_cast %131 : vector<8x32xf32> to vector<1x8x32xf32>
    tpu.vector_store %arg34[%c1_81, %c0_82, %c0_83], %169 {strides = array<i32>} : memref<6x8x32xf32, #tpu.memory_space<vmem>>, vector<1x8x32xf32>,
    %c4_84 = arith.constant 4 : index
    %c0_85 = arith.constant 0 : index
    %c0_86 = arith.constant 0 : index
    %170 = vector.load %arg35[%c4_84, %c0_85, %c0_86] : memref<6x8x32xf32, #tpu.memory_space<vmem>>, vector<1x8x32xf32>
    %171 = vector.shape_cast %170 : vector<1x8x32xf32> to vector<8x32xf32>
    %172 = vector.shape_cast %166 : vector<8x32xf32> to vector<1x8x32xf32>
    tpu.vector_store %arg35[%c4_84, %c0_85, %c0_86], %172 {strides = array<i32>} : memref<6x8x32xf32, #tpu.memory_space<vmem>>, vector<1x8x32xf32>,
    %c0_87 = arith.constant 0 : index
    %c0_88 = arith.constant 0 : index
    %173 = vector.load %arg32[%c0_87, %c0_88] : memref<8x32xf32, #tpu.memory_space<vmem>>, vector<8x32xf32>
    tpu.vector_store %arg32[%c0_87, %c0_88], %131 {strides = array<i32>} : memref<8x32xf32, #tpu.memory_space<vmem>>, vector<8x32xf32>,
    %c0_89 = arith.constant 0 : index
    %c0_90 = arith.constant 0 : index
    %174 = vector.load %arg33[%c0_89, %c0_90] : memref<8x32xf32, #tpu.memory_space<vmem>>, vector<8x32xf32>
    tpu.vector_store %arg33[%c0_89, %c0_90], %166 {strides = array<i32>} : memref<8x32xf32, #tpu.memory_space<vmem>>, vector<8x32xf32>,
    %c2 = arith.constant 2 : index
    %c0_91 = arith.constant 0 : index
    %c0_92 = arith.constant 0 : index
    %175 = vector.load %arg36[%c2, %c0_91, %c0_92] : memref<6x8x96xf32, #tpu.memory_space<vmem>>, vector<1x8x96xf32>
    %176 = vector.shape_cast %175 : vector<1x8x96xf32> to vector<8x96xf32>
    %c0_93 = arith.constant 0 : index
    %c0_94 = arith.constant 0 : index
    %177 = vector.load %arg32[%c0_93, %c0_94] : memref<8x32xf32, #tpu.memory_space<vmem>>, vector<8x32xf32>
    %178 = arith.truncf %177 : vector<8x32xf32> to vector<8x32xbf16>
    %c0_95 = arith.constant 0 : index
    %c0_96 = arith.constant 0 : index
    %179 = vector.load %arg4[%c0_95, %c0_96] : memref<32x96xbf16, #tpu.memory_space<vmem>>, vector<32x96xbf16>
    %cst_97 = arith.constant dense<0.000000e+00> : vector<8x96xf32>
    %180 = tpu.matmul %178, %179, %cst_97 {dimension_numbers = #tpu.dot_dimension_numbers<[1], [0], [0], [1], [0, 0, 1, 1], [], []>} : vector<8x32xbf16>, vector<32x96xbf16>, vector<8x96xf32> -> vector<8x96xf32>
    %181 = vector.extract_strided_slice %176 {offsets = [0, 0], sizes = [8, 32], strides = [1, 1]} : vector<8x96xf32> to vector<8x32xf32>
    %182 = vector.extract_strided_slice %180 {offsets = [0, 0], sizes = [8, 32], strides = [1, 1]} : vector<8x96xf32> to vector<8x32xf32>
    %183 = arith.addf %181, %182 : vector<8x32xf32>
    %184 = arith.negf %183 : vector<8x32xf32>
    %185 = math.exp %184 : vector<8x32xf32>
    %cst_98 = arith.constant 1.000000e+00 : f32
    %186 = vector.broadcast %cst_98 : f32 to vector<8x32xf32>
    %187 = arith.addf %186, %185 : vector<8x32xf32>
    %188 = arith.divf %186, %187 : vector<8x32xf32>
    %189 = vector.extract_strided_slice %176 {offsets = [0, 32], sizes = [8, 32], strides = [1, 1]} : vector<8x96xf32> to vector<8x32xf32>
    %190 = vector.extract_strided_slice %180 {offsets = [0, 32], sizes = [8, 32], strides = [1, 1]} : vector<8x96xf32> to vector<8x32xf32>
    %191 = arith.addf %189, %190 : vector<8x32xf32>
    %192 = arith.negf %191 : vector<8x32xf32>
    %193 = math.exp %192 : vector<8x32xf32>
    %cst_99 = arith.constant 1.000000e+00 : f32
    %194 = vector.broadcast %cst_99 : f32 to vector<8x32xf32>
    %195 = arith.addf %194, %193 : vector<8x32xf32>
    %196 = arith.divf %194, %195 : vector<8x32xf32>
    %197 = vector.extract_strided_slice %176 {offsets = [0, 64], sizes = [8, 32], strides = [1, 1]} : vector<8x96xf32> to vector<8x32xf32>
    %198 = vector.extract_strided_slice %180 {offsets = [0, 64], sizes = [8, 32], strides = [1, 1]} : vector<8x96xf32> to vector<8x32xf32>
    %c0_100 = arith.constant 0 : index
    %c0_101 = arith.constant 0 : index
    %199 = vector.load %arg6[%c0_100, %c0_101] : memref<1x32xf32, #tpu.memory_space<vmem>>, vector<1x32xf32>
    %200 = vector.broadcast %199 : vector<1x32xf32> to vector<8x32xf32>
    %201 = arith.addf %198, %200 : vector<8x32xf32>
    %202 = arith.mulf %188, %201 : vector<8x32xf32>
    %203 = arith.addf %197, %202 : vector<8x32xf32>
    %204 = math.tanh %203 : vector<8x32xf32>
    %cst_102 = arith.constant 1.000000e+00 : f32
    %205 = vector.broadcast %cst_102 : f32 to vector<8x32xf32>
    %206 = arith.subf %205, %196 : vector<8x32xf32>
    %207 = arith.mulf %206, %204 : vector<8x32xf32>
    %208 = arith.mulf %196, %177 : vector<8x32xf32>
    %209 = arith.addf %207, %208 : vector<8x32xf32>
    %c3 = arith.constant 3 : index
    %c0_103 = arith.constant 0 : index
    %c0_104 = arith.constant 0 : index
    %210 = vector.load %arg37[%c3, %c0_103, %c0_104] : memref<6x8x96xf32, #tpu.memory_space<vmem>>, vector<1x8x96xf32>
    %211 = vector.shape_cast %210 : vector<1x8x96xf32> to vector<8x96xf32>
    %c0_105 = arith.constant 0 : index
    %c0_106 = arith.constant 0 : index
    %212 = vector.load %arg33[%c0_105, %c0_106] : memref<8x32xf32, #tpu.memory_space<vmem>>, vector<8x32xf32>
    %213 = arith.truncf %212 : vector<8x32xf32> to vector<8x32xbf16>
    %c0_107 = arith.constant 0 : index
    %c0_108 = arith.constant 0 : index
    %214 = vector.load %arg8[%c0_107, %c0_108] : memref<32x96xbf16, #tpu.memory_space<vmem>>, vector<32x96xbf16>
    %cst_109 = arith.constant dense<0.000000e+00> : vector<8x96xf32>
    %215 = tpu.matmul %213, %214, %cst_109 {dimension_numbers = #tpu.dot_dimension_numbers<[1], [0], [0], [1], [0, 0, 1, 1], [], []>} : vector<8x32xbf16>, vector<32x96xbf16>, vector<8x96xf32> -> vector<8x96xf32>
    %216 = vector.extract_strided_slice %211 {offsets = [0, 0], sizes = [8, 32], strides = [1, 1]} : vector<8x96xf32> to vector<8x32xf32>
    %217 = vector.extract_strided_slice %215 {offsets = [0, 0], sizes = [8, 32], strides = [1, 1]} : vector<8x96xf32> to vector<8x32xf32>
    %218 = arith.addf %216, %217 : vector<8x32xf32>
    %219 = arith.negf %218 : vector<8x32xf32>
    %220 = math.exp %219 : vector<8x32xf32>
    %cst_110 = arith.constant 1.000000e+00 : f32
    %221 = vector.broadcast %cst_110 : f32 to vector<8x32xf32>
    %222 = arith.addf %221, %220 : vector<8x32xf32>
    %223 = arith.divf %221, %222 : vector<8x32xf32>
    %224 = vector.extract_strided_slice %211 {offsets = [0, 32], sizes = [8, 32], strides = [1, 1]} : vector<8x96xf32> to vector<8x32xf32>
    %225 = vector.extract_strided_slice %215 {offsets = [0, 32], sizes = [8, 32], strides = [1, 1]} : vector<8x96xf32> to vector<8x32xf32>
    %226 = arith.addf %224, %225 : vector<8x32xf32>
    %227 = arith.negf %226 : vector<8x32xf32>
    %228 = math.exp %227 : vector<8x32xf32>
    %cst_111 = arith.constant 1.000000e+00 : f32
    %229 = vector.broadcast %cst_111 : f32 to vector<8x32xf32>
    %230 = arith.addf %229, %228 : vector<8x32xf32>
    %231 = arith.divf %229, %230 : vector<8x32xf32>
    %232 = vector.extract_strided_slice %211 {offsets = [0, 64], sizes = [8, 32], strides = [1, 1]} : vector<8x96xf32> to vector<8x32xf32>
    %233 = vector.extract_strided_slice %215 {offsets = [0, 64], sizes = [8, 32], strides = [1, 1]} : vector<8x96xf32> to vector<8x32xf32>
    %c0_112 = arith.constant 0 : index
    %c0_113 = arith.constant 0 : index
    %234 = vector.load %arg10[%c0_112, %c0_113] : memref<1x32xf32, #tpu.memory_space<vmem>>, vector<1x32xf32>
    %235 = vector.broadcast %234 : vector<1x32xf32> to vector<8x32xf32>
    %236 = arith.addf %233, %235 : vector<8x32xf32>
    %237 = arith.mulf %223, %236 : vector<8x32xf32>
    %238 = arith.addf %232, %237 : vector<8x32xf32>
    %239 = math.tanh %238 : vector<8x32xf32>
    %cst_114 = arith.constant 1.000000e+00 : f32
    %240 = vector.broadcast %cst_114 : f32 to vector<8x32xf32>
    %241 = arith.subf %240, %231 : vector<8x32xf32>
    %242 = arith.mulf %241, %239 : vector<8x32xf32>
    %243 = arith.mulf %231, %212 : vector<8x32xf32>
    %244 = arith.addf %242, %243 : vector<8x32xf32>
    %c2_115 = arith.constant 2 : index
    %c0_116 = arith.constant 0 : index
    %c0_117 = arith.constant 0 : index
    %245 = vector.load %arg34[%c2_115, %c0_116, %c0_117] : memref<6x8x32xf32, #tpu.memory_space<vmem>>, vector<1x8x32xf32>
    %246 = vector.shape_cast %245 : vector<1x8x32xf32> to vector<8x32xf32>
    %247 = vector.shape_cast %209 : vector<8x32xf32> to vector<1x8x32xf32>
    tpu.vector_store %arg34[%c2_115, %c0_116, %c0_117], %247 {strides = array<i32>} : memref<6x8x32xf32, #tpu.memory_space<vmem>>, vector<1x8x32xf32>,
    %c3_118 = arith.constant 3 : index
    %c0_119 = arith.constant 0 : index
    %c0_120 = arith.constant 0 : index
    %248 = vector.load %arg35[%c3_118, %c0_119, %c0_120] : memref<6x8x32xf32, #tpu.memory_space<vmem>>, vector<1x8x32xf32>
    %249 = vector.shape_cast %248 : vector<1x8x32xf32> to vector<8x32xf32>
    %250 = vector.shape_cast %244 : vector<8x32xf32> to vector<1x8x32xf32>
    tpu.vector_store %arg35[%c3_118, %c0_119, %c0_120], %250 {strides = array<i32>} : memref<6x8x32xf32, #tpu.memory_space<vmem>>, vector<1x8x32xf32>,
    %c0_121 = arith.constant 0 : index
    %c0_122 = arith.constant 0 : index
    %251 = vector.load %arg32[%c0_121, %c0_122] : memref<8x32xf32, #tpu.memory_space<vmem>>, vector<8x32xf32>
    tpu.vector_store %arg32[%c0_121, %c0_122], %209 {strides = array<i32>} : memref<8x32xf32, #tpu.memory_space<vmem>>, vector<8x32xf32>,
    %c0_123 = arith.constant 0 : index
    %c0_124 = arith.constant 0 : index
    %252 = vector.load %arg33[%c0_123, %c0_124] : memref<8x32xf32, #tpu.memory_space<vmem>>, vector<8x32xf32>
    tpu.vector_store %arg33[%c0_123, %c0_124], %244 {strides = array<i32>} : memref<8x32xf32, #tpu.memory_space<vmem>>, vector<8x32xf32>,
    %c3_125 = arith.constant 3 : index
    %c0_126 = arith.constant 0 : index
    %c0_127 = arith.constant 0 : index
    %253 = vector.load %arg36[%c3_125, %c0_126, %c0_127] : memref<6x8x96xf32, #tpu.memory_space<vmem>>, vector<1x8x96xf32>
    %254 = vector.shape_cast %253 : vector<1x8x96xf32> to vector<8x96xf32>
    %c0_128 = arith.constant 0 : index
    %c0_129 = arith.constant 0 : index
    %255 = vector.load %arg32[%c0_128, %c0_129] : memref<8x32xf32, #tpu.memory_space<vmem>>, vector<8x32xf32>
    %256 = arith.truncf %255 : vector<8x32xf32> to vector<8x32xbf16>
    %c0_130 = arith.constant 0 : index
    %c0_131 = arith.constant 0 : index
    %257 = vector.load %arg4[%c0_130, %c0_131] : memref<32x96xbf16, #tpu.memory_space<vmem>>, vector<32x96xbf16>
    %cst_132 = arith.constant dense<0.000000e+00> : vector<8x96xf32>
    %258 = tpu.matmul %256, %257, %cst_132 {dimension_numbers = #tpu.dot_dimension_numbers<[1], [0], [0], [1], [0, 0, 1, 1], [], []>} : vector<8x32xbf16>, vector<32x96xbf16>, vector<8x96xf32> -> vector<8x96xf32>
    %259 = vector.extract_strided_slice %254 {offsets = [0, 0], sizes = [8, 32], strides = [1, 1]} : vector<8x96xf32> to vector<8x32xf32>
    %260 = vector.extract_strided_slice %258 {offsets = [0, 0], sizes = [8, 32], strides = [1, 1]} : vector<8x96xf32> to vector<8x32xf32>
    %261 = arith.addf %259, %260 : vector<8x32xf32>
    %262 = arith.negf %261 : vector<8x32xf32>
    %263 = math.exp %262 : vector<8x32xf32>
    %cst_133 = arith.constant 1.000000e+00 : f32
    %264 = vector.broadcast %cst_133 : f32 to vector<8x32xf32>
    %265 = arith.addf %264, %263 : vector<8x32xf32>
    %266 = arith.divf %264, %265 : vector<8x32xf32>
    %267 = vector.extract_strided_slice %254 {offsets = [0, 32], sizes = [8, 32], strides = [1, 1]} : vector<8x96xf32> to vector<8x32xf32>
    %268 = vector.extract_strided_slice %258 {offsets = [0, 32], sizes = [8, 32], strides = [1, 1]} : vector<8x96xf32> to vector<8x32xf32>
    %269 = arith.addf %267, %268 : vector<8x32xf32>
    %270 = arith.negf %269 : vector<8x32xf32>
    %271 = math.exp %270 : vector<8x32xf32>
    %cst_134 = arith.constant 1.000000e+00 : f32
    %272 = vector.broadcast %cst_134 : f32 to vector<8x32xf32>
    %273 = arith.addf %272, %271 : vector<8x32xf32>
    %274 = arith.divf %272, %273 : vector<8x32xf32>
    %275 = vector.extract_strided_slice %254 {offsets = [0, 64], sizes = [8, 32], strides = [1, 1]} : vector<8x96xf32> to vector<8x32xf32>
    %276 = vector.extract_strided_slice %258 {offsets = [0, 64], sizes = [8, 32], strides = [1, 1]} : vector<8x96xf32> to vector<8x32xf32>
    %c0_135 = arith.constant 0 : index
    %c0_136 = arith.constant 0 : index
    %277 = vector.load %arg6[%c0_135, %c0_136] : memref<1x32xf32, #tpu.memory_space<vmem>>, vector<1x32xf32>
    %278 = vector.broadcast %277 : vector<1x32xf32> to vector<8x32xf32>
    %279 = arith.addf %276, %278 : vector<8x32xf32>
    %280 = arith.mulf %266, %279 : vector<8x32xf32>
    %281 = arith.addf %275, %280 : vector<8x32xf32>
    %282 = math.tanh %281 : vector<8x32xf32>
    %cst_137 = arith.constant 1.000000e+00 : f32
    %283 = vector.broadcast %cst_137 : f32 to vector<8x32xf32>
    %284 = arith.subf %283, %274 : vector<8x32xf32>
    %285 = arith.mulf %284, %282 : vector<8x32xf32>
    %286 = arith.mulf %274, %255 : vector<8x32xf32>
    %287 = arith.addf %285, %286 : vector<8x32xf32>
    %c2_138 = arith.constant 2 : index
    %c0_139 = arith.constant 0 : index
    %c0_140 = arith.constant 0 : index
    %288 = vector.load %arg37[%c2_138, %c0_139, %c0_140] : memref<6x8x96xf32, #tpu.memory_space<vmem>>, vector<1x8x96xf32>
    %289 = vector.shape_cast %288 : vector<1x8x96xf32> to vector<8x96xf32>
    %c0_141 = arith.constant 0 : index
    %c0_142 = arith.constant 0 : index
    %290 = vector.load %arg33[%c0_141, %c0_142] : memref<8x32xf32, #tpu.memory_space<vmem>>, vector<8x32xf32>
    %291 = arith.truncf %290 : vector<8x32xf32> to vector<8x32xbf16>
    %c0_143 = arith.constant 0 : index
    %c0_144 = arith.constant 0 : index
    %292 = vector.load %arg8[%c0_143, %c0_144] : memref<32x96xbf16, #tpu.memory_space<vmem>>, vector<32x96xbf16>
    %cst_145 = arith.constant dense<0.000000e+00> : vector<8x96xf32>
    %293 = tpu.matmul %291, %292, %cst_145 {dimension_numbers = #tpu.dot_dimension_numbers<[1], [0], [0], [1], [0, 0, 1, 1], [], []>} : vector<8x32xbf16>, vector<32x96xbf16>, vector<8x96xf32> -> vector<8x96xf32>
    %294 = vector.extract_strided_slice %289 {offsets = [0, 0], sizes = [8, 32], strides = [1, 1]} : vector<8x96xf32> to vector<8x32xf32>
    %295 = vector.extract_strided_slice %293 {offsets = [0, 0], sizes = [8, 32], strides = [1, 1]} : vector<8x96xf32> to vector<8x32xf32>
    %296 = arith.addf %294, %295 : vector<8x32xf32>
    %297 = arith.negf %296 : vector<8x32xf32>
    %298 = math.exp %297 : vector<8x32xf32>
    %cst_146 = arith.constant 1.000000e+00 : f32
    %299 = vector.broadcast %cst_146 : f32 to vector<8x32xf32>
    %300 = arith.addf %299, %298 : vector<8x32xf32>
    %301 = arith.divf %299, %300 : vector<8x32xf32>
    %302 = vector.extract_strided_slice %289 {offsets = [0, 32], sizes = [8, 32], strides = [1, 1]} : vector<8x96xf32> to vector<8x32xf32>
    %303 = vector.extract_strided_slice %293 {offsets = [0, 32], sizes = [8, 32], strides = [1, 1]} : vector<8x96xf32> to vector<8x32xf32>
    %304 = arith.addf %302, %303 : vector<8x32xf32>
    %305 = arith.negf %304 : vector<8x32xf32>
    %306 = math.exp %305 : vector<8x32xf32>
    %cst_147 = arith.constant 1.000000e+00 : f32
    %307 = vector.broadcast %cst_147 : f32 to vector<8x32xf32>
    %308 = arith.addf %307, %306 : vector<8x32xf32>
    %309 = arith.divf %307, %308 : vector<8x32xf32>
    %310 = vector.extract_strided_slice %289 {offsets = [0, 64], sizes = [8, 32], strides = [1, 1]} : vector<8x96xf32> to vector<8x32xf32>
    %311 = vector.extract_strided_slice %293 {offsets = [0, 64], sizes = [8, 32], strides = [1, 1]} : vector<8x96xf32> to vector<8x32xf32>
    %c0_148 = arith.constant 0 : index
    %c0_149 = arith.constant 0 : index
    %312 = vector.load %arg10[%c0_148, %c0_149] : memref<1x32xf32, #tpu.memory_space<vmem>>, vector<1x32xf32>
    %313 = vector.broadcast %312 : vector<1x32xf32> to vector<8x32xf32>
    %314 = arith.addf %311, %313 : vector<8x32xf32>
    %315 = arith.mulf %301, %314 : vector<8x32xf32>
    %316 = arith.addf %310, %315 : vector<8x32xf32>
    %317 = math.tanh %316 : vector<8x32xf32>
    %cst_150 = arith.constant 1.000000e+00 : f32
    %318 = vector.broadcast %cst_150 : f32 to vector<8x32xf32>
    %319 = arith.subf %318, %309 : vector<8x32xf32>
    %320 = arith.mulf %319, %317 : vector<8x32xf32>
    %321 = arith.mulf %309, %290 : vector<8x32xf32>
    %322 = arith.addf %320, %321 : vector<8x32xf32>
    %c3_151 = arith.constant 3 : index
    %c0_152 = arith.constant 0 : index
    %c0_153 = arith.constant 0 : index
    %323 = vector.load %arg34[%c3_151, %c0_152, %c0_153] : memref<6x8x32xf32, #tpu.memory_space<vmem>>, vector<1x8x32xf32>
    %324 = vector.shape_cast %323 : vector<1x8x32xf32> to vector<8x32xf32>
    %325 = vector.shape_cast %287 : vector<8x32xf32> to vector<1x8x32xf32>
    tpu.vector_store %arg34[%c3_151, %c0_152, %c0_153], %325 {strides = array<i32>} : memref<6x8x32xf32, #tpu.memory_space<vmem>>, vector<1x8x32xf32>,
    %c2_154 = arith.constant 2 : index
    %c0_155 = arith.constant 0 : index
    %c0_156 = arith.constant 0 : index
    %326 = vector.load %arg35[%c2_154, %c0_155, %c0_156] : memref<6x8x32xf32, #tpu.memory_space<vmem>>, vector<1x8x32xf32>
    %327 = vector.shape_cast %326 : vector<1x8x32xf32> to vector<8x32xf32>
    %328 = vector.shape_cast %322 : vector<8x32xf32> to vector<1x8x32xf32>
    tpu.vector_store %arg35[%c2_154, %c0_155, %c0_156], %328 {strides = array<i32>} : memref<6x8x32xf32, #tpu.memory_space<vmem>>, vector<1x8x32xf32>,
    %c0_157 = arith.constant 0 : index
    %c0_158 = arith.constant 0 : index
    %329 = vector.load %arg32[%c0_157, %c0_158] : memref<8x32xf32, #tpu.memory_space<vmem>>, vector<8x32xf32>
    tpu.vector_store %arg32[%c0_157, %c0_158], %287 {strides = array<i32>} : memref<8x32xf32, #tpu.memory_space<vmem>>, vector<8x32xf32>,
    %c0_159 = arith.constant 0 : index
    %c0_160 = arith.constant 0 : index
    %330 = vector.load %arg33[%c0_159, %c0_160] : memref<8x32xf32, #tpu.memory_space<vmem>>, vector<8x32xf32>
    tpu.vector_store %arg33[%c0_159, %c0_160], %322 {strides = array<i32>} : memref<8x32xf32, #tpu.memory_space<vmem>>, vector<8x32xf32>,
    %c4_161 = arith.constant 4 : index
    %c0_162 = arith.constant 0 : index
    %c0_163 = arith.constant 0 : index
    %331 = vector.load %arg36[%c4_161, %c0_162, %c0_163] : memref<6x8x96xf32, #tpu.memory_space<vmem>>, vector<1x8x96xf32>
    %332 = vector.shape_cast %331 : vector<1x8x96xf32> to vector<8x96xf32>
    %c0_164 = arith.constant 0 : index
    %c0_165 = arith.constant 0 : index
    %333 = vector.load %arg32[%c0_164, %c0_165] : memref<8x32xf32, #tpu.memory_space<vmem>>, vector<8x32xf32>
    %334 = arith.truncf %333 : vector<8x32xf32> to vector<8x32xbf16>
    %c0_166 = arith.constant 0 : index
    %c0_167 = arith.constant 0 : index
    %335 = vector.load %arg4[%c0_166, %c0_167] : memref<32x96xbf16, #tpu.memory_space<vmem>>, vector<32x96xbf16>
    %cst_168 = arith.constant dense<0.000000e+00> : vector<8x96xf32>
    %336 = tpu.matmul %334, %335, %cst_168 {dimension_numbers = #tpu.dot_dimension_numbers<[1], [0], [0], [1], [0, 0, 1, 1], [], []>} : vector<8x32xbf16>, vector<32x96xbf16>, vector<8x96xf32> -> vector<8x96xf32>
    %337 = vector.extract_strided_slice %332 {offsets = [0, 0], sizes = [8, 32], strides = [1, 1]} : vector<8x96xf32> to vector<8x32xf32>
    %338 = vector.extract_strided_slice %336 {offsets = [0, 0], sizes = [8, 32], strides = [1, 1]} : vector<8x96xf32> to vector<8x32xf32>
    %339 = arith.addf %337, %338 : vector<8x32xf32>
    %340 = arith.negf %339 : vector<8x32xf32>
    %341 = math.exp %340 : vector<8x32xf32>
    %cst_169 = arith.constant 1.000000e+00 : f32
    %342 = vector.broadcast %cst_169 : f32 to vector<8x32xf32>
    %343 = arith.addf %342, %341 : vector<8x32xf32>
    %344 = arith.divf %342, %343 : vector<8x32xf32>
    %345 = vector.extract_strided_slice %332 {offsets = [0, 32], sizes = [8, 32], strides = [1, 1]} : vector<8x96xf32> to vector<8x32xf32>
    %346 = vector.extract_strided_slice %336 {offsets = [0, 32], sizes = [8, 32], strides = [1, 1]} : vector<8x96xf32> to vector<8x32xf32>
    %347 = arith.addf %345, %346 : vector<8x32xf32>
    %348 = arith.negf %347 : vector<8x32xf32>
    %349 = math.exp %348 : vector<8x32xf32>
    %cst_170 = arith.constant 1.000000e+00 : f32
    %350 = vector.broadcast %cst_170 : f32 to vector<8x32xf32>
    %351 = arith.addf %350, %349 : vector<8x32xf32>
    %352 = arith.divf %350, %351 : vector<8x32xf32>
    %353 = vector.extract_strided_slice %332 {offsets = [0, 64], sizes = [8, 32], strides = [1, 1]} : vector<8x96xf32> to vector<8x32xf32>
    %354 = vector.extract_strided_slice %336 {offsets = [0, 64], sizes = [8, 32], strides = [1, 1]} : vector<8x96xf32> to vector<8x32xf32>
    %c0_171 = arith.constant 0 : index
    %c0_172 = arith.constant 0 : index
    %355 = vector.load %arg6[%c0_171, %c0_172] : memref<1x32xf32, #tpu.memory_space<vmem>>, vector<1x32xf32>
    %356 = vector.broadcast %355 : vector<1x32xf32> to vector<8x32xf32>
    %357 = arith.addf %354, %356 : vector<8x32xf32>
    %358 = arith.mulf %344, %357 : vector<8x32xf32>
    %359 = arith.addf %353, %358 : vector<8x32xf32>
    %360 = math.tanh %359 : vector<8x32xf32>
    %cst_173 = arith.constant 1.000000e+00 : f32
    %361 = vector.broadcast %cst_173 : f32 to vector<8x32xf32>
    %362 = arith.subf %361, %352 : vector<8x32xf32>
    %363 = arith.mulf %362, %360 : vector<8x32xf32>
    %364 = arith.mulf %352, %333 : vector<8x32xf32>
    %365 = arith.addf %363, %364 : vector<8x32xf32>
    %c1_174 = arith.constant 1 : index
    %c0_175 = arith.constant 0 : index
    %c0_176 = arith.constant 0 : index
    %366 = vector.load %arg37[%c1_174, %c0_175, %c0_176] : memref<6x8x96xf32, #tpu.memory_space<vmem>>, vector<1x8x96xf32>
    %367 = vector.shape_cast %366 : vector<1x8x96xf32> to vector<8x96xf32>
    %c0_177 = arith.constant 0 : index
    %c0_178 = arith.constant 0 : index
    %368 = vector.load %arg33[%c0_177, %c0_178] : memref<8x32xf32, #tpu.memory_space<vmem>>, vector<8x32xf32>
    %369 = arith.truncf %368 : vector<8x32xf32> to vector<8x32xbf16>
    %c0_179 = arith.constant 0 : index
    %c0_180 = arith.constant 0 : index
    %370 = vector.load %arg8[%c0_179, %c0_180] : memref<32x96xbf16, #tpu.memory_space<vmem>>, vector<32x96xbf16>
    %cst_181 = arith.constant dense<0.000000e+00> : vector<8x96xf32>
    %371 = tpu.matmul %369, %370, %cst_181 {dimension_numbers = #tpu.dot_dimension_numbers<[1], [0], [0], [1], [0, 0, 1, 1], [], []>} : vector<8x32xbf16>, vector<32x96xbf16>, vector<8x96xf32> -> vector<8x96xf32>
    %372 = vector.extract_strided_slice %367 {offsets = [0, 0], sizes = [8, 32], strides = [1, 1]} : vector<8x96xf32> to vector<8x32xf32>
    %373 = vector.extract_strided_slice %371 {offsets = [0, 0], sizes = [8, 32], strides = [1, 1]} : vector<8x96xf32> to vector<8x32xf32>
    %374 = arith.addf %372, %373 : vector<8x32xf32>
    %375 = arith.negf %374 : vector<8x32xf32>
    %376 = math.exp %375 : vector<8x32xf32>
    %cst_182 = arith.constant 1.000000e+00 : f32
    %377 = vector.broadcast %cst_182 : f32 to vector<8x32xf32>
    %378 = arith.addf %377, %376 : vector<8x32xf32>
    %379 = arith.divf %377, %378 : vector<8x32xf32>
    %380 = vector.extract_strided_slice %367 {offsets = [0, 32], sizes = [8, 32], strides = [1, 1]} : vector<8x96xf32> to vector<8x32xf32>
    %381 = vector.extract_strided_slice %371 {offsets = [0, 32], sizes = [8, 32], strides = [1, 1]} : vector<8x96xf32> to vector<8x32xf32>
    %382 = arith.addf %380, %381 : vector<8x32xf32>
    %383 = arith.negf %382 : vector<8x32xf32>
    %384 = math.exp %383 : vector<8x32xf32>
    %cst_183 = arith.constant 1.000000e+00 : f32
    %385 = vector.broadcast %cst_183 : f32 to vector<8x32xf32>
    %386 = arith.addf %385, %384 : vector<8x32xf32>
    %387 = arith.divf %385, %386 : vector<8x32xf32>
    %388 = vector.extract_strided_slice %367 {offsets = [0, 64], sizes = [8, 32], strides = [1, 1]} : vector<8x96xf32> to vector<8x32xf32>
    %389 = vector.extract_strided_slice %371 {offsets = [0, 64], sizes = [8, 32], strides = [1, 1]} : vector<8x96xf32> to vector<8x32xf32>
    %c0_184 = arith.constant 0 : index
    %c0_185 = arith.constant 0 : index
    %390 = vector.load %arg10[%c0_184, %c0_185] : memref<1x32xf32, #tpu.memory_space<vmem>>, vector<1x32xf32>
    %391 = vector.broadcast %390 : vector<1x32xf32> to vector<8x32xf32>
    %392 = arith.addf %389, %391 : vector<8x32xf32>
    %393 = arith.mulf %379, %392 : vector<8x32xf32>
    %394 = arith.addf %388, %393 : vector<8x32xf32>
    %395 = math.tanh %394 : vector<8x32xf32>
    %cst_186 = arith.constant 1.000000e+00 : f32
    %396 = vector.broadcast %cst_186 : f32 to vector<8x32xf32>
    %397 = arith.subf %396, %387 : vector<8x32xf32>
    %398 = arith.mulf %397, %395 : vector<8x32xf32>
    %399 = arith.mulf %387, %368 : vector<8x32xf32>
    %400 = arith.addf %398, %399 : vector<8x32xf32>
    %c4_187 = arith.constant 4 : index
    %c0_188 = arith.constant 0 : index
    %c0_189 = arith.constant 0 : index
    %401 = vector.load %arg34[%c4_187, %c0_188, %c0_189] : memref<6x8x32xf32, #tpu.memory_space<vmem>>, vector<1x8x32xf32>
    %402 = vector.shape_cast %401 : vector<1x8x32xf32> to vector<8x32xf32>
    %403 = vector.shape_cast %365 : vector<8x32xf32> to vector<1x8x32xf32>
    tpu.vector_store %arg34[%c4_187, %c0_188, %c0_189], %403 {strides = array<i32>} : memref<6x8x32xf32, #tpu.memory_space<vmem>>, vector<1x8x32xf32>,
    %c1_190 = arith.constant 1 : index
    %c0_191 = arith.constant 0 : index
    %c0_192 = arith.constant 0 : index
    %404 = vector.load %arg35[%c1_190, %c0_191, %c0_192] : memref<6x8x32xf32, #tpu.memory_space<vmem>>, vector<1x8x32xf32>
    %405 = vector.shape_cast %404 : vector<1x8x32xf32> to vector<8x32xf32>
    %406 = vector.shape_cast %400 : vector<8x32xf32> to vector<1x8x32xf32>
    tpu.vector_store %arg35[%c1_190, %c0_191, %c0_192], %406 {strides = array<i32>} : memref<6x8x32xf32, #tpu.memory_space<vmem>>, vector<1x8x32xf32>,
    %c0_193 = arith.constant 0 : index
    %c0_194 = arith.constant 0 : index
    %407 = vector.load %arg32[%c0_193, %c0_194] : memref<8x32xf32, #tpu.memory_space<vmem>>, vector<8x32xf32>
    tpu.vector_store %arg32[%c0_193, %c0_194], %365 {strides = array<i32>} : memref<8x32xf32, #tpu.memory_space<vmem>>, vector<8x32xf32>,
    %c0_195 = arith.constant 0 : index
    %c0_196 = arith.constant 0 : index
    %408 = vector.load %arg33[%c0_195, %c0_196] : memref<8x32xf32, #tpu.memory_space<vmem>>, vector<8x32xf32>
    tpu.vector_store %arg33[%c0_195, %c0_196], %400 {strides = array<i32>} : memref<8x32xf32, #tpu.memory_space<vmem>>, vector<8x32xf32>,
    %c5_197 = arith.constant 5 : index
    %c0_198 = arith.constant 0 : index
    %c0_199 = arith.constant 0 : index
    %409 = vector.load %arg36[%c5_197, %c0_198, %c0_199] : memref<6x8x96xf32, #tpu.memory_space<vmem>>, vector<1x8x96xf32>
    %410 = vector.shape_cast %409 : vector<1x8x96xf32> to vector<8x96xf32>
    %c0_200 = arith.constant 0 : index
    %c0_201 = arith.constant 0 : index
    %411 = vector.load %arg32[%c0_200, %c0_201] : memref<8x32xf32, #tpu.memory_space<vmem>>, vector<8x32xf32>
    %412 = arith.truncf %411 : vector<8x32xf32> to vector<8x32xbf16>
    %c0_202 = arith.constant 0 : index
    %c0_203 = arith.constant 0 : index
    %413 = vector.load %arg4[%c0_202, %c0_203] : memref<32x96xbf16, #tpu.memory_space<vmem>>, vector<32x96xbf16>
    %cst_204 = arith.constant dense<0.000000e+00> : vector<8x96xf32>
    %414 = tpu.matmul %412, %413, %cst_204 {dimension_numbers = #tpu.dot_dimension_numbers<[1], [0], [0], [1], [0, 0, 1, 1], [], []>} : vector<8x32xbf16>, vector<32x96xbf16>, vector<8x96xf32> -> vector<8x96xf32>
    %415 = vector.extract_strided_slice %410 {offsets = [0, 0], sizes = [8, 32], strides = [1, 1]} : vector<8x96xf32> to vector<8x32xf32>
    %416 = vector.extract_strided_slice %414 {offsets = [0, 0], sizes = [8, 32], strides = [1, 1]} : vector<8x96xf32> to vector<8x32xf32>
    %417 = arith.addf %415, %416 : vector<8x32xf32>
    %418 = arith.negf %417 : vector<8x32xf32>
    %419 = math.exp %418 : vector<8x32xf32>
    %cst_205 = arith.constant 1.000000e+00 : f32
    %420 = vector.broadcast %cst_205 : f32 to vector<8x32xf32>
    %421 = arith.addf %420, %419 : vector<8x32xf32>
    %422 = arith.divf %420, %421 : vector<8x32xf32>
    %423 = vector.extract_strided_slice %410 {offsets = [0, 32], sizes = [8, 32], strides = [1, 1]} : vector<8x96xf32> to vector<8x32xf32>
    %424 = vector.extract_strided_slice %414 {offsets = [0, 32], sizes = [8, 32], strides = [1, 1]} : vector<8x96xf32> to vector<8x32xf32>
    %425 = arith.addf %423, %424 : vector<8x32xf32>
    %426 = arith.negf %425 : vector<8x32xf32>
    %427 = math.exp %426 : vector<8x32xf32>
    %cst_206 = arith.constant 1.000000e+00 : f32
    %428 = vector.broadcast %cst_206 : f32 to vector<8x32xf32>
    %429 = arith.addf %428, %427 : vector<8x32xf32>
    %430 = arith.divf %428, %429 : vector<8x32xf32>
    %431 = vector.extract_strided_slice %410 {offsets = [0, 64], sizes = [8, 32], strides = [1, 1]} : vector<8x96xf32> to vector<8x32xf32>
    %432 = vector.extract_strided_slice %414 {offsets = [0, 64], sizes = [8, 32], strides = [1, 1]} : vector<8x96xf32> to vector<8x32xf32>
    %c0_207 = arith.constant 0 : index
    %c0_208 = arith.constant 0 : index
    %433 = vector.load %arg6[%c0_207, %c0_208] : memref<1x32xf32, #tpu.memory_space<vmem>>, vector<1x32xf32>
    %434 = vector.broadcast %433 : vector<1x32xf32> to vector<8x32xf32>
    %435 = arith.addf %432, %434 : vector<8x32xf32>
    %436 = arith.mulf %422, %435 : vector<8x32xf32>
    %437 = arith.addf %431, %436 : vector<8x32xf32>
    %438 = math.tanh %437 : vector<8x32xf32>
    %cst_209 = arith.constant 1.000000e+00 : f32
    %439 = vector.broadcast %cst_209 : f32 to vector<8x32xf32>
    %440 = arith.subf %439, %430 : vector<8x32xf32>
    %441 = arith.mulf %440, %438 : vector<8x32xf32>
    %442 = arith.mulf %430, %411 : vector<8x32xf32>
    %443 = arith.addf %441, %442 : vector<8x32xf32>
    %c0_210 = arith.constant 0 : index
    %c0_211 = arith.constant 0 : index
    %c0_212 = arith.constant 0 : index
    %444 = vector.load %arg37[%c0_210, %c0_211, %c0_212] : memref<6x8x96xf32, #tpu.memory_space<vmem>>, vector<1x8x96xf32>
    %445 = vector.shape_cast %444 : vector<1x8x96xf32> to vector<8x96xf32>
    %c0_213 = arith.constant 0 : index
    %c0_214 = arith.constant 0 : index
    %446 = vector.load %arg33[%c0_213, %c0_214] : memref<8x32xf32, #tpu.memory_space<vmem>>, vector<8x32xf32>
    %447 = arith.truncf %446 : vector<8x32xf32> to vector<8x32xbf16>
    %c0_215 = arith.constant 0 : index
    %c0_216 = arith.constant 0 : index
    %448 = vector.load %arg8[%c0_215, %c0_216] : memref<32x96xbf16, #tpu.memory_space<vmem>>, vector<32x96xbf16>
    %cst_217 = arith.constant dense<0.000000e+00> : vector<8x96xf32>
    %449 = tpu.matmul %447, %448, %cst_217 {dimension_numbers = #tpu.dot_dimension_numbers<[1], [0], [0], [1], [0, 0, 1, 1], [], []>} : vector<8x32xbf16>, vector<32x96xbf16>, vector<8x96xf32> -> vector<8x96xf32>
    %450 = vector.extract_strided_slice %445 {offsets = [0, 0], sizes = [8, 32], strides = [1, 1]} : vector<8x96xf32> to vector<8x32xf32>
    %451 = vector.extract_strided_slice %449 {offsets = [0, 0], sizes = [8, 32], strides = [1, 1]} : vector<8x96xf32> to vector<8x32xf32>
    %452 = arith.addf %450, %451 : vector<8x32xf32>
    %453 = arith.negf %452 : vector<8x32xf32>
    %454 = math.exp %453 : vector<8x32xf32>
    %cst_218 = arith.constant 1.000000e+00 : f32
    %455 = vector.broadcast %cst_218 : f32 to vector<8x32xf32>
    %456 = arith.addf %455, %454 : vector<8x32xf32>
    %457 = arith.divf %455, %456 : vector<8x32xf32>
    %458 = vector.extract_strided_slice %445 {offsets = [0, 32], sizes = [8, 32], strides = [1, 1]} : vector<8x96xf32> to vector<8x32xf32>
    %459 = vector.extract_strided_slice %449 {offsets = [0, 32], sizes = [8, 32], strides = [1, 1]} : vector<8x96xf32> to vector<8x32xf32>
    %460 = arith.addf %458, %459 : vector<8x32xf32>
    %461 = arith.negf %460 : vector<8x32xf32>
    %462 = math.exp %461 : vector<8x32xf32>
    %cst_219 = arith.constant 1.000000e+00 : f32
    %463 = vector.broadcast %cst_219 : f32 to vector<8x32xf32>
    %464 = arith.addf %463, %462 : vector<8x32xf32>
    %465 = arith.divf %463, %464 : vector<8x32xf32>
    %466 = vector.extract_strided_slice %445 {offsets = [0, 64], sizes = [8, 32], strides = [1, 1]} : vector<8x96xf32> to vector<8x32xf32>
    %467 = vector.extract_strided_slice %449 {offsets = [0, 64], sizes = [8, 32], strides = [1, 1]} : vector<8x96xf32> to vector<8x32xf32>
    %c0_220 = arith.constant 0 : index
    %c0_221 = arith.constant 0 : index
    %468 = vector.load %arg10[%c0_220, %c0_221] : memref<1x32xf32, #tpu.memory_space<vmem>>, vector<1x32xf32>
    %469 = vector.broadcast %468 : vector<1x32xf32> to vector<8x32xf32>
    %470 = arith.addf %467, %469 : vector<8x32xf32>
    %471 = arith.mulf %457, %470 : vector<8x32xf32>
    %472 = arith.addf %466, %471 : vector<8x32xf32>
    %473 = math.tanh %472 : vector<8x32xf32>
    %cst_222 = arith.constant 1.000000e+00 : f32
    %474 = vector.broadcast %cst_222 : f32 to vector<8x32xf32>
    %475 = arith.subf %474, %465 : vector<8x32xf32>
    %476 = arith.mulf %475, %473 : vector<8x32xf32>
    %477 = arith.mulf %465, %446 : vector<8x32xf32>
    %478 = arith.addf %476, %477 : vector<8x32xf32>
    %c5_223 = arith.constant 5 : index
    %c0_224 = arith.constant 0 : index
    %c0_225 = arith.constant 0 : index
    %479 = vector.load %arg34[%c5_223, %c0_224, %c0_225] : memref<6x8x32xf32, #tpu.memory_space<vmem>>, vector<1x8x32xf32>
    %480 = vector.shape_cast %479 : vector<1x8x32xf32> to vector<8x32xf32>
    %481 = vector.shape_cast %443 : vector<8x32xf32> to vector<1x8x32xf32>
    tpu.vector_store %arg34[%c5_223, %c0_224, %c0_225], %481 {strides = array<i32>} : memref<6x8x32xf32, #tpu.memory_space<vmem>>, vector<1x8x32xf32>,
    %c0_226 = arith.constant 0 : index
    %c0_227 = arith.constant 0 : index
    %c0_228 = arith.constant 0 : index
    %482 = vector.load %arg35[%c0_226, %c0_227, %c0_228] : memref<6x8x32xf32, #tpu.memory_space<vmem>>, vector<1x8x32xf32>
    %483 = vector.shape_cast %482 : vector<1x8x32xf32> to vector<8x32xf32>
    %484 = vector.shape_cast %478 : vector<8x32xf32> to vector<1x8x32xf32>
    tpu.vector_store %arg35[%c0_226, %c0_227, %c0_228], %484 {strides = array<i32>} : memref<6x8x32xf32, #tpu.memory_space<vmem>>, vector<1x8x32xf32>,
    %c0_229 = arith.constant 0 : index
    %c0_230 = arith.constant 0 : index
    %485 = vector.load %arg32[%c0_229, %c0_230] : memref<8x32xf32, #tpu.memory_space<vmem>>, vector<8x32xf32>
    tpu.vector_store %arg32[%c0_229, %c0_230], %443 {strides = array<i32>} : memref<8x32xf32, #tpu.memory_space<vmem>>, vector<8x32xf32>,
    %c0_231 = arith.constant 0 : index
    %c0_232 = arith.constant 0 : index
    %486 = vector.load %arg33[%c0_231, %c0_232] : memref<8x32xf32, #tpu.memory_space<vmem>>, vector<8x32xf32>
    tpu.vector_store %arg33[%c0_231, %c0_232], %478 {strides = array<i32>} : memref<8x32xf32, #tpu.memory_space<vmem>>, vector<8x32xf32>,
    %c0_233 = arith.constant 0 : index
    %c0_234 = arith.constant 0 : index
    %487 = vector.load %arg32[%c0_233, %c0_234] : memref<8x32xf32, #tpu.memory_space<vmem>>, vector<8x32xf32>
    %488 = arith.truncf %487 : vector<8x32xf32> to vector<8x32xbf16>
    %c0_235 = arith.constant 0 : index
    %c0_236 = arith.constant 0 : index
    %489 = vector.load %arg11[%c0_235, %c0_236] : memref<32x32xbf16, #tpu.memory_space<vmem>>, vector<32x32xbf16>
    %cst_237 = arith.constant dense<0.000000e+00> : vector<8x32xf32>
    %490 = tpu.matmul %488, %489, %cst_237 {dimension_numbers = #tpu.dot_dimension_numbers<[1], [0], [0], [1], [0, 0, 1, 1], [], []>} : vector<8x32xbf16>, vector<32x32xbf16>, vector<8x32xf32> -> vector<8x32xf32>
    %c0_238 = arith.constant 0 : index
    %c0_239 = arith.constant 0 : index
    %491 = vector.load %arg33[%c0_238, %c0_239] : memref<8x32xf32, #tpu.memory_space<vmem>>, vector<8x32xf32>
    %492 = arith.truncf %491 : vector<8x32xf32> to vector<8x32xbf16>
    %c0_240 = arith.constant 0 : index
    %c0_241 = arith.constant 0 : index
    %493 = vector.load %arg12[%c0_240, %c0_241] : memref<32x32xbf16, #tpu.memory_space<vmem>>, vector<32x32xbf16>
    %cst_242 = arith.constant dense<0.000000e+00> : vector<8x32xf32>
    %494 = tpu.matmul %492, %493, %cst_242 {dimension_numbers = #tpu.dot_dimension_numbers<[1], [0], [0], [1], [0, 0, 1, 1], [], []>} : vector<8x32xbf16>, vector<32x32xbf16>, vector<8x32xf32> -> vector<8x32xf32>
    %495 = arith.addf %490, %494 : vector<8x32xf32>
    %c0_243 = arith.constant 0 : index
    %c0_244 = arith.constant 0 : index
    %496 = vector.load %arg13[%c0_243, %c0_244] : memref<1x32xf32, #tpu.memory_space<vmem>>, vector<1x32xf32>
    %497 = vector.broadcast %496 : vector<1x32xf32> to vector<8x32xf32>
    %498 = arith.addf %495, %497 : vector<8x32xf32>
    %499 = math.tanh %498 : vector<8x32xf32>
    %c0_245 = arith.constant 0 : index
    %c0_246 = arith.constant 0 : index
    %500 = vector.load %arg39[%c0_245, %c0_246] : memref<8x32xf32, #tpu.memory_space<vmem>>, vector<8x32xf32>
    tpu.vector_store %arg39[%c0_245, %c0_246], %499 {strides = array<i32>} : memref<8x32xf32, #tpu.memory_space<vmem>>, vector<8x32xf32>,
    %c0_247 = arith.constant 0 : index
    %c0_248 = arith.constant 0 : index
    %c0_249 = arith.constant 0 : index
    %501 = vector.load %arg34[%c0_247, %c0_248, %c0_249] : memref<6x8x32xf32, #tpu.memory_space<vmem>>, vector<6x8x32xf32>
    %502 = vector.shape_cast %501 : vector<6x8x32xf32> to vector<48x32xf32>
    %503 = arith.truncf %502 : vector<48x32xf32> to vector<48x32xbf16>
    %c0_250 = arith.constant 0 : index
    %c0_251 = arith.constant 0 : index
    %c0_252 = arith.constant 0 : index
    %504 = vector.load %arg35[%c0_250, %c0_251, %c0_252] : memref<6x8x32xf32, #tpu.memory_space<vmem>>, vector<6x8x32xf32>
    %505 = vector.shape_cast %504 : vector<6x8x32xf32> to vector<48x32xf32>
    %506 = arith.truncf %505 : vector<48x32xf32> to vector<48x32xbf16>
    %c0_253 = arith.constant 0 : index
    %c0_254 = arith.constant 0 : index
    %507 = vector.load %arg16[%c0_253, %c0_254] : memref<32x32xbf16, #tpu.memory_space<vmem>>, vector<32x32xbf16>
    %cst_255 = arith.constant dense<0.000000e+00> : vector<48x32xf32>
    %508 = tpu.matmul %503, %507, %cst_255 {dimension_numbers = #tpu.dot_dimension_numbers<[1], [0], [0], [1], [0, 0, 1, 1], [], []>} : vector<48x32xbf16>, vector<32x32xbf16>, vector<48x32xf32> -> vector<48x32xf32>
    %c0_256 = arith.constant 0 : index
    %c0_257 = arith.constant 0 : index
    %509 = vector.load %arg17[%c0_256, %c0_257] : memref<32x32xbf16, #tpu.memory_space<vmem>>, vector<32x32xbf16>
    %cst_258 = arith.constant dense<0.000000e+00> : vector<48x32xf32>
    %510 = tpu.matmul %506, %509, %cst_258 {dimension_numbers = #tpu.dot_dimension_numbers<[1], [0], [0], [1], [0, 0, 1, 1], [], []>} : vector<48x32xbf16>, vector<32x32xbf16>, vector<48x32xf32> -> vector<48x32xf32>
    %511 = arith.addf %508, %510 : vector<48x32xf32>
    %c0_259 = arith.constant 0 : index
    %c0_260 = arith.constant 0 : index
    %512 = vector.load %arg18[%c0_259, %c0_260] : memref<1x32xf32, #tpu.memory_space<vmem>>, vector<1x32xf32>
    %513 = vector.broadcast %512 : vector<1x32xf32> to vector<48x32xf32>
    %514 = arith.addf %511, %513 : vector<48x32xf32>
    %515 = vector.shape_cast %514 : vector<48x32xf32> to vector<6x8x32xf32>
    %c0_261 = arith.constant 0 : index
    %c0_262 = arith.constant 0 : index
    %c0_263 = arith.constant 0 : index
    %516 = vector.load %arg38[%c0_261, %c0_262, %c0_263] : memref<6x8x32xf32, #tpu.memory_space<vmem>>, vector<6x8x32xf32>
    tpu.vector_store %arg38[%c0_261, %c0_262, %c0_263], %515 {strides = array<i32>} : memref<6x8x32xf32, #tpu.memory_space<vmem>>, vector<6x8x32xf32>,
    %c0_264 = arith.constant 0 : index
    %c0_265 = arith.constant 0 : index
    %517 = vector.load %arg19[%c0_264, %c0_265] : memref<1x32xf32, #tpu.memory_space<vmem>>, vector<1x32xf32>
    %518 = vector.shape_cast %517 : vector<1x32xf32> to vector<1x1x32xf32>
    %519 = tpu.iota {dimensions = array<i32: 1>} : vector<8x128xi32>
    %cst_266 = arith.constant 0.000000e+00 : f32
    %520 = vector.broadcast %cst_266 : f32 to vector<8x128xf32>
    %c0_267 = arith.constant 0 : index
    %c0_268 = arith.constant 0 : index
    %c0_269 = arith.constant 0 : index
    %521 = vector.load %arg41[%c0_267, %c0_268, %c0_269] : memref<2x8x128xf32, #tpu.memory_space<vmem>>, vector<1x8x128xf32>
    %522 = vector.shape_cast %521 : vector<1x8x128xf32> to vector<8x128xf32>
    %523 = vector.shape_cast %520 : vector<8x128xf32> to vector<1x8x128xf32>
    tpu.vector_store %arg41[%c0_267, %c0_268, %c0_269], %523 {strides = array<i32>} : memref<2x8x128xf32, #tpu.memory_space<vmem>>, vector<1x8x128xf32>,
    %c0_i32 = arith.constant 0 : i32
    %c0_i32_270 = arith.constant 0 : i32
    %c0_i32_271 = arith.constant 0 : i32
    %c0_i32_272 = arith.constant 0 : i32
    %c0_i32_273 = arith.constant 0 : i32
    %524 = tpu.memref_slice %arg41[%c0_i32, %c0_i32_272, %c0_i32_273] : memref<2x8x128xf32, #tpu.memory_space<vmem>> -> memref<1x8x128xf32, #tpu.memory_space<vmem>>
    %525 = tpu.memref_squeeze %524 : memref<1x8x128xf32, #tpu.memory_space<vmem>> -> memref<8x128xf32, #tpu.memory_space<vmem>>
    %c0_i32_274 = arith.constant 0 : i32
    %c0_i32_275 = arith.constant 0 : i32
    %526 = tpu.memref_slice %arg31[%c0_i32_270, %c0_i32_274, %c0_i32_275] : memref<5x8x128xf32, #tpu.memory_space<any>> -> memref<1x8x128xf32, #tpu.memory_space<any>>
    %527 = tpu.memref_squeeze %526 : memref<1x8x128xf32, #tpu.memory_space<any>> -> memref<8x128xf32, #tpu.memory_space<any>>
    %528 = tpu.memref_slice %arg42[%c0_i32_271] : memref<2x!tpu.dma_semaphore, #tpu.memory_space<semaphore_mem>> -> memref<1x!tpu.dma_semaphore, #tpu.memory_space<semaphore_mem>>
    %529 = tpu.memref_squeeze %528 : memref<1x!tpu.dma_semaphore, #tpu.memory_space<semaphore_mem>> -> memref<!tpu.dma_semaphore, #tpu.memory_space<semaphore_mem>>
    tpu.enqueue_dma source(%525 : memref<8x128xf32, #tpu.memory_space<vmem>>) target(%527 : memref<8x128xf32, #tpu.memory_space<any>>) target_semaphore(%529 : memref<!tpu.dma_semaphore, #tpu.memory_space<semaphore_mem>>)
    %c0_276 = arith.constant 0 : index
    %c0_277 = arith.constant 0 : index
    %c0_278 = arith.constant 0 : index
    %530 = vector.load %arg1[%c0_276, %c0_277, %c0_278] : memref<5x8x1xi32, #tpu.memory_space<vmem>>, vector<1x8x1xi32>
    %531 = vector.shape_cast %530 : vector<1x8x1xi32> to vector<8x1xi32>
    %532 = vector.broadcast %531 : vector<8x1xi32> to vector<8x128xi32>
    %533 = arith.cmpi eq, %519, %532 : vector<8x128xi32>
    %534 = arith.extui %533 : vector<8x128xi1> to vector<8x128xi32>
    %535 = arith.sitofp %534 : vector<8x128xi32> to vector<8x128xf32>
    %c0_279 = arith.constant 0 : index
    %c0_280 = arith.constant 0 : index
    %536 = vector.load %arg40[%c0_279, %c0_280] : memref<8x128xf32, #tpu.memory_space<vmem>>, vector<8x128xf32>
    tpu.vector_store %arg40[%c0_279, %c0_280], %535 {strides = array<i32>} : memref<8x128xf32, #tpu.memory_space<vmem>>, vector<8x128xf32>,
    %c0_281 = arith.constant 0 : index
    %c0_282 = arith.constant 0 : index
    %537 = vector.load %arg39[%c0_281, %c0_282] : memref<8x32xf32, #tpu.memory_space<vmem>>, vector<8x32xf32>
    %c0_283 = arith.constant 0 : index
    %c0_284 = arith.constant 0 : index
    %538 = vector.load %arg40[%c0_283, %c0_284] : memref<8x128xf32, #tpu.memory_space<vmem>>, vector<8x128xf32>
    %539 = arith.truncf %538 : vector<8x128xf32> to vector<8x128xbf16>
    %c0_285 = arith.constant 0 : index
    %c0_286 = arith.constant 0 : index
    %540 = vector.load %arg14[%c0_285, %c0_286] : memref<128x32xbf16, #tpu.memory_space<vmem>>, vector<128x32xbf16>
    %cst_287 = arith.constant dense<0.000000e+00> : vector<8x32xf32>
    %541 = tpu.matmul %539, %540, %cst_287 {dimension_numbers = #tpu.dot_dimension_numbers<[1], [0], [0], [1], [0, 0, 1, 1], [], []>} : vector<8x128xbf16>, vector<128x32xbf16>, vector<8x32xf32> -> vector<8x32xf32>
    %542 = arith.truncf %537 : vector<8x32xf32> to vector<8x32xbf16>
    %c0_288 = arith.constant 0 : index
    %c0_289 = arith.constant 0 : index
    %543 = vector.load %arg15[%c0_288, %c0_289] : memref<32x32xbf16, #tpu.memory_space<vmem>>, vector<32x32xbf16>
    %cst_290 = arith.constant dense<0.000000e+00> : vector<8x32xf32>
    %544 = tpu.matmul %542, %543, %cst_290 {dimension_numbers = #tpu.dot_dimension_numbers<[1], [0], [0], [1], [0, 0, 1, 1], [], []>} : vector<8x32xbf16>, vector<32x32xbf16>, vector<8x32xf32> -> vector<8x32xf32>
    %545 = vector.shape_cast %544 : vector<8x32xf32> to vector<1x8x32xf32>
    %c0_291 = arith.constant 0 : index
    %c0_292 = arith.constant 0 : index
    %c0_293 = arith.constant 0 : index
    %546 = vector.load %arg38[%c0_291, %c0_292, %c0_293] : memref<6x8x32xf32, #tpu.memory_space<vmem>>, vector<6x8x32xf32>
    %547 = vector.broadcast %545 : vector<1x8x32xf32> to vector<6x8x32xf32>
    %548 = arith.addf %547, %546 : vector<6x8x32xf32>
    %549 = math.tanh %548 : vector<6x8x32xf32>
    %550 = vector.broadcast %518 : vector<1x1x32xf32> to vector<6x8x32xf32>
    %551 = arith.mulf %549, %550 : vector<6x8x32xf32>
    %cst_294 = arith.constant dense<0.000000e+00> : vector<6x8xf32>
    %552 = vector.multi_reduction <add>, %551, %cst_294 [2] : vector<6x8x32xf32> to vector<6x8xf32>
    %553 = vector.shape_cast %552 : vector<6x8xf32> to vector<6x8x1xf32>
    %cst_295 = arith.constant dense<0xFF800000> : vector<8x1xf32>
    %554 = vector.multi_reduction <maximumf>, %553, %cst_295 [0] : vector<6x8x1xf32> to vector<8x1xf32>
    %555 = vector.shape_cast %554 : vector<8x1xf32> to vector<1x8x1xf32>
    %556 = vector.broadcast %555 : vector<1x8x1xf32> to vector<6x8x1xf32>
    %557 = arith.subf %553, %556 : vector<6x8x1xf32>
    %558 = math.exp %557 : vector<6x8x1xf32>
    %cst_296 = arith.constant dense<0.000000e+00> : vector<8x1xf32>
    %559 = vector.multi_reduction <add>, %558, %cst_296 [0] : vector<6x8x1xf32> to vector<8x1xf32>
    %560 = vector.shape_cast %559 : vector<8x1xf32> to vector<1x8x1xf32>
    %561 = vector.broadcast %560 : vector<1x8x1xf32> to vector<6x8x1xf32>
    %562 = arith.divf %558, %561 : vector<6x8x1xf32>
    %c0_297 = arith.constant 0 : index
    %c0_298 = arith.constant 0 : index
    %c0_299 = arith.constant 0 : index
    %563 = vector.load %arg34[%c0_297, %c0_298, %c0_299] : memref<6x8x32xf32, #tpu.memory_space<vmem>>, vector<6x8x32xf32>
    %564 = vector.broadcast %562 : vector<6x8x1xf32> to vector<6x8x32xf32>
    %565 = arith.mulf %564, %563 : vector<6x8x32xf32>
    %cst_300 = arith.constant dense<0.000000e+00> : vector<8x32xf32>
    %566 = vector.multi_reduction <add>, %565, %cst_300 [0] : vector<6x8x32xf32> to vector<8x32xf32>
    %c0_301 = arith.constant 0 : index
    %c0_302 = arith.constant 0 : index
    %c0_303 = arith.constant 0 : index
    %567 = vector.load %arg35[%c0_301, %c0_302, %c0_303] : memref<6x8x32xf32, #tpu.memory_space<vmem>>, vector<6x8x32xf32>
    %568 = vector.broadcast %562 : vector<6x8x1xf32> to vector<6x8x32xf32>
    %569 = arith.mulf %568, %567 : vector<6x8x32xf32>
    %cst_304 = arith.constant dense<0.000000e+00> : vector<8x32xf32>
    %570 = vector.multi_reduction <add>, %569, %cst_304 [0] : vector<6x8x32xf32> to vector<8x32xf32>
    %571 = arith.truncf %541 : vector<8x32xf32> to vector<8x32xbf16>
    %c0_305 = arith.constant 0 : index
    %c0_306 = arith.constant 0 : index
    %572 = vector.load %arg20[%c0_305, %c0_306] : memref<32x96xbf16, #tpu.memory_space<vmem>>, vector<32x96xbf16>
    %cst_307 = arith.constant dense<0.000000e+00> : vector<8x96xf32>
    %573 = tpu.matmul %571, %572, %cst_307 {dimension_numbers = #tpu.dot_dimension_numbers<[1], [0], [0], [1], [0, 0, 1, 1], [], []>} : vector<8x32xbf16>, vector<32x96xbf16>, vector<8x96xf32> -> vector<8x96xf32>
    %574 = arith.truncf %566 : vector<8x32xf32> to vector<8x32xbf16>
    %c0_308 = arith.constant 0 : index
    %c0_309 = arith.constant 0 : index
    %575 = vector.load %arg21[%c0_308, %c0_309] : memref<32x96xbf16, #tpu.memory_space<vmem>>, vector<32x96xbf16>
    %cst_310 = arith.constant dense<0.000000e+00> : vector<8x96xf32>
    %576 = tpu.matmul %574, %575, %cst_310 {dimension_numbers = #tpu.dot_dimension_numbers<[1], [0], [0], [1], [0, 0, 1, 1], [], []>} : vector<8x32xbf16>, vector<32x96xbf16>, vector<8x96xf32> -> vector<8x96xf32>
    %577 = arith.addf %573, %576 : vector<8x96xf32>
    %578 = arith.truncf %570 : vector<8x32xf32> to vector<8x32xbf16>
    %c0_311 = arith.constant 0 : index
    %c0_312 = arith.constant 0 : index
    %579 = vector.load %arg22[%c0_311, %c0_312] : memref<32x96xbf16, #tpu.memory_space<vmem>>, vector<32x96xbf16>
    %cst_313 = arith.constant dense<0.000000e+00> : vector<8x96xf32>
    %580 = tpu.matmul %578, %579, %cst_313 {dimension_numbers = #tpu.dot_dimension_numbers<[1], [0], [0], [1], [0, 0, 1, 1], [], []>} : vector<8x32xbf16>, vector<32x96xbf16>, vector<8x96xf32> -> vector<8x96xf32>
    %581 = arith.addf %577, %580 : vector<8x96xf32>
    %c0_314 = arith.constant 0 : index
    %c0_315 = arith.constant 0 : index
    %582 = vector.load %arg24[%c0_314, %c0_315] : memref<1x96xf32, #tpu.memory_space<vmem>>, vector<1x96xf32>
    %583 = vector.broadcast %582 : vector<1x96xf32> to vector<8x96xf32>
    %584 = arith.addf %581, %583 : vector<8x96xf32>
    %585 = arith.truncf %537 : vector<8x32xf32> to vector<8x32xbf16>
    %c0_316 = arith.constant 0 : index
    %c0_317 = arith.constant 0 : index
    %586 = vector.load %arg23[%c0_316, %c0_317] : memref<32x96xbf16, #tpu.memory_space<vmem>>, vector<32x96xbf16>
    %cst_318 = arith.constant dense<0.000000e+00> : vector<8x96xf32>
    %587 = tpu.matmul %585, %586, %cst_318 {dimension_numbers = #tpu.dot_dimension_numbers<[1], [0], [0], [1], [0, 0, 1, 1], [], []>} : vector<8x32xbf16>, vector<32x96xbf16>, vector<8x96xf32> -> vector<8x96xf32>
    %588 = vector.extract_strided_slice %584 {offsets = [0, 0], sizes = [8, 32], strides = [1, 1]} : vector<8x96xf32> to vector<8x32xf32>
    %589 = vector.extract_strided_slice %587 {offsets = [0, 0], sizes = [8, 32], strides = [1, 1]} : vector<8x96xf32> to vector<8x32xf32>
    %590 = arith.addf %588, %589 : vector<8x32xf32>
    %591 = arith.negf %590 : vector<8x32xf32>
    %592 = math.exp %591 : vector<8x32xf32>
    %cst_319 = arith.constant 1.000000e+00 : f32
    %593 = vector.broadcast %cst_319 : f32 to vector<8x32xf32>
    %594 = arith.addf %593, %592 : vector<8x32xf32>
    %595 = arith.divf %593, %594 : vector<8x32xf32>
    %596 = vector.extract_strided_slice %584 {offsets = [0, 32], sizes = [8, 32], strides = [1, 1]} : vector<8x96xf32> to vector<8x32xf32>
    %597 = vector.extract_strided_slice %587 {offsets = [0, 32], sizes = [8, 32], strides = [1, 1]} : vector<8x96xf32> to vector<8x32xf32>
    %598 = arith.addf %596, %597 : vector<8x32xf32>
    %599 = arith.negf %598 : vector<8x32xf32>
    %600 = math.exp %599 : vector<8x32xf32>
    %cst_320 = arith.constant 1.000000e+00 : f32
    %601 = vector.broadcast %cst_320 : f32 to vector<8x32xf32>
    %602 = arith.addf %601, %600 : vector<8x32xf32>
    %603 = arith.divf %601, %602 : vector<8x32xf32>
    %604 = vector.extract_strided_slice %584 {offsets = [0, 64], sizes = [8, 32], strides = [1, 1]} : vector<8x96xf32> to vector<8x32xf32>
    %605 = vector.extract_strided_slice %587 {offsets = [0, 64], sizes = [8, 32], strides = [1, 1]} : vector<8x96xf32> to vector<8x32xf32>
    %c0_321 = arith.constant 0 : index
    %c0_322 = arith.constant 0 : index
    %606 = vector.load %arg25[%c0_321, %c0_322] : memref<1x32xf32, #tpu.memory_space<vmem>>, vector<1x32xf32>
    %607 = vector.broadcast %606 : vector<1x32xf32> to vector<8x32xf32>
    %608 = arith.addf %605, %607 : vector<8x32xf32>
    %609 = arith.mulf %595, %608 : vector<8x32xf32>
    %610 = arith.addf %604, %609 : vector<8x32xf32>
    %611 = math.tanh %610 : vector<8x32xf32>
    %cst_323 = arith.constant 1.000000e+00 : f32
    %612 = vector.broadcast %cst_323 : f32 to vector<8x32xf32>
    %613 = arith.subf %612, %603 : vector<8x32xf32>
    %614 = arith.mulf %613, %611 : vector<8x32xf32>
    %615 = arith.mulf %603, %537 : vector<8x32xf32>
    %616 = arith.addf %614, %615 : vector<8x32xf32>
    %617 = arith.truncf %616 : vector<8x32xf32> to vector<8x32xbf16>
    %c0_324 = arith.constant 0 : index
    %c0_325 = arith.constant 0 : index
    %618 = vector.load %arg26[%c0_324, %c0_325] : memref<32x128xbf16, #tpu.memory_space<vmem>>, vector<32x128xbf16>
    %cst_326 = arith.constant dense<0.000000e+00> : vector<8x128xf32>
    %619 = tpu.matmul %617, %618, %cst_326 {dimension_numbers = #tpu.dot_dimension_numbers<[1], [0], [0], [1], [0, 0, 1, 1], [], []>} : vector<8x32xbf16>, vector<32x128xbf16>, vector<8x128xf32> -> vector<8x128xf32>
    %620 = arith.truncf %566 : vector<8x32xf32> to vector<8x32xbf16>
    %c0_327 = arith.constant 0 : index
    %c0_328 = arith.constant 0 : index
    %621 = vector.load %arg27[%c0_327, %c0_328] : memref<32x128xbf16, #tpu.memory_space<vmem>>, vector<32x128xbf16>
    %cst_329 = arith.constant dense<0.000000e+00> : vector<8x128xf32>
    %622 = tpu.matmul %620, %621, %cst_329 {dimension_numbers = #tpu.dot_dimension_numbers<[1], [0], [0], [1], [0, 0, 1, 1], [], []>} : vector<8x32xbf16>, vector<32x128xbf16>, vector<8x128xf32> -> vector<8x128xf32>
    %623 = arith.addf %619, %622 : vector<8x128xf32>
    %624 = arith.truncf %570 : vector<8x32xf32> to vector<8x32xbf16>
    %c0_330 = arith.constant 0 : index
    %c0_331 = arith.constant 0 : index
    %625 = vector.load %arg28[%c0_330, %c0_331] : memref<32x128xbf16, #tpu.memory_space<vmem>>, vector<32x128xbf16>
    %cst_332 = arith.constant dense<0.000000e+00> : vector<8x128xf32>
    %626 = tpu.matmul %624, %625, %cst_332 {dimension_numbers = #tpu.dot_dimension_numbers<[1], [0], [0], [1], [0, 0, 1, 1], [], []>} : vector<8x32xbf16>, vector<32x128xbf16>, vector<8x128xf32> -> vector<8x128xf32>
    %627 = arith.addf %623, %626 : vector<8x128xf32>
    %628 = arith.truncf %541 : vector<8x32xf32> to vector<8x32xbf16>
    %c0_333 = arith.constant 0 : index
    %c0_334 = arith.constant 0 : index
    %629 = vector.load %arg29[%c0_333, %c0_334] : memref<32x128xbf16, #tpu.memory_space<vmem>>, vector<32x128xbf16>
    %cst_335 = arith.constant dense<0.000000e+00> : vector<8x128xf32>
    %630 = tpu.matmul %628, %629, %cst_335 {dimension_numbers = #tpu.dot_dimension_numbers<[1], [0], [0], [1], [0, 0, 1, 1], [], []>} : vector<8x32xbf16>, vector<32x128xbf16>, vector<8x128xf32> -> vector<8x128xf32>
    %631 = arith.addf %627, %630 : vector<8x128xf32>
    %c0_336 = arith.constant 0 : index
    %c0_337 = arith.constant 0 : index
    %632 = vector.load %arg30[%c0_336, %c0_337] : memref<1x128xf32, #tpu.memory_space<vmem>>, vector<1x128xf32>
    %633 = vector.broadcast %632 : vector<1x128xf32> to vector<8x128xf32>
    %634 = arith.addf %631, %633 : vector<8x128xf32>
    %c1_338 = arith.constant 1 : index
    %c0_339 = arith.constant 0 : index
    %c0_340 = arith.constant 0 : index
    %635 = vector.load %arg41[%c1_338, %c0_339, %c0_340] : memref<2x8x128xf32, #tpu.memory_space<vmem>>, vector<1x8x128xf32>
    %636 = vector.shape_cast %635 : vector<1x8x128xf32> to vector<8x128xf32>
    %637 = vector.shape_cast %634 : vector<8x128xf32> to vector<1x8x128xf32>
    tpu.vector_store %arg41[%c1_338, %c0_339, %c0_340], %637 {strides = array<i32>} : memref<2x8x128xf32, #tpu.memory_space<vmem>>, vector<1x8x128xf32>,
    %c1_i32 = arith.constant 1 : i32
    %c1_i32_341 = arith.constant 1 : i32
    %c1_i32_342 = arith.constant 1 : i32
    %c0_i32_343 = arith.constant 0 : i32
    %c0_i32_344 = arith.constant 0 : i32
    %638 = tpu.memref_slice %arg41[%c1_i32, %c0_i32_343, %c0_i32_344] : memref<2x8x128xf32, #tpu.memory_space<vmem>> -> memref<1x8x128xf32, #tpu.memory_space<vmem>>
    %639 = tpu.memref_squeeze %638 : memref<1x8x128xf32, #tpu.memory_space<vmem>> -> memref<8x128xf32, #tpu.memory_space<vmem>>
    %c0_i32_345 = arith.constant 0 : i32
    %c0_i32_346 = arith.constant 0 : i32
    %640 = tpu.memref_slice %arg31[%c1_i32_341, %c0_i32_345, %c0_i32_346] : memref<5x8x128xf32, #tpu.memory_space<any>> -> memref<1x8x128xf32, #tpu.memory_space<any>>
    %641 = tpu.memref_squeeze %640 : memref<1x8x128xf32, #tpu.memory_space<any>> -> memref<8x128xf32, #tpu.memory_space<any>>
    %642 = tpu.memref_slice %arg42[%c1_i32_342] : memref<2x!tpu.dma_semaphore, #tpu.memory_space<semaphore_mem>> -> memref<1x!tpu.dma_semaphore, #tpu.memory_space<semaphore_mem>>
    %643 = tpu.memref_squeeze %642 : memref<1x!tpu.dma_semaphore, #tpu.memory_space<semaphore_mem>> -> memref<!tpu.dma_semaphore, #tpu.memory_space<semaphore_mem>>
    tpu.enqueue_dma source(%639 : memref<8x128xf32, #tpu.memory_space<vmem>>) target(%641 : memref<8x128xf32, #tpu.memory_space<any>>) target_semaphore(%643 : memref<!tpu.dma_semaphore, #tpu.memory_space<semaphore_mem>>)
    %c1_347 = arith.constant 1 : index
    %644 = memref.load %arg0[%c1_347] : memref<5xi32, #tpu.memory_space<smem>>
    %c0_i32_348 = arith.constant 0 : i32
    %645 = arith.cmpi ne, %644, %c0_i32_348 : i32
    %646 = arith.extui %645 : i1 to i32
    %c0_i32_349 = arith.constant 0 : i32
    %647 = arith.cmpi ne, %646, %c0_i32_349 : i32
    scf.if %647 {
      %c1_612 = arith.constant 1 : index
      %c0_613 = arith.constant 0 : index
      %c0_614 = arith.constant 0 : index
      %1031 = vector.load %arg1[%c1_612, %c0_613, %c0_614] : memref<5x8x1xi32, #tpu.memory_space<vmem>>, vector<1x8x1xi32>
      %1032 = vector.shape_cast %1031 : vector<1x8x1xi32> to vector<8x1xi32>
      %1033 = vector.broadcast %1032 : vector<8x1xi32> to vector<8x128xi32>
      %1034 = arith.cmpi eq, %519, %1033 : vector<8x128xi32>
      %1035 = arith.extui %1034 : vector<8x128xi1> to vector<8x128xi32>
      %1036 = arith.sitofp %1035 : vector<8x128xi32> to vector<8x128xf32>
      %c0_615 = arith.constant 0 : index
      %c0_616 = arith.constant 0 : index
      %1037 = vector.load %arg40[%c0_615, %c0_616] : memref<8x128xf32, #tpu.memory_space<vmem>>, vector<8x128xf32>
      tpu.vector_store %arg40[%c0_615, %c0_616], %1036 {strides = array<i32>} : memref<8x128xf32, #tpu.memory_space<vmem>>, vector<8x128xf32>,
    } else {
    }
    %c1_350 = arith.constant 1 : index
    %648 = memref.load %arg0[%c1_350] : memref<5xi32, #tpu.memory_space<smem>>
    %c0_i32_351 = arith.constant 0 : i32
    %649 = arith.cmpi eq, %648, %c0_i32_351 : i32
    %650 = arith.extui %649 : i1 to i32
    %c0_i32_352 = arith.constant 0 : i32
    %651 = arith.cmpi ne, %650, %c0_i32_352 : i32
    scf.if %651 {
      %cst_612 = arith.constant dense<0xFF800000> : vector<8xf32>
      %1031 = vector.multi_reduction <maximumf>, %634, %cst_612 [1] : vector<8x128xf32> to vector<8xf32>
      %1032 = vector.shape_cast %1031 : vector<8xf32> to vector<8x1xf32>
      %1033 = vector.broadcast %1032 : vector<8x1xf32> to vector<8x128xf32>
      %1034 = arith.cmpf oeq, %634, %1033 : vector<8x128xf32>
      %c128_i32 = arith.constant 128 : i32
      %1035 = vector.broadcast %c128_i32 : i32 to vector<8x128xi32>
      %1036 = arith.select %1034, %519, %1035 : vector<8x128xi1>, vector<8x128xi32>
      %cst_613 = arith.constant dense<2147483647> : vector<8xi32>
      %1037 = vector.multi_reduction <minsi>, %1036, %cst_613 [1] : vector<8x128xi32> to vector<8xi32>
      %1038 = vector.shape_cast %1037 : vector<8xi32> to vector<8x1xi32>
      %1039 = vector.broadcast %1038 : vector<8x1xi32> to vector<8x128xi32>
      %1040 = arith.cmpi eq, %519, %1039 : vector<8x128xi32>
      %1041 = arith.extui %1040 : vector<8x128xi1> to vector<8x128xi32>
      %1042 = arith.sitofp %1041 : vector<8x128xi32> to vector<8x128xf32>
      %c0_614 = arith.constant 0 : index
      %c0_615 = arith.constant 0 : index
      %1043 = vector.load %arg40[%c0_614, %c0_615] : memref<8x128xf32, #tpu.memory_space<vmem>>, vector<8x128xf32>
      tpu.vector_store %arg40[%c0_614, %c0_615], %1042 {strides = array<i32>} : memref<8x128xf32, #tpu.memory_space<vmem>>, vector<8x128xf32>,
    } else {
    }
    %c0_353 = arith.constant 0 : index
    %c0_354 = arith.constant 0 : index
    %652 = vector.load %arg39[%c0_353, %c0_354] : memref<8x32xf32, #tpu.memory_space<vmem>>, vector<8x32xf32>
    tpu.vector_store %arg39[%c0_353, %c0_354], %616 {strides = array<i32>} : memref<8x32xf32, #tpu.memory_space<vmem>>, vector<8x32xf32>,
    %c0_355 = arith.constant 0 : index
    %c0_356 = arith.constant 0 : index
    %653 = vector.load %arg39[%c0_355, %c0_356] : memref<8x32xf32, #tpu.memory_space<vmem>>, vector<8x32xf32>
    %c0_357 = arith.constant 0 : index
    %c0_358 = arith.constant 0 : index
    %654 = vector.load %arg40[%c0_357, %c0_358] : memref<8x128xf32, #tpu.memory_space<vmem>>, vector<8x128xf32>
    %655 = arith.truncf %654 : vector<8x128xf32> to vector<8x128xbf16>
    %c0_359 = arith.constant 0 : index
    %c0_360 = arith.constant 0 : index
    %656 = vector.load %arg14[%c0_359, %c0_360] : memref<128x32xbf16, #tpu.memory_space<vmem>>, vector<128x32xbf16>
    %cst_361 = arith.constant dense<0.000000e+00> : vector<8x32xf32>
    %657 = tpu.matmul %655, %656, %cst_361 {dimension_numbers = #tpu.dot_dimension_numbers<[1], [0], [0], [1], [0, 0, 1, 1], [], []>} : vector<8x128xbf16>, vector<128x32xbf16>, vector<8x32xf32> -> vector<8x32xf32>
    %658 = arith.truncf %653 : vector<8x32xf32> to vector<8x32xbf16>
    %c0_362 = arith.constant 0 : index
    %c0_363 = arith.constant 0 : index
    %659 = vector.load %arg15[%c0_362, %c0_363] : memref<32x32xbf16, #tpu.memory_space<vmem>>, vector<32x32xbf16>
    %cst_364 = arith.constant dense<0.000000e+00> : vector<8x32xf32>
    %660 = tpu.matmul %658, %659, %cst_364 {dimension_numbers = #tpu.dot_dimension_numbers<[1], [0], [0], [1], [0, 0, 1, 1], [], []>} : vector<8x32xbf16>, vector<32x32xbf16>, vector<8x32xf32> -> vector<8x32xf32>
    %661 = vector.shape_cast %660 : vector<8x32xf32> to vector<1x8x32xf32>
    %c0_365 = arith.constant 0 : index
    %c0_366 = arith.constant 0 : index
    %c0_367 = arith.constant 0 : index
    %662 = vector.load %arg38[%c0_365, %c0_366, %c0_367] : memref<6x8x32xf32, #tpu.memory_space<vmem>>, vector<6x8x32xf32>
    %663 = vector.broadcast %661 : vector<1x8x32xf32> to vector<6x8x32xf32>
    %664 = arith.addf %663, %662 : vector<6x8x32xf32>
    %665 = math.tanh %664 : vector<6x8x32xf32>
    %666 = vector.broadcast %518 : vector<1x1x32xf32> to vector<6x8x32xf32>
    %667 = arith.mulf %665, %666 : vector<6x8x32xf32>
    %cst_368 = arith.constant dense<0.000000e+00> : vector<6x8xf32>
    %668 = vector.multi_reduction <add>, %667, %cst_368 [2] : vector<6x8x32xf32> to vector<6x8xf32>
    %669 = vector.shape_cast %668 : vector<6x8xf32> to vector<6x8x1xf32>
    %cst_369 = arith.constant dense<0xFF800000> : vector<8x1xf32>
    %670 = vector.multi_reduction <maximumf>, %669, %cst_369 [0] : vector<6x8x1xf32> to vector<8x1xf32>
    %671 = vector.shape_cast %670 : vector<8x1xf32> to vector<1x8x1xf32>
    %672 = vector.broadcast %671 : vector<1x8x1xf32> to vector<6x8x1xf32>
    %673 = arith.subf %669, %672 : vector<6x8x1xf32>
    %674 = math.exp %673 : vector<6x8x1xf32>
    %cst_370 = arith.constant dense<0.000000e+00> : vector<8x1xf32>
    %675 = vector.multi_reduction <add>, %674, %cst_370 [0] : vector<6x8x1xf32> to vector<8x1xf32>
    %676 = vector.shape_cast %675 : vector<8x1xf32> to vector<1x8x1xf32>
    %677 = vector.broadcast %676 : vector<1x8x1xf32> to vector<6x8x1xf32>
    %678 = arith.divf %674, %677 : vector<6x8x1xf32>
    %c0_371 = arith.constant 0 : index
    %c0_372 = arith.constant 0 : index
    %c0_373 = arith.constant 0 : index
    %679 = vector.load %arg34[%c0_371, %c0_372, %c0_373] : memref<6x8x32xf32, #tpu.memory_space<vmem>>, vector<6x8x32xf32>
    %680 = vector.broadcast %678 : vector<6x8x1xf32> to vector<6x8x32xf32>
    %681 = arith.mulf %680, %679 : vector<6x8x32xf32>
    %cst_374 = arith.constant dense<0.000000e+00> : vector<8x32xf32>
    %682 = vector.multi_reduction <add>, %681, %cst_374 [0] : vector<6x8x32xf32> to vector<8x32xf32>
    %c0_375 = arith.constant 0 : index
    %c0_376 = arith.constant 0 : index
    %c0_377 = arith.constant 0 : index
    %683 = vector.load %arg35[%c0_375, %c0_376, %c0_377] : memref<6x8x32xf32, #tpu.memory_space<vmem>>, vector<6x8x32xf32>
    %684 = vector.broadcast %678 : vector<6x8x1xf32> to vector<6x8x32xf32>
    %685 = arith.mulf %684, %683 : vector<6x8x32xf32>
    %cst_378 = arith.constant dense<0.000000e+00> : vector<8x32xf32>
    %686 = vector.multi_reduction <add>, %685, %cst_378 [0] : vector<6x8x32xf32> to vector<8x32xf32>
    %687 = arith.truncf %657 : vector<8x32xf32> to vector<8x32xbf16>
    %c0_379 = arith.constant 0 : index
    %c0_380 = arith.constant 0 : index
    %688 = vector.load %arg20[%c0_379, %c0_380] : memref<32x96xbf16, #tpu.memory_space<vmem>>, vector<32x96xbf16>
    %cst_381 = arith.constant dense<0.000000e+00> : vector<8x96xf32>
    %689 = tpu.matmul %687, %688, %cst_381 {dimension_numbers = #tpu.dot_dimension_numbers<[1], [0], [0], [1], [0, 0, 1, 1], [], []>} : vector<8x32xbf16>, vector<32x96xbf16>, vector<8x96xf32> -> vector<8x96xf32>
    %690 = arith.truncf %682 : vector<8x32xf32> to vector<8x32xbf16>
    %c0_382 = arith.constant 0 : index
    %c0_383 = arith.constant 0 : index
    %691 = vector.load %arg21[%c0_382, %c0_383] : memref<32x96xbf16, #tpu.memory_space<vmem>>, vector<32x96xbf16>
    %cst_384 = arith.constant dense<0.000000e+00> : vector<8x96xf32>
    %692 = tpu.matmul %690, %691, %cst_384 {dimension_numbers = #tpu.dot_dimension_numbers<[1], [0], [0], [1], [0, 0, 1, 1], [], []>} : vector<8x32xbf16>, vector<32x96xbf16>, vector<8x96xf32> -> vector<8x96xf32>
    %693 = arith.addf %689, %692 : vector<8x96xf32>
    %694 = arith.truncf %686 : vector<8x32xf32> to vector<8x32xbf16>
    %c0_385 = arith.constant 0 : index
    %c0_386 = arith.constant 0 : index
    %695 = vector.load %arg22[%c0_385, %c0_386] : memref<32x96xbf16, #tpu.memory_space<vmem>>, vector<32x96xbf16>
    %cst_387 = arith.constant dense<0.000000e+00> : vector<8x96xf32>
    %696 = tpu.matmul %694, %695, %cst_387 {dimension_numbers = #tpu.dot_dimension_numbers<[1], [0], [0], [1], [0, 0, 1, 1], [], []>} : vector<8x32xbf16>, vector<32x96xbf16>, vector<8x96xf32> -> vector<8x96xf32>
    %697 = arith.addf %693, %696 : vector<8x96xf32>
    %c0_388 = arith.constant 0 : index
    %c0_389 = arith.constant 0 : index
    %698 = vector.load %arg24[%c0_388, %c0_389] : memref<1x96xf32, #tpu.memory_space<vmem>>, vector<1x96xf32>
    %699 = vector.broadcast %698 : vector<1x96xf32> to vector<8x96xf32>
    %700 = arith.addf %697, %699 : vector<8x96xf32>
    %701 = arith.truncf %653 : vector<8x32xf32> to vector<8x32xbf16>
    %c0_390 = arith.constant 0 : index
    %c0_391 = arith.constant 0 : index
    %702 = vector.load %arg23[%c0_390, %c0_391] : memref<32x96xbf16, #tpu.memory_space<vmem>>, vector<32x96xbf16>
    %cst_392 = arith.constant dense<0.000000e+00> : vector<8x96xf32>
    %703 = tpu.matmul %701, %702, %cst_392 {dimension_numbers = #tpu.dot_dimension_numbers<[1], [0], [0], [1], [0, 0, 1, 1], [], []>} : vector<8x32xbf16>, vector<32x96xbf16>, vector<8x96xf32> -> vector<8x96xf32>
    %704 = vector.extract_strided_slice %700 {offsets = [0, 0], sizes = [8, 32], strides = [1, 1]} : vector<8x96xf32> to vector<8x32xf32>
    %705 = vector.extract_strided_slice %703 {offsets = [0, 0], sizes = [8, 32], strides = [1, 1]} : vector<8x96xf32> to vector<8x32xf32>
    %706 = arith.addf %704, %705 : vector<8x32xf32>
    %707 = arith.negf %706 : vector<8x32xf32>
    %708 = math.exp %707 : vector<8x32xf32>
    %cst_393 = arith.constant 1.000000e+00 : f32
    %709 = vector.broadcast %cst_393 : f32 to vector<8x32xf32>
    %710 = arith.addf %709, %708 : vector<8x32xf32>
    %711 = arith.divf %709, %710 : vector<8x32xf32>
    %712 = vector.extract_strided_slice %700 {offsets = [0, 32], sizes = [8, 32], strides = [1, 1]} : vector<8x96xf32> to vector<8x32xf32>
    %713 = vector.extract_strided_slice %703 {offsets = [0, 32], sizes = [8, 32], strides = [1, 1]} : vector<8x96xf32> to vector<8x32xf32>
    %714 = arith.addf %712, %713 : vector<8x32xf32>
    %715 = arith.negf %714 : vector<8x32xf32>
    %716 = math.exp %715 : vector<8x32xf32>
    %cst_394 = arith.constant 1.000000e+00 : f32
    %717 = vector.broadcast %cst_394 : f32 to vector<8x32xf32>
    %718 = arith.addf %717, %716 : vector<8x32xf32>
    %719 = arith.divf %717, %718 : vector<8x32xf32>
    %720 = vector.extract_strided_slice %700 {offsets = [0, 64], sizes = [8, 32], strides = [1, 1]} : vector<8x96xf32> to vector<8x32xf32>
    %721 = vector.extract_strided_slice %703 {offsets = [0, 64], sizes = [8, 32], strides = [1, 1]} : vector<8x96xf32> to vector<8x32xf32>
    %c0_395 = arith.constant 0 : index
    %c0_396 = arith.constant 0 : index
    %722 = vector.load %arg25[%c0_395, %c0_396] : memref<1x32xf32, #tpu.memory_space<vmem>>, vector<1x32xf32>
    %723 = vector.broadcast %722 : vector<1x32xf32> to vector<8x32xf32>
    %724 = arith.addf %721, %723 : vector<8x32xf32>
    %725 = arith.mulf %711, %724 : vector<8x32xf32>
    %726 = arith.addf %720, %725 : vector<8x32xf32>
    %727 = math.tanh %726 : vector<8x32xf32>
    %cst_397 = arith.constant 1.000000e+00 : f32
    %728 = vector.broadcast %cst_397 : f32 to vector<8x32xf32>
    %729 = arith.subf %728, %719 : vector<8x32xf32>
    %730 = arith.mulf %729, %727 : vector<8x32xf32>
    %731 = arith.mulf %719, %653 : vector<8x32xf32>
    %732 = arith.addf %730, %731 : vector<8x32xf32>
    %733 = arith.truncf %732 : vector<8x32xf32> to vector<8x32xbf16>
    %c0_398 = arith.constant 0 : index
    %c0_399 = arith.constant 0 : index
    %734 = vector.load %arg26[%c0_398, %c0_399] : memref<32x128xbf16, #tpu.memory_space<vmem>>, vector<32x128xbf16>
    %cst_400 = arith.constant dense<0.000000e+00> : vector<8x128xf32>
    %735 = tpu.matmul %733, %734, %cst_400 {dimension_numbers = #tpu.dot_dimension_numbers<[1], [0], [0], [1], [0, 0, 1, 1], [], []>} : vector<8x32xbf16>, vector<32x128xbf16>, vector<8x128xf32> -> vector<8x128xf32>
    %736 = arith.truncf %682 : vector<8x32xf32> to vector<8x32xbf16>
    %c0_401 = arith.constant 0 : index
    %c0_402 = arith.constant 0 : index
    %737 = vector.load %arg27[%c0_401, %c0_402] : memref<32x128xbf16, #tpu.memory_space<vmem>>, vector<32x128xbf16>
    %cst_403 = arith.constant dense<0.000000e+00> : vector<8x128xf32>
    %738 = tpu.matmul %736, %737, %cst_403 {dimension_numbers = #tpu.dot_dimension_numbers<[1], [0], [0], [1], [0, 0, 1, 1], [], []>} : vector<8x32xbf16>, vector<32x128xbf16>, vector<8x128xf32> -> vector<8x128xf32>
    %739 = arith.addf %735, %738 : vector<8x128xf32>
    %740 = arith.truncf %686 : vector<8x32xf32> to vector<8x32xbf16>
    %c0_404 = arith.constant 0 : index
    %c0_405 = arith.constant 0 : index
    %741 = vector.load %arg28[%c0_404, %c0_405] : memref<32x128xbf16, #tpu.memory_space<vmem>>, vector<32x128xbf16>
    %cst_406 = arith.constant dense<0.000000e+00> : vector<8x128xf32>
    %742 = tpu.matmul %740, %741, %cst_406 {dimension_numbers = #tpu.dot_dimension_numbers<[1], [0], [0], [1], [0, 0, 1, 1], [], []>} : vector<8x32xbf16>, vector<32x128xbf16>, vector<8x128xf32> -> vector<8x128xf32>
    %743 = arith.addf %739, %742 : vector<8x128xf32>
    %744 = arith.truncf %657 : vector<8x32xf32> to vector<8x32xbf16>
    %c0_407 = arith.constant 0 : index
    %c0_408 = arith.constant 0 : index
    %745 = vector.load %arg29[%c0_407, %c0_408] : memref<32x128xbf16, #tpu.memory_space<vmem>>, vector<32x128xbf16>
    %cst_409 = arith.constant dense<0.000000e+00> : vector<8x128xf32>
    %746 = tpu.matmul %744, %745, %cst_409 {dimension_numbers = #tpu.dot_dimension_numbers<[1], [0], [0], [1], [0, 0, 1, 1], [], []>} : vector<8x32xbf16>, vector<32x128xbf16>, vector<8x128xf32> -> vector<8x128xf32>
    %747 = arith.addf %743, %746 : vector<8x128xf32>
    %c0_410 = arith.constant 0 : index
    %c0_411 = arith.constant 0 : index
    %748 = vector.load %arg30[%c0_410, %c0_411] : memref<1x128xf32, #tpu.memory_space<vmem>>, vector<1x128xf32>
    %749 = vector.broadcast %748 : vector<1x128xf32> to vector<8x128xf32>
    %750 = arith.addf %747, %749 : vector<8x128xf32>
    %c0_i32_412 = arith.constant 0 : i32
    %c0_i32_413 = arith.constant 0 : i32
    %c0_i32_414 = arith.constant 0 : i32
    %c0_i32_415 = arith.constant 0 : i32
    %c0_i32_416 = arith.constant 0 : i32
    %751 = tpu.memref_slice %arg41[%c0_i32_412, %c0_i32_415, %c0_i32_416] : memref<2x8x128xf32, #tpu.memory_space<vmem>> -> memref<1x8x128xf32, #tpu.memory_space<vmem>>
    %752 = tpu.memref_squeeze %751 : memref<1x8x128xf32, #tpu.memory_space<vmem>> -> memref<8x128xf32, #tpu.memory_space<vmem>>
    %c0_i32_417 = arith.constant 0 : i32
    %c0_i32_418 = arith.constant 0 : i32
    %753 = tpu.memref_slice %arg31[%c0_i32_413, %c0_i32_417, %c0_i32_418] : memref<5x8x128xf32, #tpu.memory_space<any>> -> memref<1x8x128xf32, #tpu.memory_space<any>>
    %754 = tpu.memref_squeeze %753 : memref<1x8x128xf32, #tpu.memory_space<any>> -> memref<8x128xf32, #tpu.memory_space<any>>
    %755 = tpu.memref_slice %arg42[%c0_i32_414] : memref<2x!tpu.dma_semaphore, #tpu.memory_space<semaphore_mem>> -> memref<1x!tpu.dma_semaphore, #tpu.memory_space<semaphore_mem>>
    %756 = tpu.memref_squeeze %755 : memref<1x!tpu.dma_semaphore, #tpu.memory_space<semaphore_mem>> -> memref<!tpu.dma_semaphore, #tpu.memory_space<semaphore_mem>>
    tpu.wait_dma2 semaphore(%756 : memref<!tpu.dma_semaphore, #tpu.memory_space<semaphore_mem>>) src(%752 : memref<8x128xf32, #tpu.memory_space<vmem>>) dst(%754 : memref<8x128xf32, #tpu.memory_space<any>>)
    %c0_419 = arith.constant 0 : index
    %c0_420 = arith.constant 0 : index
    %c0_421 = arith.constant 0 : index
    %757 = vector.load %arg41[%c0_419, %c0_420, %c0_421] : memref<2x8x128xf32, #tpu.memory_space<vmem>>, vector<1x8x128xf32>
    %758 = vector.shape_cast %757 : vector<1x8x128xf32> to vector<8x128xf32>
    %759 = vector.shape_cast %750 : vector<8x128xf32> to vector<1x8x128xf32>
    tpu.vector_store %arg41[%c0_419, %c0_420, %c0_421], %759 {strides = array<i32>} : memref<2x8x128xf32, #tpu.memory_space<vmem>>, vector<1x8x128xf32>,
    %c0_i32_422 = arith.constant 0 : i32
    %c2_i32 = arith.constant 2 : i32
    %c0_i32_423 = arith.constant 0 : i32
    %c0_i32_424 = arith.constant 0 : i32
    %c0_i32_425 = arith.constant 0 : i32
    %760 = tpu.memref_slice %arg41[%c0_i32_422, %c0_i32_424, %c0_i32_425] : memref<2x8x128xf32, #tpu.memory_space<vmem>> -> memref<1x8x128xf32, #tpu.memory_space<vmem>>
    %761 = tpu.memref_squeeze %760 : memref<1x8x128xf32, #tpu.memory_space<vmem>> -> memref<8x128xf32, #tpu.memory_space<vmem>>
    %c0_i32_426 = arith.constant 0 : i32
    %c0_i32_427 = arith.constant 0 : i32
    %762 = tpu.memref_slice %arg31[%c2_i32, %c0_i32_426, %c0_i32_427] : memref<5x8x128xf32, #tpu.memory_space<any>> -> memref<1x8x128xf32, #tpu.memory_space<any>>
    %763 = tpu.memref_squeeze %762 : memref<1x8x128xf32, #tpu.memory_space<any>> -> memref<8x128xf32, #tpu.memory_space<any>>
    %764 = tpu.memref_slice %arg42[%c0_i32_423] : memref<2x!tpu.dma_semaphore, #tpu.memory_space<semaphore_mem>> -> memref<1x!tpu.dma_semaphore, #tpu.memory_space<semaphore_mem>>
    %765 = tpu.memref_squeeze %764 : memref<1x!tpu.dma_semaphore, #tpu.memory_space<semaphore_mem>> -> memref<!tpu.dma_semaphore, #tpu.memory_space<semaphore_mem>>
    tpu.enqueue_dma source(%761 : memref<8x128xf32, #tpu.memory_space<vmem>>) target(%763 : memref<8x128xf32, #tpu.memory_space<any>>) target_semaphore(%765 : memref<!tpu.dma_semaphore, #tpu.memory_space<semaphore_mem>>)
    %c2_428 = arith.constant 2 : index
    %766 = memref.load %arg0[%c2_428] : memref<5xi32, #tpu.memory_space<smem>>
    %c0_i32_429 = arith.constant 0 : i32
    %767 = arith.cmpi ne, %766, %c0_i32_429 : i32
    %768 = arith.extui %767 : i1 to i32
    %c0_i32_430 = arith.constant 0 : i32
    %769 = arith.cmpi ne, %768, %c0_i32_430 : i32
    scf.if %769 {
      %c2_612 = arith.constant 2 : index
      %c0_613 = arith.constant 0 : index
      %c0_614 = arith.constant 0 : index
      %1031 = vector.load %arg1[%c2_612, %c0_613, %c0_614] : memref<5x8x1xi32, #tpu.memory_space<vmem>>, vector<1x8x1xi32>
      %1032 = vector.shape_cast %1031 : vector<1x8x1xi32> to vector<8x1xi32>
      %1033 = vector.broadcast %1032 : vector<8x1xi32> to vector<8x128xi32>
      %1034 = arith.cmpi eq, %519, %1033 : vector<8x128xi32>
      %1035 = arith.extui %1034 : vector<8x128xi1> to vector<8x128xi32>
      %1036 = arith.sitofp %1035 : vector<8x128xi32> to vector<8x128xf32>
      %c0_615 = arith.constant 0 : index
      %c0_616 = arith.constant 0 : index
      %1037 = vector.load %arg40[%c0_615, %c0_616] : memref<8x128xf32, #tpu.memory_space<vmem>>, vector<8x128xf32>
      tpu.vector_store %arg40[%c0_615, %c0_616], %1036 {strides = array<i32>} : memref<8x128xf32, #tpu.memory_space<vmem>>, vector<8x128xf32>,
    } else {
    }
    %c2_431 = arith.constant 2 : index
    %770 = memref.load %arg0[%c2_431] : memref<5xi32, #tpu.memory_space<smem>>
    %c0_i32_432 = arith.constant 0 : i32
    %771 = arith.cmpi eq, %770, %c0_i32_432 : i32
    %772 = arith.extui %771 : i1 to i32
    %c0_i32_433 = arith.constant 0 : i32
    %773 = arith.cmpi ne, %772, %c0_i32_433 : i32
    scf.if %773 {
      %cst_612 = arith.constant dense<0xFF800000> : vector<8xf32>
      %1031 = vector.multi_reduction <maximumf>, %750, %cst_612 [1] : vector<8x128xf32> to vector<8xf32>
      %1032 = vector.shape_cast %1031 : vector<8xf32> to vector<8x1xf32>
      %1033 = vector.broadcast %1032 : vector<8x1xf32> to vector<8x128xf32>
      %1034 = arith.cmpf oeq, %750, %1033 : vector<8x128xf32>
      %c128_i32 = arith.constant 128 : i32
      %1035 = vector.broadcast %c128_i32 : i32 to vector<8x128xi32>
      %1036 = arith.select %1034, %519, %1035 : vector<8x128xi1>, vector<8x128xi32>
      %cst_613 = arith.constant dense<2147483647> : vector<8xi32>
      %1037 = vector.multi_reduction <minsi>, %1036, %cst_613 [1] : vector<8x128xi32> to vector<8xi32>
      %1038 = vector.shape_cast %1037 : vector<8xi32> to vector<8x1xi32>
      %1039 = vector.broadcast %1038 : vector<8x1xi32> to vector<8x128xi32>
      %1040 = arith.cmpi eq, %519, %1039 : vector<8x128xi32>
      %1041 = arith.extui %1040 : vector<8x128xi1> to vector<8x128xi32>
      %1042 = arith.sitofp %1041 : vector<8x128xi32> to vector<8x128xf32>
      %c0_614 = arith.constant 0 : index
      %c0_615 = arith.constant 0 : index
      %1043 = vector.load %arg40[%c0_614, %c0_615] : memref<8x128xf32, #tpu.memory_space<vmem>>, vector<8x128xf32>
      tpu.vector_store %arg40[%c0_614, %c0_615], %1042 {strides = array<i32>} : memref<8x128xf32, #tpu.memory_space<vmem>>, vector<8x128xf32>,
    } else {
    }
    %c0_434 = arith.constant 0 : index
    %c0_435 = arith.constant 0 : index
    %774 = vector.load %arg39[%c0_434, %c0_435] : memref<8x32xf32, #tpu.memory_space<vmem>>, vector<8x32xf32>
    tpu.vector_store %arg39[%c0_434, %c0_435], %732 {strides = array<i32>} : memref<8x32xf32, #tpu.memory_space<vmem>>, vector<8x32xf32>,
    %c0_436 = arith.constant 0 : index
    %c0_437 = arith.constant 0 : index
    %775 = vector.load %arg39[%c0_436, %c0_437] : memref<8x32xf32, #tpu.memory_space<vmem>>, vector<8x32xf32>
    %c0_438 = arith.constant 0 : index
    %c0_439 = arith.constant 0 : index
    %776 = vector.load %arg40[%c0_438, %c0_439] : memref<8x128xf32, #tpu.memory_space<vmem>>, vector<8x128xf32>
    %777 = arith.truncf %776 : vector<8x128xf32> to vector<8x128xbf16>
    %c0_440 = arith.constant 0 : index
    %c0_441 = arith.constant 0 : index
    %778 = vector.load %arg14[%c0_440, %c0_441] : memref<128x32xbf16, #tpu.memory_space<vmem>>, vector<128x32xbf16>
    %cst_442 = arith.constant dense<0.000000e+00> : vector<8x32xf32>
    %779 = tpu.matmul %777, %778, %cst_442 {dimension_numbers = #tpu.dot_dimension_numbers<[1], [0], [0], [1], [0, 0, 1, 1], [], []>} : vector<8x128xbf16>, vector<128x32xbf16>, vector<8x32xf32> -> vector<8x32xf32>
    %780 = arith.truncf %775 : vector<8x32xf32> to vector<8x32xbf16>
    %c0_443 = arith.constant 0 : index
    %c0_444 = arith.constant 0 : index
    %781 = vector.load %arg15[%c0_443, %c0_444] : memref<32x32xbf16, #tpu.memory_space<vmem>>, vector<32x32xbf16>
    %cst_445 = arith.constant dense<0.000000e+00> : vector<8x32xf32>
    %782 = tpu.matmul %780, %781, %cst_445 {dimension_numbers = #tpu.dot_dimension_numbers<[1], [0], [0], [1], [0, 0, 1, 1], [], []>} : vector<8x32xbf16>, vector<32x32xbf16>, vector<8x32xf32> -> vector<8x32xf32>
    %783 = vector.shape_cast %782 : vector<8x32xf32> to vector<1x8x32xf32>
    %c0_446 = arith.constant 0 : index
    %c0_447 = arith.constant 0 : index
    %c0_448 = arith.constant 0 : index
    %784 = vector.load %arg38[%c0_446, %c0_447, %c0_448] : memref<6x8x32xf32, #tpu.memory_space<vmem>>, vector<6x8x32xf32>
    %785 = vector.broadcast %783 : vector<1x8x32xf32> to vector<6x8x32xf32>
    %786 = arith.addf %785, %784 : vector<6x8x32xf32>
    %787 = math.tanh %786 : vector<6x8x32xf32>
    %788 = vector.broadcast %518 : vector<1x1x32xf32> to vector<6x8x32xf32>
    %789 = arith.mulf %787, %788 : vector<6x8x32xf32>
    %cst_449 = arith.constant dense<0.000000e+00> : vector<6x8xf32>
    %790 = vector.multi_reduction <add>, %789, %cst_449 [2] : vector<6x8x32xf32> to vector<6x8xf32>
    %791 = vector.shape_cast %790 : vector<6x8xf32> to vector<6x8x1xf32>
    %cst_450 = arith.constant dense<0xFF800000> : vector<8x1xf32>
    %792 = vector.multi_reduction <maximumf>, %791, %cst_450 [0] : vector<6x8x1xf32> to vector<8x1xf32>
    %793 = vector.shape_cast %792 : vector<8x1xf32> to vector<1x8x1xf32>
    %794 = vector.broadcast %793 : vector<1x8x1xf32> to vector<6x8x1xf32>
    %795 = arith.subf %791, %794 : vector<6x8x1xf32>
    %796 = math.exp %795 : vector<6x8x1xf32>
    %cst_451 = arith.constant dense<0.000000e+00> : vector<8x1xf32>
    %797 = vector.multi_reduction <add>, %796, %cst_451 [0] : vector<6x8x1xf32> to vector<8x1xf32>
    %798 = vector.shape_cast %797 : vector<8x1xf32> to vector<1x8x1xf32>
    %799 = vector.broadcast %798 : vector<1x8x1xf32> to vector<6x8x1xf32>
    %800 = arith.divf %796, %799 : vector<6x8x1xf32>
    %c0_452 = arith.constant 0 : index
    %c0_453 = arith.constant 0 : index
    %c0_454 = arith.constant 0 : index
    %801 = vector.load %arg34[%c0_452, %c0_453, %c0_454] : memref<6x8x32xf32, #tpu.memory_space<vmem>>, vector<6x8x32xf32>
    %802 = vector.broadcast %800 : vector<6x8x1xf32> to vector<6x8x32xf32>
    %803 = arith.mulf %802, %801 : vector<6x8x32xf32>
    %cst_455 = arith.constant dense<0.000000e+00> : vector<8x32xf32>
    %804 = vector.multi_reduction <add>, %803, %cst_455 [0] : vector<6x8x32xf32> to vector<8x32xf32>
    %c0_456 = arith.constant 0 : index
    %c0_457 = arith.constant 0 : index
    %c0_458 = arith.constant 0 : index
    %805 = vector.load %arg35[%c0_456, %c0_457, %c0_458] : memref<6x8x32xf32, #tpu.memory_space<vmem>>, vector<6x8x32xf32>
    %806 = vector.broadcast %800 : vector<6x8x1xf32> to vector<6x8x32xf32>
    %807 = arith.mulf %806, %805 : vector<6x8x32xf32>
    %cst_459 = arith.constant dense<0.000000e+00> : vector<8x32xf32>
    %808 = vector.multi_reduction <add>, %807, %cst_459 [0] : vector<6x8x32xf32> to vector<8x32xf32>
    %809 = arith.truncf %779 : vector<8x32xf32> to vector<8x32xbf16>
    %c0_460 = arith.constant 0 : index
    %c0_461 = arith.constant 0 : index
    %810 = vector.load %arg20[%c0_460, %c0_461] : memref<32x96xbf16, #tpu.memory_space<vmem>>, vector<32x96xbf16>
    %cst_462 = arith.constant dense<0.000000e+00> : vector<8x96xf32>
    %811 = tpu.matmul %809, %810, %cst_462 {dimension_numbers = #tpu.dot_dimension_numbers<[1], [0], [0], [1], [0, 0, 1, 1], [], []>} : vector<8x32xbf16>, vector<32x96xbf16>, vector<8x96xf32> -> vector<8x96xf32>
    %812 = arith.truncf %804 : vector<8x32xf32> to vector<8x32xbf16>
    %c0_463 = arith.constant 0 : index
    %c0_464 = arith.constant 0 : index
    %813 = vector.load %arg21[%c0_463, %c0_464] : memref<32x96xbf16, #tpu.memory_space<vmem>>, vector<32x96xbf16>
    %cst_465 = arith.constant dense<0.000000e+00> : vector<8x96xf32>
    %814 = tpu.matmul %812, %813, %cst_465 {dimension_numbers = #tpu.dot_dimension_numbers<[1], [0], [0], [1], [0, 0, 1, 1], [], []>} : vector<8x32xbf16>, vector<32x96xbf16>, vector<8x96xf32> -> vector<8x96xf32>
    %815 = arith.addf %811, %814 : vector<8x96xf32>
    %816 = arith.truncf %808 : vector<8x32xf32> to vector<8x32xbf16>
    %c0_466 = arith.constant 0 : index
    %c0_467 = arith.constant 0 : index
    %817 = vector.load %arg22[%c0_466, %c0_467] : memref<32x96xbf16, #tpu.memory_space<vmem>>, vector<32x96xbf16>
    %cst_468 = arith.constant dense<0.000000e+00> : vector<8x96xf32>
    %818 = tpu.matmul %816, %817, %cst_468 {dimension_numbers = #tpu.dot_dimension_numbers<[1], [0], [0], [1], [0, 0, 1, 1], [], []>} : vector<8x32xbf16>, vector<32x96xbf16>, vector<8x96xf32> -> vector<8x96xf32>
    %819 = arith.addf %815, %818 : vector<8x96xf32>
    %c0_469 = arith.constant 0 : index
    %c0_470 = arith.constant 0 : index
    %820 = vector.load %arg24[%c0_469, %c0_470] : memref<1x96xf32, #tpu.memory_space<vmem>>, vector<1x96xf32>
    %821 = vector.broadcast %820 : vector<1x96xf32> to vector<8x96xf32>
    %822 = arith.addf %819, %821 : vector<8x96xf32>
    %823 = arith.truncf %775 : vector<8x32xf32> to vector<8x32xbf16>
    %c0_471 = arith.constant 0 : index
    %c0_472 = arith.constant 0 : index
    %824 = vector.load %arg23[%c0_471, %c0_472] : memref<32x96xbf16, #tpu.memory_space<vmem>>, vector<32x96xbf16>
    %cst_473 = arith.constant dense<0.000000e+00> : vector<8x96xf32>
    %825 = tpu.matmul %823, %824, %cst_473 {dimension_numbers = #tpu.dot_dimension_numbers<[1], [0], [0], [1], [0, 0, 1, 1], [], []>} : vector<8x32xbf16>, vector<32x96xbf16>, vector<8x96xf32> -> vector<8x96xf32>
    %826 = vector.extract_strided_slice %822 {offsets = [0, 0], sizes = [8, 32], strides = [1, 1]} : vector<8x96xf32> to vector<8x32xf32>
    %827 = vector.extract_strided_slice %825 {offsets = [0, 0], sizes = [8, 32], strides = [1, 1]} : vector<8x96xf32> to vector<8x32xf32>
    %828 = arith.addf %826, %827 : vector<8x32xf32>
    %829 = arith.negf %828 : vector<8x32xf32>
    %830 = math.exp %829 : vector<8x32xf32>
    %cst_474 = arith.constant 1.000000e+00 : f32
    %831 = vector.broadcast %cst_474 : f32 to vector<8x32xf32>
    %832 = arith.addf %831, %830 : vector<8x32xf32>
    %833 = arith.divf %831, %832 : vector<8x32xf32>
    %834 = vector.extract_strided_slice %822 {offsets = [0, 32], sizes = [8, 32], strides = [1, 1]} : vector<8x96xf32> to vector<8x32xf32>
    %835 = vector.extract_strided_slice %825 {offsets = [0, 32], sizes = [8, 32], strides = [1, 1]} : vector<8x96xf32> to vector<8x32xf32>
    %836 = arith.addf %834, %835 : vector<8x32xf32>
    %837 = arith.negf %836 : vector<8x32xf32>
    %838 = math.exp %837 : vector<8x32xf32>
    %cst_475 = arith.constant 1.000000e+00 : f32
    %839 = vector.broadcast %cst_475 : f32 to vector<8x32xf32>
    %840 = arith.addf %839, %838 : vector<8x32xf32>
    %841 = arith.divf %839, %840 : vector<8x32xf32>
    %842 = vector.extract_strided_slice %822 {offsets = [0, 64], sizes = [8, 32], strides = [1, 1]} : vector<8x96xf32> to vector<8x32xf32>
    %843 = vector.extract_strided_slice %825 {offsets = [0, 64], sizes = [8, 32], strides = [1, 1]} : vector<8x96xf32> to vector<8x32xf32>
    %c0_476 = arith.constant 0 : index
    %c0_477 = arith.constant 0 : index
    %844 = vector.load %arg25[%c0_476, %c0_477] : memref<1x32xf32, #tpu.memory_space<vmem>>, vector<1x32xf32>
    %845 = vector.broadcast %844 : vector<1x32xf32> to vector<8x32xf32>
    %846 = arith.addf %843, %845 : vector<8x32xf32>
    %847 = arith.mulf %833, %846 : vector<8x32xf32>
    %848 = arith.addf %842, %847 : vector<8x32xf32>
    %849 = math.tanh %848 : vector<8x32xf32>
    %cst_478 = arith.constant 1.000000e+00 : f32
    %850 = vector.broadcast %cst_478 : f32 to vector<8x32xf32>
    %851 = arith.subf %850, %841 : vector<8x32xf32>
    %852 = arith.mulf %851, %849 : vector<8x32xf32>
    %853 = arith.mulf %841, %775 : vector<8x32xf32>
    %854 = arith.addf %852, %853 : vector<8x32xf32>
    %855 = arith.truncf %854 : vector<8x32xf32> to vector<8x32xbf16>
    %c0_479 = arith.constant 0 : index
    %c0_480 = arith.constant 0 : index
    %856 = vector.load %arg26[%c0_479, %c0_480] : memref<32x128xbf16, #tpu.memory_space<vmem>>, vector<32x128xbf16>
    %cst_481 = arith.constant dense<0.000000e+00> : vector<8x128xf32>
    %857 = tpu.matmul %855, %856, %cst_481 {dimension_numbers = #tpu.dot_dimension_numbers<[1], [0], [0], [1], [0, 0, 1, 1], [], []>} : vector<8x32xbf16>, vector<32x128xbf16>, vector<8x128xf32> -> vector<8x128xf32>
    %858 = arith.truncf %804 : vector<8x32xf32> to vector<8x32xbf16>
    %c0_482 = arith.constant 0 : index
    %c0_483 = arith.constant 0 : index
    %859 = vector.load %arg27[%c0_482, %c0_483] : memref<32x128xbf16, #tpu.memory_space<vmem>>, vector<32x128xbf16>
    %cst_484 = arith.constant dense<0.000000e+00> : vector<8x128xf32>
    %860 = tpu.matmul %858, %859, %cst_484 {dimension_numbers = #tpu.dot_dimension_numbers<[1], [0], [0], [1], [0, 0, 1, 1], [], []>} : vector<8x32xbf16>, vector<32x128xbf16>, vector<8x128xf32> -> vector<8x128xf32>
    %861 = arith.addf %857, %860 : vector<8x128xf32>
    %862 = arith.truncf %808 : vector<8x32xf32> to vector<8x32xbf16>
    %c0_485 = arith.constant 0 : index
    %c0_486 = arith.constant 0 : index
    %863 = vector.load %arg28[%c0_485, %c0_486] : memref<32x128xbf16, #tpu.memory_space<vmem>>, vector<32x128xbf16>
    %cst_487 = arith.constant dense<0.000000e+00> : vector<8x128xf32>
    %864 = tpu.matmul %862, %863, %cst_487 {dimension_numbers = #tpu.dot_dimension_numbers<[1], [0], [0], [1], [0, 0, 1, 1], [], []>} : vector<8x32xbf16>, vector<32x128xbf16>, vector<8x128xf32> -> vector<8x128xf32>
    %865 = arith.addf %861, %864 : vector<8x128xf32>
    %866 = arith.truncf %779 : vector<8x32xf32> to vector<8x32xbf16>
    %c0_488 = arith.constant 0 : index
    %c0_489 = arith.constant 0 : index
    %867 = vector.load %arg29[%c0_488, %c0_489] : memref<32x128xbf16, #tpu.memory_space<vmem>>, vector<32x128xbf16>
    %cst_490 = arith.constant dense<0.000000e+00> : vector<8x128xf32>
    %868 = tpu.matmul %866, %867, %cst_490 {dimension_numbers = #tpu.dot_dimension_numbers<[1], [0], [0], [1], [0, 0, 1, 1], [], []>} : vector<8x32xbf16>, vector<32x128xbf16>, vector<8x128xf32> -> vector<8x128xf32>
    %869 = arith.addf %865, %868 : vector<8x128xf32>
    %c0_491 = arith.constant 0 : index
    %c0_492 = arith.constant 0 : index
    %870 = vector.load %arg30[%c0_491, %c0_492] : memref<1x128xf32, #tpu.memory_space<vmem>>, vector<1x128xf32>
    %871 = vector.broadcast %870 : vector<1x128xf32> to vector<8x128xf32>
    %872 = arith.addf %869, %871 : vector<8x128xf32>
    %c1_i32_493 = arith.constant 1 : i32
    %c1_i32_494 = arith.constant 1 : i32
    %c1_i32_495 = arith.constant 1 : i32
    %c0_i32_496 = arith.constant 0 : i32
    %c0_i32_497 = arith.constant 0 : i32
    %873 = tpu.memref_slice %arg41[%c1_i32_493, %c0_i32_496, %c0_i32_497] : memref<2x8x128xf32, #tpu.memory_space<vmem>> -> memref<1x8x128xf32, #tpu.memory_space<vmem>>
    %874 = tpu.memref_squeeze %873 : memref<1x8x128xf32, #tpu.memory_space<vmem>> -> memref<8x128xf32, #tpu.memory_space<vmem>>
    %c0_i32_498 = arith.constant 0 : i32
    %c0_i32_499 = arith.constant 0 : i32
    %875 = tpu.memref_slice %arg31[%c1_i32_494, %c0_i32_498, %c0_i32_499] : memref<5x8x128xf32, #tpu.memory_space<any>> -> memref<1x8x128xf32, #tpu.memory_space<any>>
    %876 = tpu.memref_squeeze %875 : memref<1x8x128xf32, #tpu.memory_space<any>> -> memref<8x128xf32, #tpu.memory_space<any>>
    %877 = tpu.memref_slice %arg42[%c1_i32_495] : memref<2x!tpu.dma_semaphore, #tpu.memory_space<semaphore_mem>> -> memref<1x!tpu.dma_semaphore, #tpu.memory_space<semaphore_mem>>
    %878 = tpu.memref_squeeze %877 : memref<1x!tpu.dma_semaphore, #tpu.memory_space<semaphore_mem>> -> memref<!tpu.dma_semaphore, #tpu.memory_space<semaphore_mem>>
    tpu.wait_dma2 semaphore(%878 : memref<!tpu.dma_semaphore, #tpu.memory_space<semaphore_mem>>) src(%874 : memref<8x128xf32, #tpu.memory_space<vmem>>) dst(%876 : memref<8x128xf32, #tpu.memory_space<any>>)
    %c1_500 = arith.constant 1 : index
    %c0_501 = arith.constant 0 : index
    %c0_502 = arith.constant 0 : index
    %879 = vector.load %arg41[%c1_500, %c0_501, %c0_502] : memref<2x8x128xf32, #tpu.memory_space<vmem>>, vector<1x8x128xf32>
    %880 = vector.shape_cast %879 : vector<1x8x128xf32> to vector<8x128xf32>
    %881 = vector.shape_cast %872 : vector<8x128xf32> to vector<1x8x128xf32>
    tpu.vector_store %arg41[%c1_500, %c0_501, %c0_502], %881 {strides = array<i32>} : memref<2x8x128xf32, #tpu.memory_space<vmem>>, vector<1x8x128xf32>,
    %c1_i32_503 = arith.constant 1 : i32
    %c3_i32 = arith.constant 3 : i32
    %c1_i32_504 = arith.constant 1 : i32
    %c0_i32_505 = arith.constant 0 : i32
    %c0_i32_506 = arith.constant 0 : i32
    %882 = tpu.memref_slice %arg41[%c1_i32_503, %c0_i32_505, %c0_i32_506] : memref<2x8x128xf32, #tpu.memory_space<vmem>> -> memref<1x8x128xf32, #tpu.memory_space<vmem>>
    %883 = tpu.memref_squeeze %882 : memref<1x8x128xf32, #tpu.memory_space<vmem>> -> memref<8x128xf32, #tpu.memory_space<vmem>>
    %c0_i32_507 = arith.constant 0 : i32
    %c0_i32_508 = arith.constant 0 : i32
    %884 = tpu.memref_slice %arg31[%c3_i32, %c0_i32_507, %c0_i32_508] : memref<5x8x128xf32, #tpu.memory_space<any>> -> memref<1x8x128xf32, #tpu.memory_space<any>>
    %885 = tpu.memref_squeeze %884 : memref<1x8x128xf32, #tpu.memory_space<any>> -> memref<8x128xf32, #tpu.memory_space<any>>
    %886 = tpu.memref_slice %arg42[%c1_i32_504] : memref<2x!tpu.dma_semaphore, #tpu.memory_space<semaphore_mem>> -> memref<1x!tpu.dma_semaphore, #tpu.memory_space<semaphore_mem>>
    %887 = tpu.memref_squeeze %886 : memref<1x!tpu.dma_semaphore, #tpu.memory_space<semaphore_mem>> -> memref<!tpu.dma_semaphore, #tpu.memory_space<semaphore_mem>>
    tpu.enqueue_dma source(%883 : memref<8x128xf32, #tpu.memory_space<vmem>>) target(%885 : memref<8x128xf32, #tpu.memory_space<any>>) target_semaphore(%887 : memref<!tpu.dma_semaphore, #tpu.memory_space<semaphore_mem>>)
    %c3_509 = arith.constant 3 : index
    %888 = memref.load %arg0[%c3_509] : memref<5xi32, #tpu.memory_space<smem>>
    %c0_i32_510 = arith.constant 0 : i32
    %889 = arith.cmpi ne, %888, %c0_i32_510 : i32
    %890 = arith.extui %889 : i1 to i32
    %c0_i32_511 = arith.constant 0 : i32
    %891 = arith.cmpi ne, %890, %c0_i32_511 : i32
    scf.if %891 {
      %c3_612 = arith.constant 3 : index
      %c0_613 = arith.constant 0 : index
      %c0_614 = arith.constant 0 : index
      %1031 = vector.load %arg1[%c3_612, %c0_613, %c0_614] : memref<5x8x1xi32, #tpu.memory_space<vmem>>, vector<1x8x1xi32>
      %1032 = vector.shape_cast %1031 : vector<1x8x1xi32> to vector<8x1xi32>
      %1033 = vector.broadcast %1032 : vector<8x1xi32> to vector<8x128xi32>
      %1034 = arith.cmpi eq, %519, %1033 : vector<8x128xi32>
      %1035 = arith.extui %1034 : vector<8x128xi1> to vector<8x128xi32>
      %1036 = arith.sitofp %1035 : vector<8x128xi32> to vector<8x128xf32>
      %c0_615 = arith.constant 0 : index
      %c0_616 = arith.constant 0 : index
      %1037 = vector.load %arg40[%c0_615, %c0_616] : memref<8x128xf32, #tpu.memory_space<vmem>>, vector<8x128xf32>
      tpu.vector_store %arg40[%c0_615, %c0_616], %1036 {strides = array<i32>} : memref<8x128xf32, #tpu.memory_space<vmem>>, vector<8x128xf32>,
    } else {
    }
    %c3_512 = arith.constant 3 : index
    %892 = memref.load %arg0[%c3_512] : memref<5xi32, #tpu.memory_space<smem>>
    %c0_i32_513 = arith.constant 0 : i32
    %893 = arith.cmpi eq, %892, %c0_i32_513 : i32
    %894 = arith.extui %893 : i1 to i32
    %c0_i32_514 = arith.constant 0 : i32
    %895 = arith.cmpi ne, %894, %c0_i32_514 : i32
    scf.if %895 {
      %cst_612 = arith.constant dense<0xFF800000> : vector<8xf32>
      %1031 = vector.multi_reduction <maximumf>, %872, %cst_612 [1] : vector<8x128xf32> to vector<8xf32>
      %1032 = vector.shape_cast %1031 : vector<8xf32> to vector<8x1xf32>
      %1033 = vector.broadcast %1032 : vector<8x1xf32> to vector<8x128xf32>
      %1034 = arith.cmpf oeq, %872, %1033 : vector<8x128xf32>
      %c128_i32 = arith.constant 128 : i32
      %1035 = vector.broadcast %c128_i32 : i32 to vector<8x128xi32>
      %1036 = arith.select %1034, %519, %1035 : vector<8x128xi1>, vector<8x128xi32>
      %cst_613 = arith.constant dense<2147483647> : vector<8xi32>
      %1037 = vector.multi_reduction <minsi>, %1036, %cst_613 [1] : vector<8x128xi32> to vector<8xi32>
      %1038 = vector.shape_cast %1037 : vector<8xi32> to vector<8x1xi32>
      %1039 = vector.broadcast %1038 : vector<8x1xi32> to vector<8x128xi32>
      %1040 = arith.cmpi eq, %519, %1039 : vector<8x128xi32>
      %1041 = arith.extui %1040 : vector<8x128xi1> to vector<8x128xi32>
      %1042 = arith.sitofp %1041 : vector<8x128xi32> to vector<8x128xf32>
      %c0_614 = arith.constant 0 : index
      %c0_615 = arith.constant 0 : index
      %1043 = vector.load %arg40[%c0_614, %c0_615] : memref<8x128xf32, #tpu.memory_space<vmem>>, vector<8x128xf32>
      tpu.vector_store %arg40[%c0_614, %c0_615], %1042 {strides = array<i32>} : memref<8x128xf32, #tpu.memory_space<vmem>>, vector<8x128xf32>,
    } else {
    }
    %c0_515 = arith.constant 0 : index
    %c0_516 = arith.constant 0 : index
    %896 = vector.load %arg39[%c0_515, %c0_516] : memref<8x32xf32, #tpu.memory_space<vmem>>, vector<8x32xf32>
    tpu.vector_store %arg39[%c0_515, %c0_516], %854 {strides = array<i32>} : memref<8x32xf32, #tpu.memory_space<vmem>>, vector<8x32xf32>,
    %c0_517 = arith.constant 0 : index
    %c0_518 = arith.constant 0 : index
    %897 = vector.load %arg39[%c0_517, %c0_518] : memref<8x32xf32, #tpu.memory_space<vmem>>, vector<8x32xf32>
    %c0_519 = arith.constant 0 : index
    %c0_520 = arith.constant 0 : index
    %898 = vector.load %arg40[%c0_519, %c0_520] : memref<8x128xf32, #tpu.memory_space<vmem>>, vector<8x128xf32>
    %899 = arith.truncf %898 : vector<8x128xf32> to vector<8x128xbf16>
    %c0_521 = arith.constant 0 : index
    %c0_522 = arith.constant 0 : index
    %900 = vector.load %arg14[%c0_521, %c0_522] : memref<128x32xbf16, #tpu.memory_space<vmem>>, vector<128x32xbf16>
    %cst_523 = arith.constant dense<0.000000e+00> : vector<8x32xf32>
    %901 = tpu.matmul %899, %900, %cst_523 {dimension_numbers = #tpu.dot_dimension_numbers<[1], [0], [0], [1], [0, 0, 1, 1], [], []>} : vector<8x128xbf16>, vector<128x32xbf16>, vector<8x32xf32> -> vector<8x32xf32>
    %902 = arith.truncf %897 : vector<8x32xf32> to vector<8x32xbf16>
    %c0_524 = arith.constant 0 : index
    %c0_525 = arith.constant 0 : index
    %903 = vector.load %arg15[%c0_524, %c0_525] : memref<32x32xbf16, #tpu.memory_space<vmem>>, vector<32x32xbf16>
    %cst_526 = arith.constant dense<0.000000e+00> : vector<8x32xf32>
    %904 = tpu.matmul %902, %903, %cst_526 {dimension_numbers = #tpu.dot_dimension_numbers<[1], [0], [0], [1], [0, 0, 1, 1], [], []>} : vector<8x32xbf16>, vector<32x32xbf16>, vector<8x32xf32> -> vector<8x32xf32>
    %905 = vector.shape_cast %904 : vector<8x32xf32> to vector<1x8x32xf32>
    %c0_527 = arith.constant 0 : index
    %c0_528 = arith.constant 0 : index
    %c0_529 = arith.constant 0 : index
    %906 = vector.load %arg38[%c0_527, %c0_528, %c0_529] : memref<6x8x32xf32, #tpu.memory_space<vmem>>, vector<6x8x32xf32>
    %907 = vector.broadcast %905 : vector<1x8x32xf32> to vector<6x8x32xf32>
    %908 = arith.addf %907, %906 : vector<6x8x32xf32>
    %909 = math.tanh %908 : vector<6x8x32xf32>
    %910 = vector.broadcast %518 : vector<1x1x32xf32> to vector<6x8x32xf32>
    %911 = arith.mulf %909, %910 : vector<6x8x32xf32>
    %cst_530 = arith.constant dense<0.000000e+00> : vector<6x8xf32>
    %912 = vector.multi_reduction <add>, %911, %cst_530 [2] : vector<6x8x32xf32> to vector<6x8xf32>
    %913 = vector.shape_cast %912 : vector<6x8xf32> to vector<6x8x1xf32>
    %cst_531 = arith.constant dense<0xFF800000> : vector<8x1xf32>
    %914 = vector.multi_reduction <maximumf>, %913, %cst_531 [0] : vector<6x8x1xf32> to vector<8x1xf32>
    %915 = vector.shape_cast %914 : vector<8x1xf32> to vector<1x8x1xf32>
    %916 = vector.broadcast %915 : vector<1x8x1xf32> to vector<6x8x1xf32>
    %917 = arith.subf %913, %916 : vector<6x8x1xf32>
    %918 = math.exp %917 : vector<6x8x1xf32>
    %cst_532 = arith.constant dense<0.000000e+00> : vector<8x1xf32>
    %919 = vector.multi_reduction <add>, %918, %cst_532 [0] : vector<6x8x1xf32> to vector<8x1xf32>
    %920 = vector.shape_cast %919 : vector<8x1xf32> to vector<1x8x1xf32>
    %921 = vector.broadcast %920 : vector<1x8x1xf32> to vector<6x8x1xf32>
    %922 = arith.divf %918, %921 : vector<6x8x1xf32>
    %c0_533 = arith.constant 0 : index
    %c0_534 = arith.constant 0 : index
    %c0_535 = arith.constant 0 : index
    %923 = vector.load %arg34[%c0_533, %c0_534, %c0_535] : memref<6x8x32xf32, #tpu.memory_space<vmem>>, vector<6x8x32xf32>
    %924 = vector.broadcast %922 : vector<6x8x1xf32> to vector<6x8x32xf32>
    %925 = arith.mulf %924, %923 : vector<6x8x32xf32>
    %cst_536 = arith.constant dense<0.000000e+00> : vector<8x32xf32>
    %926 = vector.multi_reduction <add>, %925, %cst_536 [0] : vector<6x8x32xf32> to vector<8x32xf32>
    %c0_537 = arith.constant 0 : index
    %c0_538 = arith.constant 0 : index
    %c0_539 = arith.constant 0 : index
    %927 = vector.load %arg35[%c0_537, %c0_538, %c0_539] : memref<6x8x32xf32, #tpu.memory_space<vmem>>, vector<6x8x32xf32>
    %928 = vector.broadcast %922 : vector<6x8x1xf32> to vector<6x8x32xf32>
    %929 = arith.mulf %928, %927 : vector<6x8x32xf32>
    %cst_540 = arith.constant dense<0.000000e+00> : vector<8x32xf32>
    %930 = vector.multi_reduction <add>, %929, %cst_540 [0] : vector<6x8x32xf32> to vector<8x32xf32>
    %931 = arith.truncf %901 : vector<8x32xf32> to vector<8x32xbf16>
    %c0_541 = arith.constant 0 : index
    %c0_542 = arith.constant 0 : index
    %932 = vector.load %arg20[%c0_541, %c0_542] : memref<32x96xbf16, #tpu.memory_space<vmem>>, vector<32x96xbf16>
    %cst_543 = arith.constant dense<0.000000e+00> : vector<8x96xf32>
    %933 = tpu.matmul %931, %932, %cst_543 {dimension_numbers = #tpu.dot_dimension_numbers<[1], [0], [0], [1], [0, 0, 1, 1], [], []>} : vector<8x32xbf16>, vector<32x96xbf16>, vector<8x96xf32> -> vector<8x96xf32>
    %934 = arith.truncf %926 : vector<8x32xf32> to vector<8x32xbf16>
    %c0_544 = arith.constant 0 : index
    %c0_545 = arith.constant 0 : index
    %935 = vector.load %arg21[%c0_544, %c0_545] : memref<32x96xbf16, #tpu.memory_space<vmem>>, vector<32x96xbf16>
    %cst_546 = arith.constant dense<0.000000e+00> : vector<8x96xf32>
    %936 = tpu.matmul %934, %935, %cst_546 {dimension_numbers = #tpu.dot_dimension_numbers<[1], [0], [0], [1], [0, 0, 1, 1], [], []>} : vector<8x32xbf16>, vector<32x96xbf16>, vector<8x96xf32> -> vector<8x96xf32>
    %937 = arith.addf %933, %936 : vector<8x96xf32>
    %938 = arith.truncf %930 : vector<8x32xf32> to vector<8x32xbf16>
    %c0_547 = arith.constant 0 : index
    %c0_548 = arith.constant 0 : index
    %939 = vector.load %arg22[%c0_547, %c0_548] : memref<32x96xbf16, #tpu.memory_space<vmem>>, vector<32x96xbf16>
    %cst_549 = arith.constant dense<0.000000e+00> : vector<8x96xf32>
    %940 = tpu.matmul %938, %939, %cst_549 {dimension_numbers = #tpu.dot_dimension_numbers<[1], [0], [0], [1], [0, 0, 1, 1], [], []>} : vector<8x32xbf16>, vector<32x96xbf16>, vector<8x96xf32> -> vector<8x96xf32>
    %941 = arith.addf %937, %940 : vector<8x96xf32>
    %c0_550 = arith.constant 0 : index
    %c0_551 = arith.constant 0 : index
    %942 = vector.load %arg24[%c0_550, %c0_551] : memref<1x96xf32, #tpu.memory_space<vmem>>, vector<1x96xf32>
    %943 = vector.broadcast %942 : vector<1x96xf32> to vector<8x96xf32>
    %944 = arith.addf %941, %943 : vector<8x96xf32>
    %945 = arith.truncf %897 : vector<8x32xf32> to vector<8x32xbf16>
    %c0_552 = arith.constant 0 : index
    %c0_553 = arith.constant 0 : index
    %946 = vector.load %arg23[%c0_552, %c0_553] : memref<32x96xbf16, #tpu.memory_space<vmem>>, vector<32x96xbf16>
    %cst_554 = arith.constant dense<0.000000e+00> : vector<8x96xf32>
    %947 = tpu.matmul %945, %946, %cst_554 {dimension_numbers = #tpu.dot_dimension_numbers<[1], [0], [0], [1], [0, 0, 1, 1], [], []>} : vector<8x32xbf16>, vector<32x96xbf16>, vector<8x96xf32> -> vector<8x96xf32>
    %948 = vector.extract_strided_slice %944 {offsets = [0, 0], sizes = [8, 32], strides = [1, 1]} : vector<8x96xf32> to vector<8x32xf32>
    %949 = vector.extract_strided_slice %947 {offsets = [0, 0], sizes = [8, 32], strides = [1, 1]} : vector<8x96xf32> to vector<8x32xf32>
    %950 = arith.addf %948, %949 : vector<8x32xf32>
    %951 = arith.negf %950 : vector<8x32xf32>
    %952 = math.exp %951 : vector<8x32xf32>
    %cst_555 = arith.constant 1.000000e+00 : f32
    %953 = vector.broadcast %cst_555 : f32 to vector<8x32xf32>
    %954 = arith.addf %953, %952 : vector<8x32xf32>
    %955 = arith.divf %953, %954 : vector<8x32xf32>
    %956 = vector.extract_strided_slice %944 {offsets = [0, 32], sizes = [8, 32], strides = [1, 1]} : vector<8x96xf32> to vector<8x32xf32>
    %957 = vector.extract_strided_slice %947 {offsets = [0, 32], sizes = [8, 32], strides = [1, 1]} : vector<8x96xf32> to vector<8x32xf32>
    %958 = arith.addf %956, %957 : vector<8x32xf32>
    %959 = arith.negf %958 : vector<8x32xf32>
    %960 = math.exp %959 : vector<8x32xf32>
    %cst_556 = arith.constant 1.000000e+00 : f32
    %961 = vector.broadcast %cst_556 : f32 to vector<8x32xf32>
    %962 = arith.addf %961, %960 : vector<8x32xf32>
    %963 = arith.divf %961, %962 : vector<8x32xf32>
    %964 = vector.extract_strided_slice %944 {offsets = [0, 64], sizes = [8, 32], strides = [1, 1]} : vector<8x96xf32> to vector<8x32xf32>
    %965 = vector.extract_strided_slice %947 {offsets = [0, 64], sizes = [8, 32], strides = [1, 1]} : vector<8x96xf32> to vector<8x32xf32>
    %c0_557 = arith.constant 0 : index
    %c0_558 = arith.constant 0 : index
    %966 = vector.load %arg25[%c0_557, %c0_558] : memref<1x32xf32, #tpu.memory_space<vmem>>, vector<1x32xf32>
    %967 = vector.broadcast %966 : vector<1x32xf32> to vector<8x32xf32>
    %968 = arith.addf %965, %967 : vector<8x32xf32>
    %969 = arith.mulf %955, %968 : vector<8x32xf32>
    %970 = arith.addf %964, %969 : vector<8x32xf32>
    %971 = math.tanh %970 : vector<8x32xf32>
    %cst_559 = arith.constant 1.000000e+00 : f32
    %972 = vector.broadcast %cst_559 : f32 to vector<8x32xf32>
    %973 = arith.subf %972, %963 : vector<8x32xf32>
    %974 = arith.mulf %973, %971 : vector<8x32xf32>
    %975 = arith.mulf %963, %897 : vector<8x32xf32>
    %976 = arith.addf %974, %975 : vector<8x32xf32>
    %977 = arith.truncf %976 : vector<8x32xf32> to vector<8x32xbf16>
    %c0_560 = arith.constant 0 : index
    %c0_561 = arith.constant 0 : index
    %978 = vector.load %arg26[%c0_560, %c0_561] : memref<32x128xbf16, #tpu.memory_space<vmem>>, vector<32x128xbf16>
    %cst_562 = arith.constant dense<0.000000e+00> : vector<8x128xf32>
    %979 = tpu.matmul %977, %978, %cst_562 {dimension_numbers = #tpu.dot_dimension_numbers<[1], [0], [0], [1], [0, 0, 1, 1], [], []>} : vector<8x32xbf16>, vector<32x128xbf16>, vector<8x128xf32> -> vector<8x128xf32>
    %980 = arith.truncf %926 : vector<8x32xf32> to vector<8x32xbf16>
    %c0_563 = arith.constant 0 : index
    %c0_564 = arith.constant 0 : index
    %981 = vector.load %arg27[%c0_563, %c0_564] : memref<32x128xbf16, #tpu.memory_space<vmem>>, vector<32x128xbf16>
    %cst_565 = arith.constant dense<0.000000e+00> : vector<8x128xf32>
    %982 = tpu.matmul %980, %981, %cst_565 {dimension_numbers = #tpu.dot_dimension_numbers<[1], [0], [0], [1], [0, 0, 1, 1], [], []>} : vector<8x32xbf16>, vector<32x128xbf16>, vector<8x128xf32> -> vector<8x128xf32>
    %983 = arith.addf %979, %982 : vector<8x128xf32>
    %984 = arith.truncf %930 : vector<8x32xf32> to vector<8x32xbf16>
    %c0_566 = arith.constant 0 : index
    %c0_567 = arith.constant 0 : index
    %985 = vector.load %arg28[%c0_566, %c0_567] : memref<32x128xbf16, #tpu.memory_space<vmem>>, vector<32x128xbf16>
    %cst_568 = arith.constant dense<0.000000e+00> : vector<8x128xf32>
    %986 = tpu.matmul %984, %985, %cst_568 {dimension_numbers = #tpu.dot_dimension_numbers<[1], [0], [0], [1], [0, 0, 1, 1], [], []>} : vector<8x32xbf16>, vector<32x128xbf16>, vector<8x128xf32> -> vector<8x128xf32>
    %987 = arith.addf %983, %986 : vector<8x128xf32>
    %988 = arith.truncf %901 : vector<8x32xf32> to vector<8x32xbf16>
    %c0_569 = arith.constant 0 : index
    %c0_570 = arith.constant 0 : index
    %989 = vector.load %arg29[%c0_569, %c0_570] : memref<32x128xbf16, #tpu.memory_space<vmem>>, vector<32x128xbf16>
    %cst_571 = arith.constant dense<0.000000e+00> : vector<8x128xf32>
    %990 = tpu.matmul %988, %989, %cst_571 {dimension_numbers = #tpu.dot_dimension_numbers<[1], [0], [0], [1], [0, 0, 1, 1], [], []>} : vector<8x32xbf16>, vector<32x128xbf16>, vector<8x128xf32> -> vector<8x128xf32>
    %991 = arith.addf %987, %990 : vector<8x128xf32>
    %c0_572 = arith.constant 0 : index
    %c0_573 = arith.constant 0 : index
    %992 = vector.load %arg30[%c0_572, %c0_573] : memref<1x128xf32, #tpu.memory_space<vmem>>, vector<1x128xf32>
    %993 = vector.broadcast %992 : vector<1x128xf32> to vector<8x128xf32>
    %994 = arith.addf %991, %993 : vector<8x128xf32>
    %c0_i32_574 = arith.constant 0 : i32
    %c2_i32_575 = arith.constant 2 : i32
    %c0_i32_576 = arith.constant 0 : i32
    %c0_i32_577 = arith.constant 0 : i32
    %c0_i32_578 = arith.constant 0 : i32
    %995 = tpu.memref_slice %arg41[%c0_i32_574, %c0_i32_577, %c0_i32_578] : memref<2x8x128xf32, #tpu.memory_space<vmem>> -> memref<1x8x128xf32, #tpu.memory_space<vmem>>
    %996 = tpu.memref_squeeze %995 : memref<1x8x128xf32, #tpu.memory_space<vmem>> -> memref<8x128xf32, #tpu.memory_space<vmem>>
    %c0_i32_579 = arith.constant 0 : i32
    %c0_i32_580 = arith.constant 0 : i32
    %997 = tpu.memref_slice %arg31[%c2_i32_575, %c0_i32_579, %c0_i32_580] : memref<5x8x128xf32, #tpu.memory_space<any>> -> memref<1x8x128xf32, #tpu.memory_space<any>>
    %998 = tpu.memref_squeeze %997 : memref<1x8x128xf32, #tpu.memory_space<any>> -> memref<8x128xf32, #tpu.memory_space<any>>
    %999 = tpu.memref_slice %arg42[%c0_i32_576] : memref<2x!tpu.dma_semaphore, #tpu.memory_space<semaphore_mem>> -> memref<1x!tpu.dma_semaphore, #tpu.memory_space<semaphore_mem>>
    %1000 = tpu.memref_squeeze %999 : memref<1x!tpu.dma_semaphore, #tpu.memory_space<semaphore_mem>> -> memref<!tpu.dma_semaphore, #tpu.memory_space<semaphore_mem>>
    tpu.wait_dma2 semaphore(%1000 : memref<!tpu.dma_semaphore, #tpu.memory_space<semaphore_mem>>) src(%996 : memref<8x128xf32, #tpu.memory_space<vmem>>) dst(%998 : memref<8x128xf32, #tpu.memory_space<any>>)
    %c0_581 = arith.constant 0 : index
    %c0_582 = arith.constant 0 : index
    %c0_583 = arith.constant 0 : index
    %1001 = vector.load %arg41[%c0_581, %c0_582, %c0_583] : memref<2x8x128xf32, #tpu.memory_space<vmem>>, vector<1x8x128xf32>
    %1002 = vector.shape_cast %1001 : vector<1x8x128xf32> to vector<8x128xf32>
    %1003 = vector.shape_cast %994 : vector<8x128xf32> to vector<1x8x128xf32>
    tpu.vector_store %arg41[%c0_581, %c0_582, %c0_583], %1003 {strides = array<i32>} : memref<2x8x128xf32, #tpu.memory_space<vmem>>, vector<1x8x128xf32>,
    %c0_i32_584 = arith.constant 0 : i32
    %c4_i32 = arith.constant 4 : i32
    %c0_i32_585 = arith.constant 0 : i32
    %c0_i32_586 = arith.constant 0 : i32
    %c0_i32_587 = arith.constant 0 : i32
    %1004 = tpu.memref_slice %arg41[%c0_i32_584, %c0_i32_586, %c0_i32_587] : memref<2x8x128xf32, #tpu.memory_space<vmem>> -> memref<1x8x128xf32, #tpu.memory_space<vmem>>
    %1005 = tpu.memref_squeeze %1004 : memref<1x8x128xf32, #tpu.memory_space<vmem>> -> memref<8x128xf32, #tpu.memory_space<vmem>>
    %c0_i32_588 = arith.constant 0 : i32
    %c0_i32_589 = arith.constant 0 : i32
    %1006 = tpu.memref_slice %arg31[%c4_i32, %c0_i32_588, %c0_i32_589] : memref<5x8x128xf32, #tpu.memory_space<any>> -> memref<1x8x128xf32, #tpu.memory_space<any>>
    %1007 = tpu.memref_squeeze %1006 : memref<1x8x128xf32, #tpu.memory_space<any>> -> memref<8x128xf32, #tpu.memory_space<any>>
    %1008 = tpu.memref_slice %arg42[%c0_i32_585] : memref<2x!tpu.dma_semaphore, #tpu.memory_space<semaphore_mem>> -> memref<1x!tpu.dma_semaphore, #tpu.memory_space<semaphore_mem>>
    %1009 = tpu.memref_squeeze %1008 : memref<1x!tpu.dma_semaphore, #tpu.memory_space<semaphore_mem>> -> memref<!tpu.dma_semaphore, #tpu.memory_space<semaphore_mem>>
    tpu.enqueue_dma source(%1005 : memref<8x128xf32, #tpu.memory_space<vmem>>) target(%1007 : memref<8x128xf32, #tpu.memory_space<any>>) target_semaphore(%1009 : memref<!tpu.dma_semaphore, #tpu.memory_space<semaphore_mem>>)
    %c4_590 = arith.constant 4 : index
    %1010 = memref.load %arg0[%c4_590] : memref<5xi32, #tpu.memory_space<smem>>
    %c0_i32_591 = arith.constant 0 : i32
    %1011 = arith.cmpi ne, %1010, %c0_i32_591 : i32
    %1012 = arith.extui %1011 : i1 to i32
    %c0_i32_592 = arith.constant 0 : i32
    %1013 = arith.cmpi ne, %1012, %c0_i32_592 : i32
    scf.if %1013 {
      %c4_612 = arith.constant 4 : index
      %c0_613 = arith.constant 0 : index
      %c0_614 = arith.constant 0 : index
      %1031 = vector.load %arg1[%c4_612, %c0_613, %c0_614] : memref<5x8x1xi32, #tpu.memory_space<vmem>>, vector<1x8x1xi32>
      %1032 = vector.shape_cast %1031 : vector<1x8x1xi32> to vector<8x1xi32>
      %1033 = vector.broadcast %1032 : vector<8x1xi32> to vector<8x128xi32>
      %1034 = arith.cmpi eq, %519, %1033 : vector<8x128xi32>
      %1035 = arith.extui %1034 : vector<8x128xi1> to vector<8x128xi32>
      %1036 = arith.sitofp %1035 : vector<8x128xi32> to vector<8x128xf32>
      %c0_615 = arith.constant 0 : index
      %c0_616 = arith.constant 0 : index
      %1037 = vector.load %arg40[%c0_615, %c0_616] : memref<8x128xf32, #tpu.memory_space<vmem>>, vector<8x128xf32>
      tpu.vector_store %arg40[%c0_615, %c0_616], %1036 {strides = array<i32>} : memref<8x128xf32, #tpu.memory_space<vmem>>, vector<8x128xf32>,
    } else {
    }
    %c4_593 = arith.constant 4 : index
    %1014 = memref.load %arg0[%c4_593] : memref<5xi32, #tpu.memory_space<smem>>
    %c0_i32_594 = arith.constant 0 : i32
    %1015 = arith.cmpi eq, %1014, %c0_i32_594 : i32
    %1016 = arith.extui %1015 : i1 to i32
    %c0_i32_595 = arith.constant 0 : i32
    %1017 = arith.cmpi ne, %1016, %c0_i32_595 : i32
    scf.if %1017 {
      %cst_612 = arith.constant dense<0xFF800000> : vector<8xf32>
      %1031 = vector.multi_reduction <maximumf>, %994, %cst_612 [1] : vector<8x128xf32> to vector<8xf32>
      %1032 = vector.shape_cast %1031 : vector<8xf32> to vector<8x1xf32>
      %1033 = vector.broadcast %1032 : vector<8x1xf32> to vector<8x128xf32>
      %1034 = arith.cmpf oeq, %994, %1033 : vector<8x128xf32>
      %c128_i32 = arith.constant 128 : i32
      %1035 = vector.broadcast %c128_i32 : i32 to vector<8x128xi32>
      %1036 = arith.select %1034, %519, %1035 : vector<8x128xi1>, vector<8x128xi32>
      %cst_613 = arith.constant dense<2147483647> : vector<8xi32>
      %1037 = vector.multi_reduction <minsi>, %1036, %cst_613 [1] : vector<8x128xi32> to vector<8xi32>
      %1038 = vector.shape_cast %1037 : vector<8xi32> to vector<8x1xi32>
      %1039 = vector.broadcast %1038 : vector<8x1xi32> to vector<8x128xi32>
      %1040 = arith.cmpi eq, %519, %1039 : vector<8x128xi32>
      %1041 = arith.extui %1040 : vector<8x128xi1> to vector<8x128xi32>
      %1042 = arith.sitofp %1041 : vector<8x128xi32> to vector<8x128xf32>
      %c0_614 = arith.constant 0 : index
      %c0_615 = arith.constant 0 : index
      %1043 = vector.load %arg40[%c0_614, %c0_615] : memref<8x128xf32, #tpu.memory_space<vmem>>, vector<8x128xf32>
      tpu.vector_store %arg40[%c0_614, %c0_615], %1042 {strides = array<i32>} : memref<8x128xf32, #tpu.memory_space<vmem>>, vector<8x128xf32>,
    } else {
    }
    %c0_596 = arith.constant 0 : index
    %c0_597 = arith.constant 0 : index
    %1018 = vector.load %arg39[%c0_596, %c0_597] : memref<8x32xf32, #tpu.memory_space<vmem>>, vector<8x32xf32>
    tpu.vector_store %arg39[%c0_596, %c0_597], %976 {strides = array<i32>} : memref<8x32xf32, #tpu.memory_space<vmem>>, vector<8x32xf32>,
    %c1_i32_598 = arith.constant 1 : i32
    %c3_i32_599 = arith.constant 3 : i32
    %c1_i32_600 = arith.constant 1 : i32
    %c0_i32_601 = arith.constant 0 : i32
    %c0_i32_602 = arith.constant 0 : i32
    %1019 = tpu.memref_slice %arg41[%c1_i32_598, %c0_i32_601, %c0_i32_602] : memref<2x8x128xf32, #tpu.memory_space<vmem>> -> memref<1x8x128xf32, #tpu.memory_space<vmem>>
    %1020 = tpu.memref_squeeze %1019 : memref<1x8x128xf32, #tpu.memory_space<vmem>> -> memref<8x128xf32, #tpu.memory_space<vmem>>
    %c0_i32_603 = arith.constant 0 : i32
    %c0_i32_604 = arith.constant 0 : i32
    %1021 = tpu.memref_slice %arg31[%c3_i32_599, %c0_i32_603, %c0_i32_604] : memref<5x8x128xf32, #tpu.memory_space<any>> -> memref<1x8x128xf32, #tpu.memory_space<any>>
    %1022 = tpu.memref_squeeze %1021 : memref<1x8x128xf32, #tpu.memory_space<any>> -> memref<8x128xf32, #tpu.memory_space<any>>
    %1023 = tpu.memref_slice %arg42[%c1_i32_600] : memref<2x!tpu.dma_semaphore, #tpu.memory_space<semaphore_mem>> -> memref<1x!tpu.dma_semaphore, #tpu.memory_space<semaphore_mem>>
    %1024 = tpu.memref_squeeze %1023 : memref<1x!tpu.dma_semaphore, #tpu.memory_space<semaphore_mem>> -> memref<!tpu.dma_semaphore, #tpu.memory_space<semaphore_mem>>
    tpu.wait_dma2 semaphore(%1024 : memref<!tpu.dma_semaphore, #tpu.memory_space<semaphore_mem>>) src(%1020 : memref<8x128xf32, #tpu.memory_space<vmem>>) dst(%1022 : memref<8x128xf32, #tpu.memory_space<any>>)
    %c0_i32_605 = arith.constant 0 : i32
    %c4_i32_606 = arith.constant 4 : i32
    %c0_i32_607 = arith.constant 0 : i32
    %c0_i32_608 = arith.constant 0 : i32
    %c0_i32_609 = arith.constant 0 : i32
    %1025 = tpu.memref_slice %arg41[%c0_i32_605, %c0_i32_608, %c0_i32_609] : memref<2x8x128xf32, #tpu.memory_space<vmem>> -> memref<1x8x128xf32, #tpu.memory_space<vmem>>
    %1026 = tpu.memref_squeeze %1025 : memref<1x8x128xf32, #tpu.memory_space<vmem>> -> memref<8x128xf32, #tpu.memory_space<vmem>>
    %c0_i32_610 = arith.constant 0 : i32
    %c0_i32_611 = arith.constant 0 : i32
    %1027 = tpu.memref_slice %arg31[%c4_i32_606, %c0_i32_610, %c0_i32_611] : memref<5x8x128xf32, #tpu.memory_space<any>> -> memref<1x8x128xf32, #tpu.memory_space<any>>
    %1028 = tpu.memref_squeeze %1027 : memref<1x8x128xf32, #tpu.memory_space<any>> -> memref<8x128xf32, #tpu.memory_space<any>>
    %1029 = tpu.memref_slice %arg42[%c0_i32_607] : memref<2x!tpu.dma_semaphore, #tpu.memory_space<semaphore_mem>> -> memref<1x!tpu.dma_semaphore, #tpu.memory_space<semaphore_mem>>
    %1030 = tpu.memref_squeeze %1029 : memref<1x!tpu.dma_semaphore, #tpu.memory_space<semaphore_mem>> -> memref<!tpu.dma_semaphore, #tpu.memory_space<semaphore_mem>>
    tpu.wait_dma2 semaphore(%1030 : memref<!tpu.dma_semaphore, #tpu.memory_space<semaphore_mem>>) src(%1026 : memref<8x128xf32, #tpu.memory_space<vmem>>) dst(%1028 : memref<8x128xf32, #tpu.memory_space<any>>)
    return
  }
}

</mosaic_0001>

<llo_original>
// kernel: tpu_custom_call.1
$region0: #{tpu_custom_call.1}
  #allocation0 [shape = 'u32[]', space=smem, size = 0x4, offset = 0x4, fixed_abs, tag = 'smem constant byte address 0x4 - core index']
  #allocation1 [shape = 'u32[144,128]{1,0:T(1,128)}', space=vmem, size = 0x12000, scoped, tag = 'internal scratch']
  #allocation2 [shape = 'f32[8,32]{1,0:T(8,128)}', space=vmem, size = 0x1000, scoped, tag = 'scratch operand']
  #allocation3 [shape = 'f32[8,32]{1,0:T(8,128)}', space=vmem, size = 0x1000, scoped, tag = 'scratch operand']
  #allocation4 [shape = 'f32[6,8,32]{2,1,0:T(8,128)}', space=vmem, size = 0x6000, scoped, tag = 'scratch operand']
  #allocation5 [shape = 'f32[6,8,32]{2,1,0:T(8,128)}', space=vmem, size = 0x6000, scoped, tag = 'scratch operand']
  #allocation6 [shape = 'f32[6,8,96]{2,1,0:T(8,128)}', space=vmem, size = 0x6000, scoped, tag = 'scratch operand']
  #allocation7 [shape = 'f32[6,8,96]{2,1,0:T(8,128)}', space=vmem, size = 0x6000, scoped, tag = 'scratch operand']
  #allocation8 [shape = 'f32[6,8,32]{2,1,0:T(8,128)}', space=vmem, size = 0x6000, scoped, tag = 'scratch operand']
  #allocation9 [shape = 'f32[8,32]{1,0:T(8,128)}', space=vmem, size = 0x1000, scoped, tag = 'scratch operand']
  #allocation10 [shape = 'f32[8,128]{1,0:T(8,128)}', space=vmem, size = 0x1000, scoped, tag = 'scratch operand']
  #allocation11 [shape = 'f32[2,8,128]{2,1,0:T(8,128)}', space=vmem, size = 0x2000, scoped, tag = 'scratch operand']
  #allocation12 [shape = 's32[2]{0}', space=sflag, size = 0x8, scoped, tag = 'scratch operand']
  #allocation28 [shape = 's32[]', space=sflag, size = 0x4, offset = 0, fixed_abs, tag = 'sflag constant byte address 0x0 - dummy sync flag']
  #allocation29 [shape = 's32[]', space=sflag, size = 0x4, offset = 0, fixed_abs, tag = 'sflag constant byte address 0x0 - dummy sync flag']
  #allocation30 [shape = 'u32[]', space=smem, size = 0x4, offset = 0x44, fixed_abs, tag = 'smem constant byte address 0x44 - assertion arg 0']
  #allocation31 [shape = 'u32[]', space=smem, size = 0x4, offset = 0x48, fixed_abs, tag = 'smem constant byte address 0x48 - assertion arg 1']
  #allocation32 [shape = 's32[]', space=sflag, size = 0x4, offset = 0, fixed_abs, tag = 'sflag constant byte address 0x0 - dummy sync flag']
  #allocation33 [shape = 's32[]', space=sflag, size = 0x4, offset = 0, fixed_abs, tag = 'sflag constant byte address 0x0 - dummy sync flag']
  #allocation34 [shape = 's32[]', space=sflag, size = 0x4, offset = 0, fixed_abs, tag = 'sflag constant byte address 0x0 - dummy sync flag']
  #allocation35 [shape = 's32[]', space=sflag, size = 0x4, offset = 0, fixed_abs, tag = 'sflag constant byte address 0x0 - dummy sync flag']
  #allocation36 [shape = 's32[]', space=sflag, size = 0x4, offset = 0, fixed_abs, tag = 'sflag constant byte address 0x0 - dummy sync flag']
  #allocation37 [shape = 's32[]', space=sflag, size = 0x4, offset = 0, fixed_abs, tag = 'sflag constant byte address 0x0 - dummy sync flag']
  #allocation38 [shape = 's32[]', space=sflag, size = 0x4, offset = 0, fixed_abs, tag = 'sflag constant byte address 0x0 - dummy sync flag']
  #allocation39 [shape = 's32[]', space=sflag, size = 0x4, offset = 0, fixed_abs, tag = 'sflag constant byte address 0x0 - dummy sync flag']
  %s0 = inlined_call_operand.smem [shape: u32[32], index: -1, kind: input, shape index: {}]
  %s1 = sld [smem:[%s0]]
  %s2 = scalar_lea.smem %s0, 1
  %s3 = sld [smem:[%s2]]
  %s4 = scalar_lea.smem %s0, 2
  %s5 = sld [smem:[%s4]]
  %s6 = scalar_lea.smem %s0, 3
  %s7 = sld [smem:[%s6]]
  %s8 = scalar_lea.smem %s0, 4
  %s9 = sld [smem:[%s8]]
  %s10 = scalar_lea.smem %s0, 5
  %s11 = sld [smem:[%s10]]
  %s12 = scalar_lea.smem %s0, 6
  %s13 = sld [smem:[%s12]]
  %s14 = scalar_lea.smem %s0, 7
  %s15 = sld [smem:[%s14]]
  %s16 = scalar_lea.smem %s0, 8
  %s17 = sld [smem:[%s16]]
  %s18 = scalar_lea.smem %s0, 9
  %s19 = sld [smem:[%s18]]
  %s20 = scalar_lea.smem %s0, 10
  %s21 = sld [smem:[%s20]]
  %s22 = scalar_lea.smem %s0, 11
  %s23 = sld [smem:[%s22]]
  %s24 = scalar_lea.smem %s0, 12
  %s25 = sld [smem:[%s24]]
  %s26 = scalar_lea.smem %s0, 13
  %s27 = sld [smem:[%s26]]
  %s28 = scalar_lea.smem %s0, 14
  %s29 = sld [smem:[%s28]]
  %s30 = scalar_lea.smem %s0, 15
  %s31 = sld [smem:[%s30]]
  %s32 = scalar_lea.smem %s0, 16
  %s33 = sld [smem:[%s32]]
  %s34 = scalar_lea.smem %s0, 17
  %s35 = sld [smem:[%s34]]
  %s36 = scalar_lea.smem %s0, 18
  %s37 = sld [smem:[%s36]]
  %s38 = scalar_lea.smem %s0, 19
  %s39 = sld [smem:[%s38]]
  %s40 = scalar_lea.smem %s0, 20
  %s41 = sld [smem:[%s40]]
  %s42 = scalar_lea.smem %s0, 21
  %s43 = sld [smem:[%s42]]
  %s44 = scalar_lea.smem %s0, 22
  %s45 = sld [smem:[%s44]]
  %s46 = scalar_lea.smem %s0, 23
  %s47 = sld [smem:[%s46]]
  %s48 = scalar_lea.smem %s0, 24
  %s49 = sld [smem:[%s48]]
  %s50 = scalar_lea.smem %s0, 25
  %s51 = sld [smem:[%s50]]
  %s52 = scalar_lea.smem %s0, 26
  %s53 = sld [smem:[%s52]]
  %s54 = scalar_lea.smem %s0, 27
  %s55 = sld [smem:[%s54]]
  %s56 = scalar_lea.smem %s0, 28
  %s57 = sld [smem:[%s56]]
  %s58 = scalar_lea.smem %s0, 29
  %s59 = sld [smem:[%s58]]
  %s60 = scalar_lea.smem %s0, 30
  %s61 = sld [smem:[%s60]]
  %s62 = scalar_lea.smem %s0, 31
  %s63 = sld [smem:[%s62]]
  %s64 = sld [smem:[#allocation0]]
  $region214: #{tpu_custom_call.1} parent=0
    _
  %s66 = ssub.s32 1, %s64
  %s67 = scalar_select 0, %s66, %s64
  $region1: #{tpu_custom_call.1} parent=0
    #allocation13 [shape = 'u8[512]{0}', space=smem, size = 0x200, scoped, tag = 'input window, operand 0, single buffered']
    #allocation14 [shape = 's32[1]{0}', space=sflag, size = 0x4, scoped, tag = 'scoped memory for tpu_custom_call.1']
    #allocation15 [shape = 's32[1]{0}', space=sflag, size = 0x4, scoped, tag = 'scoped memory for tpu_custom_call.1']
    #allocation16 [shape = 'u8[512]{0}', space=vmem, size = 0x400, scoped, tag = 'input window, operand 5, single buffered']
    #allocation17 [shape = 'u8[512]{0}', space=vmem, size = 0x400, scoped, tag = 'input window, operand 6, single buffered']
    #allocation18 [shape = 's32[1]{0}', space=sflag, size = 0x4, scoped, tag = 'scoped memory for tpu_custom_call.1']
    #allocation19 [shape = 'u8[512]{0}', space=vmem, size = 0x400, scoped, tag = 'input window, operand 9, single buffered']
    #allocation20 [shape = 'u8[512]{0}', space=vmem, size = 0x400, scoped, tag = 'input window, operand 10, single buffered']
    #allocation21 [shape = 's32[1]{0}', space=sflag, size = 0x4, scoped, tag = 'scoped memory for tpu_custom_call.1']
    #allocation22 [shape = 'u8[512]{0}', space=vmem, size = 0x400, scoped, tag = 'input window, operand 13, single buffered']
    #allocation23 [shape = 'u8[512]{0}', space=vmem, size = 0x400, scoped, tag = 'input window, operand 18, single buffered']
    #allocation24 [shape = 's32[1]{0}', space=sflag, size = 0x4, scoped, tag = 'scoped memory for tpu_custom_call.1']
    #allocation25 [shape = 'u8[512]{0}', space=vmem, size = 0x400, scoped, tag = 'input window, operand 19, single buffered']
    #allocation26 [shape = 'u8[8192]{0}', space=vmem, size = 0x2000, scoped, tag = 'input window, operand 28, single buffered']
    #allocation27 [shape = 's32[1]{0}', space=sflag, size = 0x4, scoped, tag = 'scoped memory for tpu_custom_call.1']
    %68 = vsyncpa [#allocation15], 0
    %69 = vsyncpa [#allocation14], 0
    %70 = vsyncpa [#allocation18], 0
    %71 = vsyncpa [#allocation21], 0
    %72 = vsyncpa [#allocation24], 0
    %73 = vsyncpa [#allocation27], 0
    // Predicated region
    $region2: #{tpu_custom_call.1} parent=1 // pred_check
      _
    $region3: #{tpu_custom_call.1} parent=1 // pred_check_branch
      %75 = sbr.rel (0) target = $region5
    $region4: #{tpu_custom_call.1} parent=1 // pred_region
      %s77 = ssub.s32 16, 16
      %78 = vsyncadd [#allocation15], %s77
      %81 = dma.hbm_to_smem %s1, 16, [#allocation13], [#allocation15]
    $region5: #{tpu_custom_call.1} parent=1 // pred_fallthru
      _
    // Predicated region
    $region6: #{tpu_custom_call.1} parent=1 // pred_check
      _
    $region7: #{tpu_custom_call.1} parent=1 // pred_check_branch
      %83 = sbr.rel (0) target = $region9
    $region8: #{tpu_custom_call.1} parent=1 // pred_region
      _
    $region9: #{tpu_custom_call.1} parent=1 // pred_fallthru
      _
    // Predicated region
    $region10: #{tpu_custom_call.1} parent=1 // pred_check
      _
    $region11: #{tpu_custom_call.1} parent=1 // pred_check_branch
      %85 = sbr.rel (0) target = $region13
    $region12: #{tpu_custom_call.1} parent=1 // pred_region
      _
    $region13: #{tpu_custom_call.1} parent=1 // pred_fallthru
      _
    // Predicated region
    $region14: #{tpu_custom_call.1} parent=1 // pred_check
      _
    $region15: #{tpu_custom_call.1} parent=1 // pred_check_branch
      %87 = sbr.rel (0) target = $region17
    $region16: #{tpu_custom_call.1} parent=1 // pred_region
      _
    $region17: #{tpu_custom_call.1} parent=1 // pred_fallthru
      _
    // Predicated region
    $region18: #{tpu_custom_call.1} parent=1 // pred_check
      _
    $region19: #{tpu_custom_call.1} parent=1 // pred_check_branch
      %89 = sbr.rel (0) target = $region21
    $region20: #{tpu_custom_call.1} parent=1 // pred_region
      _
    $region21: #{tpu_custom_call.1} parent=1 // pred_fallthru
      _
    // Predicated region
    $region22: #{tpu_custom_call.1} parent=1 // pred_check
      _
    $region23: #{tpu_custom_call.1} parent=1 // pred_check_branch
      %91 = sbr.rel (0) target = $region25
    $region24: #{tpu_custom_call.1} parent=1 // pred_region
      %s93 = ssub.s32 16, 16
      %94 = vsyncadd [#allocation14], %s93
      %s96 = sshll.u32 [#allocation16], 4
      %s97 = int_to_ptr.vmem [resolvable:$true] %s96
      %99 = dma.hbm_to_vmem [thread:$0]  %s11, 16, %s97, [#allocation14]
    $region25: #{tpu_custom_call.1} parent=1 // pred_fallthru
      _
    // Predicated region
    $region26: #{tpu_custom_call.1} parent=1 // pred_check
      _
    $region27: #{tpu_custom_call.1} parent=1 // pred_check_branch
      %101 = sbr.rel (0) target = $region29
    $region28: #{tpu_custom_call.1} parent=1 // pred_region
      %s103 = ssub.s32 16, 16
      %104 = vsyncadd [#allocation18], %s103
      %s106 = sshll.u32 [#allocation17], 4
      %s107 = int_to_ptr.vmem [resolvable:$true] %s106
      %109 = dma.hbm_to_vmem [thread:$0]  %s13, 16, %s107, [#allocation18]
    $region29: #{tpu_custom_call.1} parent=1 // pred_fallthru
      _
    // Predicated region
    $region30: #{tpu_custom_call.1} parent=1 // pred_check
      _
    $region31: #{tpu_custom_call.1} parent=1 // pred_check_branch
      %111 = sbr.rel (0) target = $region33
    $region32: #{tpu_custom_call.1} parent=1 // pred_region
      _
    $region33: #{tpu_custom_call.1} parent=1 // pred_fallthru
      _
    // Predicated region
    $region34: #{tpu_custom_call.1} parent=1 // pred_check
      _
    $region35: #{tpu_custom_call.1} parent=1 // pred_check_branch
      %113 = sbr.rel (0) target = $region37
    $region36: #{tpu_custom_call.1} parent=1 // pred_region
      _
    $region37: #{tpu_custom_call.1} parent=1 // pred_fallthru
      _
    // Predicated region
    $region38: #{tpu_custom_call.1} parent=1 // pred_check
      _
    $region39: #{tpu_custom_call.1} parent=1 // pred_check_branch
      %115 = sbr.rel (0) target = $region41
    $region40: #{tpu_custom_call.1} parent=1 // pred_region
      %s117 = ssub.s32 16, 16
      %118 = vsyncadd [#allocation18], %s117
      %s120 = sshll.u32 [#allocation19], 4
      %s121 = int_to_ptr.vmem [resolvable:$true] %s120
      %123 = dma.hbm_to_vmem [thread:$0]  %s19, 16, %s121, [#allocation18]
    $region41: #{tpu_custom_call.1} parent=1 // pred_fallthru
      _
    // Predicated region
    $region42: #{tpu_custom_call.1} parent=1 // pred_check
      _
    $region43: #{tpu_custom_call.1} parent=1 // pred_check_branch
      %125 = sbr.rel (0) target = $region45
    $region44: #{tpu_custom_call.1} parent=1 // pred_region
      %s127 = ssub.s32 16, 16
      %128 = vsyncadd [#allocation21], %s127
      %s130 = sshll.u32 [#allocation20], 4
      %s131 = int_to_ptr.vmem [resolvable:$true] %s130
      %133 = dma.hbm_to_vmem [thread:$0]  %s21, 16, %s131, [#allocation21]
    $region45: #{tpu_custom_call.1} parent=1 // pred_fallthru
      _
    // Predicated region
    $region46: #{tpu_custom_call.1} parent=1 // pred_check
      _
    $region47: #{tpu_custom_call.1} parent=1 // pred_check_branch
      %135 = sbr.rel (0) target = $region49
    $region48: #{tpu_custom_call.1} parent=1 // pred_region
      _
    $region49: #{tpu_custom_call.1} parent=1 // pred_fallthru
      _
    // Predicated region
    $region50: #{tpu_custom_call.1} parent=1 // pred_check
      _
    $region51: #{tpu_custom_call.1} parent=1 // pred_check_branch
      %137 = sbr.rel (0) target = $region53
    $region52: #{tpu_custom_call.1} parent=1 // pred_region
      _
    $region53: #{tpu_custom_call.1} parent=1 // pred_fallthru
      _
    // Predicated region
    $region54: #{tpu_custom_call.1} parent=1 // pred_check
      _
    $region55: #{tpu_custom_call.1} parent=1 // pred_check_branch
      %139 = sbr.rel (0) target = $region57
    $region56: #{tpu_custom_call.1} parent=1 // pred_region
      %s141 = ssub.s32 16, 16
      %142 = vsyncadd [#allocation21], %s141
      %s144 = sshll.u32 [#allocation22], 4
      %s145 = int_to_ptr.vmem [resolvable:$true] %s144
      %147 = dma.hbm_to_vmem [thread:$0]  %s27, 16, %s145, [#allocation21]
    $region57: #{tpu_custom_call.1} parent=1 // pred_fallthru
      _
    // Predicated region
    $region58: #{tpu_custom_call.1} parent=1 // pred_check
      _
    $region59: #{tpu_custom_call.1} parent=1 // pred_check_branch
      %149 = sbr.rel (0) target = $region61
    $region60: #{tpu_custom_call.1} parent=1 // pred_region
      _
    $region61: #{tpu_custom_call.1} parent=1 // pred_fallthru
      _
    // Predicated region
    $region62: #{tpu_custom_call.1} parent=1 // pred_check
      _
    $region63: #{tpu_custom_call.1} parent=1 // pred_check_branch
      %151 = sbr.rel (0) target = $region65
    $region64: #{tpu_custom_call.1} parent=1 // pred_region
      _
    $region65: #{tpu_custom_call.1} parent=1 // pred_fallthru
      _
    // Predicated region
    $region66: #{tpu_custom_call.1} parent=1 // pred_check
      _
    $region67: #{tpu_custom_call.1} parent=1 // pred_check_branch
      %153 = sbr.rel (0) target = $region69
    $region68: #{tpu_custom_call.1} parent=1 // pred_region
      _
    $region69: #{tpu_custom_call.1} parent=1 // pred_fallthru
      _
    // Predicated region
    $region70: #{tpu_custom_call.1} parent=1 // pred_check
      _
    $region71: #{tpu_custom_call.1} parent=1 // pred_check_branch
      %155 = sbr.rel (0) target = $region73
    $region72: #{tpu_custom_call.1} parent=1 // pred_region
      _
    $region73: #{tpu_custom_call.1} parent=1 // pred_fallthru
      _
    // Predicated region
    $region74: #{tpu_custom_call.1} parent=1 // pred_check
      _
    $region75: #{tpu_custom_call.1} parent=1 // pred_check_branch
      %157 = sbr.rel (0) target = $region77
    $region76: #{tpu_custom_call.1} parent=1 // pred_region
      %s159 = ssub.s32 16, 16
      %160 = vsyncadd [#allocation24], %s159
      %s162 = sshll.u32 [#allocation23], 4
      %s163 = int_to_ptr.vmem [resolvable:$true] %s162
      %165 = dma.hbm_to_vmem [thread:$0]  %s37, 16, %s163, [#allocation24]
    $region77: #{tpu_custom_call.1} parent=1 // pred_fallthru
      _
    // Predicated region
    $region78: #{tpu_custom_call.1} parent=1 // pred_check
      _
    $region79: #{tpu_custom_call.1} parent=1 // pred_check_branch
      %167 = sbr.rel (0) target = $region81
    $region80: #{tpu_custom_call.1} parent=1 // pred_region
      %s169 = ssub.s32 16, 16
      %170 = vsyncadd [#allocation24], %s169
      %s172 = sshll.u32 [#allocation25], 4
      %s173 = int_to_ptr.vmem [resolvable:$true] %s172
      %175 = dma.hbm_to_vmem [thread:$0]  %s39, 16, %s173, [#allocation24]
    $region81: #{tpu_custom_call.1} parent=1 // pred_fallthru
      _
    // Predicated region
    $region82: #{tpu_custom_call.1} parent=1 // pred_check
      _
    $region83: #{tpu_custom_call.1} parent=1 // pred_check_branch
      %177 = sbr.rel (0) target = $region85
    $region84: #{tpu_custom_call.1} parent=1 // pred_region
      _
    $region85: #{tpu_custom_call.1} parent=1 // pred_fallthru
      _
    // Predicated region
    $region86: #{tpu_custom_call.1} parent=1 // pred_check
      _
    $region87: #{tpu_custom_call.1} parent=1 // pred_check_branch
      %179 = sbr.rel (0) target = $region89
    $region88: #{tpu_custom_call.1} parent=1 // pred_region
      _
    $region89: #{tpu_custom_call.1} parent=1 // pred_fallthru
      _
    // Predicated region
    $region90: #{tpu_custom_call.1} parent=1 // pred_check
      _
    $region91: #{tpu_custom_call.1} parent=1 // pred_check_branch
      %181 = sbr.rel (0) target = $region93
    $region92: #{tpu_custom_call.1} parent=1 // pred_region
      _
    $region93: #{tpu_custom_call.1} parent=1 // pred_fallthru
      _
    // Predicated region
    $region94: #{tpu_custom_call.1} parent=1 // pred_check
      _
    $region95: #{tpu_custom_call.1} parent=1 // pred_check_branch
      %183 = sbr.rel (0) target = $region97
    $region96: #{tpu_custom_call.1} parent=1 // pred_region
      _
    $region97: #{tpu_custom_call.1} parent=1 // pred_fallthru
      _
    // Predicated region
    $region98: #{tpu_custom_call.1} parent=1 // pred_check
      _
    $region99: #{tpu_custom_call.1} parent=1 // pred_check_branch
      %185 = sbr.rel (0) target = $region101
    $region100: #{tpu_custom_call.1} parent=1 // pred_region
      _
    $region101: #{tpu_custom_call.1} parent=1 // pred_fallthru
      _
    // Predicated region
    $region102: #{tpu_custom_call.1} parent=1 // pred_check
      _
    $region103: #{tpu_custom_call.1} parent=1 // pred_check_branch
      %187 = sbr.rel (0) target = $region105
    $region104: #{tpu_custom_call.1} parent=1 // pred_region
      _
    $region105: #{tpu_custom_call.1} parent=1 // pred_fallthru
      _
    // Predicated region
    $region106: #{tpu_custom_call.1} parent=1 // pred_check
      _
    $region107: #{tpu_custom_call.1} parent=1 // pred_check_branch
      %189 = sbr.rel (0) target = $region109
    $region108: #{tpu_custom_call.1} parent=1 // pred_region
      _
    $region109: #{tpu_custom_call.1} parent=1 // pred_fallthru
      _
    // Predicated region
    $region110: #{tpu_custom_call.1} parent=1 // pred_check
      _
    $region111: #{tpu_custom_call.1} parent=1 // pred_check_branch
      %191 = sbr.rel (0) target = $region113
    $region112: #{tpu_custom_call.1} parent=1 // pred_region
      _
    $region113: #{tpu_custom_call.1} parent=1 // pred_fallthru
      _
    // Predicated region
    $region114: #{tpu_custom_call.1} parent=1 // pred_check
      _
    $region115: #{tpu_custom_call.1} parent=1 // pred_check_branch
      %193 = sbr.rel (0) target = $region117
    $region116: #{tpu_custom_call.1} parent=1 // pred_region
      %s195 = ssub.s32 256, 256
      %196 = vsyncadd [#allocation27], %s195
      %s197 = sshll.u32 [#allocation26], 4
      %s198 = int_to_ptr.vmem [resolvable:$true] %s197
      %203 = dma.hbm_to_vmem [thread:$0]  %s57, 256, %s198, [#allocation27], 64, 64, 4
    $region117: #{tpu_custom_call.1} parent=1 // pred_fallthru
      _
    // Predicated region
    $region118: #{tpu_custom_call.1} parent=1 // pred_check
      _
    $region119: #{tpu_custom_call.1} parent=1 // pred_check_branch
      %205 = sbr.rel (0) target = $region121
    $region120: #{tpu_custom_call.1} parent=1 // pred_region
      _
    $region121: #{tpu_custom_call.1} parent=1 // pred_fallthru
      _
    // Predicated region
    $region122: #{tpu_custom_call.1} parent=1 // pred_check
      _
    $region123: #{tpu_custom_call.1} parent=1 // pred_check_branch
      %207 = sbr.rel (0) target = $region125
    $region124: #{tpu_custom_call.1} parent=1 // pred_region
      _
    $region125: #{tpu_custom_call.1} parent=1 // pred_fallthru
      _
    // Predicated region
    $region126: #{tpu_custom_call.1} parent=1 // pred_check
      _
    $region127: #{tpu_custom_call.1} parent=1 // pred_check_branch
      %209 = sbr.rel (0) target = $region129
    $region128: #{tpu_custom_call.1} parent=1 // pred_region
      %210 = dma.done [#allocation15], 16
    $region129: #{tpu_custom_call.1} parent=1 // pred_fallthru
      _
    // Predicated region
    $region130: #{tpu_custom_call.1} parent=1 // pred_check
      _
    $region131: #{tpu_custom_call.1} parent=1 // pred_check_branch
      %212 = sbr.rel (0) target = $region133
    $region132: #{tpu_custom_call.1} parent=1 // pred_region
      %213 = dma.done [#allocation14], 16
    $region133: #{tpu_custom_call.1} parent=1 // pred_fallthru
      _
    // Predicated region
    $region134: #{tpu_custom_call.1} parent=1 // pred_check
      _
    $region135: #{tpu_custom_call.1} parent=1 // pred_check_branch
      %215 = sbr.rel (0) target = $region137
    $region136: #{tpu_custom_call.1} parent=1 // pred_region
      %216 = dma.done [#allocation18], 16
    $region137: #{tpu_custom_call.1} parent=1 // pred_fallthru
      _
    // Predicated region
    $region138: #{tpu_custom_call.1} parent=1 // pred_check
      _
    $region139: #{tpu_custom_call.1} parent=1 // pred_check_branch
      %218 = sbr.rel (0) target = $region141
    $region140: #{tpu_custom_call.1} parent=1 // pred_region
      %219 = dma.done [#allocation18], 16
    $region141: #{tpu_custom_call.1} parent=1 // pred_fallthru
      _
    // Predicated region
    $region142: #{tpu_custom_call.1} parent=1 // pred_check
      _
    $region143: #{tpu_custom_call.1} parent=1 // pred_check_branch
      %221 = sbr.rel (0) target = $region145
    $region144: #{tpu_custom_call.1} parent=1 // pred_region
      %222 = dma.done [#allocation21], 16
    $region145: #{tpu_custom_call.1} parent=1 // pred_fallthru
      _
    // Predicated region
    $region146: #{tpu_custom_call.1} parent=1 // pred_check
      _
    $region147: #{tpu_custom_call.1} parent=1 // pred_check_branch
      %224 = sbr.rel (0) target = $region149
    $region148: #{tpu_custom_call.1} parent=1 // pred_region
      %225 = dma.done [#allocation21], 16
    $region149: #{tpu_custom_call.1} parent=1 // pred_fallthru
      _
    // Predicated region
    $region150: #{tpu_custom_call.1} parent=1 // pred_check
      _
    $region151: #{tpu_custom_call.1} parent=1 // pred_check_branch
      %227 = sbr.rel (0) target = $region153
    $region152: #{tpu_custom_call.1} parent=1 // pred_region
      %228 = dma.done [#allocation24], 16
    $region153: #{tpu_custom_call.1} parent=1 // pred_fallthru
      _
    // Predicated region
    $region154: #{tpu_custom_call.1} parent=1 // pred_check
      _
    $region155: #{tpu_custom_call.1} parent=1 // pred_check_branch
      %230 = sbr.rel (0) target = $region157
    $region156: #{tpu_custom_call.1} parent=1 // pred_region
      %231 = dma.done [#allocation24], 16
    $region157: #{tpu_custom_call.1} parent=1 // pred_fallthru
      _
    // Predicated region
    $region158: #{tpu_custom_call.1} parent=1 // pred_check
      _
    $region159: #{tpu_custom_call.1} parent=1 // pred_check_branch
      %233 = sbr.rel (0) target = $region161
    $region160: #{tpu_custom_call.1} parent=1 // pred_region
      %234 = dma.done [#allocation27], 256
    $region161: #{tpu_custom_call.1} parent=1 // pred_fallthru
      _
    %235 = sfence
    %v237 = vld [vmem:[%s5] sm:$0xf]
    %v238 = vld [vmem:[%s5 + $0x4] sm:$0xf]
    %v239 = vld [vmem:[%s5 + $0x8] sm:$0xf]
    %v240 = vld [vmem:[%s5 + $0xc] sm:$0xf]
    %v241 = vld [vmem:[%s5 + $0x10] sm:$0xf]
    %v242 = vld [vmem:[%s5 + $0x14] sm:$0xf]
    %v243 = vld [vmem:[%s7] sm:$0xf]
    %v244 = vld [vmem:[%s7 + $0x4] sm:$0xf]
    %v245 = vld [vmem:[%s7 + $0x8] sm:$0xf]
    %v246 = vld [vmem:[%s7 + $0xc] sm:$0xf]
    %v247 = vld [vmem:[#allocation16] sm:$0x1]
    %v249 = vlaneseq
    %v250 = vshrl.u32 %v249, 7
    %v251 = vsub.s32 0, %v250
    %v252 = vrot.slane %v247, %v251
    %v260 = vunpack.c.l.b16 %v237
    %v261 = vunpack.c.l.b16 %v238
    %v262 = vunpack.c.l.b16 %v239
    %v263 = vunpack.c.l.b16 %v240
    %v264 = vunpack.c.l.b16 %v241
    %v265 = vunpack.c.l.b16 %v242
    %v266 = vpack.c.b16 %v261, %v260
    %v267 = vpack.c.b16 %v263, %v262
    %v268 = vpack.c.b16 %v265, %v264
    %v273 = vunpack.c.l.b16 %v243
    %v274 = vunpack.c.l.b16 %v244
    %v275 = vunpack.c.l.b16 %v245
    %v276 = vunpack.c.l.b16 %v246
    %v277 = vpack.c.b16 %v274, %v273
    %v278 = vpack.c.b16 %v276, %v275
    %vm281 = vcmask 261120
    %v283 = vsel %vm281, %v266, 0
    %v286 = vsel %vm281, %v267, 0
    %v289 = vsel %vm281, %v268, 0
    %291 = vmatprep.subr.bf16.mxu0 0
    %292 = vmatpush1.bf16.msra.mxu0 %v277
    %293 = vmatprep.subr.bf16.mxu0 0
    %294 = vmatpush1.bf16.msra.mxu0 %v278
    %295 = vmatprep.subr.bf16.mxu0 0
    %296 = vmatpush1.bf16.msra.mxu0 0
    %297 = vmatprep.subr.bf16.mxu0 0
    %298 = vmatpush1.bf16.msra.mxu0 0
    %299 = vmatprep.subr.bf16.mxu0 0
    %300 = vmatpush1.bf16.msra.mxu0 0
    %301 = vmatprep.subr.bf16.mxu0 0
    %302 = vmatpush1.bf16.msra.mxu0 0
    %303 = vmatprep.subr.bf16.mxu0 0
    %304 = vmatpush1.bf16.msra.mxu0 0
    %305 = vmatprep.subr.bf16.mxu0 0
    %306 = vmatpush1.bf16.msra.mxu0 0
    %307 = vmatprep.subr.bf16.mxu0 0
    %308 = vmatpush1.bf16.msra.mxu0 0
    %309 = vmatprep.subr.bf16.mxu0 0
    %310 = vmatpush1.bf16.msra.mxu0 0
    %311 = vmatprep.subr.bf16.mxu0 0
    %312 = vmatpush1.bf16.msra.mxu0 0
    %313 = vmatprep.subr.bf16.mxu0 0
    %314 = vmatpush1.bf16.msra.mxu0 0
    %315 = vmatprep.subr.bf16.mxu0 0
    %316 = vmatpush1.bf16.msra.mxu0 0
    %317 = vmatprep.subr.bf16.mxu0 0
    %318 = vmatpush1.bf16.msra.mxu0 0
    %319 = vmatprep.subr.bf16.mxu0 0
    %320 = vmatpush1.bf16.msra.mxu0 0
    %321 = vmatprep.subr.bf16.mxu0 0
    %322 = vmatpush1.bf16.msra.mxu0 0
    %323 = vmatprep.mubr.bf16.mxu0 0
    %324 = vmatmul.mubr.bf16.gmra.mrb[0].mxu0 %v283
    %v325 = vpop.f32.mrb[0].mxu0
    %v326 = vadd.f32 %v252, %v325
    %v327 = vpop.f32.mrb[0].mxu0
    %v328 = vpop.f32.mrb[0].mxu0
    %v329 = vadd.f32 %v252, %v328
    %v330 = vpop.f32.mrb[0].mxu0
    %331 = vmatprep.mubr.bf16.mxu0 0
    %332 = vmatmul.mubr.bf16.gmra.mrb[0].mxu0 %v286
    %v333 = vpop.f32.mrb[0].mxu0
    %v334 = vadd.f32 %v252, %v333
    %v335 = vpop.f32.mrb[0].mxu0
    %v336 = vpop.f32.mrb[0].mxu0
    %v337 = vadd.f32 %v252, %v336
    %v338 = vpop.f32.mrb[0].mxu0
    %339 = vmatprep.mubr.bf16.mxu0 0
    %340 = vmatmul.mubr.bf16.gmra.mrb[0].mxu0 %v289
    %v341 = vpop.f32.mrb[0].mxu0
    %v342 = vadd.f32 %v252, %v341
    %v343 = vpop.f32.mrb[0].mxu0
    %v344 = vpop.f32.mrb[0].mxu0
    %v345 = vadd.f32 %v252, %v344
    %v346 = vpop.f32.mrb[0].mxu0
    %347 = vdwg.mxu0
    %vm348 = vcmask 785408
    %349 = vst.msk [vmem:[#allocation6] sm:$0xff] %vm348, %v326
    %350 = vst.msk [vmem:[#allocation6 + $0x8] sm:$0xff] %vm348, %v329
    %351 = vst.msk [vmem:[#allocation6 + $0x10] sm:$0xff] %vm348, %v334
    %352 = vst.msk [vmem:[#allocation6 + $0x18] sm:$0xff] %vm348, %v337
    %353 = vst.msk [vmem:[#allocation6 + $0x20] sm:$0xff] %vm348, %v342
    %354 = vst.msk [vmem:[#allocation6 + $0x28] sm:$0xff] %vm348, %v345
    %v355 = vld [vmem:[%s15] sm:$0xf]
    %v356 = vld [vmem:[%s15 + $0x4] sm:$0xf]
    %v357 = vld [vmem:[%s15 + $0x8] sm:$0xf]
    %v358 = vld [vmem:[%s15 + $0xc] sm:$0xf]
    %v359 = vld [vmem:[#allocation19] sm:$0x1]
    %v361 = vlaneseq
    %v362 = vshrl.u32 %v361, 7
    %v363 = vsub.s32 0, %v362
    %v364 = vrot.slane %v359, %v363
    %v370 = vunpack.c.l.b16 %v355
    %v371 = vunpack.c.l.b16 %v356
    %v372 = vunpack.c.l.b16 %v357
    %v373 = vunpack.c.l.b16 %v358
    %v374 = vpack.c.b16 %v371, %v370
    %v375 = vpack.c.b16 %v373, %v372
    %378 = vmatprep.subr.bf16.mxu0 0
    %379 = vmatpush1.bf16.msra.mxu0 %v374
    %380 = vmatprep.subr.bf16.mxu0 0
    %381 = vmatpush1.bf16.msra.mxu0 %v375
    %382 = vmatprep.subr.bf16.mxu0 0
    %383 = vmatpush1.bf16.msra.mxu0 0
    %384 = vmatprep.subr.bf16.mxu0 0
    %385 = vmatpush1.bf16.msra.mxu0 0
    %386 = vmatprep.subr.bf16.mxu0 0
    %387 = vmatpush1.bf16.msra.mxu0 0
    %388 = vmatprep.subr.bf16.mxu0 0
    %389 = vmatpush1.bf16.msra.mxu0 0
    %390 = vmatprep.subr.bf16.mxu0 0
    %391 = vmatpush1.bf16.msra.mxu0 0
    %392 = vmatprep.subr.bf16.mxu0 0
    %393 = vmatpush1.bf16.msra.mxu0 0
    %394 = vmatprep.subr.bf16.mxu0 0
    %395 = vmatpush1.bf16.msra.mxu0 0
    %396 = vmatprep.subr.bf16.mxu0 0
    %397 = vmatpush1.bf16.msra.mxu0 0
    %398 = vmatprep.subr.bf16.mxu0 0
    %399 = vmatpush1.bf16.msra.mxu0 0
    %400 = vmatprep.subr.bf16.mxu0 0
    %401 = vmatpush1.bf16.msra.mxu0 0
    %402 = vmatprep.subr.bf16.mxu0 0
    %403 = vmatpush1.bf16.msra.mxu0 0
    %404 = vmatprep.subr.bf16.mxu0 0
    %405 = vmatpush1.bf16.msra.mxu0 0
    %406 = vmatprep.subr.bf16.mxu0 0
    %407 = vmatpush1.bf16.msra.mxu0 0
    %408 = vmatprep.subr.bf16.mxu0 0
    %409 = vmatpush1.bf16.msra.mxu0 0
    %410 = vmatprep.mubr.bf16.mxu0 0
    %411 = vmatmul.mubr.bf16.gmra.mrb[0].mxu0 %v283
    %v412 = vpop.f32.mrb[0].mxu0
    %v413 = vadd.f32 %v364, %v412
    %v414 = vpop.f32.mrb[0].mxu0
    %v415 = vpop.f32.mrb[0].mxu0
    %v416 = vadd.f32 %v364, %v415
    %v417 = vpop.f32.mrb[0].mxu0
    %418 = vmatprep.mubr.bf16.mxu0 0
    %419 = vmatmul.mubr.bf16.gmra.mrb[0].mxu0 %v286
    %v420 = vpop.f32.mrb[0].mxu0
    %v421 = vadd.f32 %v364, %v420
    %v422 = vpop.f32.mrb[0].mxu0
    %v423 = vpop.f32.mrb[0].mxu0
    %v424 = vadd.f32 %v364, %v423
    %v425 = vpop.f32.mrb[0].mxu0
    %426 = vmatprep.mubr.bf16.mxu0 0
    %427 = vmatmul.mubr.bf16.gmra.mrb[0].mxu0 %v289
    %v428 = vpop.f32.mrb[0].mxu0
    %v429 = vadd.f32 %v364, %v428
    %v430 = vpop.f32.mrb[0].mxu0
    %v431 = vpop.f32.mrb[0].mxu0
    %v432 = vadd.f32 %v364, %v431
    %v433 = vpop.f32.mrb[0].mxu0
    %434 = vdwg.mxu0
    %435 = vst.msk [vmem:[#allocation7] sm:$0xff] %vm348, %v413
    %436 = vst.msk [vmem:[#allocation7 + $0x8] sm:$0xff] %vm348, %v416
    %437 = vst.msk [vmem:[#allocation7 + $0x10] sm:$0xff] %vm348, %v421
    %438 = vst.msk [vmem:[#allocation7 + $0x18] sm:$0xff] %vm348, %v424
    %439 = vst.msk [vmem:[#allocation7 + $0x20] sm:$0xff] %vm348, %v429
    %440 = vst.msk [vmem:[#allocation7 + $0x28] sm:$0xff] %vm348, %v432
    %441 = vst.msk [vmem:[#allocation2] sm:$0xff] %vm281, 0.0
    %442 = vst.msk [vmem:[#allocation3] sm:$0xff] %vm281, 0.0
    %v443 = vld [vmem:[#allocation6] sm:$0xff]
    %v444 = vld [vmem:[#allocation2] sm:$0xff]
    %v445 = vpack.c.bf16 %v444, %v444
    %v446 = vld [vmem:[%s9] sm:$0xf]
    %v447 = vld [vmem:[%s9 + $0x4] sm:$0xf]
    %v448 = vld [vmem:[%s9 + $0x8] sm:$0xf]
    %v449 = vld [vmem:[%s9 + $0xc] sm:$0xf]
    %v454 = vunpack.c.l.b16 %v446
    %v455 = vunpack.c.l.b16 %v447
    %v456 = vunpack.c.l.b16 %v448
    %v457 = vunpack.c.l.b16 %v449
    %v458 = vpack.c.b16 %v455, %v454
    %v459 = vpack.c.b16 %v457, %v456
    %v463 = vsel %vm281, %v445, 0
    %465 = vmatprep.subr.bf16.mxu0 0
    %466 = vmatpush1.bf16.msra.mxu0 %v458
    %467 = vmatprep.subr.bf16.mxu0 0
    %468 = vmatpush1.bf16.msra.mxu0 %v459
    %469 = vmatprep.subr.bf16.mxu0 0
    %470 = vmatpush1.bf16.msra.mxu0 0
    %471 = vmatprep.subr.bf16.mxu0 0
    %472 = vmatpush1.bf16.msra.mxu0 0
    %473 = vmatprep.subr.bf16.mxu0 0
    %474 = vmatpush1.bf16.msra.mxu0 0
    %475 = vmatprep.subr.bf16.mxu0 0
    %476 = vmatpush1.bf16.msra.mxu0 0
    %477 = vmatprep.subr.bf16.mxu0 0
    %478 = vmatpush1.bf16.msra.mxu0 0
    %479 = vmatprep.subr.bf16.mxu0 0
    %480 = vmatpush1.bf16.msra.mxu0 0
    %481 = vmatprep.subr.bf16.mxu0 0
    %482 = vmatpush1.bf16.msra.mxu0 0
    %483 = vmatprep.subr.bf16.mxu0 0
    %484 = vmatpush1.bf16.msra.mxu0 0
    %485 = vmatprep.subr.bf16.mxu0 0
    %486 = vmatpush1.bf16.msra.mxu0 0
    %487 = vmatprep.subr.bf16.mxu0 0
    %488 = vmatpush1.bf16.msra.mxu0 0
    %489 = vmatprep.subr.bf16.mxu0 0
    %490 = vmatpush1.bf16.msra.mxu0 0
    %491 = vmatprep.subr.bf16.mxu0 0
    %492 = vmatpush1.bf16.msra.mxu0 0
    %493 = vmatprep.subr.bf16.mxu0 0
    %494 = vmatpush1.bf16.msra.mxu0 0
    %495 = vmatprep.subr.bf16.mxu0 0
    %496 = vmatpush1.bf16.msra.mxu0 0
    %497 = vmatprep.mubr.bf16.mxu0 0
    %498 = vmatmul.mubr.bf16.gmra.mrb[0].mxu0 %v463
    %v499 = vpop.f32.mrb[0].mxu0
    %v500 = vadd.f32 0.0, %v499
    %v501 = vpop.f32.mrb[0].mxu0
    %v502 = vpop.f32.mrb[0].mxu0
    %v503 = vpop.f32.mrb[0].mxu0
    %504 = vdwg.mxu0
    %v505 = vadd.f32 %v443, %v500
    %v506 = vxor.u32 %v505, 2147483648
    %v507 = vmul.f32 %v506, 1.442695
    %v508 = vpow.pop %v507
    %v509 = vadd.f32 %v508, 1.0
    %v510 = vrcp.pop %v509
    %v511 = vmul.f32 1.0, %v510
    %v512 = vld [vmem:[#allocation17] sm:$0x1]
    %v514 = vlaneseq
    %v515 = vshrl.u32 %v514, 7
    %v516 = vsub.s32 0, %v515
    %v517 = vrot.slane %v512, %v516
    %518 = vrot.lane.b32.xlu0 %v517, 64
    %v519 = vpop.permute.xlu0 %518
    %v521 = vadd.f32 %v500, %v519
    %523 = vrot.lane.b32.xlu0 %v521, 64
    %v524 = vpop.permute.xlu0 %523
    %v526 = vmul.f32 %v511, %v524
    %528 = vrot.lane.b32.xlu0 %v526, 64
    %v529 = vpop.permute.xlu0 %528
    %v531 = vadd.f32 %v443, %v529
    %v532 = vtanh.pop %v531
    %v533 = vsub.f32 1.0, %v511
    %535 = vrot.lane.b32.xlu0 %v532, 96
    %v536 = vpop.permute.xlu0 %535
    %v538 = vmul.f32 %v533, %v536
    %540 = vrot.lane.b32.xlu0 %v444, 32
    %v541 = vpop.permute.xlu0 %540
    %v543 = vmul.f32 %v511, %v541
    %v544 = vadd.f32 %v538, %v543
    %s545 = scalar_lea.vmem [#allocation7], 40
    %v546 = vld [vmem:[%s545] sm:$0xff]
    %v547 = vld [vmem:[#allocation3] sm:$0xff]
    %v548 = vpack.c.bf16 %v547, %v547
    %v549 = vld [vmem:[%s17] sm:$0xf]
    %v550 = vld [vmem:[%s17 + $0x4] sm:$0xf]
    %v551 = vld [vmem:[%s17 + $0x8] sm:$0xf]
    %v552 = vld [vmem:[%s17 + $0xc] sm:$0xf]
    %v557 = vunpack.c.l.b16 %v549
    %v558 = vunpack.c.l.b16 %v550
    %v559 = vunpack.c.l.b16 %v551
    %v560 = vunpack.c.l.b16 %v552
    %v561 = vpack.c.b16 %v558, %v557
    %v562 = vpack.c.b16 %v560, %v559
    %v566 = vsel %vm281, %v548, 0
    %568 = vmatprep.subr.bf16.mxu0 0
    %569 = vmatpush1.bf16.msra.mxu0 %v561
    %570 = vmatprep.subr.bf16.mxu0 0
    %571 = vmatpush1.bf16.msra.mxu0 %v562
    %572 = vmatprep.subr.bf16.mxu0 0
    %573 = vmatpush1.bf16.msra.mxu0 0
    %574 = vmatprep.subr.bf16.mxu0 0
    %575 = vmatpush1.bf16.msra.mxu0 0
    %576 = vmatprep.subr.bf16.mxu0 0
    %577 = vmatpush1.bf16.msra.mxu0 0
    %578 = vmatprep.subr.bf16.mxu0 0
    %579 = vmatpush1.bf16.msra.mxu0 0
    %580 = vmatprep.subr.bf16.mxu0 0
    %581 = vmatpush1.bf16.msra.mxu0 0
    %582 = vmatprep.subr.bf16.mxu0 0
    %583 = vmatpush1.bf16.msra.mxu0 0
    %584 = vmatprep.subr.bf16.mxu0 0
    %585 = vmatpush1.bf16.msra.mxu0 0
    %586 = vmatprep.subr.bf16.mxu0 0
    %587 = vmatpush1.bf16.msra.mxu0 0
    %588 = vmatprep.subr.bf16.mxu0 0
    %589 = vmatpush1.bf16.msra.mxu0 0
    %590 = vmatprep.subr.bf16.mxu0 0
    %591 = vmatpush1.bf16.msra.mxu0 0
    %592 = vmatprep.subr.bf16.mxu0 0
    %593 = vmatpush1.bf16.msra.mxu0 0
    %594 = vmatprep.subr.bf16.mxu0 0
    %595 = vmatpush1.bf16.msra.mxu0 0
    %596 = vmatprep.subr.bf16.mxu0 0
    %597 = vmatpush1.bf16.msra.mxu0 0
    %598 = vmatprep.subr.bf16.mxu0 0
    %599 = vmatpush1.bf16.msra.mxu0 0
    %600 = vmatprep.mubr.bf16.mxu0 0
    %601 = vmatmul.mubr.bf16.gmra.mrb[0].mxu0 %v566
    %v602 = vpop.f32.mrb[0].mxu0
    %v603 = vadd.f32 0.0, %v602
    %v604 = vpop.f32.mrb[0].mxu0
    %v605 = vpop.f32.mrb[0].mxu0
    %v606 = vpop.f32.mrb[0].mxu0
    %607 = vdwg.mxu0
    %v608 = vadd.f32 %v546, %v603
    %v609 = vxor.u32 %v608, 2147483648
    %v610 = vmul.f32 %v609, 1.442695
    %v611 = vpow.pop %v610
    %v612 = vadd.f32 %v611, 1.0
    %v613 = vrcp.pop %v612
    %v614 = vmul.f32 1.0, %v613
    %v615 = vld [vmem:[#allocation20] sm:$0x1]
    %v617 = vlaneseq
    %v618 = vshrl.u32 %v617, 7
    %v619 = vsub.s32 0, %v618
    %v620 = vrot.slane %v615, %v619
    %621 = vrot.lane.b32.xlu0 %v620, 64
    %v622 = vpop.permute.xlu0 %621
    %v624 = vadd.f32 %v603, %v622
    %626 = vrot.lane.b32.xlu0 %v624, 64
    %v627 = vpop.permute.xlu0 %626
    %v629 = vmul.f32 %v614, %v627
    %631 = vrot.lane.b32.xlu0 %v629, 64
    %v632 = vpop.permute.xlu0 %631
    %v634 = vadd.f32 %v546, %v632
    %v635 = vtanh.pop %v634
    %v636 = vsub.f32 1.0, %v614
    %638 = vrot.lane.b32.xlu0 %v635, 96
    %v639 = vpop.permute.xlu0 %638
    %v641 = vmul.f32 %v636, %v639
    %643 = vrot.lane.b32.xlu0 %v547, 32
    %v644 = vpop.permute.xlu0 %643
    %v646 = vmul.f32 %v614, %v644
    %v647 = vadd.f32 %v641, %v646
    %649 = vrot.lane.b32.xlu0 %v544, 96
    %v650 = vpop.permute.xlu0 %649
    %652 = vst.msk [vmem:[#allocation4] sm:$0xff] %vm281, %v650
    %654 = vrot.lane.b32.xlu0 %v647, 96
    %v655 = vpop.permute.xlu0 %654
    %s657 = scalar_lea.vmem [#allocation5], 40
    %658 = vst.msk [vmem:[%s657] sm:$0xff] %vm281, %v655
    %659 = vst.msk [vmem:[#allocation2] sm:$0xff] %vm281, %v650
    %660 = vst.msk [vmem:[#allocation3] sm:$0xff] %vm281, %v655
    %s661 = scalar_lea.vmem [#allocation6], 8
    %v662 = vld [vmem:[%s661] sm:$0xff]
    %v663 = vld [vmem:[#allocation2] sm:$0xff]
    %v664 = vpack.c.bf16 %v663, %v663
    %v665 = vld [vmem:[%s9] sm:$0xf]
    %v666 = vld [vmem:[%s9 + $0x4] sm:$0xf]
    %v667 = vld [vmem:[%s9 + $0x8] sm:$0xf]
    %v668 = vld [vmem:[%s9 + $0xc] sm:$0xf]
    %v673 = vunpack.c.l.b16 %v665
    %v674 = vunpack.c.l.b16 %v666
    %v675 = vunpack.c.l.b16 %v667
    %v676 = vunpack.c.l.b16 %v668
    %v677 = vpack.c.b16 %v674, %v673
    %v678 = vpack.c.b16 %v676, %v675
    %v682 = vsel %vm281, %v664, 0
    %684 = vmatprep.subr.bf16.mxu0 0
    %685 = vmatpush1.bf16.msra.mxu0 %v677
    %686 = vmatprep.subr.bf16.mxu0 0
    %687 = vmatpush1.bf16.msra.mxu0 %v678
    %688 = vmatprep.subr.bf16.mxu0 0
    %689 = vmatpush1.bf16.msra.mxu0 0
    %690 = vmatprep.subr.bf16.mxu0 0
    %691 = vmatpush1.bf16.msra.mxu0 0
    %692 = vmatprep.subr.bf16.mxu0 0
    %693 = vmatpush1.bf16.msra.mxu0 0
    %694 = vmatprep.subr.bf16.mxu0 0
    %695 = vmatpush1.bf16.msra.mxu0 0
    %696 = vmatprep.subr.bf16.mxu0 0
    %697 = vmatpush1.bf16.msra.mxu0 0
    %698 = vmatprep.subr.bf16.mxu0 0
    %699 = vmatpush1.bf16.msra.mxu0 0
    %700 = vmatprep.subr.bf16.mxu0 0
    %701 = vmatpush1.bf16.msra.mxu0 0
    %702 = vmatprep.subr.bf16.mxu0 0
    %703 = vmatpush1.bf16.msra.mxu0 0
    %704 = vmatprep.subr.bf16.mxu0 0
    %705 = vmatpush1.bf16.msra.mxu0 0
    %706 = vmatprep.subr.bf16.mxu0 0
    %707 = vmatpush1.bf16.msra.mxu0 0
    %708 = vmatprep.subr.bf16.mxu0 0
    %709 = vmatpush1.bf16.msra.mxu0 0
    %710 = vmatprep.subr.bf16.mxu0 0
    %711 = vmatpush1.bf16.msra.mxu0 0
    %712 = vmatprep.subr.bf16.mxu0 0
    %713 = vmatpush1.bf16.msra.mxu0 0
    %714 = vmatprep.subr.bf16.mxu0 0
    %715 = vmatpush1.bf16.msra.mxu0 0
    %716 = vmatprep.mubr.bf16.mxu0 0
    %717 = vmatmul.mubr.bf16.gmra.mrb[0].mxu0 %v682
    %v718 = vpop.f32.mrb[0].mxu0
    %v719 = vadd.f32 0.0, %v718
    %v720 = vpop.f32.mrb[0].mxu0
    %v721 = vpop.f32.mrb[0].mxu0
    %v722 = vpop.f32.mrb[0].mxu0
    %723 = vdwg.mxu0
    %v724 = vadd.f32 %v662, %v719
    %v725 = vxor.u32 %v724, 2147483648
    %v726 = vmul.f32 %v725, 1.442695
    %v727 = vpow.pop %v726
    %v728 = vadd.f32 %v727, 1.0
    %v729 = vrcp.pop %v728
    %v730 = vmul.f32 1.0, %v729
    %v731 = vld [vmem:[#allocation17] sm:$0x1]
    %v733 = vlaneseq
    %v734 = vshrl.u32 %v733, 7
    %v735 = vsub.s32 0, %v734
    %v736 = vrot.slane %v731, %v735
    %737 = vrot.lane.b32.xlu0 %v736, 64
    %v738 = vpop.permute.xlu0 %737
    %v740 = vadd.f32 %v719, %v738
    %742 = vrot.lane.b32.xlu0 %v740, 64
    %v743 = vpop.permute.xlu0 %742
    %v745 = vmul.f32 %v730, %v743
    %747 = vrot.lane.b32.xlu0 %v745, 64
    %v748 = vpop.permute.xlu0 %747
    %v750 = vadd.f32 %v662, %v748
    %v751 = vtanh.pop %v750
    %v752 = vsub.f32 1.0, %v730
    %754 = vrot.lane.b32.xlu0 %v751, 96
    %v755 = vpop.permute.xlu0 %754
    %v757 = vmul.f32 %v752, %v755
    %759 = vrot.lane.b32.xlu0 %v663, 32
    %v760 = vpop.permute.xlu0 %759
    %v762 = vmul.f32 %v730, %v760
    %v763 = vadd.f32 %v757, %v762
    %s764 = scalar_lea.vmem [#allocation7], 32
    %v765 = vld [vmem:[%s764] sm:$0xff]
    %v766 = vld [vmem:[#allocation3] sm:$0xff]
    %v767 = vpack.c.bf16 %v766, %v766
    %v768 = vld [vmem:[%s17] sm:$0xf]
    %v769 = vld [vmem:[%s17 + $0x4] sm:$0xf]
    %v770 = vld [vmem:[%s17 + $0x8] sm:$0xf]
    %v771 = vld [vmem:[%s17 + $0xc] sm:$0xf]
    %v776 = vunpack.c.l.b16 %v768
    %v777 = vunpack.c.l.b16 %v769
    %v778 = vunpack.c.l.b16 %v770
    %v779 = vunpack.c.l.b16 %v771
    %v780 = vpack.c.b16 %v777, %v776
    %v781 = vpack.c.b16 %v779, %v778
    %v785 = vsel %vm281, %v767, 0
    %787 = vmatprep.subr.bf16.mxu0 0
    %788 = vmatpush1.bf16.msra.mxu0 %v780
    %789 = vmatprep.subr.bf16.mxu0 0
    %790 = vmatpush1.bf16.msra.mxu0 %v781
    %791 = vmatprep.subr.bf16.mxu0 0
    %792 = vmatpush1.bf16.msra.mxu0 0
    %793 = vmatprep.subr.bf16.mxu0 0
    %794 = vmatpush1.bf16.msra.mxu0 0
    %795 = vmatprep.subr.bf16.mxu0 0
    %796 = vmatpush1.bf16.msra.mxu0 0
    %797 = vmatprep.subr.bf16.mxu0 0
    %798 = vmatpush1.bf16.msra.mxu0 0
    %799 = vmatprep.subr.bf16.mxu0 0
    %800 = vmatpush1.bf16.msra.mxu0 0
    %801 = vmatprep.subr.bf16.mxu0 0
    %802 = vmatpush1.bf16.msra.mxu0 0
    %803 = vmatprep.subr.bf16.mxu0 0
    %804 = vmatpush1.bf16.msra.mxu0 0
    %805 = vmatprep.subr.bf16.mxu0 0
    %806 = vmatpush1.bf16.msra.mxu0 0
    %807 = vmatprep.subr.bf16.mxu0 0
    %808 = vmatpush1.bf16.msra.mxu0 0
    %809 = vmatprep.subr.bf16.mxu0 0
    %810 = vmatpush1.bf16.msra.mxu0 0
    %811 = vmatprep.subr.bf16.mxu0 0
    %812 = vmatpush1.bf16.msra.mxu0 0
    %813 = vmatprep.subr.bf16.mxu0 0
    %814 = vmatpush1.bf16.msra.mxu0 0
    %815 = vmatprep.subr.bf16.mxu0 0
    %816 = vmatpush1.bf16.msra.mxu0 0
    %817 = vmatprep.subr.bf16.mxu0 0
    %818 = vmatpush1.bf16.msra.mxu0 0
    %819 = vmatprep.mubr.bf16.mxu0 0
    %820 = vmatmul.mubr.bf16.gmra.mrb[0].mxu0 %v785
    %v821 = vpop.f32.mrb[0].mxu0
    %v822 = vadd.f32 0.0, %v821
    %v823 = vpop.f32.mrb[0].mxu0
    %v824 = vpop.f32.mrb[0].mxu0
    %v825 = vpop.f32.mrb[0].mxu0
    %826 = vdwg.mxu0
    %v827 = vadd.f32 %v765, %v822
    %v828 = vxor.u32 %v827, 2147483648
    %v829 = vmul.f32 %v828, 1.442695
    %v830 = vpow.pop %v829
    %v831 = vadd.f32 %v830, 1.0
    %v832 = vrcp.pop %v831
    %v833 = vmul.f32 1.0, %v832
    %v834 = vld [vmem:[#allocation20] sm:$0x1]
    %v836 = vlaneseq
    %v837 = vshrl.u32 %v836, 7
    %v838 = vsub.s32 0, %v837
    %v839 = vrot.slane %v834, %v838
    %840 = vrot.lane.b32.xlu0 %v839, 64
    %v841 = vpop.permute.xlu0 %840
    %v843 = vadd.f32 %v822, %v841
    %845 = vrot.lane.b32.xlu0 %v843, 64
    %v846 = vpop.permute.xlu0 %845
    %v848 = vmul.f32 %v833, %v846
    %850 = vrot.lane.b32.xlu0 %v848, 64
    %v851 = vpop.permute.xlu0 %850
    %v853 = vadd.f32 %v765, %v851
    %v854 = vtanh.pop %v853
    %v855 = vsub.f32 1.0, %v833
    %857 = vrot.lane.b32.xlu0 %v854, 96
    %v858 = vpop.permute.xlu0 %857
    %v860 = vmul.f32 %v855, %v858
    %862 = vrot.lane.b32.xlu0 %v766, 32
    %v863 = vpop.permute.xlu0 %862
    %v865 = vmul.f32 %v833, %v863
    %v866 = vadd.f32 %v860, %v865
    %868 = vrot.lane.b32.xlu0 %v763, 96
    %v869 = vpop.permute.xlu0 %868
    %s871 = scalar_lea.vmem [#allocation4], 8
    %872 = vst.msk [vmem:[%s871] sm:$0xff] %vm281, %v869
    %874 = vrot.lane.b32.xlu0 %v866, 96
    %v875 = vpop.permute.xlu0 %874
    %s877 = scalar_lea.vmem [#allocation5], 32
    %878 = vst.msk [vmem:[%s877] sm:$0xff] %vm281, %v875
    %879 = vst.msk [vmem:[#allocation2] sm:$0xff] %vm281, %v869
    %880 = vst.msk [vmem:[#allocation3] sm:$0xff] %vm281, %v875
    %s881 = scalar_lea.vmem [#allocation6], 16
    %v882 = vld [vmem:[%s881] sm:$0xff]
    %v883 = vld [vmem:[#allocation2] sm:$0xff]
    %v884 = vpack.c.bf16 %v883, %v883
    %v885 = vld [vmem:[%s9] sm:$0xf]
    %v886 = vld [vmem:[%s9 + $0x4] sm:$0xf]
    %v887 = vld [vmem:[%s9 + $0x8] sm:$0xf]
    %v888 = vld [vmem:[%s9 + $0xc] sm:$0xf]
    %v893 = vunpack.c.l.b16 %v885
    %v894 = vunpack.c.l.b16 %v886
    %v895 = vunpack.c.l.b16 %v887
    %v896 = vunpack.c.l.b16 %v888
    %v897 = vpack.c.b16 %v894, %v893
    %v898 = vpack.c.b16 %v896, %v895
    %v902 = vsel %vm281, %v884, 0
    %904 = vmatprep.subr.bf16.mxu0 0
    %905 = vmatpush1.bf16.msra.mxu0 %v897
    %906 = vmatprep.subr.bf16.mxu0 0
    %907 = vmatpush1.bf16.msra.mxu0 %v898
    %908 = vmatprep.subr.bf16.mxu0 0
    %909 = vmatpush1.bf16.msra.mxu0 0
    %910 = vmatprep.subr.bf16.mxu0 0
    %911 = vmatpush1.bf16.msra.mxu0 0
    %912 = vmatprep.subr.bf16.mxu0 0
    %913 = vmatpush1.bf16.msra.mxu0 0
    %914 = vmatprep.subr.bf16.mxu0 0
    %915 = vmatpush1.bf16.msra.mxu0 0
    %916 = vmatprep.subr.bf16.mxu0 0
    %917 = vmatpush1.bf16.msra.mxu0 0
    %918 = vmatprep.subr.bf16.mxu0 0
    %919 = vmatpush1.bf16.msra.mxu0 0
    %920 = vmatprep.subr.bf16.mxu0 0
    %921 = vmatpush1.bf16.msra.mxu0 0
    %922 = vmatprep.subr.bf16.mxu0 0
    %923 = vmatpush1.bf16.msra.mxu0 0
    %924 = vmatprep.subr.bf16.mxu0 0
    %925 = vmatpush1.bf16.msra.mxu0 0
    %926 = vmatprep.subr.bf16.mxu0 0
    %927 = vmatpush1.bf16.msra.mxu0 0
    %928 = vmatprep.subr.bf16.mxu0 0
    %929 = vmatpush1.bf16.msra.mxu0 0
    %930 = vmatprep.subr.bf16.mxu0 0
    %931 = vmatpush1.bf16.msra.mxu0 0
    %932 = vmatprep.subr.bf16.mxu0 0
    %933 = vmatpush1.bf16.msra.mxu0 0
    %934 = vmatprep.subr.bf16.mxu0 0
    %935 = vmatpush1.bf16.msra.mxu0 0
    %936 = vmatprep.mubr.bf16.mxu0 0
    %937 = vmatmul.mubr.bf16.gmra.mrb[0].mxu0 %v902
    %v938 = vpop.f32.mrb[0].mxu0
    %v939 = vadd.f32 0.0, %v938
    %v940 = vpop.f32.mrb[0].mxu0
    %v941 = vpop.f32.mrb[0].mxu0
    %v942 = vpop.f32.mrb[0].mxu0
    %943 = vdwg.mxu0
    %v944 = vadd.f32 %v882, %v939
    %v945 = vxor.u32 %v944, 2147483648
    %v946 = vmul.f32 %v945, 1.442695
    %v947 = vpow.pop %v946
    %v948 = vadd.f32 %v947, 1.0
    %v949 = vrcp.pop %v948
    %v950 = vmul.f32 1.0, %v949
    %v951 = vld [vmem:[#allocation17] sm:$0x1]
    %v953 = vlaneseq
    %v954 = vshrl.u32 %v953, 7
    %v955 = vsub.s32 0, %v954
    %v956 = vrot.slane %v951, %v955
    %957 = vrot.lane.b32.xlu0 %v956, 64
    %v958 = vpop.permute.xlu0 %957
    %v960 = vadd.f32 %v939, %v958
    %962 = vrot.lane.b32.xlu0 %v960, 64
    %v963 = vpop.permute.xlu0 %962
    %v965 = vmul.f32 %v950, %v963
    %967 = vrot.lane.b32.xlu0 %v965, 64
    %v968 = vpop.permute.xlu0 %967
    %v970 = vadd.f32 %v882, %v968
    %v971 = vtanh.pop %v970
    %v972 = vsub.f32 1.0, %v950
    %974 = vrot.lane.b32.xlu0 %v971, 96
    %v975 = vpop.permute.xlu0 %974
    %v977 = vmul.f32 %v972, %v975
    %979 = vrot.lane.b32.xlu0 %v883, 32
    %v980 = vpop.permute.xlu0 %979
    %v982 = vmul.f32 %v950, %v980
    %v983 = vadd.f32 %v977, %v982
    %s984 = scalar_lea.vmem [#allocation7], 24
    %v985 = vld [vmem:[%s984] sm:$0xff]
    %v986 = vld [vmem:[#allocation3] sm:$0xff]
    %v987 = vpack.c.bf16 %v986, %v986
    %v988 = vld [vmem:[%s17] sm:$0xf]
    %v989 = vld [vmem:[%s17 + $0x4] sm:$0xf]
    %v990 = vld [vmem:[%s17 + $0x8] sm:$0xf]
    %v991 = vld [vmem:[%s17 + $0xc] sm:$0xf]
    %v996 = vunpack.c.l.b16 %v988
    %v997 = vunpack.c.l.b16 %v989
    %v998 = vunpack.c.l.b16 %v990
    %v999 = vunpack.c.l.b16 %v991
    %v1000 = vpack.c.b16 %v997, %v996
    %v1001 = vpack.c.b16 %v999, %v998
    %v1005 = vsel %vm281, %v987, 0
    %1007 = vmatprep.subr.bf16.mxu0 0
    %1008 = vmatpush1.bf16.msra.mxu0 %v1000
    %1009 = vmatprep.subr.bf16.mxu0 0
    %1010 = vmatpush1.bf16.msra.mxu0 %v1001
    %1011 = vmatprep.subr.bf16.mxu0 0
    %1012 = vmatpush1.bf16.msra.mxu0 0
    %1013 = vmatprep.subr.bf16.mxu0 0
    %1014 = vmatpush1.bf16.msra.mxu0 0
    %1015 = vmatprep.subr.bf16.mxu0 0
    %1016 = vmatpush1.bf16.msra.mxu0 0
    %1017 = vmatprep.subr.bf16.mxu0 0
    %1018 = vmatpush1.bf16.msra.mxu0 0
    %1019 = vmatprep.subr.bf16.mxu0 0
    %1020 = vmatpush1.bf16.msra.mxu0 0
    %1021 = vmatprep.subr.bf16.mxu0 0
    %1022 = vmatpush1.bf16.msra.mxu0 0
    %1023 = vmatprep.subr.bf16.mxu0 0
    %1024 = vmatpush1.bf16.msra.mxu0 0
    %1025 = vmatprep.subr.bf16.mxu0 0
    %1026 = vmatpush1.bf16.msra.mxu0 0
    %1027 = vmatprep.subr.bf16.mxu0 0
    %1028 = vmatpush1.bf16.msra.mxu0 0
    %1029 = vmatprep.subr.bf16.mxu0 0
    %1030 = vmatpush1.bf16.msra.mxu0 0
    %1031 = vmatprep.subr.bf16.mxu0 0
    %1032 = vmatpush1.bf16.msra.mxu0 0
    %1033 = vmatprep.subr.bf16.mxu0 0
    %1034 = vmatpush1.bf16.msra.mxu0 0
    %1035 = vmatprep.subr.bf16.mxu0 0
    %1036 = vmatpush1.bf16.msra.mxu0 0
    %1037 = vmatprep.subr.bf16.mxu0 0
    %1038 = vmatpush1.bf16.msra.mxu0 0
    %1039 = vmatprep.mubr.bf16.mxu0 0
    %1040 = vmatmul.mubr.bf16.gmra.mrb[0].mxu0 %v1005
    %v1041 = vpop.f32.mrb[0].mxu0
    %v1042 = vadd.f32 0.0, %v1041
    %v1043 = vpop.f32.mrb[0].mxu0
    %v1044 = vpop.f32.mrb[0].mxu0
    %v1045 = vpop.f32.mrb[0].mxu0
    %1046 = vdwg.mxu0
    %v1047 = vadd.f32 %v985, %v1042
    %v1048 = vxor.u32 %v1047, 2147483648
    %v1049 = vmul.f32 %v1048, 1.442695
    %v1050 = vpow.pop %v1049
    %v1051 = vadd.f32 %v1050, 1.0
    %v1052 = vrcp.pop %v1051
    %v1053 = vmul.f32 1.0, %v1052
    %v1054 = vld [vmem:[#allocation20] sm:$0x1]
    %v1056 = vlaneseq
    %v1057 = vshrl.u32 %v1056, 7
    %v1058 = vsub.s32 0, %v1057
    %v1059 = vrot.slane %v1054, %v1058
    %1060 = vrot.lane.b32.xlu0 %v1059, 64
    %v1061 = vpop.permute.xlu0 %1060
    %v1063 = vadd.f32 %v1042, %v1061
    %1065 = vrot.lane.b32.xlu0 %v1063, 64
    %v1066 = vpop.permute.xlu0 %1065
    %v1068 = vmul.f32 %v1053, %v1066
    %1070 = vrot.lane.b32.xlu0 %v1068, 64
    %v1071 = vpop.permute.xlu0 %1070
    %v1073 = vadd.f32 %v985, %v1071
    %v1074 = vtanh.pop %v1073
    %v1075 = vsub.f32 1.0, %v1053
    %1077 = vrot.lane.b32.xlu0 %v1074, 96
    %v1078 = vpop.permute.xlu0 %1077
    %v1080 = vmul.f32 %v1075, %v1078
    %1082 = vrot.lane.b32.xlu0 %v986, 32
    %v1083 = vpop.permute.xlu0 %1082
    %v1085 = vmul.f32 %v1053, %v1083
    %v1086 = vadd.f32 %v1080, %v1085
    %1088 = vrot.lane.b32.xlu0 %v983, 96
    %v1089 = vpop.permute.xlu0 %1088
    %s1091 = scalar_lea.vmem [#allocation4], 16
    %1092 = vst.msk [vmem:[%s1091] sm:$0xff] %vm281, %v1089
    %1094 = vrot.lane.b32.xlu0 %v1086, 96
    %v1095 = vpop.permute.xlu0 %1094
    %s1097 = scalar_lea.vmem [#allocation5], 24
    %1098 = vst.msk [vmem:[%s1097] sm:$0xff] %vm281, %v1095
    %1099 = vst.msk [vmem:[#allocation2] sm:$0xff] %vm281, %v1089
    %1100 = vst.msk [vmem:[#allocation3] sm:$0xff] %vm281, %v1095
    %s1101 = scalar_lea.vmem [#allocation6], 24
    %v1102 = vld [vmem:[%s1101] sm:$0xff]
    %v1103 = vld [vmem:[#allocation2] sm:$0xff]
    %v1104 = vpack.c.bf16 %v1103, %v1103
    %v1105 = vld [vmem:[%s9] sm:$0xf]
    %v1106 = vld [vmem:[%s9 + $0x4] sm:$0xf]
    %v1107 = vld [vmem:[%s9 + $0x8] sm:$0xf]
    %v1108 = vld [vmem:[%s9 + $0xc] sm:$0xf]
    %v1113 = vunpack.c.l.b16 %v1105
    %v1114 = vunpack.c.l.b16 %v1106
    %v1115 = vunpack.c.l.b16 %v1107
    %v1116 = vunpack.c.l.b16 %v1108
    %v1117 = vpack.c.b16 %v1114, %v1113
    %v1118 = vpack.c.b16 %v1116, %v1115
    %v1122 = vsel %vm281, %v1104, 0
    %1124 = vmatprep.subr.bf16.mxu0 0
    %1125 = vmatpush1.bf16.msra.mxu0 %v1117
    %1126 = vmatprep.subr.bf16.mxu0 0
    %1127 = vmatpush1.bf16.msra.mxu0 %v1118
    %1128 = vmatprep.subr.bf16.mxu0 0
    %1129 = vmatpush1.bf16.msra.mxu0 0
    %1130 = vmatprep.subr.bf16.mxu0 0
    %1131 = vmatpush1.bf16.msra.mxu0 0
    %1132 = vmatprep.subr.bf16.mxu0 0
    %1133 = vmatpush1.bf16.msra.mxu0 0
    %1134 = vmatprep.subr.bf16.mxu0 0
    %1135 = vmatpush1.bf16.msra.mxu0 0
    %1136 = vmatprep.subr.bf16.mxu0 0
    %1137 = vmatpush1.bf16.msra.mxu0 0
    %1138 = vmatprep.subr.bf16.mxu0 0
    %1139 = vmatpush1.bf16.msra.mxu0 0
    %1140 = vmatprep.subr.bf16.mxu0 0
    %1141 = vmatpush1.bf16.msra.mxu0 0
    %1142 = vmatprep.subr.bf16.mxu0 0
    %1143 = vmatpush1.bf16.msra.mxu0 0
    %1144 = vmatprep.subr.bf16.mxu0 0
    %1145 = vmatpush1.bf16.msra.mxu0 0
    %1146 = vmatprep.subr.bf16.mxu0 0
    %1147 = vmatpush1.bf16.msra.mxu0 0
    %1148 = vmatprep.subr.bf16.mxu0 0
    %1149 = vmatpush1.bf16.msra.mxu0 0
    %1150 = vmatprep.subr.bf16.mxu0 0
    %1151 = vmatpush1.bf16.msra.mxu0 0
    %1152 = vmatprep.subr.bf16.mxu0 0
    %1153 = vmatpush1.bf16.msra.mxu0 0
    %1154 = vmatprep.subr.bf16.mxu0 0
    %1155 = vmatpush1.bf16.msra.mxu0 0
    %1156 = vmatprep.mubr.bf16.mxu0 0
    %1157 = vmatmul.mubr.bf16.gmra.mrb[0].mxu0 %v1122
    %v1158 = vpop.f32.mrb[0].mxu0
    %v1159 = vadd.f32 0.0, %v1158
    %v1160 = vpop.f32.mrb[0].mxu0
    %v1161 = vpop.f32.mrb[0].mxu0
    %v1162 = vpop.f32.mrb[0].mxu0
    %1163 = vdwg.mxu0
    %v1164 = vadd.f32 %v1102, %v1159
    %v1165 = vxor.u32 %v1164, 2147483648
    %v1166 = vmul.f32 %v1165, 1.442695
    %v1167 = vpow.pop %v1166
    %v1168 = vadd.f32 %v1167, 1.0
    %v1169 = vrcp.pop %v1168
    %v1170 = vmul.f32 1.0, %v1169
    %v1171 = vld [vmem:[#allocation17] sm:$0x1]
    %v1173 = vlaneseq
    %v1174 = vshrl.u32 %v1173, 7
    %v1175 = vsub.s32 0, %v1174
    %v1176 = vrot.slane %v1171, %v1175
    %1177 = vrot.lane.b32.xlu0 %v1176, 64
    %v1178 = vpop.permute.xlu0 %1177
    %v1180 = vadd.f32 %v1159, %v1178
    %1182 = vrot.lane.b32.xlu0 %v1180, 64
    %v1183 = vpop.permute.xlu0 %1182
    %v1185 = vmul.f32 %v1170, %v1183
    %1187 = vrot.lane.b32.xlu0 %v1185, 64
    %v1188 = vpop.permute.xlu0 %1187
    %v1190 = vadd.f32 %v1102, %v1188
    %v1191 = vtanh.pop %v1190
    %v1192 = vsub.f32 1.0, %v1170
    %1194 = vrot.lane.b32.xlu0 %v1191, 96
    %v1195 = vpop.permute.xlu0 %1194
    %v1197 = vmul.f32 %v1192, %v1195
    %1199 = vrot.lane.b32.xlu0 %v1103, 32
    %v1200 = vpop.permute.xlu0 %1199
    %v1202 = vmul.f32 %v1170, %v1200
    %v1203 = vadd.f32 %v1197, %v1202
    %s1204 = scalar_lea.vmem [#allocation7], 16
    %v1205 = vld [vmem:[%s1204] sm:$0xff]
    %v1206 = vld [vmem:[#allocation3] sm:$0xff]
    %v1207 = vpack.c.bf16 %v1206, %v1206
    %v1208 = vld [vmem:[%s17] sm:$0xf]
    %v1209 = vld [vmem:[%s17 + $0x4] sm:$0xf]
    %v1210 = vld [vmem:[%s17 + $0x8] sm:$0xf]
    %v1211 = vld [vmem:[%s17 + $0xc] sm:$0xf]
    %v1216 = vunpack.c.l.b16 %v1208
    %v1217 = vunpack.c.l.b16 %v1209
    %v1218 = vunpack.c.l.b16 %v1210
    %v1219 = vunpack.c.l.b16 %v1211
    %v1220 = vpack.c.b16 %v1217, %v1216
    %v1221 = vpack.c.b16 %v1219, %v1218
    %v1225 = vsel %vm281, %v1207, 0
    %1227 = vmatprep.subr.bf16.mxu0 0
    %1228 = vmatpush1.bf16.msra.mxu0 %v1220
    %1229 = vmatprep.subr.bf16.mxu0 0
    %1230 = vmatpush1.bf16.msra.mxu0 %v1221
    %1231 = vmatprep.subr.bf16.mxu0 0
    %1232 = vmatpush1.bf16.msra.mxu0 0
    %1233 = vmatprep.subr.bf16.mxu0 0
    %1234 = vmatpush1.bf16.msra.mxu0 0
    %1235 = vmatprep.subr.bf16.mxu0 0
    %1236 = vmatpush1.bf16.msra.mxu0 0
    %1237 = vmatprep.subr.bf16.mxu0 0
    %1238 = vmatpush1.bf16.msra.mxu0 0
    %1239 = vmatprep.subr.bf16.mxu0 0
    %1240 = vmatpush1.bf16.msra.mxu0 0
    %1241 = vmatprep.subr.bf16.mxu0 0
    %1242 = vmatpush1.bf16.msra.mxu0 0
    %1243 = vmatprep.subr.bf16.mxu0 0
    %1244 = vmatpush1.bf16.msra.mxu0 0
    %1245 = vmatprep.subr.bf16.mxu0 0
    %1246 = vmatpush1.bf16.msra.mxu0 0
    %1247 = vmatprep.subr.bf16.mxu0 0
    %1248 = vmatpush1.bf16.msra.mxu0 0
    %1249 = vmatprep.subr.bf16.mxu0 0
    %1250 = vmatpush1.bf16.msra.mxu0 0
    %1251 = vmatprep.subr.bf16.mxu0 0
    %1252 = vmatpush1.bf16.msra.mxu0 0
    %1253 = vmatprep.subr.bf16.mxu0 0
    %1254 = vmatpush1.bf16.msra.mxu0 0
    %1255 = vmatprep.subr.bf16.mxu0 0
    %1256 = vmatpush1.bf16.msra.mxu0 0
    %1257 = vmatprep.subr.bf16.mxu0 0
    %1258 = vmatpush1.bf16.msra.mxu0 0
    %1259 = vmatprep.mubr.bf16.mxu0 0
    %1260 = vmatmul.mubr.bf16.gmra.mrb[0].mxu0 %v1225
    %v1261 = vpop.f32.mrb[0].mxu0
    %v1262 = vadd.f32 0.0, %v1261
    %v1263 = vpop.f32.mrb[0].mxu0
    %v1264 = vpop.f32.mrb[0].mxu0
    %v1265 = vpop.f32.mrb[0].mxu0
    %1266 = vdwg.mxu0
    %v1267 = vadd.f32 %v1205, %v1262
    %v1268 = vxor.u32 %v1267, 2147483648
    %v1269 = vmul.f32 %v1268, 1.442695
    %v1270 = vpow.pop %v1269
    %v1271 = vadd.f32 %v1270, 1.0
    %v1272 = vrcp.pop %v1271
    %v1273 = vmul.f32 1.0, %v1272
    %v1274 = vld [vmem:[#allocation20] sm:$0x1]
    %v1276 = vlaneseq
    %v1277 = vshrl.u32 %v1276, 7
    %v1278 = vsub.s32 0, %v1277
    %v1279 = vrot.slane %v1274, %v1278
    %1280 = vrot.lane.b32.xlu0 %v1279, 64
    %v1281 = vpop.permute.xlu0 %1280
    %v1283 = vadd.f32 %v1262, %v1281
    %1285 = vrot.lane.b32.xlu0 %v1283, 64
    %v1286 = vpop.permute.xlu0 %1285
    %v1288 = vmul.f32 %v1273, %v1286
    %1290 = vrot.lane.b32.xlu0 %v1288, 64
    %v1291 = vpop.permute.xlu0 %1290
    %v1293 = vadd.f32 %v1205, %v1291
    %v1294 = vtanh.pop %v1293
    %v1295 = vsub.f32 1.0, %v1273
    %1297 = vrot.lane.b32.xlu0 %v1294, 96
    %v1298 = vpop.permute.xlu0 %1297
    %v1300 = vmul.f32 %v1295, %v1298
    %1302 = vrot.lane.b32.xlu0 %v1206, 32
    %v1303 = vpop.permute.xlu0 %1302
    %v1305 = vmul.f32 %v1273, %v1303
    %v1306 = vadd.f32 %v1300, %v1305
    %1308 = vrot.lane.b32.xlu0 %v1203, 96
    %v1309 = vpop.permute.xlu0 %1308
    %s1311 = scalar_lea.vmem [#allocation4], 24
    %1312 = vst.msk [vmem:[%s1311] sm:$0xff] %vm281, %v1309
    %1314 = vrot.lane.b32.xlu0 %v1306, 96
    %v1315 = vpop.permute.xlu0 %1314
    %s1317 = scalar_lea.vmem [#allocation5], 16
    %1318 = vst.msk [vmem:[%s1317] sm:$0xff] %vm281, %v1315
    %1319 = vst.msk [vmem:[#allocation2] sm:$0xff] %vm281, %v1309
    %1320 = vst.msk [vmem:[#allocation3] sm:$0xff] %vm281, %v1315
    %s1321 = scalar_lea.vmem [#allocation6], 32
    %v1322 = vld [vmem:[%s1321] sm:$0xff]
    %v1323 = vld [vmem:[#allocation2] sm:$0xff]
    %v1324 = vpack.c.bf16 %v1323, %v1323
    %v1325 = vld [vmem:[%s9] sm:$0xf]
    %v1326 = vld [vmem:[%s9 + $0x4] sm:$0xf]
    %v1327 = vld [vmem:[%s9 + $0x8] sm:$0xf]
    %v1328 = vld [vmem:[%s9 + $0xc] sm:$0xf]
    %v1333 = vunpack.c.l.b16 %v1325
    %v1334 = vunpack.c.l.b16 %v1326
    %v1335 = vunpack.c.l.b16 %v1327
    %v1336 = vunpack.c.l.b16 %v1328
    %v1337 = vpack.c.b16 %v1334, %v1333
    %v1338 = vpack.c.b16 %v1336, %v1335
    %v1342 = vsel %vm281, %v1324, 0
    %1344 = vmatprep.subr.bf16.mxu0 0
    %1345 = vmatpush1.bf16.msra.mxu0 %v1337
    %1346 = vmatprep.subr.bf16.mxu0 0
    %1347 = vmatpush1.bf16.msra.mxu0 %v1338
    %1348 = vmatprep.subr.bf16.mxu0 0
    %1349 = vmatpush1.bf16.msra.mxu0 0
    %1350 = vmatprep.subr.bf16.mxu0 0
    %1351 = vmatpush1.bf16.msra.mxu0 0
    %1352 = vmatprep.subr.bf16.mxu0 0
    %1353 = vmatpush1.bf16.msra.mxu0 0
    %1354 = vmatprep.subr.bf16.mxu0 0
    %1355 = vmatpush1.bf16.msra.mxu0 0
    %1356 = vmatprep.subr.bf16.mxu0 0
    %1357 = vmatpush1.bf16.msra.mxu0 0
    %1358 = vmatprep.subr.bf16.mxu0 0
    %1359 = vmatpush1.bf16.msra.mxu0 0
    %1360 = vmatprep.subr.bf16.mxu0 0
    %1361 = vmatpush1.bf16.msra.mxu0 0
    %1362 = vmatprep.subr.bf16.mxu0 0
    %1363 = vmatpush1.bf16.msra.mxu0 0
    %1364 = vmatprep.subr.bf16.mxu0 0
    %1365 = vmatpush1.bf16.msra.mxu0 0
    %1366 = vmatprep.subr.bf16.mxu0 0
    %1367 = vmatpush1.bf16.msra.mxu0 0
    %1368 = vmatprep.subr.bf16.mxu0 0
    %1369 = vmatpush1.bf16.msra.mxu0 0
    %1370 = vmatprep.subr.bf16.mxu0 0
    %1371 = vmatpush1.bf16.msra.mxu0 0
    %1372 = vmatprep.subr.bf16.mxu0 0
    %1373 = vmatpush1.bf16.msra.mxu0 0
    %1374 = vmatprep.subr.bf16.mxu0 0
    %1375 = vmatpush1.bf16.msra.mxu0 0
    %1376 = vmatprep.mubr.bf16.mxu0 0
    %1377 = vmatmul.mubr.bf16.gmra.mrb[0].mxu0 %v1342
    %v1378 = vpop.f32.mrb[0].mxu0
    %v1379 = vadd.f32 0.0, %v1378
    %v1380 = vpop.f32.mrb[0].mxu0
    %v1381 = vpop.f32.mrb[0].mxu0
    %v1382 = vpop.f32.mrb[0].mxu0
    %1383 = vdwg.mxu0
    %v1384 = vadd.f32 %v1322, %v1379
    %v1385 = vxor.u32 %v1384, 2147483648
    %v1386 = vmul.f32 %v1385, 1.442695
    %v1387 = vpow.pop %v1386
    %v1388 = vadd.f32 %v1387, 1.0
    %v1389 = vrcp.pop %v1388
    %v1390 = vmul.f32 1.0, %v1389
    %v1391 = vld [vmem:[#allocation17] sm:$0x1]
    %v1393 = vlaneseq
    %v1394 = vshrl.u32 %v1393, 7
    %v1395 = vsub.s32 0, %v1394
    %v1396 = vrot.slane %v1391, %v1395
    %1397 = vrot.lane.b32.xlu0 %v1396, 64
    %v1398 = vpop.permute.xlu0 %1397
    %v1400 = vadd.f32 %v1379, %v1398
    %1402 = vrot.lane.b32.xlu0 %v1400, 64
    %v1403 = vpop.permute.xlu0 %1402
    %v1405 = vmul.f32 %v1390, %v1403
    %1407 = vrot.lane.b32.xlu0 %v1405, 64
    %v1408 = vpop.permute.xlu0 %1407
    %v1410 = vadd.f32 %v1322, %v1408
    %v1411 = vtanh.pop %v1410
    %v1412 = vsub.f32 1.0, %v1390
    %1414 = vrot.lane.b32.xlu0 %v1411, 96
    %v1415 = vpop.permute.xlu0 %1414
    %v1417 = vmul.f32 %v1412, %v1415
    %1419 = vrot.lane.b32.xlu0 %v1323, 32
    %v1420 = vpop.permute.xlu0 %1419
    %v1422 = vmul.f32 %v1390, %v1420
    %v1423 = vadd.f32 %v1417, %v1422
    %s1424 = scalar_lea.vmem [#allocation7], 8
    %v1425 = vld [vmem:[%s1424] sm:$0xff]
    %v1426 = vld [vmem:[#allocation3] sm:$0xff]
    %v1427 = vpack.c.bf16 %v1426, %v1426
    %v1428 = vld [vmem:[%s17] sm:$0xf]
    %v1429 = vld [vmem:[%s17 + $0x4] sm:$0xf]
    %v1430 = vld [vmem:[%s17 + $0x8] sm:$0xf]
    %v1431 = vld [vmem:[%s17 + $0xc] sm:$0xf]
    %v1436 = vunpack.c.l.b16 %v1428
    %v1437 = vunpack.c.l.b16 %v1429
    %v1438 = vunpack.c.l.b16 %v1430
    %v1439 = vunpack.c.l.b16 %v1431
    %v1440 = vpack.c.b16 %v1437, %v1436
    %v1441 = vpack.c.b16 %v1439, %v1438
    %v1445 = vsel %vm281, %v1427, 0
    %1447 = vmatprep.subr.bf16.mxu0 0
    %1448 = vmatpush1.bf16.msra.mxu0 %v1440
    %1449 = vmatprep.subr.bf16.mxu0 0
    %1450 = vmatpush1.bf16.msra.mxu0 %v1441
    %1451 = vmatprep.subr.bf16.mxu0 0
    %1452 = vmatpush1.bf16.msra.mxu0 0
    %1453 = vmatprep.subr.bf16.mxu0 0
    %1454 = vmatpush1.bf16.msra.mxu0 0
    %1455 = vmatprep.subr.bf16.mxu0 0
    %1456 = vmatpush1.bf16.msra.mxu0 0
    %1457 = vmatprep.subr.bf16.mxu0 0
    %1458 = vmatpush1.bf16.msra.mxu0 0
    %1459 = vmatprep.subr.bf16.mxu0 0
    %1460 = vmatpush1.bf16.msra.mxu0 0
    %1461 = vmatprep.subr.bf16.mxu0 0
    %1462 = vmatpush1.bf16.msra.mxu0 0
    %1463 = vmatprep.subr.bf16.mxu0 0
    %1464 = vmatpush1.bf16.msra.mxu0 0
    %1465 = vmatprep.subr.bf16.mxu0 0
    %1466 = vmatpush1.bf16.msra.mxu0 0
    %1467 = vmatprep.subr.bf16.mxu0 0
    %1468 = vmatpush1.bf16.msra.mxu0 0
    %1469 = vmatprep.subr.bf16.mxu0 0
    %1470 = vmatpush1.bf16.msra.mxu0 0
    %1471 = vmatprep.subr.bf16.mxu0 0
    %1472 = vmatpush1.bf16.msra.mxu0 0
    %1473 = vmatprep.subr.bf16.mxu0 0
    %1474 = vmatpush1.bf16.msra.mxu0 0
    %1475 = vmatprep.subr.bf16.mxu0 0
    %1476 = vmatpush1.bf16.msra.mxu0 0
    %1477 = vmatprep.subr.bf16.mxu0 0
    %1478 = vmatpush1.bf16.msra.mxu0 0
    %1479 = vmatprep.mubr.bf16.mxu0 0
    %1480 = vmatmul.mubr.bf16.gmra.mrb[0].mxu0 %v1445
    %v1481 = vpop.f32.mrb[0].mxu0
    %v1482 = vadd.f32 0.0, %v1481
    %v1483 = vpop.f32.mrb[0].mxu0
    %v1484 = vpop.f32.mrb[0].mxu0
    %v1485 = vpop.f32.mrb[0].mxu0
    %1486 = vdwg.mxu0
    %v1487 = vadd.f32 %v1425, %v1482
    %v1488 = vxor.u32 %v1487, 2147483648
    %v1489 = vmul.f32 %v1488, 1.442695
    %v1490 = vpow.pop %v1489
    %v1491 = vadd.f32 %v1490, 1.0
    %v1492 = vrcp.pop %v1491
    %v1493 = vmul.f32 1.0, %v1492
    %v1494 = vld [vmem:[#allocation20] sm:$0x1]
    %v1496 = vlaneseq
    %v1497 = vshrl.u32 %v1496, 7
    %v1498 = vsub.s32 0, %v1497
    %v1499 = vrot.slane %v1494, %v1498
    %1500 = vrot.lane.b32.xlu0 %v1499, 64
    %v1501 = vpop.permute.xlu0 %1500
    %v1503 = vadd.f32 %v1482, %v1501
    %1505 = vrot.lane.b32.xlu0 %v1503, 64
    %v1506 = vpop.permute.xlu0 %1505
    %v1508 = vmul.f32 %v1493, %v1506
    %1510 = vrot.lane.b32.xlu0 %v1508, 64
    %v1511 = vpop.permute.xlu0 %1510
    %v1513 = vadd.f32 %v1425, %v1511
    %v1514 = vtanh.pop %v1513
    %v1515 = vsub.f32 1.0, %v1493
    %1517 = vrot.lane.b32.xlu0 %v1514, 96
    %v1518 = vpop.permute.xlu0 %1517
    %v1520 = vmul.f32 %v1515, %v1518
    %1522 = vrot.lane.b32.xlu0 %v1426, 32
    %v1523 = vpop.permute.xlu0 %1522
    %v1525 = vmul.f32 %v1493, %v1523
    %v1526 = vadd.f32 %v1520, %v1525
    %1528 = vrot.lane.b32.xlu0 %v1423, 96
    %v1529 = vpop.permute.xlu0 %1528
    %s1531 = scalar_lea.vmem [#allocation4], 32
    %1532 = vst.msk [vmem:[%s1531] sm:$0xff] %vm281, %v1529
    %1534 = vrot.lane.b32.xlu0 %v1526, 96
    %v1535 = vpop.permute.xlu0 %1534
    %s1537 = scalar_lea.vmem [#allocation5], 8
    %1538 = vst.msk [vmem:[%s1537] sm:$0xff] %vm281, %v1535
    %1539 = vst.msk [vmem:[#allocation2] sm:$0xff] %vm281, %v1529
    %1540 = vst.msk [vmem:[#allocation3] sm:$0xff] %vm281, %v1535
    %s1541 = scalar_lea.vmem [#allocation6], 40
    %v1542 = vld [vmem:[%s1541] sm:$0xff]
    %v1543 = vld [vmem:[#allocation2] sm:$0xff]
    %v1544 = vpack.c.bf16 %v1543, %v1543
    %v1545 = vld [vmem:[%s9] sm:$0xf]
    %v1546 = vld [vmem:[%s9 + $0x4] sm:$0xf]
    %v1547 = vld [vmem:[%s9 + $0x8] sm:$0xf]
    %v1548 = vld [vmem:[%s9 + $0xc] sm:$0xf]
    %v1553 = vunpack.c.l.b16 %v1545
    %v1554 = vunpack.c.l.b16 %v1546
    %v1555 = vunpack.c.l.b16 %v1547
    %v1556 = vunpack.c.l.b16 %v1548
    %v1557 = vpack.c.b16 %v1554, %v1553
    %v1558 = vpack.c.b16 %v1556, %v1555
    %v1562 = vsel %vm281, %v1544, 0
    %1564 = vmatprep.subr.bf16.mxu0 0
    %1565 = vmatpush1.bf16.msra.mxu0 %v1557
    %1566 = vmatprep.subr.bf16.mxu0 0
    %1567 = vmatpush1.bf16.msra.mxu0 %v1558
    %1568 = vmatprep.subr.bf16.mxu0 0
    %1569 = vmatpush1.bf16.msra.mxu0 0
    %1570 = vmatprep.subr.bf16.mxu0 0
    %1571 = vmatpush1.bf16.msra.mxu0 0
    %1572 = vmatprep.subr.bf16.mxu0 0
    %1573 = vmatpush1.bf16.msra.mxu0 0
    %1574 = vmatprep.subr.bf16.mxu0 0
    %1575 = vmatpush1.bf16.msra.mxu0 0
    %1576 = vmatprep.subr.bf16.mxu0 0
    %1577 = vmatpush1.bf16.msra.mxu0 0
    %1578 = vmatprep.subr.bf16.mxu0 0
    %1579 = vmatpush1.bf16.msra.mxu0 0
    %1580 = vmatprep.subr.bf16.mxu0 0
    %1581 = vmatpush1.bf16.msra.mxu0 0
    %1582 = vmatprep.subr.bf16.mxu0 0
    %1583 = vmatpush1.bf16.msra.mxu0 0
    %1584 = vmatprep.subr.bf16.mxu0 0
    %1585 = vmatpush1.bf16.msra.mxu0 0
    %1586 = vmatprep.subr.bf16.mxu0 0
    %1587 = vmatpush1.bf16.msra.mxu0 0
    %1588 = vmatprep.subr.bf16.mxu0 0
    %1589 = vmatpush1.bf16.msra.mxu0 0
    %1590 = vmatprep.subr.bf16.mxu0 0
    %1591 = vmatpush1.bf16.msra.mxu0 0
    %1592 = vmatprep.subr.bf16.mxu0 0
    %1593 = vmatpush1.bf16.msra.mxu0 0
    %1594 = vmatprep.subr.bf16.mxu0 0
    %1595 = vmatpush1.bf16.msra.mxu0 0
    %1596 = vmatprep.mubr.bf16.mxu0 0
    %1597 = vmatmul.mubr.bf16.gmra.mrb[0].mxu0 %v1562
    %v1598 = vpop.f32.mrb[0].mxu0
    %v1599 = vadd.f32 0.0, %v1598
    %v1600 = vpop.f32.mrb[0].mxu0
    %v1601 = vpop.f32.mrb[0].mxu0
    %v1602 = vpop.f32.mrb[0].mxu0
    %1603 = vdwg.mxu0
    %v1604 = vadd.f32 %v1542, %v1599
    %v1605 = vxor.u32 %v1604, 2147483648
    %v1606 = vmul.f32 %v1605, 1.442695
    %v1607 = vpow.pop %v1606
    %v1608 = vadd.f32 %v1607, 1.0
    %v1609 = vrcp.pop %v1608
    %v1610 = vmul.f32 1.0, %v1609
    %v1611 = vld [vmem:[#allocation17] sm:$0x1]
    %v1613 = vlaneseq
    %v1614 = vshrl.u32 %v1613, 7
    %v1615 = vsub.s32 0, %v1614
    %v1616 = vrot.slane %v1611, %v1615
    %1617 = vrot.lane.b32.xlu0 %v1616, 64
    %v1618 = vpop.permute.xlu0 %1617
    %v1620 = vadd.f32 %v1599, %v1618
    %1622 = vrot.lane.b32.xlu0 %v1620, 64
    %v1623 = vpop.permute.xlu0 %1622
    %v1625 = vmul.f32 %v1610, %v1623
    %1627 = vrot.lane.b32.xlu0 %v1625, 64
    %v1628 = vpop.permute.xlu0 %1627
    %v1630 = vadd.f32 %v1542, %v1628
    %v1631 = vtanh.pop %v1630
    %v1632 = vsub.f32 1.0, %v1610
    %1634 = vrot.lane.b32.xlu0 %v1631, 96
    %v1635 = vpop.permute.xlu0 %1634
    %v1637 = vmul.f32 %v1632, %v1635
    %1639 = vrot.lane.b32.xlu0 %v1543, 32
    %v1640 = vpop.permute.xlu0 %1639
    %v1642 = vmul.f32 %v1610, %v1640
    %v1643 = vadd.f32 %v1637, %v1642
    %v1644 = vld [vmem:[#allocation7] sm:$0xff]
    %v1645 = vld [vmem:[#allocation3] sm:$0xff]
    %v1646 = vpack.c.bf16 %v1645, %v1645
    %v1647 = vld [vmem:[%s17] sm:$0xf]
    %v1648 = vld [vmem:[%s17 + $0x4] sm:$0xf]
    %v1649 = vld [vmem:[%s17 + $0x8] sm:$0xf]
    %v1650 = vld [vmem:[%s17 + $0xc] sm:$0xf]
    %v1655 = vunpack.c.l.b16 %v1647
    %v1656 = vunpack.c.l.b16 %v1648
    %v1657 = vunpack.c.l.b16 %v1649
    %v1658 = vunpack.c.l.b16 %v1650
    %v1659 = vpack.c.b16 %v1656, %v1655
    %v1660 = vpack.c.b16 %v1658, %v1657
    %v1664 = vsel %vm281, %v1646, 0
    %1666 = vmatprep.subr.bf16.mxu0 0
    %1667 = vmatpush1.bf16.msra.mxu0 %v1659
    %1668 = vmatprep.subr.bf16.mxu0 0
    %1669 = vmatpush1.bf16.msra.mxu0 %v1660
    %1670 = vmatprep.subr.bf16.mxu0 0
    %1671 = vmatpush1.bf16.msra.mxu0 0
    %1672 = vmatprep.subr.bf16.mxu0 0
    %1673 = vmatpush1.bf16.msra.mxu0 0
    %1674 = vmatprep.subr.bf16.mxu0 0
    %1675 = vmatpush1.bf16.msra.mxu0 0
    %1676 = vmatprep.subr.bf16.mxu0 0
    %1677 = vmatpush1.bf16.msra.mxu0 0
    %1678 = vmatprep.subr.bf16.mxu0 0
    %1679 = vmatpush1.bf16.msra.mxu0 0
    %1680 = vmatprep.subr.bf16.mxu0 0
    %1681 = vmatpush1.bf16.msra.mxu0 0
    %1682 = vmatprep.subr.bf16.mxu0 0
    %1683 = vmatpush1.bf16.msra.mxu0 0
    %1684 = vmatprep.subr.bf16.mxu0 0
    %1685 = vmatpush1.bf16.msra.mxu0 0
    %1686 = vmatprep.subr.bf16.mxu0 0
    %1687 = vmatpush1.bf16.msra.mxu0 0
    %1688 = vmatprep.subr.bf16.mxu0 0
    %1689 = vmatpush1.bf16.msra.mxu0 0
    %1690 = vmatprep.subr.bf16.mxu0 0
    %1691 = vmatpush1.bf16.msra.mxu0 0
    %1692 = vmatprep.subr.bf16.mxu0 0
    %1693 = vmatpush1.bf16.msra.mxu0 0
    %1694 = vmatprep.subr.bf16.mxu0 0
    %1695 = vmatpush1.bf16.msra.mxu0 0
    %1696 = vmatprep.subr.bf16.mxu0 0
    %1697 = vmatpush1.bf16.msra.mxu0 0
    %1698 = vmatprep.mubr.bf16.mxu0 0
    %1699 = vmatmul.mubr.bf16.gmra.mrb[0].mxu0 %v1664
    %v1700 = vpop.f32.mrb[0].mxu0
    %v1701 = vadd.f32 0.0, %v1700
    %v1702 = vpop.f32.mrb[0].mxu0
    %v1703 = vpop.f32.mrb[0].mxu0
    %v1704 = vpop.f32.mrb[0].mxu0
    %1705 = vdwg.mxu0
    %v1706 = vadd.f32 %v1644, %v1701
    %v1707 = vxor.u32 %v1706, 2147483648
    %v1708 = vmul.f32 %v1707, 1.442695
    %v1709 = vpow.pop %v1708
    %v1710 = vadd.f32 %v1709, 1.0
    %v1711 = vrcp.pop %v1710
    %v1712 = vmul.f32 1.0, %v1711
    %v1713 = vld [vmem:[#allocation20] sm:$0x1]
    %v1715 = vlaneseq
    %v1716 = vshrl.u32 %v1715, 7
    %v1717 = vsub.s32 0, %v1716
    %v1718 = vrot.slane %v1713, %v1717
    %1719 = vrot.lane.b32.xlu0 %v1718, 64
    %v1720 = vpop.permute.xlu0 %1719
    %v1722 = vadd.f32 %v1701, %v1720
    %1724 = vrot.lane.b32.xlu0 %v1722, 64
    %v1725 = vpop.permute.xlu0 %1724
    %v1727 = vmul.f32 %v1712, %v1725
    %1729 = vrot.lane.b32.xlu0 %v1727, 64
    %v1730 = vpop.permute.xlu0 %1729
    %v1732 = vadd.f32 %v1644, %v1730
    %v1733 = vtanh.pop %v1732
    %v1734 = vsub.f32 1.0, %v1712
    %1736 = vrot.lane.b32.xlu0 %v1733, 96
    %v1737 = vpop.permute.xlu0 %1736
    %v1739 = vmul.f32 %v1734, %v1737
    %1741 = vrot.lane.b32.xlu0 %v1645, 32
    %v1742 = vpop.permute.xlu0 %1741
    %v1744 = vmul.f32 %v1712, %v1742
    %v1745 = vadd.f32 %v1739, %v1744
    %1747 = vrot.lane.b32.xlu0 %v1643, 96
    %v1748 = vpop.permute.xlu0 %1747
    %s1750 = scalar_lea.vmem [#allocation4], 40
    %1751 = vst.msk [vmem:[%s1750] sm:$0xff] %vm281, %v1748
    %1753 = vrot.lane.b32.xlu0 %v1745, 96
    %v1754 = vpop.permute.xlu0 %1753
    %1756 = vst.msk [vmem:[#allocation5] sm:$0xff] %vm281, %v1754
    %1757 = vst.msk [vmem:[#allocation2] sm:$0xff] %vm281, %v1748
    %1758 = vst.msk [vmem:[#allocation3] sm:$0xff] %vm281, %v1754
    %v1759 = vld [vmem:[#allocation2] sm:$0xff]
    %v1760 = vpack.c.bf16 %v1759, %v1759
    %v1761 = vld [vmem:[%s23] sm:$0xf]
    %v1762 = vld [vmem:[%s23 + $0x4] sm:$0xf]
    %v1763 = vld [vmem:[%s23 + $0x8] sm:$0xf]
    %v1764 = vld [vmem:[%s23 + $0xc] sm:$0xf]
    %v1765 = vld [vmem:[#allocation3] sm:$0xff]
    %v1766 = vpack.c.bf16 %v1765, %v1765
    %v1767 = vld [vmem:[%s25] sm:$0xf]
    %v1768 = vld [vmem:[%s25 + $0x4] sm:$0xf]
    %v1769 = vld [vmem:[%s25 + $0x8] sm:$0xf]
    %v1770 = vld [vmem:[%s25 + $0xc] sm:$0xf]
    %v1775 = vunpack.c.l.b16 %v1767
    %v1776 = vunpack.c.l.b16 %v1768
    %v1777 = vunpack.c.l.b16 %v1769
    %v1778 = vunpack.c.l.b16 %v1770
    %v1779 = vpack.c.b16 %v1776, %v1775
    %v1780 = vpack.c.b16 %v1778, %v1777
    %v1784 = vsel %vm281, %v1766, 0
    %1786 = vmatprep.subr.bf16.mxu0 0
    %1787 = vmatpush1.bf16.msra.mxu0 %v1779
    %1788 = vmatprep.subr.bf16.mxu0 0
    %1789 = vmatpush1.bf16.msra.mxu0 %v1780
    %1790 = vmatprep.subr.bf16.mxu0 0
    %1791 = vmatpush1.bf16.msra.mxu0 0
    %1792 = vmatprep.subr.bf16.mxu0 0
    %1793 = vmatpush1.bf16.msra.mxu0 0
    %1794 = vmatprep.subr.bf16.mxu0 0
    %1795 = vmatpush1.bf16.msra.mxu0 0
    %1796 = vmatprep.subr.bf16.mxu0 0
    %1797 = vmatpush1.bf16.msra.mxu0 0
    %1798 = vmatprep.subr.bf16.mxu0 0
    %1799 = vmatpush1.bf16.msra.mxu0 0
    %1800 = vmatprep.subr.bf16.mxu0 0
    %1801 = vmatpush1.bf16.msra.mxu0 0
    %1802 = vmatprep.subr.bf16.mxu0 0
    %1803 = vmatpush1.bf16.msra.mxu0 0
    %1804 = vmatprep.subr.bf16.mxu0 0
    %1805 = vmatpush1.bf16.msra.mxu0 0
    %1806 = vmatprep.subr.bf16.mxu0 0
    %1807 = vmatpush1.bf16.msra.mxu0 0
    %1808 = vmatprep.subr.bf16.mxu0 0
    %1809 = vmatpush1.bf16.msra.mxu0 0
    %1810 = vmatprep.subr.bf16.mxu0 0
    %1811 = vmatpush1.bf16.msra.mxu0 0
    %1812 = vmatprep.subr.bf16.mxu0 0
    %1813 = vmatpush1.bf16.msra.mxu0 0
    %1814 = vmatprep.subr.bf16.mxu0 0
    %1815 = vmatpush1.bf16.msra.mxu0 0
    %1816 = vmatprep.subr.bf16.mxu0 0
    %1817 = vmatpush1.bf16.msra.mxu0 0
    %1818 = vmatprep.mubr.bf16.mxu0 0
    %1819 = vmatmul.mubr.bf16.gmra.mrb[0].mxu0 %v1784
    %v1820 = vpop.f32.mrb[0].mxu0
    %v1821 = vadd.f32 0.0, %v1820
    %v1822 = vpop.f32.mrb[0].mxu0
    %v1823 = vpop.f32.mrb[0].mxu0
    %v1824 = vpop.f32.mrb[0].mxu0
    %1825 = vdwg.mxu0
    %v1830 = vunpack.c.l.b16 %v1761
    %v1831 = vunpack.c.l.b16 %v1762
    %v1832 = vunpack.c.l.b16 %v1763
    %v1833 = vunpack.c.l.b16 %v1764
    %v1834 = vpack.c.b16 %v1831, %v1830
    %v1835 = vpack.c.b16 %v1833, %v1832
    %v1839 = vsel %vm281, %v1760, 0
    %1841 = vmatprep.subr.bf16.mxu0 0
    %1842 = vmatpush1.bf16.msra.mxu0 %v1834
    %1843 = vmatprep.subr.bf16.mxu0 0
    %1844 = vmatpush1.bf16.msra.mxu0 %v1835
    %1845 = vmatprep.subr.bf16.mxu0 0
    %1846 = vmatpush1.bf16.msra.mxu0 0
    %1847 = vmatprep.subr.bf16.mxu0 0
    %1848 = vmatpush1.bf16.msra.mxu0 0
    %1849 = vmatprep.subr.bf16.mxu0 0
    %1850 = vmatpush1.bf16.msra.mxu0 0
    %1851 = vmatprep.subr.bf16.mxu0 0
    %1852 = vmatpush1.bf16.msra.mxu0 0
    %1853 = vmatprep.subr.bf16.mxu0 0
    %1854 = vmatpush1.bf16.msra.mxu0 0
    %1855 = vmatprep.subr.bf16.mxu0 0
    %1856 = vmatpush1.bf16.msra.mxu0 0
    %1857 = vmatprep.subr.bf16.mxu0 0
    %1858 = vmatpush1.bf16.msra.mxu0 0
    %1859 = vmatprep.subr.bf16.mxu0 0
    %1860 = vmatpush1.bf16.msra.mxu0 0
    %1861 = vmatprep.subr.bf16.mxu0 0
    %1862 = vmatpush1.bf16.msra.mxu0 0
    %1863 = vmatprep.subr.bf16.mxu0 0
    %1864 = vmatpush1.bf16.msra.mxu0 0
    %1865 = vmatprep.subr.bf16.mxu0 0
    %1866 = vmatpush1.bf16.msra.mxu0 0
    %1867 = vmatprep.subr.bf16.mxu0 0
    %1868 = vmatpush1.bf16.msra.mxu0 0
    %1869 = vmatprep.subr.bf16.mxu0 0
    %1870 = vmatpush1.bf16.msra.mxu0 0
    %1871 = vmatprep.subr.bf16.mxu0 0
    %1872 = vmatpush1.bf16.msra.mxu0 0
    %1873 = vmatprep.mubr.bf16.mxu0 0
    %1874 = vmatmul.mubr.bf16.gmra.mrb[0].mxu0 %v1839
    %v1875 = vpop.f32.mrb[0].mxu0
    %v1876 = vadd.f32 %v1821, %v1875
    %v1877 = vpop.f32.mrb[0].mxu0
    %v1878 = vpop.f32.mrb[0].mxu0
    %v1879 = vpop.f32.mrb[0].mxu0
    %1880 = vdwg.mxu0
    %v1881 = vld [vmem:[#allocation22] sm:$0x1]
    %v1883 = vlaneseq
    %v1884 = vshrl.u32 %v1883, 7
    %v1885 = vsub.s32 0, %v1884
    %v1886 = vrot.slane %v1881, %v1885
    %v1888 = vadd.f32 %v1876, %v1886
    %v1889 = vtanh.pop %v1888
    %1890 = vst.msk [vmem:[#allocation9] sm:$0xff] %vm281, %v1889
    %v1891 = vld [vmem:[#allocation4] sm:$0xff]
    %v1892 = vld [vmem:[#allocation4 + $0x8] sm:$0xff]
    %v1893 = vld [vmem:[#allocation4 + $0x10] sm:$0xff]
    %v1894 = vld [vmem:[#allocation4 + $0x18] sm:$0xff]
    %v1895 = vld [vmem:[#allocation4 + $0x20] sm:$0xff]
    %v1896 = vld [vmem:[#allocation4 + $0x28] sm:$0xff]
    %v1897 = vpack.c.bf16 %v1892, %v1891
    %v1898 = vpack.c.bf16 %v1894, %v1893
    %v1899 = vpack.c.bf16 %v1896, %v1895
    %v1900 = vld [vmem:[#allocation5] sm:$0xff]
    %v1901 = vld [vmem:[#allocation5 + $0x8] sm:$0xff]
    %v1902 = vld [vmem:[#allocation5 + $0x10] sm:$0xff]
    %v1903 = vld [vmem:[#allocation5 + $0x18] sm:$0xff]
    %v1904 = vld [vmem:[#allocation5 + $0x20] sm:$0xff]
    %v1905 = vld [vmem:[#allocation5 + $0x28] sm:$0xff]
    %v1906 = vpack.c.bf16 %v1901, %v1900
    %v1907 = vpack.c.bf16 %v1903, %v1902
    %v1908 = vpack.c.bf16 %v1905, %v1904
    %v1909 = vld [vmem:[%s33] sm:$0xf]
    %v1910 = vld [vmem:[%s33 + $0x4] sm:$0xf]
    %v1911 = vld [vmem:[%s33 + $0x8] sm:$0xf]
    %v1912 = vld [vmem:[%s33 + $0xc] sm:$0xf]
    %v1913 = vld [vmem:[%s35] sm:$0xf]
    %v1914 = vld [vmem:[%s35 + $0x4] sm:$0xf]
    %v1915 = vld [vmem:[%s35 + $0x8] sm:$0xf]
    %v1916 = vld [vmem:[%s35 + $0xc] sm:$0xf]
    %v1921 = vunpack.c.l.b16 %v1913
    %v1922 = vunpack.c.l.b16 %v1914
    %v1923 = vunpack.c.l.b16 %v1915
    %v1924 = vunpack.c.l.b16 %v1916
    %v1925 = vpack.c.b16 %v1922, %v1921
    %v1926 = vpack.c.b16 %v1924, %v1923
    %v1930 = vsel %vm281, %v1906, 0
    %v1933 = vsel %vm281, %v1907, 0
    %v1936 = vsel %vm281, %v1908, 0
    %1938 = vmatprep.subr.bf16.mxu0 0
    %1939 = vmatpush1.bf16.msra.mxu0 %v1925
    %1940 = vmatprep.subr.bf16.mxu0 0
    %1941 = vmatpush1.bf16.msra.mxu0 %v1926
    %1942 = vmatprep.subr.bf16.mxu0 0
    %1943 = vmatpush1.bf16.msra.mxu0 0
    %1944 = vmatprep.subr.bf16.mxu0 0
    %1945 = vmatpush1.bf16.msra.mxu0 0
    %1946 = vmatprep.subr.bf16.mxu0 0
    %1947 = vmatpush1.bf16.msra.mxu0 0
    %1948 = vmatprep.subr.bf16.mxu0 0
    %1949 = vmatpush1.bf16.msra.mxu0 0
    %1950 = vmatprep.subr.bf16.mxu0 0
    %1951 = vmatpush1.bf16.msra.mxu0 0
    %1952 = vmatprep.subr.bf16.mxu0 0
    %1953 = vmatpush1.bf16.msra.mxu0 0
    %1954 = vmatprep.subr.bf16.mxu0 0
    %1955 = vmatpush1.bf16.msra.mxu0 0
    %1956 = vmatprep.subr.bf16.mxu0 0
    %1957 = vmatpush1.bf16.msra.mxu0 0
    %1958 = vmatprep.subr.bf16.mxu0 0
    %1959 = vmatpush1.bf16.msra.mxu0 0
    %1960 = vmatprep.subr.bf16.mxu0 0
    %1961 = vmatpush1.bf16.msra.mxu0 0
    %1962 = vmatprep.subr.bf16.mxu0 0
    %1963 = vmatpush1.bf16.msra.mxu0 0
    %1964 = vmatprep.subr.bf16.mxu0 0
    %1965 = vmatpush1.bf16.msra.mxu0 0
    %1966 = vmatprep.subr.bf16.mxu0 0
    %1967 = vmatpush1.bf16.msra.mxu0 0
    %1968 = vmatprep.subr.bf16.mxu0 0
    %1969 = vmatpush1.bf16.msra.mxu0 0
    %1970 = vmatprep.mubr.bf16.mxu0 0
    %1971 = vmatmul.mubr.bf16.gmra.mrb[0].mxu0 %v1930
    %v1972 = vpop.f32.mrb[0].mxu0
    %v1973 = vadd.f32 0.0, %v1972
    %v1974 = vpop.f32.mrb[0].mxu0
    %v1975 = vpop.f32.mrb[0].mxu0
    %v1976 = vadd.f32 0.0, %v1975
    %v1977 = vpop.f32.mrb[0].mxu0
    %1978 = vmatprep.mubr.bf16.mxu0 0
    %1979 = vmatmul.mubr.bf16.gmra.mrb[0].mxu0 %v1933
    %v1980 = vpop.f32.mrb[0].mxu0
    %v1981 = vadd.f32 0.0, %v1980
    %v1982 = vpop.f32.mrb[0].mxu0
    %v1983 = vpop.f32.mrb[0].mxu0
    %v1984 = vadd.f32 0.0, %v1983
    %v1985 = vpop.f32.mrb[0].mxu0
    %1986 = vmatprep.mubr.bf16.mxu0 0
    %1987 = vmatmul.mubr.bf16.gmra.mrb[0].mxu0 %v1936
    %v1988 = vpop.f32.mrb[0].mxu0
    %v1989 = vadd.f32 0.0, %v1988
    %v1990 = vpop.f32.mrb[0].mxu0
    %v1991 = vpop.f32.mrb[0].mxu0
    %v1992 = vadd.f32 0.0, %v1991
    %v1993 = vpop.f32.mrb[0].mxu0
    %1994 = vdwg.mxu0
    %v1999 = vunpack.c.l.b16 %v1909
    %v2000 = vunpack.c.l.b16 %v1910
    %v2001 = vunpack.c.l.b16 %v1911
    %v2002 = vunpack.c.l.b16 %v1912
    %v2003 = vpack.c.b16 %v2000, %v1999
    %v2004 = vpack.c.b16 %v2002, %v2001
    %v2008 = vsel %vm281, %v1897, 0
    %v2011 = vsel %vm281, %v1898, 0
    %v2014 = vsel %vm281, %v1899, 0
    %2016 = vmatprep.subr.bf16.mxu0 0
    %2017 = vmatpush1.bf16.msra.mxu0 %v2003
    %2018 = vmatprep.subr.bf16.mxu0 0
    %2019 = vmatpush1.bf16.msra.mxu0 %v2004
    %2020 = vmatprep.subr.bf16.mxu0 0
    %2021 = vmatpush1.bf16.msra.mxu0 0
    %2022 = vmatprep.subr.bf16.mxu0 0
    %2023 = vmatpush1.bf16.msra.mxu0 0
    %2024 = vmatprep.subr.bf16.mxu0 0
    %2025 = vmatpush1.bf16.msra.mxu0 0
    %2026 = vmatprep.subr.bf16.mxu0 0
    %2027 = vmatpush1.bf16.msra.mxu0 0
    %2028 = vmatprep.subr.bf16.mxu0 0
    %2029 = vmatpush1.bf16.msra.mxu0 0
    %2030 = vmatprep.subr.bf16.mxu0 0
    %2031 = vmatpush1.bf16.msra.mxu0 0
    %2032 = vmatprep.subr.bf16.mxu0 0
    %2033 = vmatpush1.bf16.msra.mxu0 0
    %2034 = vmatprep.subr.bf16.mxu0 0
    %2035 = vmatpush1.bf16.msra.mxu0 0
    %2036 = vmatprep.subr.bf16.mxu0 0
    %2037 = vmatpush1.bf16.msra.mxu0 0
    %2038 = vmatprep.subr.bf16.mxu0 0
    %2039 = vmatpush1.bf16.msra.mxu0 0
    %2040 = vmatprep.subr.bf16.mxu0 0
    %2041 = vmatpush1.bf16.msra.mxu0 0
    %2042 = vmatprep.subr.bf16.mxu0 0
    %2043 = vmatpush1.bf16.msra.mxu0 0
    %2044 = vmatprep.subr.bf16.mxu0 0
    %2045 = vmatpush1.bf16.msra.mxu0 0
    %2046 = vmatprep.subr.bf16.mxu0 0
    %2047 = vmatpush1.bf16.msra.mxu0 0
    %2048 = vmatprep.mubr.bf16.mxu0 0
    %2049 = vmatmul.mubr.bf16.gmra.mrb[0].mxu0 %v2008
    %v2050 = vpop.f32.mrb[0].mxu0
    %v2051 = vadd.f32 %v1973, %v2050
    %v2052 = vpop.f32.mrb[0].mxu0
    %v2053 = vpop.f32.mrb[0].mxu0
    %v2054 = vadd.f32 %v1976, %v2053
    %v2055 = vpop.f32.mrb[0].mxu0
    %2056 = vmatprep.mubr.bf16.mxu0 0
    %2057 = vmatmul.mubr.bf16.gmra.mrb[0].mxu0 %v2011
    %v2058 = vpop.f32.mrb[0].mxu0
    %v2059 = vadd.f32 %v1981, %v2058
    %v2060 = vpop.f32.mrb[0].mxu0
    %v2061 = vpop.f32.mrb[0].mxu0
    %v2062 = vadd.f32 %v1984, %v2061
    %v2063 = vpop.f32.mrb[0].mxu0
    %2064 = vmatprep.mubr.bf16.mxu0 0
    %2065 = vmatmul.mubr.bf16.gmra.mrb[0].mxu0 %v2014
    %v2066 = vpop.f32.mrb[0].mxu0
    %v2067 = vadd.f32 %v1989, %v2066
    %v2068 = vpop.f32.mrb[0].mxu0
    %v2069 = vpop.f32.mrb[0].mxu0
    %v2070 = vadd.f32 %v1992, %v2069
    %v2071 = vpop.f32.mrb[0].mxu0
    %2072 = vdwg.mxu0
    %v2073 = vld [vmem:[#allocation23] sm:$0x1]
    %v2075 = vlaneseq
    %v2076 = vshrl.u32 %v2075, 7
    %v2077 = vsub.s32 0, %v2076
    %v2078 = vrot.slane %v2073, %v2077
    %v2080 = vadd.f32 %v2051, %v2078
    %v2081 = vadd.f32 %v2054, %v2078
    %v2082 = vadd.f32 %v2059, %v2078
    %v2083 = vadd.f32 %v2062, %v2078
    %v2084 = vadd.f32 %v2067, %v2078
    %v2085 = vadd.f32 %v2070, %v2078
    %2086 = vst.msk [vmem:[#allocation8] sm:$0xff] %vm281, %v2080
    %2087 = vst.msk [vmem:[#allocation8 + $0x8] sm:$0xff] %vm281, %v2081
    %2088 = vst.msk [vmem:[#allocation8 + $0x10] sm:$0xff] %vm281, %v2082
    %2089 = vst.msk [vmem:[#allocation8 + $0x18] sm:$0xff] %vm281, %v2083
    %2090 = vst.msk [vmem:[#allocation8 + $0x20] sm:$0xff] %vm281, %v2084
    %2091 = vst.msk [vmem:[#allocation8 + $0x28] sm:$0xff] %vm281, %v2085
    %v2092 = vld [vmem:[#allocation25] sm:$0x1]
    %v2093 = vlaneseq
    %v2094 = vand.u32 %v2093, 127
    %2095 = vst [vmem:[#allocation11] sm:$0xff] 0.0
    // Predicated region
    $region162: #{tpu_custom_call.1} parent=1 // pred_check
      _
    $region163: #{tpu_custom_call.1} parent=1 // pred_check_branch
      %2097 = sbr.rel target = $region165
    $region164: #{tpu_custom_call.1} parent=1 // pred_region
      %2098 = sst [smem:[#allocation30]] [#allocation29]
      %2099 = sst [smem:[#allocation31]] [#allocation28]
    $region165: #{tpu_custom_call.1} parent=1 // pred_fallthru
      _
    %2101 = shalt.err (0)
    %s2103 = sshll.u32 [#allocation11], 4
    %s2104 = int_to_ptr.vmem [resolvable:$true] %s2103
    %2106 = dma.vmem_to_hbm [thread:$0]  %s2104, 128, %s63, [#allocation12]
    %v2107 = vld [vmem:[%s3] sm:$0xff]
    %2108 = vset.pattern.permute.xlu0 0
    %2109 = vperm.xlu0 %2108, %v2107
    %v2110 = vpop.permute.xlu0 %2109
    %vm2111 = vcmp.eq.s32.totalorder %v2094, %v2110
    %v2112 = vsel %vm2111, 1, 0
    %v2113 = vcvt.s32.f32 %v2112
    %2114 = vst [vmem:[#allocation10] sm:$0xff] %v2113
    %v2115 = vld [vmem:[#allocation9] sm:$0xff]
    %v2116 = vld [vmem:[#allocation10] sm:$0xff]
    %v2117 = vpack.c.bf16 %v2116, %v2116
    %v2118 = vld [vmem:[%s29] sm:$0xf]
    %v2119 = vld [vmem:[%s29 + $0x4] sm:$0xf]
    %v2120 = vld [vmem:[%s29 + $0x8] sm:$0xf]
    %v2121 = vld [vmem:[%s29 + $0xc] sm:$0xf]
    %v2122 = vld [vmem:[%s29 + $0x10] sm:$0xf]
    %v2123 = vld [vmem:[%s29 + $0x14] sm:$0xf]
    %v2124 = vld [vmem:[%s29 + $0x18] sm:$0xf]
    %v2125 = vld [vmem:[%s29 + $0x1c] sm:$0xf]
    %v2126 = vld [vmem:[%s29 + $0x20] sm:$0xf]
    %v2127 = vld [vmem:[%s29 + $0x24] sm:$0xf]
    %v2128 = vld [vmem:[%s29 + $0x28] sm:$0xf]
    %v2129 = vld [vmem:[%s29 + $0x2c] sm:$0xf]
    %v2130 = vld [vmem:[%s29 + $0x30] sm:$0xf]
    %v2131 = vld [vmem:[%s29 + $0x34] sm:$0xf]
    %v2132 = vld [vmem:[%s29 + $0x38] sm:$0xf]
    %v2133 = vld [vmem:[%s29 + $0x3c] sm:$0xf]
    %v2150 = vunpack.c.l.b16 %v2118
    %v2151 = vunpack.c.l.b16 %v2119
    %v2152 = vunpack.c.l.b16 %v2120
    %v2153 = vunpack.c.l.b16 %v2121
    %v2154 = vunpack.c.l.b16 %v2122
    %v2155 = vunpack.c.l.b16 %v2123
    %v2156 = vunpack.c.l.b16 %v2124
    %v2157 = vunpack.c.l.b16 %v2125
    %v2158 = vunpack.c.l.b16 %v2126
    %v2159 = vunpack.c.l.b16 %v2127
    %v2160 = vunpack.c.l.b16 %v2128
    %v2161 = vunpack.c.l.b16 %v2129
    %v2162 = vunpack.c.l.b16 %v2130
    %v2163 = vunpack.c.l.b16 %v2131
    %v2164 = vunpack.c.l.b16 %v2132
    %v2165 = vunpack.c.l.b16 %v2133
    %v2166 = vpack.c.b16 %v2151, %v2150
    %v2167 = vpack.c.b16 %v2153, %v2152
    %v2168 = vpack.c.b16 %v2155, %v2154
    %v2169 = vpack.c.b16 %v2157, %v2156
    %v2170 = vpack.c.b16 %v2159, %v2158
    %v2171 = vpack.c.b16 %v2161, %v2160
    %v2172 = vpack.c.b16 %v2163, %v2162
    %v2173 = vpack.c.b16 %v2165, %v2164
    %2182 = vmatprep.subr.bf16.mxu0 0
    %2183 = vmatpush1.bf16.msra.mxu0 %v2166
    %2184 = vmatprep.subr.bf16.mxu0 0
    %2185 = vmatpush1.bf16.msra.mxu0 %v2167
    %2186 = vmatprep.subr.bf16.mxu0 0
    %2187 = vmatpush1.bf16.msra.mxu0 %v2168
    %2188 = vmatprep.subr.bf16.mxu0 0
    %2189 = vmatpush1.bf16.msra.mxu0 %v2169
    %2190 = vmatprep.subr.bf16.mxu0 0
    %2191 = vmatpush1.bf16.msra.mxu0 %v2170
    %2192 = vmatprep.subr.bf16.mxu0 0
    %2193 = vmatpush1.bf16.msra.mxu0 %v2171
    %2194 = vmatprep.subr.bf16.mxu0 0
    %2195 = vmatpush1.bf16.msra.mxu0 %v2172
    %2196 = vmatprep.subr.bf16.mxu0 0
    %2197 = vmatpush1.bf16.msra.mxu0 %v2173
    %2198 = vmatprep.subr.bf16.mxu0 0
    %2199 = vmatpush1.bf16.msra.mxu0 0
    %2200 = vmatprep.subr.bf16.mxu0 0
    %2201 = vmatpush1.bf16.msra.mxu0 0
    %2202 = vmatprep.subr.bf16.mxu0 0
    %2203 = vmatpush1.bf16.msra.mxu0 0
    %2204 = vmatprep.subr.bf16.mxu0 0
    %2205 = vmatpush1.bf16.msra.mxu0 0
    %2206 = vmatprep.subr.bf16.mxu0 0
    %2207 = vmatpush1.bf16.msra.mxu0 0
    %2208 = vmatprep.subr.bf16.mxu0 0
    %2209 = vmatpush1.bf16.msra.mxu0 0
    %2210 = vmatprep.subr.bf16.mxu0 0
    %2211 = vmatpush1.bf16.msra.mxu0 0
    %2212 = vmatprep.subr.bf16.mxu0 0
    %2213 = vmatpush1.bf16.msra.mxu0 0
    %2214 = vmatprep.mubr.bf16.mxu0 0
    %2215 = vmatmul.mubr.bf16.gmra.mrb[0].mxu0 %v2117
    %v2216 = vpop.f32.mrb[0].mxu0
    %v2217 = vadd.f32 0.0, %v2216
    %v2218 = vpop.f32.mrb[0].mxu0
    %v2219 = vpop.f32.mrb[0].mxu0
    %v2220 = vpop.f32.mrb[0].mxu0
    %2221 = vdwg.mxu0
    %v2222 = vpack.c.bf16 %v2115, %v2115
    %v2223 = vld [vmem:[%s31] sm:$0xf]
    %v2224 = vld [vmem:[%s31 + $0x4] sm:$0xf]
    %v2225 = vld [vmem:[%s31 + $0x8] sm:$0xf]
    %v2226 = vld [vmem:[%s31 + $0xc] sm:$0xf]
    %v2231 = vunpack.c.l.b16 %v2223
    %v2232 = vunpack.c.l.b16 %v2224
    %v2233 = vunpack.c.l.b16 %v2225
    %v2234 = vunpack.c.l.b16 %v2226
    %v2235 = vpack.c.b16 %v2232, %v2231
    %v2236 = vpack.c.b16 %v2234, %v2233
    %v2240 = vsel %vm281, %v2222, 0
    %2242 = vmatprep.subr.bf16.mxu0 0
    %2243 = vmatpush1.bf16.msra.mxu0 %v2235
    %2244 = vmatprep.subr.bf16.mxu0 0
    %2245 = vmatpush1.bf16.msra.mxu0 %v2236
    %2246 = vmatprep.subr.bf16.mxu0 0
    %2247 = vmatpush1.bf16.msra.mxu0 0
    %2248 = vmatprep.subr.bf16.mxu0 0
    %2249 = vmatpush1.bf16.msra.mxu0 0
    %2250 = vmatprep.subr.bf16.mxu0 0
    %2251 = vmatpush1.bf16.msra.mxu0 0
    %2252 = vmatprep.subr.bf16.mxu0 0
    %2253 = vmatpush1.bf16.msra.mxu0 0
    %2254 = vmatprep.subr.bf16.mxu0 0
    %2255 = vmatpush1.bf16.msra.mxu0 0
    %2256 = vmatprep.subr.bf16.mxu0 0
    %2257 = vmatpush1.bf16.msra.mxu0 0
    %2258 = vmatprep.subr.bf16.mxu0 0
    %2259 = vmatpush1.bf16.msra.mxu0 0
    %2260 = vmatprep.subr.bf16.mxu0 0
    %2261 = vmatpush1.bf16.msra.mxu0 0
    %2262 = vmatprep.subr.bf16.mxu0 0
    %2263 = vmatpush1.bf16.msra.mxu0 0
    %2264 = vmatprep.subr.bf16.mxu0 0
    %2265 = vmatpush1.bf16.msra.mxu0 0
    %2266 = vmatprep.subr.bf16.mxu0 0
    %2267 = vmatpush1.bf16.msra.mxu0 0
    %2268 = vmatprep.subr.bf16.mxu0 0
    %2269 = vmatpush1.bf16.msra.mxu0 0
    %2270 = vmatprep.subr.bf16.mxu0 0
    %2271 = vmatpush1.bf16.msra.mxu0 0
    %2272 = vmatprep.subr.bf16.mxu0 0
    %2273 = vmatpush1.bf16.msra.mxu0 0
    %2274 = vmatprep.mubr.bf16.mxu0 0
    %2275 = vmatmul.mubr.bf16.gmra.mrb[0].mxu0 %v2240
    %v2276 = vpop.f32.mrb[0].mxu0
    %v2277 = vadd.f32 0.0, %v2276
    %v2278 = vpop.f32.mrb[0].mxu0
    %v2279 = vpop.f32.mrb[0].mxu0
    %v2280 = vpop.f32.mrb[0].mxu0
    %2281 = vdwg.mxu0
    %v2282 = vld [vmem:[#allocation8] sm:$0xff]
    %v2283 = vld [vmem:[#allocation8 + $0x8] sm:$0xff]
    %v2284 = vld [vmem:[#allocation8 + $0x10] sm:$0xff]
    %v2285 = vld [vmem:[#allocation8 + $0x18] sm:$0xff]
    %v2286 = vld [vmem:[#allocation8 + $0x20] sm:$0xff]
    %v2287 = vld [vmem:[#allocation8 + $0x28] sm:$0xff]
    %v2288 = vadd.f32 %v2277, %v2282
    %v2289 = vadd.f32 %v2277, %v2283
    %v2290 = vadd.f32 %v2277, %v2284
    %v2291 = vadd.f32 %v2277, %v2285
    %v2292 = vadd.f32 %v2277, %v2286
    %v2293 = vadd.f32 %v2277, %v2287
    %v2294 = vtanh.pop %v2288
    %v2295 = vtanh.pop %v2289
    %v2296 = vtanh.pop %v2290
    %v2297 = vtanh.pop %v2291
    %v2298 = vtanh.pop %v2292
    %v2299 = vtanh.pop %v2293
    %v2301 = vlaneseq
    %v2302 = vshrl.u32 %v2301, 7
    %v2303 = vsub.s32 0, %v2302
    %v2304 = vrot.slane %v2092, %v2303
    %v2306 = vmul.f32 %v2294, %v2304
    %v2307 = vmul.f32 %v2295, %v2304
    %v2308 = vmul.f32 %v2296, %v2304
    %v2309 = vmul.f32 %v2297, %v2304
    %v2310 = vmul.f32 %v2298, %v2304
    %v2311 = vmul.f32 %v2299, %v2304
    %v2312 = vsel %vm281, %v2306, 0.0
    %2313 = vadd.xlane.f32.xlu0 %v2312
    %v2314 = vpop.xlane.xlu0 %2313
    %v2315 = vsel %vm281, %v2307, 0.0
    %2316 = vadd.xlane.f32.xlu0 %v2315
    %v2317 = vpop.xlane.xlu0 %2316
    %v2318 = vsel %vm281, %v2308, 0.0
    %2319 = vadd.xlane.f32.xlu0 %v2318
    %v2320 = vpop.xlane.xlu0 %2319
    %v2321 = vsel %vm281, %v2309, 0.0
    %2322 = vadd.xlane.f32.xlu0 %v2321
    %v2323 = vpop.xlane.xlu0 %2322
    %v2324 = vsel %vm281, %v2310, 0.0
    %2325 = vadd.xlane.f32.xlu0 %v2324
    %v2326 = vpop.xlane.xlu0 %2325
    %v2327 = vsel %vm281, %v2311, 0.0
    %2328 = vadd.xlane.f32.xlu0 %v2327
    %v2329 = vpop.xlane.xlu0 %2328
    %v2330 = vmax.f32 %v2314, %v2326
    %v2331 = vmax.f32 %v2317, %v2329
    %v2332 = vmax.f32 %v2330, %v2331
    %v2333 = vmax.f32 %v2320, %v2323
    %v2334 = vmax.f32 %v2332, %v2333
    %v2335 = vsub.f32 %v2314, %v2334
    %v2336 = vsub.f32 %v2317, %v2334
    %v2337 = vsub.f32 %v2320, %v2334
    %v2338 = vsub.f32 %v2323, %v2334
    %v2339 = vsub.f32 %v2326, %v2334
    %v2340 = vsub.f32 %v2329, %v2334
    %v2341 = vmul.f32 %v2335, 1.442695
    %v2342 = vpow.pop %v2341
    %v2343 = vmul.f32 %v2336, 1.442695
    %v2344 = vpow.pop %v2343
    %v2345 = vmul.f32 %v2337, 1.442695
    %v2346 = vpow.pop %v2345
    %v2347 = vmul.f32 %v2338, 1.442695
    %v2348 = vpow.pop %v2347
    %v2349 = vmul.f32 %v2339, 1.442695
    %v2350 = vpow.pop %v2349
    %v2351 = vmul.f32 %v2340, 1.442695
    %v2352 = vpow.pop %v2351
    %v2353 = vadd.f32 %v2342, %v2344
    %v2354 = vadd.f32 %v2353, %v2346
    %v2355 = vadd.f32 %v2354, %v2348
    %v2356 = vadd.f32 %v2355, %v2350
    %v2357 = vadd.f32 %v2356, %v2352
    %v2358 = vrcp.pop %v2357
    %v2359 = vmul.f32 %v2342, %v2358
    %v2360 = vmul.f32 %v2344, %v2358
    %v2361 = vmul.f32 %v2346, %v2358
    %v2362 = vmul.f32 %v2348, %v2358
    %v2363 = vmul.f32 %v2350, %v2358
    %v2364 = vmul.f32 %v2352, %v2358
    %v2365 = vld [vmem:[#allocation4] sm:$0xff]
    %v2366 = vld [vmem:[#allocation4 + $0x8] sm:$0xff]
    %v2367 = vld [vmem:[#allocation4 + $0x10] sm:$0xff]
    %v2368 = vld [vmem:[#allocation4 + $0x18] sm:$0xff]
    %v2369 = vld [vmem:[#allocation4 + $0x20] sm:$0xff]
    %v2370 = vld [vmem:[#allocation4 + $0x28] sm:$0xff]
    %v2371 = vmul.f32 %v2359, %v2365
    %v2372 = vmul.f32 %v2360, %v2366
    %v2373 = vmul.f32 %v2361, %v2367
    %v2374 = vmul.f32 %v2362, %v2368
    %v2375 = vmul.f32 %v2363, %v2369
    %v2376 = vmul.f32 %v2364, %v2370
    %v2377 = vsel %vm281, %v2371, 0.0
    %v2378 = vsel %vm281, %v2372, 0.0
    %v2379 = vadd.f32 %v2377, %v2378
    %v2380 = vsel %vm281, %v2373, 0.0
    %v2381 = vadd.f32 %v2379, %v2380
    %v2382 = vsel %vm281, %v2374, 0.0
    %v2383 = vadd.f32 %v2381, %v2382
    %v2384 = vsel %vm281, %v2375, 0.0
    %v2385 = vadd.f32 %v2383, %v2384
    %v2386 = vsel %vm281, %v2376, 0.0
    %v2387 = vadd.f32 %v2385, %v2386
    %v2388 = vld [vmem:[#allocation5] sm:$0xff]
    %v2389 = vld [vmem:[#allocation5 + $0x8] sm:$0xff]
    %v2390 = vld [vmem:[#allocation5 + $0x10] sm:$0xff]
    %v2391 = vld [vmem:[#allocation5 + $0x18] sm:$0xff]
    %v2392 = vld [vmem:[#allocation5 + $0x20] sm:$0xff]
    %v2393 = vld [vmem:[#allocation5 + $0x28] sm:$0xff]
    %v2394 = vmul.f32 %v2359, %v2388
    %v2395 = vmul.f32 %v2360, %v2389
    %v2396 = vmul.f32 %v2361, %v2390
    %v2397 = vmul.f32 %v2362, %v2391
    %v2398 = vmul.f32 %v2363, %v2392
    %v2399 = vmul.f32 %v2364, %v2393
    %v2400 = vsel %vm281, %v2394, 0.0
    %v2401 = vsel %vm281, %v2395, 0.0
    %v2402 = vadd.f32 %v2400, %v2401
    %v2403 = vsel %vm281, %v2396, 0.0
    %v2404 = vadd.f32 %v2402, %v2403
    %v2405 = vsel %vm281, %v2397, 0.0
    %v2406 = vadd.f32 %v2404, %v2405
    %v2407 = vsel %vm281, %v2398, 0.0
    %v2408 = vadd.f32 %v2406, %v2407
    %v2409 = vsel %vm281, %v2399, 0.0
    %v2410 = vadd.f32 %v2408, %v2409
    %v2411 = vpack.c.bf16 %v2217, %v2217
    %v2412 = vld [vmem:[%s41] sm:$0xf]
    %v2413 = vld [vmem:[%s41 + $0x4] sm:$0xf]
    %v2414 = vld [vmem:[%s41 + $0x8] sm:$0xf]
    %v2415 = vld [vmem:[%s41 + $0xc] sm:$0xf]
    %v2416 = vpack.c.bf16 %v2387, %v2387
    %v2417 = vld [vmem:[%s43] sm:$0xf]
    %v2418 = vld [vmem:[%s43 + $0x4] sm:$0xf]
    %v2419 = vld [vmem:[%s43 + $0x8] sm:$0xf]
    %v2420 = vld [vmem:[%s43 + $0xc] sm:$0xf]
    %v2425 = vunpack.c.l.b16 %v2417
    %v2426 = vunpack.c.l.b16 %v2418
    %v2427 = vunpack.c.l.b16 %v2419
    %v2428 = vunpack.c.l.b16 %v2420
    %v2429 = vpack.c.b16 %v2426, %v2425
    %v2430 = vpack.c.b16 %v2428, %v2427
    %v2434 = vsel %vm281, %v2416, 0
    %2436 = vmatprep.subr.bf16.mxu0 0
    %2437 = vmatpush1.bf16.msra.mxu0 %v2429
    %2438 = vmatprep.subr.bf16.mxu0 0
    %2439 = vmatpush1.bf16.msra.mxu0 %v2430
    %2440 = vmatprep.subr.bf16.mxu0 0
    %2441 = vmatpush1.bf16.msra.mxu0 0
    %2442 = vmatprep.subr.bf16.mxu0 0
    %2443 = vmatpush1.bf16.msra.mxu0 0
    %2444 = vmatprep.subr.bf16.mxu0 0
    %2445 = vmatpush1.bf16.msra.mxu0 0
    %2446 = vmatprep.subr.bf16.mxu0 0
    %2447 = vmatpush1.bf16.msra.mxu0 0
    %2448 = vmatprep.subr.bf16.mxu0 0
    %2449 = vmatpush1.bf16.msra.mxu0 0
    %2450 = vmatprep.subr.bf16.mxu0 0
    %2451 = vmatpush1.bf16.msra.mxu0 0
    %2452 = vmatprep.subr.bf16.mxu0 0
    %2453 = vmatpush1.bf16.msra.mxu0 0
    %2454 = vmatprep.subr.bf16.mxu0 0
    %2455 = vmatpush1.bf16.msra.mxu0 0
    %2456 = vmatprep.subr.bf16.mxu0 0
    %2457 = vmatpush1.bf16.msra.mxu0 0
    %2458 = vmatprep.subr.bf16.mxu0 0
    %2459 = vmatpush1.bf16.msra.mxu0 0
    %2460 = vmatprep.subr.bf16.mxu0 0
    %2461 = vmatpush1.bf16.msra.mxu0 0
    %2462 = vmatprep.subr.bf16.mxu0 0
    %2463 = vmatpush1.bf16.msra.mxu0 0
    %2464 = vmatprep.subr.bf16.mxu0 0
    %2465 = vmatpush1.bf16.msra.mxu0 0
    %2466 = vmatprep.subr.bf16.mxu0 0
    %2467 = vmatpush1.bf16.msra.mxu0 0
    %2468 = vmatprep.mubr.bf16.mxu0 0
    %2469 = vmatmul.mubr.bf16.gmra.mrb[0].mxu0 %v2434
    %v2470 = vpop.f32.mrb[0].mxu0
    %v2471 = vadd.f32 0.0, %v2470
    %v2472 = vpop.f32.mrb[0].mxu0
    %v2473 = vpop.f32.mrb[0].mxu0
    %v2474 = vpop.f32.mrb[0].mxu0
    %2475 = vdwg.mxu0
    %v2480 = vunpack.c.l.b16 %v2412
    %v2481 = vunpack.c.l.b16 %v2413
    %v2482 = vunpack.c.l.b16 %v2414
    %v2483 = vunpack.c.l.b16 %v2415
    %v2484 = vpack.c.b16 %v2481, %v2480
    %v2485 = vpack.c.b16 %v2483, %v2482
    %v2489 = vsel %vm281, %v2411, 0
    %2491 = vmatprep.subr.bf16.mxu0 0
    %2492 = vmatpush1.bf16.msra.mxu0 %v2484
    %2493 = vmatprep.subr.bf16.mxu0 0
    %2494 = vmatpush1.bf16.msra.mxu0 %v2485
    %2495 = vmatprep.subr.bf16.mxu0 0
    %2496 = vmatpush1.bf16.msra.mxu0 0
    %2497 = vmatprep.subr.bf16.mxu0 0
    %2498 = vmatpush1.bf16.msra.mxu0 0
    %2499 = vmatprep.subr.bf16.mxu0 0
    %2500 = vmatpush1.bf16.msra.mxu0 0
    %2501 = vmatprep.subr.bf16.mxu0 0
    %2502 = vmatpush1.bf16.msra.mxu0 0
    %2503 = vmatprep.subr.bf16.mxu0 0
    %2504 = vmatpush1.bf16.msra.mxu0 0
    %2505 = vmatprep.subr.bf16.mxu0 0
    %2506 = vmatpush1.bf16.msra.mxu0 0
    %2507 = vmatprep.subr.bf16.mxu0 0
    %2508 = vmatpush1.bf16.msra.mxu0 0
    %2509 = vmatprep.subr.bf16.mxu0 0
    %2510 = vmatpush1.bf16.msra.mxu0 0
    %2511 = vmatprep.subr.bf16.mxu0 0
    %2512 = vmatpush1.bf16.msra.mxu0 0
    %2513 = vmatprep.subr.bf16.mxu0 0
    %2514 = vmatpush1.bf16.msra.mxu0 0
    %2515 = vmatprep.subr.bf16.mxu0 0
    %2516 = vmatpush1.bf16.msra.mxu0 0
    %2517 = vmatprep.subr.bf16.mxu0 0
    %2518 = vmatpush1.bf16.msra.mxu0 0
    %2519 = vmatprep.subr.bf16.mxu0 0
    %2520 = vmatpush1.bf16.msra.mxu0 0
    %2521 = vmatprep.subr.bf16.mxu0 0
    %2522 = vmatpush1.bf16.msra.mxu0 0
    %2523 = vmatprep.mubr.bf16.mxu0 0
    %2524 = vmatmul.mubr.bf16.gmra.mrb[0].mxu0 %v2489
    %v2525 = vpop.f32.mrb[0].mxu0
    %v2526 = vadd.f32 %v2471, %v2525
    %v2527 = vpop.f32.mrb[0].mxu0
    %v2528 = vpop.f32.mrb[0].mxu0
    %v2529 = vpop.f32.mrb[0].mxu0
    %2530 = vdwg.mxu0
    %v2531 = vpack.c.bf16 %v2410, %v2410
    %v2532 = vld [vmem:[%s45] sm:$0xf]
    %v2533 = vld [vmem:[%s45 + $0x4] sm:$0xf]
    %v2534 = vld [vmem:[%s45 + $0x8] sm:$0xf]
    %v2535 = vld [vmem:[%s45 + $0xc] sm:$0xf]
    %v2540 = vunpack.c.l.b16 %v2532
    %v2541 = vunpack.c.l.b16 %v2533
    %v2542 = vunpack.c.l.b16 %v2534
    %v2543 = vunpack.c.l.b16 %v2535
    %v2544 = vpack.c.b16 %v2541, %v2540
    %v2545 = vpack.c.b16 %v2543, %v2542
    %v2549 = vsel %vm281, %v2531, 0
    %2551 = vmatprep.subr.bf16.mxu0 0
    %2552 = vmatpush1.bf16.msra.mxu0 %v2544
    %2553 = vmatprep.subr.bf16.mxu0 0
    %2554 = vmatpush1.bf16.msra.mxu0 %v2545
    %2555 = vmatprep.subr.bf16.mxu0 0
    %2556 = vmatpush1.bf16.msra.mxu0 0
    %2557 = vmatprep.subr.bf16.mxu0 0
    %2558 = vmatpush1.bf16.msra.mxu0 0
    %2559 = vmatprep.subr.bf16.mxu0 0
    %2560 = vmatpush1.bf16.msra.mxu0 0
    %2561 = vmatprep.subr.bf16.mxu0 0
    %2562 = vmatpush1.bf16.msra.mxu0 0
    %2563 = vmatprep.subr.bf16.mxu0 0
    %2564 = vmatpush1.bf16.msra.mxu0 0
    %2565 = vmatprep.subr.bf16.mxu0 0
    %2566 = vmatpush1.bf16.msra.mxu0 0
    %2567 = vmatprep.subr.bf16.mxu0 0
    %2568 = vmatpush1.bf16.msra.mxu0 0
    %2569 = vmatprep.subr.bf16.mxu0 0
    %2570 = vmatpush1.bf16.msra.mxu0 0
    %2571 = vmatprep.subr.bf16.mxu0 0
    %2572 = vmatpush1.bf16.msra.mxu0 0
    %2573 = vmatprep.subr.bf16.mxu0 0
    %2574 = vmatpush1.bf16.msra.mxu0 0
    %2575 = vmatprep.subr.bf16.mxu0 0
    %2576 = vmatpush1.bf16.msra.mxu0 0
    %2577 = vmatprep.subr.bf16.mxu0 0
    %2578 = vmatpush1.bf16.msra.mxu0 0
    %2579 = vmatprep.subr.bf16.mxu0 0
    %2580 = vmatpush1.bf16.msra.mxu0 0
    %2581 = vmatprep.subr.bf16.mxu0 0
    %2582 = vmatpush1.bf16.msra.mxu0 0
    %2583 = vmatprep.mubr.bf16.mxu0 0
    %2584 = vmatmul.mubr.bf16.gmra.mrb[0].mxu0 %v2549
    %v2585 = vpop.f32.mrb[0].mxu0
    %v2586 = vadd.f32 0.0, %v2585
    %v2587 = vpop.f32.mrb[0].mxu0
    %v2588 = vpop.f32.mrb[0].mxu0
    %v2589 = vpop.f32.mrb[0].mxu0
    %2590 = vdwg.mxu0
    %v2591 = vadd.f32 %v2526, %v2586
    %v2592 = vld [vmem:[%s49] sm:$0x1]
    %v2594 = vlaneseq
    %v2595 = vshrl.u32 %v2594, 7
    %v2596 = vsub.s32 0, %v2595
    %v2597 = vrot.slane %v2592, %v2596
    %v2599 = vadd.f32 %v2591, %v2597
    %v2600 = vld [vmem:[%s47] sm:$0xf]
    %v2601 = vld [vmem:[%s47 + $0x4] sm:$0xf]
    %v2602 = vld [vmem:[%s47 + $0x8] sm:$0xf]
    %v2603 = vld [vmem:[%s47 + $0xc] sm:$0xf]
    %v2608 = vunpack.c.l.b16 %v2600
    %v2609 = vunpack.c.l.b16 %v2601
    %v2610 = vunpack.c.l.b16 %v2602
    %v2611 = vunpack.c.l.b16 %v2603
    %v2612 = vpack.c.b16 %v2609, %v2608
    %v2613 = vpack.c.b16 %v2611, %v2610
    %2616 = vmatprep.subr.bf16.mxu0 0
    %2617 = vmatpush1.bf16.msra.mxu0 %v2612
    %2618 = vmatprep.subr.bf16.mxu0 0
    %2619 = vmatpush1.bf16.msra.mxu0 %v2613
    %2620 = vmatprep.subr.bf16.mxu0 0
    %2621 = vmatpush1.bf16.msra.mxu0 0
    %2622 = vmatprep.subr.bf16.mxu0 0
    %2623 = vmatpush1.bf16.msra.mxu0 0
    %2624 = vmatprep.subr.bf16.mxu0 0
    %2625 = vmatpush1.bf16.msra.mxu0 0
    %2626 = vmatprep.subr.bf16.mxu0 0
    %2627 = vmatpush1.bf16.msra.mxu0 0
    %2628 = vmatprep.subr.bf16.mxu0 0
    %2629 = vmatpush1.bf16.msra.mxu0 0
    %2630 = vmatprep.subr.bf16.mxu0 0
    %2631 = vmatpush1.bf16.msra.mxu0 0
    %2632 = vmatprep.subr.bf16.mxu0 0
    %2633 = vmatpush1.bf16.msra.mxu0 0
    %2634 = vmatprep.subr.bf16.mxu0 0
    %2635 = vmatpush1.bf16.msra.mxu0 0
    %2636 = vmatprep.subr.bf16.mxu0 0
    %2637 = vmatpush1.bf16.msra.mxu0 0
    %2638 = vmatprep.subr.bf16.mxu0 0
    %2639 = vmatpush1.bf16.msra.mxu0 0
    %2640 = vmatprep.subr.bf16.mxu0 0
    %2641 = vmatpush1.bf16.msra.mxu0 0
    %2642 = vmatprep.subr.bf16.mxu0 0
    %2643 = vmatpush1.bf16.msra.mxu0 0
    %2644 = vmatprep.subr.bf16.mxu0 0
    %2645 = vmatpush1.bf16.msra.mxu0 0
    %2646 = vmatprep.subr.bf16.mxu0 0
    %2647 = vmatpush1.bf16.msra.mxu0 0
    %2648 = vmatprep.mubr.bf16.mxu0 0
    %2649 = vmatmul.mubr.bf16.gmra.mrb[0].mxu0 %v2240
    %v2650 = vpop.f32.mrb[0].mxu0
    %v2651 = vadd.f32 0.0, %v2650
    %v2652 = vpop.f32.mrb[0].mxu0
    %v2653 = vpop.f32.mrb[0].mxu0
    %v2654 = vpop.f32.mrb[0].mxu0
    %2655 = vdwg.mxu0
    %v2656 = vadd.f32 %v2599, %v2651
    %v2657 = vxor.u32 %v2656, 2147483648
    %v2658 = vmul.f32 %v2657, 1.442695
    %v2659 = vpow.pop %v2658
    %v2660 = vadd.f32 %v2659, 1.0
    %v2661 = vrcp.pop %v2660
    %v2662 = vmul.f32 1.0, %v2661
    %v2663 = vld [vmem:[%s51] sm:$0x1]
    %v2665 = vlaneseq
    %v2666 = vshrl.u32 %v2665, 7
    %v2667 = vsub.s32 0, %v2666
    %v2668 = vrot.slane %v2663, %v2667
    %2669 = vrot.lane.b32.xlu0 %v2668, 64
    %v2670 = vpop.permute.xlu0 %2669
    %v2672 = vadd.f32 %v2651, %v2670
    %2674 = vrot.lane.b32.xlu0 %v2672, 64
    %v2675 = vpop.permute.xlu0 %2674
    %v2677 = vmul.f32 %v2662, %v2675
    %2679 = vrot.lane.b32.xlu0 %v2677, 64
    %v2680 = vpop.permute.xlu0 %2679
    %v2682 = vadd.f32 %v2599, %v2680
    %v2683 = vtanh.pop %v2682
    %v2684 = vsub.f32 1.0, %v2662
    %2686 = vrot.lane.b32.xlu0 %v2683, 96
    %v2687 = vpop.permute.xlu0 %2686
    %v2689 = vmul.f32 %v2684, %v2687
    %2691 = vrot.lane.b32.xlu0 %v2115, 32
    %v2692 = vpop.permute.xlu0 %2691
    %v2694 = vmul.f32 %v2662, %v2692
    %v2695 = vadd.f32 %v2689, %v2694
    %v2696 = vpack.c.bf16 %v2695, %v2695
    %v2697 = vld [vmem:[%s53] sm:$0xf]
    %v2698 = vld [vmem:[%s53 + $0x4] sm:$0xf]
    %v2699 = vld [vmem:[%s53 + $0x8] sm:$0xf]
    %v2700 = vld [vmem:[%s53 + $0xc] sm:$0xf]
    %v2701 = vld [vmem:[%s55] sm:$0xf]
    %v2702 = vld [vmem:[%s55 + $0x4] sm:$0xf]
    %v2703 = vld [vmem:[%s55 + $0x8] sm:$0xf]
    %v2704 = vld [vmem:[%s55 + $0xc] sm:$0xf]
    %v2709 = vunpack.c.l.b16 %v2701
    %v2710 = vunpack.c.l.b16 %v2702
    %v2711 = vunpack.c.l.b16 %v2703
    %v2712 = vunpack.c.l.b16 %v2704
    %v2713 = vpack.c.b16 %v2710, %v2709
    %v2714 = vpack.c.b16 %v2712, %v2711
    %2717 = vmatprep.subr.bf16.mxu0 0
    %2718 = vmatpush1.bf16.msra.mxu0 %v2713
    %2719 = vmatprep.subr.bf16.mxu0 0
    %2720 = vmatpush1.bf16.msra.mxu0 %v2714
    %2721 = vmatprep.subr.bf16.mxu0 0
    %2722 = vmatpush1.bf16.msra.mxu0 0
    %2723 = vmatprep.subr.bf16.mxu0 0
    %2724 = vmatpush1.bf16.msra.mxu0 0
    %2725 = vmatprep.subr.bf16.mxu0 0
    %2726 = vmatpush1.bf16.msra.mxu0 0
    %2727 = vmatprep.subr.bf16.mxu0 0
    %2728 = vmatpush1.bf16.msra.mxu0 0
    %2729 = vmatprep.subr.bf16.mxu0 0
    %2730 = vmatpush1.bf16.msra.mxu0 0
    %2731 = vmatprep.subr.bf16.mxu0 0
    %2732 = vmatpush1.bf16.msra.mxu0 0
    %2733 = vmatprep.subr.bf16.mxu0 0
    %2734 = vmatpush1.bf16.msra.mxu0 0
    %2735 = vmatprep.subr.bf16.mxu0 0
    %2736 = vmatpush1.bf16.msra.mxu0 0
    %2737 = vmatprep.subr.bf16.mxu0 0
    %2738 = vmatpush1.bf16.msra.mxu0 0
    %2739 = vmatprep.subr.bf16.mxu0 0
    %2740 = vmatpush1.bf16.msra.mxu0 0
    %2741 = vmatprep.subr.bf16.mxu0 0
    %2742 = vmatpush1.bf16.msra.mxu0 0
    %2743 = vmatprep.subr.bf16.mxu0 0
    %2744 = vmatpush1.bf16.msra.mxu0 0
    %2745 = vmatprep.subr.bf16.mxu0 0
    %2746 = vmatpush1.bf16.msra.mxu0 0
    %2747 = vmatprep.subr.bf16.mxu0 0
    %2748 = vmatpush1.bf16.msra.mxu0 0
    %2749 = vmatprep.mubr.bf16.mxu0 0
    %2750 = vmatmul.mubr.bf16.gmra.mrb[0].mxu0 %v2434
    %v2751 = vpop.f32.mrb[0].mxu0
    %v2752 = vadd.f32 0.0, %v2751
    %v2753 = vpop.f32.mrb[0].mxu0
    %v2754 = vpop.f32.mrb[0].mxu0
    %v2755 = vpop.f32.mrb[0].mxu0
    %2756 = vdwg.mxu0
    %2758 = vrot.lane.b32.xlu0 %v2696, 96
    %v2759 = vpop.permute.xlu0 %2758
    %v2764 = vunpack.c.l.b16 %v2697
    %v2765 = vunpack.c.l.b16 %v2698
    %v2766 = vunpack.c.l.b16 %v2699
    %v2767 = vunpack.c.l.b16 %v2700
    %v2768 = vpack.c.b16 %v2765, %v2764
    %v2769 = vpack.c.b16 %v2767, %v2766
    %v2773 = vsel %vm281, %v2759, 0
    %2775 = vmatprep.subr.bf16.mxu0 0
    %2776 = vmatpush1.bf16.msra.mxu0 %v2768
    %2777 = vmatprep.subr.bf16.mxu0 0
    %2778 = vmatpush1.bf16.msra.mxu0 %v2769
    %2779 = vmatprep.subr.bf16.mxu0 0
    %2780 = vmatpush1.bf16.msra.mxu0 0
    %2781 = vmatprep.subr.bf16.mxu0 0
    %2782 = vmatpush1.bf16.msra.mxu0 0
    %2783 = vmatprep.subr.bf16.mxu0 0
    %2784 = vmatpush1.bf16.msra.mxu0 0
    %2785 = vmatprep.subr.bf16.mxu0 0
    %2786 = vmatpush1.bf16.msra.mxu0 0
    %2787 = vmatprep.subr.bf16.mxu0 0
    %2788 = vmatpush1.bf16.msra.mxu0 0
    %2789 = vmatprep.subr.bf16.mxu0 0
    %2790 = vmatpush1.bf16.msra.mxu0 0
    %2791 = vmatprep.subr.bf16.mxu0 0
    %2792 = vmatpush1.bf16.msra.mxu0 0
    %2793 = vmatprep.subr.bf16.mxu0 0
    %2794 = vmatpush1.bf16.msra.mxu0 0
    %2795 = vmatprep.subr.bf16.mxu0 0
    %2796 = vmatpush1.bf16.msra.mxu0 0
    %2797 = vmatprep.subr.bf16.mxu0 0
    %2798 = vmatpush1.bf16.msra.mxu0 0
    %2799 = vmatprep.subr.bf16.mxu0 0
    %2800 = vmatpush1.bf16.msra.mxu0 0
    %2801 = vmatprep.subr.bf16.mxu0 0
    %2802 = vmatpush1.bf16.msra.mxu0 0
    %2803 = vmatprep.subr.bf16.mxu0 0
    %2804 = vmatpush1.bf16.msra.mxu0 0
    %2805 = vmatprep.subr.bf16.mxu0 0
    %2806 = vmatpush1.bf16.msra.mxu0 0
    %2807 = vmatprep.mubr.bf16.mxu0 0
    %2808 = vmatmul.mubr.bf16.gmra.mrb[0].mxu0 %v2773
    %v2809 = vpop.f32.mrb[0].mxu0
    %v2810 = vadd.f32 %v2752, %v2809
    %v2811 = vpop.f32.mrb[0].mxu0
    %v2812 = vpop.f32.mrb[0].mxu0
    %v2813 = vpop.f32.mrb[0].mxu0
    %2814 = vdwg.mxu0
    %v2815 = vld [vmem:[#allocation26] sm:$0xf]
    %v2816 = vld [vmem:[#allocation26 + $0x4] sm:$0xf]
    %v2817 = vld [vmem:[#allocation26 + $0x8] sm:$0xf]
    %v2818 = vld [vmem:[#allocation26 + $0xc] sm:$0xf]
    %v2823 = vunpack.c.l.b16 %v2815
    %v2824 = vunpack.c.l.b16 %v2816
    %v2825 = vunpack.c.l.b16 %v2817
    %v2826 = vunpack.c.l.b16 %v2818
    %v2827 = vpack.c.b16 %v2824, %v2823
    %v2828 = vpack.c.b16 %v2826, %v2825
    %2831 = vmatprep.subr.bf16.mxu0 0
    %2832 = vmatpush1.bf16.msra.mxu0 %v2827
    %2833 = vmatprep.subr.bf16.mxu0 0
    %2834 = vmatpush1.bf16.msra.mxu0 %v2828
    %2835 = vmatprep.subr.bf16.mxu0 0
    %2836 = vmatpush1.bf16.msra.mxu0 0
    %2837 = vmatprep.subr.bf16.mxu0 0
    %2838 = vmatpush1.bf16.msra.mxu0 0
    %2839 = vmatprep.subr.bf16.mxu0 0
    %2840 = vmatpush1.bf16.msra.mxu0 0
    %2841 = vmatprep.subr.bf16.mxu0 0
    %2842 = vmatpush1.bf16.msra.mxu0 0
    %2843 = vmatprep.subr.bf16.mxu0 0
    %2844 = vmatpush1.bf16.msra.mxu0 0
    %2845 = vmatprep.subr.bf16.mxu0 0
    %2846 = vmatpush1.bf16.msra.mxu0 0
    %2847 = vmatprep.subr.bf16.mxu0 0
    %2848 = vmatpush1.bf16.msra.mxu0 0
    %2849 = vmatprep.subr.bf16.mxu0 0
    %2850 = vmatpush1.bf16.msra.mxu0 0
    %2851 = vmatprep.subr.bf16.mxu0 0
    %2852 = vmatpush1.bf16.msra.mxu0 0
    %2853 = vmatprep.subr.bf16.mxu0 0
    %2854 = vmatpush1.bf16.msra.mxu0 0
    %2855 = vmatprep.subr.bf16.mxu0 0
    %2856 = vmatpush1.bf16.msra.mxu0 0
    %2857 = vmatprep.subr.bf16.mxu0 0
    %2858 = vmatpush1.bf16.msra.mxu0 0
    %2859 = vmatprep.subr.bf16.mxu0 0
    %2860 = vmatpush1.bf16.msra.mxu0 0
    %2861 = vmatprep.subr.bf16.mxu0 0
    %2862 = vmatpush1.bf16.msra.mxu0 0
    %2863 = vmatprep.mubr.bf16.mxu0 0
    %2864 = vmatmul.mubr.bf16.gmra.mrb[0].mxu0 %v2549
    %v2865 = vpop.f32.mrb[0].mxu0
    %v2866 = vadd.f32 0.0, %v2865
    %v2867 = vpop.f32.mrb[0].mxu0
    %v2868 = vpop.f32.mrb[0].mxu0
    %v2869 = vpop.f32.mrb[0].mxu0
    %2870 = vdwg.mxu0
    %v2871 = vadd.f32 %v2810, %v2866
    %v2872 = vld [vmem:[%s59] sm:$0xf]
    %v2873 = vld [vmem:[%s59 + $0x4] sm:$0xf]
    %v2874 = vld [vmem:[%s59 + $0x8] sm:$0xf]
    %v2875 = vld [vmem:[%s59 + $0xc] sm:$0xf]
    %v2880 = vunpack.c.l.b16 %v2872
    %v2881 = vunpack.c.l.b16 %v2873
    %v2882 = vunpack.c.l.b16 %v2874
    %v2883 = vunpack.c.l.b16 %v2875
    %v2884 = vpack.c.b16 %v2881, %v2880
    %v2885 = vpack.c.b16 %v2883, %v2882
    %2888 = vmatprep.subr.bf16.mxu0 0
    %2889 = vmatpush1.bf16.msra.mxu0 %v2884
    %2890 = vmatprep.subr.bf16.mxu0 0
    %2891 = vmatpush1.bf16.msra.mxu0 %v2885
    %2892 = vmatprep.subr.bf16.mxu0 0
    %2893 = vmatpush1.bf16.msra.mxu0 0
    %2894 = vmatprep.subr.bf16.mxu0 0
    %2895 = vmatpush1.bf16.msra.mxu0 0
    %2896 = vmatprep.subr.bf16.mxu0 0
    %2897 = vmatpush1.bf16.msra.mxu0 0
    %2898 = vmatprep.subr.bf16.mxu0 0
    %2899 = vmatpush1.bf16.msra.mxu0 0
    %2900 = vmatprep.subr.bf16.mxu0 0
    %2901 = vmatpush1.bf16.msra.mxu0 0
    %2902 = vmatprep.subr.bf16.mxu0 0
    %2903 = vmatpush1.bf16.msra.mxu0 0
    %2904 = vmatprep.subr.bf16.mxu0 0
    %2905 = vmatpush1.bf16.msra.mxu0 0
    %2906 = vmatprep.subr.bf16.mxu0 0
    %2907 = vmatpush1.bf16.msra.mxu0 0
    %2908 = vmatprep.subr.bf16.mxu0 0
    %2909 = vmatpush1.bf16.msra.mxu0 0
    %2910 = vmatprep.subr.bf16.mxu0 0
    %2911 = vmatpush1.bf16.msra.mxu0 0
    %2912 = vmatprep.subr.bf16.mxu0 0
    %2913 = vmatpush1.bf16.msra.mxu0 0
    %2914 = vmatprep.subr.bf16.mxu0 0
    %2915 = vmatpush1.bf16.msra.mxu0 0
    %2916 = vmatprep.subr.bf16.mxu0 0
    %2917 = vmatpush1.bf16.msra.mxu0 0
    %2918 = vmatprep.subr.bf16.mxu0 0
    %2919 = vmatpush1.bf16.msra.mxu0 0
    %2920 = vmatprep.mubr.bf16.mxu0 0
    %2921 = vmatmul.mubr.bf16.gmra.mrb[0].mxu0 %v2489
    %v2922 = vpop.f32.mrb[0].mxu0
    %v2923 = vadd.f32 0.0, %v2922
    %v2924 = vpop.f32.mrb[0].mxu0
    %v2925 = vpop.f32.mrb[0].mxu0
    %v2926 = vpop.f32.mrb[0].mxu0
    %2927 = vdwg.mxu0
    %v2928 = vadd.f32 %v2871, %v2923
    %v2929 = vld [vmem:[%s61] sm:$0x1]
    %v2931 = vlaneseq
    %v2932 = vshrl.u32 %v2931, 7
    %v2933 = vsub.s32 0, %v2932
    %v2934 = vrot.slane %v2929, %v2933
    %v2936 = vadd.f32 %v2928, %v2934
    %s2937 = scalar_lea.vmem [#allocation11], 8
    %2938 = vst [vmem:[%s2937] sm:$0xff] %v2936
    %s2939 = scalar_lea.hbm %s63, 128
    %s2940 = scalar_lea.sflag [#allocation12], 1
    // Predicated region
    $region166: #{tpu_custom_call.1} parent=1 // pred_check
      _
    $region167: #{tpu_custom_call.1} parent=1 // pred_check_branch
      %2942 = sbr.rel target = $region169
    $region168: #{tpu_custom_call.1} parent=1 // pred_region
      %2943 = sst [smem:[#allocation30]] [#allocation33]
      %2944 = sst [smem:[#allocation31]] [#allocation32]
    $region169: #{tpu_custom_call.1} parent=1 // pred_fallthru
      _
    %2946 = shalt.err (0)
    %s2948 = sshll.u32 %s2937, 4
    %s2949 = int_to_ptr.vmem [resolvable:$true] %s2948
    %2951 = dma.vmem_to_hbm [thread:$0]  %s2949, 128, %s2939, %s2940
    %s2952 = sld [smem:[#allocation13 + $0x1]]
    %p2953 = scmp.ne.s32.totalorder %s2952, 0
    // Predicated region
    $region170: #{tpu_custom_call.1} parent=1 // pred_check
      %p2954 = pneg %p2953
    $region171: #{tpu_custom_call.1} parent=1 // pred_check_branch
      %2956 = sbr.rel (%p2954) target = $region173
    $region172: #{tpu_custom_call.1} parent=1 // pred_region
      %s2957 = scalar_lea.vmem %s3, 8
      %v2958 = vld [vmem:[%s2957] sm:$0xff]
      %2959 = vset.pattern.permute.xlu0 0
      %2960 = vperm.xlu0 %2959, %v2958
      %v2961 = vpop.permute.xlu0 %2960
      %vm2962 = vcmp.eq.s32.totalorder %v2094, %v2961
      %v2963 = vsel %vm2962, 1, 0
      %v2964 = vcvt.s32.f32 %v2963
      %2965 = vst [vmem:[#allocation10] sm:$0xff] %v2964
    $region173: #{tpu_custom_call.1} parent=1 // pred_fallthru
      _
    %s2966 = sld [smem:[#allocation13 + $0x1]]
    %p2967 = scmp.eq.s32.totalorder %s2966, 0
    // Predicated region
    $region174: #{tpu_custom_call.1} parent=1 // pred_check
      %p2968 = pneg %p2967
    $region175: #{tpu_custom_call.1} parent=1 // pred_check_branch
      %2970 = sbr.rel (%p2968) target = $region177
    $region176: #{tpu_custom_call.1} parent=1 // pred_region
      %2971 = vmax.xlane.f32.xlu0 %v2936
      %v2972 = vpop.xlane.xlu0 %2971
      %vm2973 = vcmp.eq.f32.partialorder %v2936, %v2972
      %v2974 = vsel %vm2973, %v2094, 128
      %v2975 = vand.u32 %v2974, 65535
      %v2976 = vshra.s32 %v2974, 16
      %v2977 = vcvt.s32.f32 %v2975
      %v2978 = vcvt.s32.f32 %v2976
      %2979 = vmin.xlane.f32.xlu0 %v2978
      %v2980 = vpop.xlane.xlu0 %2979
      %vm2981 = vcmp.eq.f32.partialorder %v2978, %v2980
      %v2982 = vsel %vm2981, %v2977, inf
      %2983 = vmin.xlane.f32.xlu0 %v2982
      %v2984 = vpop.xlane.xlu0 %2983
      %v2985 = vcvt.f32.s32 %v2984
      %v2986 = vcvt.f32.s32 %v2980
      %v2987 = vshll.u32 %v2986, 16
      %v2988 = vadd.s32 %v2987, %v2985
      %vm2989 = vcmp.eq.s32.totalorder %v2094, %v2988
      %v2990 = vsel %vm2989, 1, 0
      %v2991 = vcvt.s32.f32 %v2990
      %2992 = vst [vmem:[#allocation10] sm:$0xff] %v2991
    $region177: #{tpu_custom_call.1} parent=1 // pred_fallthru
      _
    %2994 = vrot.lane.b32.xlu0 %v2695, 96
    %v2995 = vpop.permute.xlu0 %2994
    %2997 = vst.msk [vmem:[#allocation9] sm:$0xff] %vm281, %v2995
    %v2998 = vld [vmem:[#allocation9] sm:$0xff]
    %v2999 = vld [vmem:[#allocation10] sm:$0xff]
    %v3000 = vpack.c.bf16 %v2999, %v2999
    %v3001 = vld [vmem:[%s29] sm:$0xf]
    %v3002 = vld [vmem:[%s29 + $0x4] sm:$0xf]
    %v3003 = vld [vmem:[%s29 + $0x8] sm:$0xf]
    %v3004 = vld [vmem:[%s29 + $0xc] sm:$0xf]
    %v3005 = vld [vmem:[%s29 + $0x10] sm:$0xf]
    %v3006 = vld [vmem:[%s29 + $0x14] sm:$0xf]
    %v3007 = vld [vmem:[%s29 + $0x18] sm:$0xf]
    %v3008 = vld [vmem:[%s29 + $0x1c] sm:$0xf]
    %v3009 = vld [vmem:[%s29 + $0x20] sm:$0xf]
    %v3010 = vld [vmem:[%s29 + $0x24] sm:$0xf]
    %v3011 = vld [vmem:[%s29 + $0x28] sm:$0xf]
    %v3012 = vld [vmem:[%s29 + $0x2c] sm:$0xf]
    %v3013 = vld [vmem:[%s29 + $0x30] sm:$0xf]
    %v3014 = vld [vmem:[%s29 + $0x34] sm:$0xf]
    %v3015 = vld [vmem:[%s29 + $0x38] sm:$0xf]
    %v3016 = vld [vmem:[%s29 + $0x3c] sm:$0xf]
    %v3033 = vunpack.c.l.b16 %v3001
    %v3034 = vunpack.c.l.b16 %v3002
    %v3035 = vunpack.c.l.b16 %v3003
    %v3036 = vunpack.c.l.b16 %v3004
    %v3037 = vunpack.c.l.b16 %v3005
    %v3038 = vunpack.c.l.b16 %v3006
    %v3039 = vunpack.c.l.b16 %v3007
    %v3040 = vunpack.c.l.b16 %v3008
    %v3041 = vunpack.c.l.b16 %v3009
    %v3042 = vunpack.c.l.b16 %v3010
    %v3043 = vunpack.c.l.b16 %v3011
    %v3044 = vunpack.c.l.b16 %v3012
    %v3045 = vunpack.c.l.b16 %v3013
    %v3046 = vunpack.c.l.b16 %v3014
    %v3047 = vunpack.c.l.b16 %v3015
    %v3048 = vunpack.c.l.b16 %v3016
    %v3049 = vpack.c.b16 %v3034, %v3033
    %v3050 = vpack.c.b16 %v3036, %v3035
    %v3051 = vpack.c.b16 %v3038, %v3037
    %v3052 = vpack.c.b16 %v3040, %v3039
    %v3053 = vpack.c.b16 %v3042, %v3041
    %v3054 = vpack.c.b16 %v3044, %v3043
    %v3055 = vpack.c.b16 %v3046, %v3045
    %v3056 = vpack.c.b16 %v3048, %v3047
    %3065 = vmatprep.subr.bf16.mxu0 0
    %3066 = vmatpush1.bf16.msra.mxu0 %v3049
    %3067 = vmatprep.subr.bf16.mxu0 0
    %3068 = vmatpush1.bf16.msra.mxu0 %v3050
    %3069 = vmatprep.subr.bf16.mxu0 0
    %3070 = vmatpush1.bf16.msra.mxu0 %v3051
    %3071 = vmatprep.subr.bf16.mxu0 0
    %3072 = vmatpush1.bf16.msra.mxu0 %v3052
    %3073 = vmatprep.subr.bf16.mxu0 0
    %3074 = vmatpush1.bf16.msra.mxu0 %v3053
    %3075 = vmatprep.subr.bf16.mxu0 0
    %3076 = vmatpush1.bf16.msra.mxu0 %v3054
    %3077 = vmatprep.subr.bf16.mxu0 0
    %3078 = vmatpush1.bf16.msra.mxu0 %v3055
    %3079 = vmatprep.subr.bf16.mxu0 0
    %3080 = vmatpush1.bf16.msra.mxu0 %v3056
    %3081 = vmatprep.subr.bf16.mxu0 0
    %3082 = vmatpush1.bf16.msra.mxu0 0
    %3083 = vmatprep.subr.bf16.mxu0 0
    %3084 = vmatpush1.bf16.msra.mxu0 0
    %3085 = vmatprep.subr.bf16.mxu0 0
    %3086 = vmatpush1.bf16.msra.mxu0 0
    %3087 = vmatprep.subr.bf16.mxu0 0
    %3088 = vmatpush1.bf16.msra.mxu0 0
    %3089 = vmatprep.subr.bf16.mxu0 0
    %3090 = vmatpush1.bf16.msra.mxu0 0
    %3091 = vmatprep.subr.bf16.mxu0 0
    %3092 = vmatpush1.bf16.msra.mxu0 0
    %3093 = vmatprep.subr.bf16.mxu0 0
    %3094 = vmatpush1.bf16.msra.mxu0 0
    %3095 = vmatprep.subr.bf16.mxu0 0
    %3096 = vmatpush1.bf16.msra.mxu0 0
    %3097 = vmatprep.mubr.bf16.mxu0 0
    %3098 = vmatmul.mubr.bf16.gmra.mrb[0].mxu0 %v3000
    %v3099 = vpop.f32.mrb[0].mxu0
    %v3100 = vadd.f32 0.0, %v3099
    %v3101 = vpop.f32.mrb[0].mxu0
    %v3102 = vpop.f32.mrb[0].mxu0
    %v3103 = vpop.f32.mrb[0].mxu0
    %3104 = vdwg.mxu0
    %v3105 = vpack.c.bf16 %v2998, %v2998
    %v3106 = vld [vmem:[%s31] sm:$0xf]
    %v3107 = vld [vmem:[%s31 + $0x4] sm:$0xf]
    %v3108 = vld [vmem:[%s31 + $0x8] sm:$0xf]
    %v3109 = vld [vmem:[%s31 + $0xc] sm:$0xf]
    %v3114 = vunpack.c.l.b16 %v3106
    %v3115 = vunpack.c.l.b16 %v3107
    %v3116 = vunpack.c.l.b16 %v3108
    %v3117 = vunpack.c.l.b16 %v3109
    %v3118 = vpack.c.b16 %v3115, %v3114
    %v3119 = vpack.c.b16 %v3117, %v3116
    %v3123 = vsel %vm281, %v3105, 0
    %3125 = vmatprep.subr.bf16.mxu0 0
    %3126 = vmatpush1.bf16.msra.mxu0 %v3118
    %3127 = vmatprep.subr.bf16.mxu0 0
    %3128 = vmatpush1.bf16.msra.mxu0 %v3119
    %3129 = vmatprep.subr.bf16.mxu0 0
    %3130 = vmatpush1.bf16.msra.mxu0 0
    %3131 = vmatprep.subr.bf16.mxu0 0
    %3132 = vmatpush1.bf16.msra.mxu0 0
    %3133 = vmatprep.subr.bf16.mxu0 0
    %3134 = vmatpush1.bf16.msra.mxu0 0
    %3135 = vmatprep.subr.bf16.mxu0 0
    %3136 = vmatpush1.bf16.msra.mxu0 0
    %3137 = vmatprep.subr.bf16.mxu0 0
    %3138 = vmatpush1.bf16.msra.mxu0 0
    %3139 = vmatprep.subr.bf16.mxu0 0
    %3140 = vmatpush1.bf16.msra.mxu0 0
    %3141 = vmatprep.subr.bf16.mxu0 0
    %3142 = vmatpush1.bf16.msra.mxu0 0
    %3143 = vmatprep.subr.bf16.mxu0 0
    %3144 = vmatpush1.bf16.msra.mxu0 0
    %3145 = vmatprep.subr.bf16.mxu0 0
    %3146 = vmatpush1.bf16.msra.mxu0 0
    %3147 = vmatprep.subr.bf16.mxu0 0
    %3148 = vmatpush1.bf16.msra.mxu0 0
    %3149 = vmatprep.subr.bf16.mxu0 0
    %3150 = vmatpush1.bf16.msra.mxu0 0
    %3151 = vmatprep.subr.bf16.mxu0 0
    %3152 = vmatpush1.bf16.msra.mxu0 0
    %3153 = vmatprep.subr.bf16.mxu0 0
    %3154 = vmatpush1.bf16.msra.mxu0 0
    %3155 = vmatprep.subr.bf16.mxu0 0
    %3156 = vmatpush1.bf16.msra.mxu0 0
    %3157 = vmatprep.mubr.bf16.mxu0 0
    %3158 = vmatmul.mubr.bf16.gmra.mrb[0].mxu0 %v3123
    %v3159 = vpop.f32.mrb[0].mxu0
    %v3160 = vadd.f32 0.0, %v3159
    %v3161 = vpop.f32.mrb[0].mxu0
    %v3162 = vpop.f32.mrb[0].mxu0
    %v3163 = vpop.f32.mrb[0].mxu0
    %3164 = vdwg.mxu0
    %v3165 = vld [vmem:[#allocation8] sm:$0xff]
    %v3166 = vld [vmem:[#allocation8 + $0x8] sm:$0xff]
    %v3167 = vld [vmem:[#allocation8 + $0x10] sm:$0xff]
    %v3168 = vld [vmem:[#allocation8 + $0x18] sm:$0xff]
    %v3169 = vld [vmem:[#allocation8 + $0x20] sm:$0xff]
    %v3170 = vld [vmem:[#allocation8 + $0x28] sm:$0xff]
    %v3171 = vadd.f32 %v3160, %v3165
    %v3172 = vadd.f32 %v3160, %v3166
    %v3173 = vadd.f32 %v3160, %v3167
    %v3174 = vadd.f32 %v3160, %v3168
    %v3175 = vadd.f32 %v3160, %v3169
    %v3176 = vadd.f32 %v3160, %v3170
    %v3177 = vtanh.pop %v3171
    %v3178 = vtanh.pop %v3172
    %v3179 = vtanh.pop %v3173
    %v3180 = vtanh.pop %v3174
    %v3181 = vtanh.pop %v3175
    %v3182 = vtanh.pop %v3176
    %v3183 = vmul.f32 %v3177, %v2304
    %v3184 = vmul.f32 %v3178, %v2304
    %v3185 = vmul.f32 %v3179, %v2304
    %v3186 = vmul.f32 %v3180, %v2304
    %v3187 = vmul.f32 %v3181, %v2304
    %v3188 = vmul.f32 %v3182, %v2304
    %v3189 = vsel %vm281, %v3183, 0.0
    %3190 = vadd.xlane.f32.xlu0 %v3189
    %v3191 = vpop.xlane.xlu0 %3190
    %v3192 = vsel %vm281, %v3184, 0.0
    %3193 = vadd.xlane.f32.xlu0 %v3192
    %v3194 = vpop.xlane.xlu0 %3193
    %v3195 = vsel %vm281, %v3185, 0.0
    %3196 = vadd.xlane.f32.xlu0 %v3195
    %v3197 = vpop.xlane.xlu0 %3196
    %v3198 = vsel %vm281, %v3186, 0.0
    %3199 = vadd.xlane.f32.xlu0 %v3198
    %v3200 = vpop.xlane.xlu0 %3199
    %v3201 = vsel %vm281, %v3187, 0.0
    %3202 = vadd.xlane.f32.xlu0 %v3201
    %v3203 = vpop.xlane.xlu0 %3202
    %v3204 = vsel %vm281, %v3188, 0.0
    %3205 = vadd.xlane.f32.xlu0 %v3204
    %v3206 = vpop.xlane.xlu0 %3205
    %v3207 = vmax.f32 %v3191, %v3203
    %v3208 = vmax.f32 %v3194, %v3206
    %v3209 = vmax.f32 %v3207, %v3208
    %v3210 = vmax.f32 %v3197, %v3200
    %v3211 = vmax.f32 %v3209, %v3210
    %v3212 = vsub.f32 %v3191, %v3211
    %v3213 = vsub.f32 %v3194, %v3211
    %v3214 = vsub.f32 %v3197, %v3211
    %v3215 = vsub.f32 %v3200, %v3211
    %v3216 = vsub.f32 %v3203, %v3211
    %v3217 = vsub.f32 %v3206, %v3211
    %v3218 = vmul.f32 %v3212, 1.442695
    %v3219 = vpow.pop %v3218
    %v3220 = vmul.f32 %v3213, 1.442695
    %v3221 = vpow.pop %v3220
    %v3222 = vmul.f32 %v3214, 1.442695
    %v3223 = vpow.pop %v3222
    %v3224 = vmul.f32 %v3215, 1.442695
    %v3225 = vpow.pop %v3224
    %v3226 = vmul.f32 %v3216, 1.442695
    %v3227 = vpow.pop %v3226
    %v3228 = vmul.f32 %v3217, 1.442695
    %v3229 = vpow.pop %v3228
    %v3230 = vadd.f32 %v3219, %v3221
    %v3231 = vadd.f32 %v3230, %v3223
    %v3232 = vadd.f32 %v3231, %v3225
    %v3233 = vadd.f32 %v3232, %v3227
    %v3234 = vadd.f32 %v3233, %v3229
    %v3235 = vrcp.pop %v3234
    %v3236 = vmul.f32 %v3219, %v3235
    %v3237 = vmul.f32 %v3221, %v3235
    %v3238 = vmul.f32 %v3223, %v3235
    %v3239 = vmul.f32 %v3225, %v3235
    %v3240 = vmul.f32 %v3227, %v3235
    %v3241 = vmul.f32 %v3229, %v3235
    %v3242 = vld [vmem:[#allocation4] sm:$0xff]
    %v3243 = vld [vmem:[#allocation4 + $0x8] sm:$0xff]
    %v3244 = vld [vmem:[#allocation4 + $0x10] sm:$0xff]
    %v3245 = vld [vmem:[#allocation4 + $0x18] sm:$0xff]
    %v3246 = vld [vmem:[#allocation4 + $0x20] sm:$0xff]
    %v3247 = vld [vmem:[#allocation4 + $0x28] sm:$0xff]
    %v3248 = vmul.f32 %v3236, %v3242
    %v3249 = vmul.f32 %v3237, %v3243
    %v3250 = vmul.f32 %v3238, %v3244
    %v3251 = vmul.f32 %v3239, %v3245
    %v3252 = vmul.f32 %v3240, %v3246
    %v3253 = vmul.f32 %v3241, %v3247
    %v3254 = vsel %vm281, %v3248, 0.0
    %v3255 = vsel %vm281, %v3249, 0.0
    %v3256 = vadd.f32 %v3254, %v3255
    %v3257 = vsel %vm281, %v3250, 0.0
    %v3258 = vadd.f32 %v3256, %v3257
    %v3259 = vsel %vm281, %v3251, 0.0
    %v3260 = vadd.f32 %v3258, %v3259
    %v3261 = vsel %vm281, %v3252, 0.0
    %v3262 = vadd.f32 %v3260, %v3261
    %v3263 = vsel %vm281, %v3253, 0.0
    %v3264 = vadd.f32 %v3262, %v3263
    %v3265 = vld [vmem:[#allocation5] sm:$0xff]
    %v3266 = vld [vmem:[#allocation5 + $0x8] sm:$0xff]
    %v3267 = vld [vmem:[#allocation5 + $0x10] sm:$0xff]
    %v3268 = vld [vmem:[#allocation5 + $0x18] sm:$0xff]
    %v3269 = vld [vmem:[#allocation5 + $0x20] sm:$0xff]
    %v3270 = vld [vmem:[#allocation5 + $0x28] sm:$0xff]
    %v3271 = vmul.f32 %v3236, %v3265
    %v3272 = vmul.f32 %v3237, %v3266
    %v3273 = vmul.f32 %v3238, %v3267
    %v3274 = vmul.f32 %v3239, %v3268
    %v3275 = vmul.f32 %v3240, %v3269
    %v3276 = vmul.f32 %v3241, %v3270
    %v3277 = vsel %vm281, %v3271, 0.0
    %v3278 = vsel %vm281, %v3272, 0.0
    %v3279 = vadd.f32 %v3277, %v3278
    %v3280 = vsel %vm281, %v3273, 0.0
    %v3281 = vadd.f32 %v3279, %v3280
    %v3282 = vsel %vm281, %v3274, 0.0
    %v3283 = vadd.f32 %v3281, %v3282
    %v3284 = vsel %vm281, %v3275, 0.0
    %v3285 = vadd.f32 %v3283, %v3284
    %v3286 = vsel %vm281, %v3276, 0.0
    %v3287 = vadd.f32 %v3285, %v3286
    %v3288 = vpack.c.bf16 %v3100, %v3100
    %v3289 = vld [vmem:[%s41] sm:$0xf]
    %v3290 = vld [vmem:[%s41 + $0x4] sm:$0xf]
    %v3291 = vld [vmem:[%s41 + $0x8] sm:$0xf]
    %v3292 = vld [vmem:[%s41 + $0xc] sm:$0xf]
    %v3293 = vpack.c.bf16 %v3264, %v3264
    %v3294 = vld [vmem:[%s43] sm:$0xf]
    %v3295 = vld [vmem:[%s43 + $0x4] sm:$0xf]
    %v3296 = vld [vmem:[%s43 + $0x8] sm:$0xf]
    %v3297 = vld [vmem:[%s43 + $0xc] sm:$0xf]
    %v3302 = vunpack.c.l.b16 %v3294
    %v3303 = vunpack.c.l.b16 %v3295
    %v3304 = vunpack.c.l.b16 %v3296
    %v3305 = vunpack.c.l.b16 %v3297
    %v3306 = vpack.c.b16 %v3303, %v3302
    %v3307 = vpack.c.b16 %v3305, %v3304
    %v3311 = vsel %vm281, %v3293, 0
    %3313 = vmatprep.subr.bf16.mxu0 0
    %3314 = vmatpush1.bf16.msra.mxu0 %v3306
    %3315 = vmatprep.subr.bf16.mxu0 0
    %3316 = vmatpush1.bf16.msra.mxu0 %v3307
    %3317 = vmatprep.subr.bf16.mxu0 0
    %3318 = vmatpush1.bf16.msra.mxu0 0
    %3319 = vmatprep.subr.bf16.mxu0 0
    %3320 = vmatpush1.bf16.msra.mxu0 0
    %3321 = vmatprep.subr.bf16.mxu0 0
    %3322 = vmatpush1.bf16.msra.mxu0 0
    %3323 = vmatprep.subr.bf16.mxu0 0
    %3324 = vmatpush1.bf16.msra.mxu0 0
    %3325 = vmatprep.subr.bf16.mxu0 0
    %3326 = vmatpush1.bf16.msra.mxu0 0
    %3327 = vmatprep.subr.bf16.mxu0 0
    %3328 = vmatpush1.bf16.msra.mxu0 0
    %3329 = vmatprep.subr.bf16.mxu0 0
    %3330 = vmatpush1.bf16.msra.mxu0 0
    %3331 = vmatprep.subr.bf16.mxu0 0
    %3332 = vmatpush1.bf16.msra.mxu0 0
    %3333 = vmatprep.subr.bf16.mxu0 0
    %3334 = vmatpush1.bf16.msra.mxu0 0
    %3335 = vmatprep.subr.bf16.mxu0 0
    %3336 = vmatpush1.bf16.msra.mxu0 0
    %3337 = vmatprep.subr.bf16.mxu0 0
    %3338 = vmatpush1.bf16.msra.mxu0 0
    %3339 = vmatprep.subr.bf16.mxu0 0
    %3340 = vmatpush1.bf16.msra.mxu0 0
    %3341 = vmatprep.subr.bf16.mxu0 0
    %3342 = vmatpush1.bf16.msra.mxu0 0
    %3343 = vmatprep.subr.bf16.mxu0 0
    %3344 = vmatpush1.bf16.msra.mxu0 0
    %3345 = vmatprep.mubr.bf16.mxu0 0
    %3346 = vmatmul.mubr.bf16.gmra.mrb[0].mxu0 %v3311
    %v3347 = vpop.f32.mrb[0].mxu0
    %v3348 = vadd.f32 0.0, %v3347
    %v3349 = vpop.f32.mrb[0].mxu0
    %v3350 = vpop.f32.mrb[0].mxu0
    %v3351 = vpop.f32.mrb[0].mxu0
    %3352 = vdwg.mxu0
    %v3357 = vunpack.c.l.b16 %v3289
    %v3358 = vunpack.c.l.b16 %v3290
    %v3359 = vunpack.c.l.b16 %v3291
    %v3360 = vunpack.c.l.b16 %v3292
    %v3361 = vpack.c.b16 %v3358, %v3357
    %v3362 = vpack.c.b16 %v3360, %v3359
    %v3366 = vsel %vm281, %v3288, 0
    %3368 = vmatprep.subr.bf16.mxu0 0
    %3369 = vmatpush1.bf16.msra.mxu0 %v3361
    %3370 = vmatprep.subr.bf16.mxu0 0
    %3371 = vmatpush1.bf16.msra.mxu0 %v3362
    %3372 = vmatprep.subr.bf16.mxu0 0
    %3373 = vmatpush1.bf16.msra.mxu0 0
    %3374 = vmatprep.subr.bf16.mxu0 0
    %3375 = vmatpush1.bf16.msra.mxu0 0
    %3376 = vmatprep.subr.bf16.mxu0 0
    %3377 = vmatpush1.bf16.msra.mxu0 0
    %3378 = vmatprep.subr.bf16.mxu0 0
    %3379 = vmatpush1.bf16.msra.mxu0 0
    %3380 = vmatprep.subr.bf16.mxu0 0
    %3381 = vmatpush1.bf16.msra.mxu0 0
    %3382 = vmatprep.subr.bf16.mxu0 0
    %3383 = vmatpush1.bf16.msra.mxu0 0
    %3384 = vmatprep.subr.bf16.mxu0 0
    %3385 = vmatpush1.bf16.msra.mxu0 0
    %3386 = vmatprep.subr.bf16.mxu0 0
    %3387 = vmatpush1.bf16.msra.mxu0 0
    %3388 = vmatprep.subr.bf16.mxu0 0
    %3389 = vmatpush1.bf16.msra.mxu0 0
    %3390 = vmatprep.subr.bf16.mxu0 0
    %3391 = vmatpush1.bf16.msra.mxu0 0
    %3392 = vmatprep.subr.bf16.mxu0 0
    %3393 = vmatpush1.bf16.msra.mxu0 0
    %3394 = vmatprep.subr.bf16.mxu0 0
    %3395 = vmatpush1.bf16.msra.mxu0 0
    %3396 = vmatprep.subr.bf16.mxu0 0
    %3397 = vmatpush1.bf16.msra.mxu0 0
    %3398 = vmatprep.subr.bf16.mxu0 0
    %3399 = vmatpush1.bf16.msra.mxu0 0
    %3400 = vmatprep.mubr.bf16.mxu0 0
    %3401 = vmatmul.mubr.bf16.gmra.mrb[0].mxu0 %v3366
    %v3402 = vpop.f32.mrb[0].mxu0
    %v3403 = vadd.f32 %v3348, %v3402
    %v3404 = vpop.f32.mrb[0].mxu0
    %v3405 = vpop.f32.mrb[0].mxu0
    %v3406 = vpop.f32.mrb[0].mxu0
    %3407 = vdwg.mxu0
    %v3408 = vpack.c.bf16 %v3287, %v3287
    %v3409 = vld [vmem:[%s45] sm:$0xf]
    %v3410 = vld [vmem:[%s45 + $0x4] sm:$0xf]
    %v3411 = vld [vmem:[%s45 + $0x8] sm:$0xf]
    %v3412 = vld [vmem:[%s45 + $0xc] sm:$0xf]
    %v3417 = vunpack.c.l.b16 %v3409
    %v3418 = vunpack.c.l.b16 %v3410
    %v3419 = vunpack.c.l.b16 %v3411
    %v3420 = vunpack.c.l.b16 %v3412
    %v3421 = vpack.c.b16 %v3418, %v3417
    %v3422 = vpack.c.b16 %v3420, %v3419
    %v3426 = vsel %vm281, %v3408, 0
    %3428 = vmatprep.subr.bf16.mxu0 0
    %3429 = vmatpush1.bf16.msra.mxu0 %v3421
    %3430 = vmatprep.subr.bf16.mxu0 0
    %3431 = vmatpush1.bf16.msra.mxu0 %v3422
    %3432 = vmatprep.subr.bf16.mxu0 0
    %3433 = vmatpush1.bf16.msra.mxu0 0
    %3434 = vmatprep.subr.bf16.mxu0 0
    %3435 = vmatpush1.bf16.msra.mxu0 0
    %3436 = vmatprep.subr.bf16.mxu0 0
    %3437 = vmatpush1.bf16.msra.mxu0 0
    %3438 = vmatprep.subr.bf16.mxu0 0
    %3439 = vmatpush1.bf16.msra.mxu0 0
    %3440 = vmatprep.subr.bf16.mxu0 0
    %3441 = vmatpush1.bf16.msra.mxu0 0
    %3442 = vmatprep.subr.bf16.mxu0 0
    %3443 = vmatpush1.bf16.msra.mxu0 0
    %3444 = vmatprep.subr.bf16.mxu0 0
    %3445 = vmatpush1.bf16.msra.mxu0 0
    %3446 = vmatprep.subr.bf16.mxu0 0
    %3447 = vmatpush1.bf16.msra.mxu0 0
    %3448 = vmatprep.subr.bf16.mxu0 0
    %3449 = vmatpush1.bf16.msra.mxu0 0
    %3450 = vmatprep.subr.bf16.mxu0 0
    %3451 = vmatpush1.bf16.msra.mxu0 0
    %3452 = vmatprep.subr.bf16.mxu0 0
    %3453 = vmatpush1.bf16.msra.mxu0 0
    %3454 = vmatprep.subr.bf16.mxu0 0
    %3455 = vmatpush1.bf16.msra.mxu0 0
    %3456 = vmatprep.subr.bf16.mxu0 0
    %3457 = vmatpush1.bf16.msra.mxu0 0
    %3458 = vmatprep.subr.bf16.mxu0 0
    %3459 = vmatpush1.bf16.msra.mxu0 0
    %3460 = vmatprep.mubr.bf16.mxu0 0
    %3461 = vmatmul.mubr.bf16.gmra.mrb[0].mxu0 %v3426
    %v3462 = vpop.f32.mrb[0].mxu0
    %v3463 = vadd.f32 0.0, %v3462
    %v3464 = vpop.f32.mrb[0].mxu0
    %v3465 = vpop.f32.mrb[0].mxu0
    %v3466 = vpop.f32.mrb[0].mxu0
    %3467 = vdwg.mxu0
    %v3468 = vadd.f32 %v3403, %v3463
    %v3469 = vld [vmem:[%s49] sm:$0x1]
    %v3471 = vlaneseq
    %v3472 = vshrl.u32 %v3471, 7
    %v3473 = vsub.s32 0, %v3472
    %v3474 = vrot.slane %v3469, %v3473
    %v3476 = vadd.f32 %v3468, %v3474
    %v3477 = vld [vmem:[%s47] sm:$0xf]
    %v3478 = vld [vmem:[%s47 + $0x4] sm:$0xf]
    %v3479 = vld [vmem:[%s47 + $0x8] sm:$0xf]
    %v3480 = vld [vmem:[%s47 + $0xc] sm:$0xf]
    %v3485 = vunpack.c.l.b16 %v3477
    %v3486 = vunpack.c.l.b16 %v3478
    %v3487 = vunpack.c.l.b16 %v3479
    %v3488 = vunpack.c.l.b16 %v3480
    %v3489 = vpack.c.b16 %v3486, %v3485
    %v3490 = vpack.c.b16 %v3488, %v3487
    %3493 = vmatprep.subr.bf16.mxu0 0
    %3494 = vmatpush1.bf16.msra.mxu0 %v3489
    %3495 = vmatprep.subr.bf16.mxu0 0
    %3496 = vmatpush1.bf16.msra.mxu0 %v3490
    %3497 = vmatprep.subr.bf16.mxu0 0
    %3498 = vmatpush1.bf16.msra.mxu0 0
    %3499 = vmatprep.subr.bf16.mxu0 0
    %3500 = vmatpush1.bf16.msra.mxu0 0
    %3501 = vmatprep.subr.bf16.mxu0 0
    %3502 = vmatpush1.bf16.msra.mxu0 0
    %3503 = vmatprep.subr.bf16.mxu0 0
    %3504 = vmatpush1.bf16.msra.mxu0 0
    %3505 = vmatprep.subr.bf16.mxu0 0
    %3506 = vmatpush1.bf16.msra.mxu0 0
    %3507 = vmatprep.subr.bf16.mxu0 0
    %3508 = vmatpush1.bf16.msra.mxu0 0
    %3509 = vmatprep.subr.bf16.mxu0 0
    %3510 = vmatpush1.bf16.msra.mxu0 0
    %3511 = vmatprep.subr.bf16.mxu0 0
    %3512 = vmatpush1.bf16.msra.mxu0 0
    %3513 = vmatprep.subr.bf16.mxu0 0
    %3514 = vmatpush1.bf16.msra.mxu0 0
    %3515 = vmatprep.subr.bf16.mxu0 0
    %3516 = vmatpush1.bf16.msra.mxu0 0
    %3517 = vmatprep.subr.bf16.mxu0 0
    %3518 = vmatpush1.bf16.msra.mxu0 0
    %3519 = vmatprep.subr.bf16.mxu0 0
    %3520 = vmatpush1.bf16.msra.mxu0 0
    %3521 = vmatprep.subr.bf16.mxu0 0
    %3522 = vmatpush1.bf16.msra.mxu0 0
    %3523 = vmatprep.subr.bf16.mxu0 0
    %3524 = vmatpush1.bf16.msra.mxu0 0
    %3525 = vmatprep.mubr.bf16.mxu0 0
    %3526 = vmatmul.mubr.bf16.gmra.mrb[0].mxu0 %v3123
    %v3527 = vpop.f32.mrb[0].mxu0
    %v3528 = vadd.f32 0.0, %v3527
    %v3529 = vpop.f32.mrb[0].mxu0
    %v3530 = vpop.f32.mrb[0].mxu0
    %v3531 = vpop.f32.mrb[0].mxu0
    %3532 = vdwg.mxu0
    %v3533 = vadd.f32 %v3476, %v3528
    %v3534 = vxor.u32 %v3533, 2147483648
    %v3535 = vmul.f32 %v3534, 1.442695
    %v3536 = vpow.pop %v3535
    %v3537 = vadd.f32 %v3536, 1.0
    %v3538 = vrcp.pop %v3537
    %v3539 = vmul.f32 1.0, %v3538
    %v3540 = vld [vmem:[%s51] sm:$0x1]
    %v3542 = vlaneseq
    %v3543 = vshrl.u32 %v3542, 7
    %v3544 = vsub.s32 0, %v3543
    %v3545 = vrot.slane %v3540, %v3544
    %3546 = vrot.lane.b32.xlu0 %v3545, 64
    %v3547 = vpop.permute.xlu0 %3546
    %v3549 = vadd.f32 %v3528, %v3547
    %3551 = vrot.lane.b32.xlu0 %v3549, 64
    %v3552 = vpop.permute.xlu0 %3551
    %v3554 = vmul.f32 %v3539, %v3552
    %3556 = vrot.lane.b32.xlu0 %v3554, 64
    %v3557 = vpop.permute.xlu0 %3556
    %v3559 = vadd.f32 %v3476, %v3557
    %v3560 = vtanh.pop %v3559
    %v3561 = vsub.f32 1.0, %v3539
    %3563 = vrot.lane.b32.xlu0 %v3560, 96
    %v3564 = vpop.permute.xlu0 %3563
    %v3566 = vmul.f32 %v3561, %v3564
    %3568 = vrot.lane.b32.xlu0 %v2998, 32
    %v3569 = vpop.permute.xlu0 %3568
    %v3571 = vmul.f32 %v3539, %v3569
    %v3572 = vadd.f32 %v3566, %v3571
    %v3573 = vpack.c.bf16 %v3572, %v3572
    %v3574 = vld [vmem:[%s53] sm:$0xf]
    %v3575 = vld [vmem:[%s53 + $0x4] sm:$0xf]
    %v3576 = vld [vmem:[%s53 + $0x8] sm:$0xf]
    %v3577 = vld [vmem:[%s53 + $0xc] sm:$0xf]
    %v3578 = vld [vmem:[%s55] sm:$0xf]
    %v3579 = vld [vmem:[%s55 + $0x4] sm:$0xf]
    %v3580 = vld [vmem:[%s55 + $0x8] sm:$0xf]
    %v3581 = vld [vmem:[%s55 + $0xc] sm:$0xf]
    %v3586 = vunpack.c.l.b16 %v3578
    %v3587 = vunpack.c.l.b16 %v3579
    %v3588 = vunpack.c.l.b16 %v3580
    %v3589 = vunpack.c.l.b16 %v3581
    %v3590 = vpack.c.b16 %v3587, %v3586
    %v3591 = vpack.c.b16 %v3589, %v3588
    %3594 = vmatprep.subr.bf16.mxu0 0
    %3595 = vmatpush1.bf16.msra.mxu0 %v3590
    %3596 = vmatprep.subr.bf16.mxu0 0
    %3597 = vmatpush1.bf16.msra.mxu0 %v3591
    %3598 = vmatprep.subr.bf16.mxu0 0
    %3599 = vmatpush1.bf16.msra.mxu0 0
    %3600 = vmatprep.subr.bf16.mxu0 0
    %3601 = vmatpush1.bf16.msra.mxu0 0
    %3602 = vmatprep.subr.bf16.mxu0 0
    %3603 = vmatpush1.bf16.msra.mxu0 0
    %3604 = vmatprep.subr.bf16.mxu0 0
    %3605 = vmatpush1.bf16.msra.mxu0 0
    %3606 = vmatprep.subr.bf16.mxu0 0
    %3607 = vmatpush1.bf16.msra.mxu0 0
    %3608 = vmatprep.subr.bf16.mxu0 0
    %3609 = vmatpush1.bf16.msra.mxu0 0
    %3610 = vmatprep.subr.bf16.mxu0 0
    %3611 = vmatpush1.bf16.msra.mxu0 0
    %3612 = vmatprep.subr.bf16.mxu0 0
    %3613 = vmatpush1.bf16.msra.mxu0 0
    %3614 = vmatprep.subr.bf16.mxu0 0
    %3615 = vmatpush1.bf16.msra.mxu0 0
    %3616 = vmatprep.subr.bf16.mxu0 0
    %3617 = vmatpush1.bf16.msra.mxu0 0
    %3618 = vmatprep.subr.bf16.mxu0 0
    %3619 = vmatpush1.bf16.msra.mxu0 0
    %3620 = vmatprep.subr.bf16.mxu0 0
    %3621 = vmatpush1.bf16.msra.mxu0 0
    %3622 = vmatprep.subr.bf16.mxu0 0
    %3623 = vmatpush1.bf16.msra.mxu0 0
    %3624 = vmatprep.subr.bf16.mxu0 0
    %3625 = vmatpush1.bf16.msra.mxu0 0
    %3626 = vmatprep.mubr.bf16.mxu0 0
    %3627 = vmatmul.mubr.bf16.gmra.mrb[0].mxu0 %v3311
    %v3628 = vpop.f32.mrb[0].mxu0
    %v3629 = vadd.f32 0.0, %v3628
    %v3630 = vpop.f32.mrb[0].mxu0
    %v3631 = vpop.f32.mrb[0].mxu0
    %v3632 = vpop.f32.mrb[0].mxu0
    %3633 = vdwg.mxu0
    %3635 = vrot.lane.b32.xlu0 %v3573, 96
    %v3636 = vpop.permute.xlu0 %3635
    %v3641 = vunpack.c.l.b16 %v3574
    %v3642 = vunpack.c.l.b16 %v3575
    %v3643 = vunpack.c.l.b16 %v3576
    %v3644 = vunpack.c.l.b16 %v3577
    %v3645 = vpack.c.b16 %v3642, %v3641
    %v3646 = vpack.c.b16 %v3644, %v3643
    %v3650 = vsel %vm281, %v3636, 0
    %3652 = vmatprep.subr.bf16.mxu0 0
    %3653 = vmatpush1.bf16.msra.mxu0 %v3645
    %3654 = vmatprep.subr.bf16.mxu0 0
    %3655 = vmatpush1.bf16.msra.mxu0 %v3646
    %3656 = vmatprep.subr.bf16.mxu0 0
    %3657 = vmatpush1.bf16.msra.mxu0 0
    %3658 = vmatprep.subr.bf16.mxu0 0
    %3659 = vmatpush1.bf16.msra.mxu0 0
    %3660 = vmatprep.subr.bf16.mxu0 0
    %3661 = vmatpush1.bf16.msra.mxu0 0
    %3662 = vmatprep.subr.bf16.mxu0 0
    %3663 = vmatpush1.bf16.msra.mxu0 0
    %3664 = vmatprep.subr.bf16.mxu0 0
    %3665 = vmatpush1.bf16.msra.mxu0 0
    %3666 = vmatprep.subr.bf16.mxu0 0
    %3667 = vmatpush1.bf16.msra.mxu0 0
    %3668 = vmatprep.subr.bf16.mxu0 0
    %3669 = vmatpush1.bf16.msra.mxu0 0
    %3670 = vmatprep.subr.bf16.mxu0 0
    %3671 = vmatpush1.bf16.msra.mxu0 0
    %3672 = vmatprep.subr.bf16.mxu0 0
    %3673 = vmatpush1.bf16.msra.mxu0 0
    %3674 = vmatprep.subr.bf16.mxu0 0
    %3675 = vmatpush1.bf16.msra.mxu0 0
    %3676 = vmatprep.subr.bf16.mxu0 0
    %3677 = vmatpush1.bf16.msra.mxu0 0
    %3678 = vmatprep.subr.bf16.mxu0 0
    %3679 = vmatpush1.bf16.msra.mxu0 0
    %3680 = vmatprep.subr.bf16.mxu0 0
    %3681 = vmatpush1.bf16.msra.mxu0 0
    %3682 = vmatprep.subr.bf16.mxu0 0
    %3683 = vmatpush1.bf16.msra.mxu0 0
    %3684 = vmatprep.mubr.bf16.mxu0 0
    %3685 = vmatmul.mubr.bf16.gmra.mrb[0].mxu0 %v3650
    %v3686 = vpop.f32.mrb[0].mxu0
    %v3687 = vadd.f32 %v3629, %v3686
    %v3688 = vpop.f32.mrb[0].mxu0
    %v3689 = vpop.f32.mrb[0].mxu0
    %v3690 = vpop.f32.mrb[0].mxu0
    %3691 = vdwg.mxu0
    %v3692 = vld [vmem:[#allocation26] sm:$0xf]
    %v3693 = vld [vmem:[#allocation26 + $0x4] sm:$0xf]
    %v3694 = vld [vmem:[#allocation26 + $0x8] sm:$0xf]
    %v3695 = vld [vmem:[#allocation26 + $0xc] sm:$0xf]
    %v3700 = vunpack.c.l.b16 %v3692
    %v3701 = vunpack.c.l.b16 %v3693
    %v3702 = vunpack.c.l.b16 %v3694
    %v3703 = vunpack.c.l.b16 %v3695
    %v3704 = vpack.c.b16 %v3701, %v3700
    %v3705 = vpack.c.b16 %v3703, %v3702
    %3708 = vmatprep.subr.bf16.mxu0 0
    %3709 = vmatpush1.bf16.msra.mxu0 %v3704
    %3710 = vmatprep.subr.bf16.mxu0 0
    %3711 = vmatpush1.bf16.msra.mxu0 %v3705
    %3712 = vmatprep.subr.bf16.mxu0 0
    %3713 = vmatpush1.bf16.msra.mxu0 0
    %3714 = vmatprep.subr.bf16.mxu0 0
    %3715 = vmatpush1.bf16.msra.mxu0 0
    %3716 = vmatprep.subr.bf16.mxu0 0
    %3717 = vmatpush1.bf16.msra.mxu0 0
    %3718 = vmatprep.subr.bf16.mxu0 0
    %3719 = vmatpush1.bf16.msra.mxu0 0
    %3720 = vmatprep.subr.bf16.mxu0 0
    %3721 = vmatpush1.bf16.msra.mxu0 0
    %3722 = vmatprep.subr.bf16.mxu0 0
    %3723 = vmatpush1.bf16.msra.mxu0 0
    %3724 = vmatprep.subr.bf16.mxu0 0
    %3725 = vmatpush1.bf16.msra.mxu0 0
    %3726 = vmatprep.subr.bf16.mxu0 0
    %3727 = vmatpush1.bf16.msra.mxu0 0
    %3728 = vmatprep.subr.bf16.mxu0 0
    %3729 = vmatpush1.bf16.msra.mxu0 0
    %3730 = vmatprep.subr.bf16.mxu0 0
    %3731 = vmatpush1.bf16.msra.mxu0 0
    %3732 = vmatprep.subr.bf16.mxu0 0
    %3733 = vmatpush1.bf16.msra.mxu0 0
    %3734 = vmatprep.subr.bf16.mxu0 0
    %3735 = vmatpush1.bf16.msra.mxu0 0
    %3736 = vmatprep.subr.bf16.mxu0 0
    %3737 = vmatpush1.bf16.msra.mxu0 0
    %3738 = vmatprep.subr.bf16.mxu0 0
    %3739 = vmatpush1.bf16.msra.mxu0 0
    %3740 = vmatprep.mubr.bf16.mxu0 0
    %3741 = vmatmul.mubr.bf16.gmra.mrb[0].mxu0 %v3426
    %v3742 = vpop.f32.mrb[0].mxu0
    %v3743 = vadd.f32 0.0, %v3742
    %v3744 = vpop.f32.mrb[0].mxu0
    %v3745 = vpop.f32.mrb[0].mxu0
    %v3746 = vpop.f32.mrb[0].mxu0
    %3747 = vdwg.mxu0
    %v3748 = vadd.f32 %v3687, %v3743
    %v3749 = vld [vmem:[%s59] sm:$0xf]
    %v3750 = vld [vmem:[%s59 + $0x4] sm:$0xf]
    %v3751 = vld [vmem:[%s59 + $0x8] sm:$0xf]
    %v3752 = vld [vmem:[%s59 + $0xc] sm:$0xf]
    %v3757 = vunpack.c.l.b16 %v3749
    %v3758 = vunpack.c.l.b16 %v3750
    %v3759 = vunpack.c.l.b16 %v3751
    %v3760 = vunpack.c.l.b16 %v3752
    %v3761 = vpack.c.b16 %v3758, %v3757
    %v3762 = vpack.c.b16 %v3760, %v3759
    %3765 = vmatprep.subr.bf16.mxu0 0
    %3766 = vmatpush1.bf16.msra.mxu0 %v3761
    %3767 = vmatprep.subr.bf16.mxu0 0
    %3768 = vmatpush1.bf16.msra.mxu0 %v3762
    %3769 = vmatprep.subr.bf16.mxu0 0
    %3770 = vmatpush1.bf16.msra.mxu0 0
    %3771 = vmatprep.subr.bf16.mxu0 0
    %3772 = vmatpush1.bf16.msra.mxu0 0
    %3773 = vmatprep.subr.bf16.mxu0 0
    %3774 = vmatpush1.bf16.msra.mxu0 0
    %3775 = vmatprep.subr.bf16.mxu0 0
    %3776 = vmatpush1.bf16.msra.mxu0 0
    %3777 = vmatprep.subr.bf16.mxu0 0
    %3778 = vmatpush1.bf16.msra.mxu0 0
    %3779 = vmatprep.subr.bf16.mxu0 0
    %3780 = vmatpush1.bf16.msra.mxu0 0
    %3781 = vmatprep.subr.bf16.mxu0 0
    %3782 = vmatpush1.bf16.msra.mxu0 0
    %3783 = vmatprep.subr.bf16.mxu0 0
    %3784 = vmatpush1.bf16.msra.mxu0 0
    %3785 = vmatprep.subr.bf16.mxu0 0
    %3786 = vmatpush1.bf16.msra.mxu0 0
    %3787 = vmatprep.subr.bf16.mxu0 0
    %3788 = vmatpush1.bf16.msra.mxu0 0
    %3789 = vmatprep.subr.bf16.mxu0 0
    %3790 = vmatpush1.bf16.msra.mxu0 0
    %3791 = vmatprep.subr.bf16.mxu0 0
    %3792 = vmatpush1.bf16.msra.mxu0 0
    %3793 = vmatprep.subr.bf16.mxu0 0
    %3794 = vmatpush1.bf16.msra.mxu0 0
    %3795 = vmatprep.subr.bf16.mxu0 0
    %3796 = vmatpush1.bf16.msra.mxu0 0
    %3797 = vmatprep.mubr.bf16.mxu0 0
    %3798 = vmatmul.mubr.bf16.gmra.mrb[0].mxu0 %v3366
    %v3799 = vpop.f32.mrb[0].mxu0
    %v3800 = vadd.f32 0.0, %v3799
    %v3801 = vpop.f32.mrb[0].mxu0
    %v3802 = vpop.f32.mrb[0].mxu0
    %v3803 = vpop.f32.mrb[0].mxu0
    %3804 = vdwg.mxu0
    %v3805 = vadd.f32 %v3748, %v3800
    %v3806 = vld [vmem:[%s61] sm:$0x1]
    %v3808 = vlaneseq
    %v3809 = vshrl.u32 %v3808, 7
    %v3810 = vsub.s32 0, %v3809
    %v3811 = vrot.slane %v3806, %v3810
    %v3813 = vadd.f32 %v3805, %v3811
    %s3814 = smul.u32 8, 1
    %s3815 = sshll.u32 %s3814, 4
    %3816 = dma.done [#allocation12], %s3815
    %3817 = vst [vmem:[#allocation11] sm:$0xff] %v3813
    %s3818 = scalar_lea.hbm %s63, 256
    // Predicated region
    $region178: #{tpu_custom_call.1} parent=1 // pred_check
      _
    $region179: #{tpu_custom_call.1} parent=1 // pred_check_branch
      %3820 = sbr.rel target = $region181
    $region180: #{tpu_custom_call.1} parent=1 // pred_region
      %3821 = sst [smem:[#allocation30]] [#allocation35]
      %3822 = sst [smem:[#allocation31]] [#allocation34]
    $region181: #{tpu_custom_call.1} parent=1 // pred_fallthru
      _
    %3824 = shalt.err (0)
    %s3826 = sshll.u32 [#allocation11], 4
    %s3827 = int_to_ptr.vmem [resolvable:$true] %s3826
    %3829 = dma.vmem_to_hbm [thread:$0]  %s3827, 128, %s3818, [#allocation12]
    %s3830 = sld [smem:[#allocation13 + $0x2]]
    %p3831 = scmp.ne.s32.totalorder %s3830, 0
    // Predicated region
    $region182: #{tpu_custom_call.1} parent=1 // pred_check
      %p3832 = pneg %p3831
    $region183: #{tpu_custom_call.1} parent=1 // pred_check_branch
      %3834 = sbr.rel (%p3832) target = $region185
    $region184: #{tpu_custom_call.1} parent=1 // pred_region
      %s3835 = scalar_lea.vmem %s3, 16
      %v3836 = vld [vmem:[%s3835] sm:$0xff]
      %3837 = vset.pattern.permute.xlu0 0
      %3838 = vperm.xlu0 %3837, %v3836
      %v3839 = vpop.permute.xlu0 %3838
      %vm3840 = vcmp.eq.s32.totalorder %v2094, %v3839
      %v3841 = vsel %vm3840, 1, 0
      %v3842 = vcvt.s32.f32 %v3841
      %3843 = vst [vmem:[#allocation10] sm:$0xff] %v3842
    $region185: #{tpu_custom_call.1} parent=1 // pred_fallthru
      _
    %s3844 = sld [smem:[#allocation13 + $0x2]]
    %p3845 = scmp.eq.s32.totalorder %s3844, 0
    // Predicated region
    $region186: #{tpu_custom_call.1} parent=1 // pred_check
      %p3846 = pneg %p3845
    $region187: #{tpu_custom_call.1} parent=1 // pred_check_branch
      %3848 = sbr.rel (%p3846) target = $region189
    $region188: #{tpu_custom_call.1} parent=1 // pred_region
      %3849 = vmax.xlane.f32.xlu0 %v3813
      %v3850 = vpop.xlane.xlu0 %3849
      %vm3851 = vcmp.eq.f32.partialorder %v3813, %v3850
      %v3852 = vsel %vm3851, %v2094, 128
      %v3853 = vand.u32 %v3852, 65535
      %v3854 = vshra.s32 %v3852, 16
      %v3855 = vcvt.s32.f32 %v3853
      %v3856 = vcvt.s32.f32 %v3854
      %3857 = vmin.xlane.f32.xlu0 %v3856
      %v3858 = vpop.xlane.xlu0 %3857
      %vm3859 = vcmp.eq.f32.partialorder %v3856, %v3858
      %v3860 = vsel %vm3859, %v3855, inf
      %3861 = vmin.xlane.f32.xlu0 %v3860
      %v3862 = vpop.xlane.xlu0 %3861
      %v3863 = vcvt.f32.s32 %v3862
      %v3864 = vcvt.f32.s32 %v3858
      %v3865 = vshll.u32 %v3864, 16
      %v3866 = vadd.s32 %v3865, %v3863
      %vm3867 = vcmp.eq.s32.totalorder %v2094, %v3866
      %v3868 = vsel %vm3867, 1, 0
      %v3869 = vcvt.s32.f32 %v3868
      %3870 = vst [vmem:[#allocation10] sm:$0xff] %v3869
    $region189: #{tpu_custom_call.1} parent=1 // pred_fallthru
      _
    %3872 = vrot.lane.b32.xlu0 %v3572, 96
    %v3873 = vpop.permute.xlu0 %3872
    %3875 = vst.msk [vmem:[#allocation9] sm:$0xff] %vm281, %v3873
    %v3876 = vld [vmem:[#allocation9] sm:$0xff]
    %v3877 = vld [vmem:[#allocation10] sm:$0xff]
    %v3878 = vpack.c.bf16 %v3877, %v3877
    %v3879 = vld [vmem:[%s29] sm:$0xf]
    %v3880 = vld [vmem:[%s29 + $0x4] sm:$0xf]
    %v3881 = vld [vmem:[%s29 + $0x8] sm:$0xf]
    %v3882 = vld [vmem:[%s29 + $0xc] sm:$0xf]
    %v3883 = vld [vmem:[%s29 + $0x10] sm:$0xf]
    %v3884 = vld [vmem:[%s29 + $0x14] sm:$0xf]
    %v3885 = vld [vmem:[%s29 + $0x18] sm:$0xf]
    %v3886 = vld [vmem:[%s29 + $0x1c] sm:$0xf]
    %v3887 = vld [vmem:[%s29 + $0x20] sm:$0xf]
    %v3888 = vld [vmem:[%s29 + $0x24] sm:$0xf]
    %v3889 = vld [vmem:[%s29 + $0x28] sm:$0xf]
    %v3890 = vld [vmem:[%s29 + $0x2c] sm:$0xf]
    %v3891 = vld [vmem:[%s29 + $0x30] sm:$0xf]
    %v3892 = vld [vmem:[%s29 + $0x34] sm:$0xf]
    %v3893 = vld [vmem:[%s29 + $0x38] sm:$0xf]
    %v3894 = vld [vmem:[%s29 + $0x3c] sm:$0xf]
    %v3911 = vunpack.c.l.b16 %v3879
    %v3912 = vunpack.c.l.b16 %v3880
    %v3913 = vunpack.c.l.b16 %v3881
    %v3914 = vunpack.c.l.b16 %v3882
    %v3915 = vunpack.c.l.b16 %v3883
    %v3916 = vunpack.c.l.b16 %v3884
    %v3917 = vunpack.c.l.b16 %v3885
    %v3918 = vunpack.c.l.b16 %v3886
    %v3919 = vunpack.c.l.b16 %v3887
    %v3920 = vunpack.c.l.b16 %v3888
    %v3921 = vunpack.c.l.b16 %v3889
    %v3922 = vunpack.c.l.b16 %v3890
    %v3923 = vunpack.c.l.b16 %v3891
    %v3924 = vunpack.c.l.b16 %v3892
    %v3925 = vunpack.c.l.b16 %v3893
    %v3926 = vunpack.c.l.b16 %v3894
    %v3927 = vpack.c.b16 %v3912, %v3911
    %v3928 = vpack.c.b16 %v3914, %v3913
    %v3929 = vpack.c.b16 %v3916, %v3915
    %v3930 = vpack.c.b16 %v3918, %v3917
    %v3931 = vpack.c.b16 %v3920, %v3919
    %v3932 = vpack.c.b16 %v3922, %v3921
    %v3933 = vpack.c.b16 %v3924, %v3923
    %v3934 = vpack.c.b16 %v3926, %v3925
    %3943 = vmatprep.subr.bf16.mxu0 0
    %3944 = vmatpush1.bf16.msra.mxu0 %v3927
    %3945 = vmatprep.subr.bf16.mxu0 0
    %3946 = vmatpush1.bf16.msra.mxu0 %v3928
    %3947 = vmatprep.subr.bf16.mxu0 0
    %3948 = vmatpush1.bf16.msra.mxu0 %v3929
    %3949 = vmatprep.subr.bf16.mxu0 0
    %3950 = vmatpush1.bf16.msra.mxu0 %v3930
    %3951 = vmatprep.subr.bf16.mxu0 0
    %3952 = vmatpush1.bf16.msra.mxu0 %v3931
    %3953 = vmatprep.subr.bf16.mxu0 0
    %3954 = vmatpush1.bf16.msra.mxu0 %v3932
    %3955 = vmatprep.subr.bf16.mxu0 0
    %3956 = vmatpush1.bf16.msra.mxu0 %v3933
    %3957 = vmatprep.subr.bf16.mxu0 0
    %3958 = vmatpush1.bf16.msra.mxu0 %v3934
    %3959 = vmatprep.subr.bf16.mxu0 0
    %3960 = vmatpush1.bf16.msra.mxu0 0
    %3961 = vmatprep.subr.bf16.mxu0 0
    %3962 = vmatpush1.bf16.msra.mxu0 0
    %3963 = vmatprep.subr.bf16.mxu0 0
    %3964 = vmatpush1.bf16.msra.mxu0 0
    %3965 = vmatprep.subr.bf16.mxu0 0
    %3966 = vmatpush1.bf16.msra.mxu0 0
    %3967 = vmatprep.subr.bf16.mxu0 0
    %3968 = vmatpush1.bf16.msra.mxu0 0
    %3969 = vmatprep.subr.bf16.mxu0 0
    %3970 = vmatpush1.bf16.msra.mxu0 0
    %3971 = vmatprep.subr.bf16.mxu0 0
    %3972 = vmatpush1.bf16.msra.mxu0 0
    %3973 = vmatprep.subr.bf16.mxu0 0
    %3974 = vmatpush1.bf16.msra.mxu0 0
    %3975 = vmatprep.mubr.bf16.mxu0 0
    %3976 = vmatmul.mubr.bf16.gmra.mrb[0].mxu0 %v3878
    %v3977 = vpop.f32.mrb[0].mxu0
    %v3978 = vadd.f32 0.0, %v3977
    %v3979 = vpop.f32.mrb[0].mxu0
    %v3980 = vpop.f32.mrb[0].mxu0
    %v3981 = vpop.f32.mrb[0].mxu0
    %3982 = vdwg.mxu0
    %v3983 = vpack.c.bf16 %v3876, %v3876
    %v3984 = vld [vmem:[%s31] sm:$0xf]
    %v3985 = vld [vmem:[%s31 + $0x4] sm:$0xf]
    %v3986 = vld [vmem:[%s31 + $0x8] sm:$0xf]
    %v3987 = vld [vmem:[%s31 + $0xc] sm:$0xf]
    %v3992 = vunpack.c.l.b16 %v3984
    %v3993 = vunpack.c.l.b16 %v3985
    %v3994 = vunpack.c.l.b16 %v3986
    %v3995 = vunpack.c.l.b16 %v3987
    %v3996 = vpack.c.b16 %v3993, %v3992
    %v3997 = vpack.c.b16 %v3995, %v3994
    %v4001 = vsel %vm281, %v3983, 0
    %4003 = vmatprep.subr.bf16.mxu0 0
    %4004 = vmatpush1.bf16.msra.mxu0 %v3996
    %4005 = vmatprep.subr.bf16.mxu0 0
    %4006 = vmatpush1.bf16.msra.mxu0 %v3997
    %4007 = vmatprep.subr.bf16.mxu0 0
    %4008 = vmatpush1.bf16.msra.mxu0 0
    %4009 = vmatprep.subr.bf16.mxu0 0
    %4010 = vmatpush1.bf16.msra.mxu0 0
    %4011 = vmatprep.subr.bf16.mxu0 0
    %4012 = vmatpush1.bf16.msra.mxu0 0
    %4013 = vmatprep.subr.bf16.mxu0 0
    %4014 = vmatpush1.bf16.msra.mxu0 0
    %4015 = vmatprep.subr.bf16.mxu0 0
    %4016 = vmatpush1.bf16.msra.mxu0 0
    %4017 = vmatprep.subr.bf16.mxu0 0
    %4018 = vmatpush1.bf16.msra.mxu0 0
    %4019 = vmatprep.subr.bf16.mxu0 0
    %4020 = vmatpush1.bf16.msra.mxu0 0
    %4021 = vmatprep.subr.bf16.mxu0 0
    %4022 = vmatpush1.bf16.msra.mxu0 0
    %4023 = vmatprep.subr.bf16.mxu0 0
    %4024 = vmatpush1.bf16.msra.mxu0 0
    %4025 = vmatprep.subr.bf16.mxu0 0
    %4026 = vmatpush1.bf16.msra.mxu0 0
    %4027 = vmatprep.subr.bf16.mxu0 0
    %4028 = vmatpush1.bf16.msra.mxu0 0
    %4029 = vmatprep.subr.bf16.mxu0 0
    %4030 = vmatpush1.bf16.msra.mxu0 0
    %4031 = vmatprep.subr.bf16.mxu0 0
    %4032 = vmatpush1.bf16.msra.mxu0 0
    %4033 = vmatprep.subr.bf16.mxu0 0
    %4034 = vmatpush1.bf16.msra.mxu0 0
    %4035 = vmatprep.mubr.bf16.mxu0 0
    %4036 = vmatmul.mubr.bf16.gmra.mrb[0].mxu0 %v4001
    %v4037 = vpop.f32.mrb[0].mxu0
    %v4038 = vadd.f32 0.0, %v4037
    %v4039 = vpop.f32.mrb[0].mxu0
    %v4040 = vpop.f32.mrb[0].mxu0
    %v4041 = vpop.f32.mrb[0].mxu0
    %4042 = vdwg.mxu0
    %v4043 = vld [vmem:[#allocation8] sm:$0xff]
    %v4044 = vld [vmem:[#allocation8 + $0x8] sm:$0xff]
    %v4045 = vld [vmem:[#allocation8 + $0x10] sm:$0xff]
    %v4046 = vld [vmem:[#allocation8 + $0x18] sm:$0xff]
    %v4047 = vld [vmem:[#allocation8 + $0x20] sm:$0xff]
    %v4048 = vld [vmem:[#allocation8 + $0x28] sm:$0xff]
    %v4049 = vadd.f32 %v4038, %v4043
    %v4050 = vadd.f32 %v4038, %v4044
    %v4051 = vadd.f32 %v4038, %v4045
    %v4052 = vadd.f32 %v4038, %v4046
    %v4053 = vadd.f32 %v4038, %v4047
    %v4054 = vadd.f32 %v4038, %v4048
    %v4055 = vtanh.pop %v4049
    %v4056 = vtanh.pop %v4050
    %v4057 = vtanh.pop %v4051
    %v4058 = vtanh.pop %v4052
    %v4059 = vtanh.pop %v4053
    %v4060 = vtanh.pop %v4054
    %v4061 = vmul.f32 %v4055, %v2304
    %v4062 = vmul.f32 %v4056, %v2304
    %v4063 = vmul.f32 %v4057, %v2304
    %v4064 = vmul.f32 %v4058, %v2304
    %v4065 = vmul.f32 %v4059, %v2304
    %v4066 = vmul.f32 %v4060, %v2304
    %v4067 = vsel %vm281, %v4061, 0.0
    %4068 = vadd.xlane.f32.xlu0 %v4067
    %v4069 = vpop.xlane.xlu0 %4068
    %v4070 = vsel %vm281, %v4062, 0.0
    %4071 = vadd.xlane.f32.xlu0 %v4070
    %v4072 = vpop.xlane.xlu0 %4071
    %v4073 = vsel %vm281, %v4063, 0.0
    %4074 = vadd.xlane.f32.xlu0 %v4073
    %v4075 = vpop.xlane.xlu0 %4074
    %v4076 = vsel %vm281, %v4064, 0.0
    %4077 = vadd.xlane.f32.xlu0 %v4076
    %v4078 = vpop.xlane.xlu0 %4077
    %v4079 = vsel %vm281, %v4065, 0.0
    %4080 = vadd.xlane.f32.xlu0 %v4079
    %v4081 = vpop.xlane.xlu0 %4080
    %v4082 = vsel %vm281, %v4066, 0.0
    %4083 = vadd.xlane.f32.xlu0 %v4082
    %v4084 = vpop.xlane.xlu0 %4083
    %v4085 = vmax.f32 %v4069, %v4081
    %v4086 = vmax.f32 %v4072, %v4084
    %v4087 = vmax.f32 %v4085, %v4086
    %v4088 = vmax.f32 %v4075, %v4078
    %v4089 = vmax.f32 %v4087, %v4088
    %v4090 = vsub.f32 %v4069, %v4089
    %v4091 = vsub.f32 %v4072, %v4089
    %v4092 = vsub.f32 %v4075, %v4089
    %v4093 = vsub.f32 %v4078, %v4089
    %v4094 = vsub.f32 %v4081, %v4089
    %v4095 = vsub.f32 %v4084, %v4089
    %v4096 = vmul.f32 %v4090, 1.442695
    %v4097 = vpow.pop %v4096
    %v4098 = vmul.f32 %v4091, 1.442695
    %v4099 = vpow.pop %v4098
    %v4100 = vmul.f32 %v4092, 1.442695
    %v4101 = vpow.pop %v4100
    %v4102 = vmul.f32 %v4093, 1.442695
    %v4103 = vpow.pop %v4102
    %v4104 = vmul.f32 %v4094, 1.442695
    %v4105 = vpow.pop %v4104
    %v4106 = vmul.f32 %v4095, 1.442695
    %v4107 = vpow.pop %v4106
    %v4108 = vadd.f32 %v4097, %v4099
    %v4109 = vadd.f32 %v4108, %v4101
    %v4110 = vadd.f32 %v4109, %v4103
    %v4111 = vadd.f32 %v4110, %v4105
    %v4112 = vadd.f32 %v4111, %v4107
    %v4113 = vrcp.pop %v4112
    %v4114 = vmul.f32 %v4097, %v4113
    %v4115 = vmul.f32 %v4099, %v4113
    %v4116 = vmul.f32 %v4101, %v4113
    %v4117 = vmul.f32 %v4103, %v4113
    %v4118 = vmul.f32 %v4105, %v4113
    %v4119 = vmul.f32 %v4107, %v4113
    %v4120 = vld [vmem:[#allocation4] sm:$0xff]
    %v4121 = vld [vmem:[#allocation4 + $0x8] sm:$0xff]
    %v4122 = vld [vmem:[#allocation4 + $0x10] sm:$0xff]
    %v4123 = vld [vmem:[#allocation4 + $0x18] sm:$0xff]
    %v4124 = vld [vmem:[#allocation4 + $0x20] sm:$0xff]
    %v4125 = vld [vmem:[#allocation4 + $0x28] sm:$0xff]
    %v4126 = vmul.f32 %v4114, %v4120
    %v4127 = vmul.f32 %v4115, %v4121
    %v4128 = vmul.f32 %v4116, %v4122
    %v4129 = vmul.f32 %v4117, %v4123
    %v4130 = vmul.f32 %v4118, %v4124
    %v4131 = vmul.f32 %v4119, %v4125
    %v4132 = vsel %vm281, %v4126, 0.0
    %v4133 = vsel %vm281, %v4127, 0.0
    %v4134 = vadd.f32 %v4132, %v4133
    %v4135 = vsel %vm281, %v4128, 0.0
    %v4136 = vadd.f32 %v4134, %v4135
    %v4137 = vsel %vm281, %v4129, 0.0
    %v4138 = vadd.f32 %v4136, %v4137
    %v4139 = vsel %vm281, %v4130, 0.0
    %v4140 = vadd.f32 %v4138, %v4139
    %v4141 = vsel %vm281, %v4131, 0.0
    %v4142 = vadd.f32 %v4140, %v4141
    %v4143 = vld [vmem:[#allocation5] sm:$0xff]
    %v4144 = vld [vmem:[#allocation5 + $0x8] sm:$0xff]
    %v4145 = vld [vmem:[#allocation5 + $0x10] sm:$0xff]
    %v4146 = vld [vmem:[#allocation5 + $0x18] sm:$0xff]
    %v4147 = vld [vmem:[#allocation5 + $0x20] sm:$0xff]
    %v4148 = vld [vmem:[#allocation5 + $0x28] sm:$0xff]
    %v4149 = vmul.f32 %v4114, %v4143
    %v4150 = vmul.f32 %v4115, %v4144
    %v4151 = vmul.f32 %v4116, %v4145
    %v4152 = vmul.f32 %v4117, %v4146
    %v4153 = vmul.f32 %v4118, %v4147
    %v4154 = vmul.f32 %v4119, %v4148
    %v4155 = vsel %vm281, %v4149, 0.0
    %v4156 = vsel %vm281, %v4150, 0.0
    %v4157 = vadd.f32 %v4155, %v4156
    %v4158 = vsel %vm281, %v4151, 0.0
    %v4159 = vadd.f32 %v4157, %v4158
    %v4160 = vsel %vm281, %v4152, 0.0
    %v4161 = vadd.f32 %v4159, %v4160
    %v4162 = vsel %vm281, %v4153, 0.0
    %v4163 = vadd.f32 %v4161, %v4162
    %v4164 = vsel %vm281, %v4154, 0.0
    %v4165 = vadd.f32 %v4163, %v4164
    %v4166 = vpack.c.bf16 %v3978, %v3978
    %v4167 = vld [vmem:[%s41] sm:$0xf]
    %v4168 = vld [vmem:[%s41 + $0x4] sm:$0xf]
    %v4169 = vld [vmem:[%s41 + $0x8] sm:$0xf]
    %v4170 = vld [vmem:[%s41 + $0xc] sm:$0xf]
    %v4171 = vpack.c.bf16 %v4142, %v4142
    %v4172 = vld [vmem:[%s43] sm:$0xf]
    %v4173 = vld [vmem:[%s43 + $0x4] sm:$0xf]
    %v4174 = vld [vmem:[%s43 + $0x8] sm:$0xf]
    %v4175 = vld [vmem:[%s43 + $0xc] sm:$0xf]
    %v4180 = vunpack.c.l.b16 %v4172
    %v4181 = vunpack.c.l.b16 %v4173
    %v4182 = vunpack.c.l.b16 %v4174
    %v4183 = vunpack.c.l.b16 %v4175
    %v4184 = vpack.c.b16 %v4181, %v4180
    %v4185 = vpack.c.b16 %v4183, %v4182
    %v4189 = vsel %vm281, %v4171, 0
    %4191 = vmatprep.subr.bf16.mxu0 0
    %4192 = vmatpush1.bf16.msra.mxu0 %v4184
    %4193 = vmatprep.subr.bf16.mxu0 0
    %4194 = vmatpush1.bf16.msra.mxu0 %v4185
    %4195 = vmatprep.subr.bf16.mxu0 0
    %4196 = vmatpush1.bf16.msra.mxu0 0
    %4197 = vmatprep.subr.bf16.mxu0 0
    %4198 = vmatpush1.bf16.msra.mxu0 0
    %4199 = vmatprep.subr.bf16.mxu0 0
    %4200 = vmatpush1.bf16.msra.mxu0 0
    %4201 = vmatprep.subr.bf16.mxu0 0
    %4202 = vmatpush1.bf16.msra.mxu0 0
    %4203 = vmatprep.subr.bf16.mxu0 0
    %4204 = vmatpush1.bf16.msra.mxu0 0
    %4205 = vmatprep.subr.bf16.mxu0 0
    %4206 = vmatpush1.bf16.msra.mxu0 0
    %4207 = vmatprep.subr.bf16.mxu0 0
    %4208 = vmatpush1.bf16.msra.mxu0 0
    %4209 = vmatprep.subr.bf16.mxu0 0
    %4210 = vmatpush1.bf16.msra.mxu0 0
    %4211 = vmatprep.subr.bf16.mxu0 0
    %4212 = vmatpush1.bf16.msra.mxu0 0
    %4213 = vmatprep.subr.bf16.mxu0 0
    %4214 = vmatpush1.bf16.msra.mxu0 0
    %4215 = vmatprep.subr.bf16.mxu0 0
    %4216 = vmatpush1.bf16.msra.mxu0 0
    %4217 = vmatprep.subr.bf16.mxu0 0
    %4218 = vmatpush1.bf16.msra.mxu0 0
    %4219 = vmatprep.subr.bf16.mxu0 0
    %4220 = vmatpush1.bf16.msra.mxu0 0
    %4221 = vmatprep.subr.bf16.mxu0 0
    %4222 = vmatpush1.bf16.msra.mxu0 0
    %4223 = vmatprep.mubr.bf16.mxu0 0
    %4224 = vmatmul.mubr.bf16.gmra.mrb[0].mxu0 %v4189
    %v4225 = vpop.f32.mrb[0].mxu0
    %v4226 = vadd.f32 0.0, %v4225
    %v4227 = vpop.f32.mrb[0].mxu0
    %v4228 = vpop.f32.mrb[0].mxu0
    %v4229 = vpop.f32.mrb[0].mxu0
    %4230 = vdwg.mxu0
    %v4235 = vunpack.c.l.b16 %v4167
    %v4236 = vunpack.c.l.b16 %v4168
    %v4237 = vunpack.c.l.b16 %v4169
    %v4238 = vunpack.c.l.b16 %v4170
    %v4239 = vpack.c.b16 %v4236, %v4235
    %v4240 = vpack.c.b16 %v4238, %v4237
    %v4244 = vsel %vm281, %v4166, 0
    %4246 = vmatprep.subr.bf16.mxu0 0
    %4247 = vmatpush1.bf16.msra.mxu0 %v4239
    %4248 = vmatprep.subr.bf16.mxu0 0
    %4249 = vmatpush1.bf16.msra.mxu0 %v4240
    %4250 = vmatprep.subr.bf16.mxu0 0
    %4251 = vmatpush1.bf16.msra.mxu0 0
    %4252 = vmatprep.subr.bf16.mxu0 0
    %4253 = vmatpush1.bf16.msra.mxu0 0
    %4254 = vmatprep.subr.bf16.mxu0 0
    %4255 = vmatpush1.bf16.msra.mxu0 0
    %4256 = vmatprep.subr.bf16.mxu0 0
    %4257 = vmatpush1.bf16.msra.mxu0 0
    %4258 = vmatprep.subr.bf16.mxu0 0
    %4259 = vmatpush1.bf16.msra.mxu0 0
    %4260 = vmatprep.subr.bf16.mxu0 0
    %4261 = vmatpush1.bf16.msra.mxu0 0
    %4262 = vmatprep.subr.bf16.mxu0 0
    %4263 = vmatpush1.bf16.msra.mxu0 0
    %4264 = vmatprep.subr.bf16.mxu0 0
    %4265 = vmatpush1.bf16.msra.mxu0 0
    %4266 = vmatprep.subr.bf16.mxu0 0
    %4267 = vmatpush1.bf16.msra.mxu0 0
    %4268 = vmatprep.subr.bf16.mxu0 0
    %4269 = vmatpush1.bf16.msra.mxu0 0
    %4270 = vmatprep.subr.bf16.mxu0 0
    %4271 = vmatpush1.bf16.msra.mxu0 0
    %4272 = vmatprep.subr.bf16.mxu0 0
    %4273 = vmatpush1.bf16.msra.mxu0 0
    %4274 = vmatprep.subr.bf16.mxu0 0
    %4275 = vmatpush1.bf16.msra.mxu0 0
    %4276 = vmatprep.subr.bf16.mxu0 0
    %4277 = vmatpush1.bf16.msra.mxu0 0
    %4278 = vmatprep.mubr.bf16.mxu0 0
    %4279 = vmatmul.mubr.bf16.gmra.mrb[0].mxu0 %v4244
    %v4280 = vpop.f32.mrb[0].mxu0
    %v4281 = vadd.f32 %v4226, %v4280
    %v4282 = vpop.f32.mrb[0].mxu0
    %v4283 = vpop.f32.mrb[0].mxu0
    %v4284 = vpop.f32.mrb[0].mxu0
    %4285 = vdwg.mxu0
    %v4286 = vpack.c.bf16 %v4165, %v4165
    %v4287 = vld [vmem:[%s45] sm:$0xf]
    %v4288 = vld [vmem:[%s45 + $0x4] sm:$0xf]
    %v4289 = vld [vmem:[%s45 + $0x8] sm:$0xf]
    %v4290 = vld [vmem:[%s45 + $0xc] sm:$0xf]
    %v4295 = vunpack.c.l.b16 %v4287
    %v4296 = vunpack.c.l.b16 %v4288
    %v4297 = vunpack.c.l.b16 %v4289
    %v4298 = vunpack.c.l.b16 %v4290
    %v4299 = vpack.c.b16 %v4296, %v4295
    %v4300 = vpack.c.b16 %v4298, %v4297
    %v4304 = vsel %vm281, %v4286, 0
    %4306 = vmatprep.subr.bf16.mxu0 0
    %4307 = vmatpush1.bf16.msra.mxu0 %v4299
    %4308 = vmatprep.subr.bf16.mxu0 0
    %4309 = vmatpush1.bf16.msra.mxu0 %v4300
    %4310 = vmatprep.subr.bf16.mxu0 0
    %4311 = vmatpush1.bf16.msra.mxu0 0
    %4312 = vmatprep.subr.bf16.mxu0 0
    %4313 = vmatpush1.bf16.msra.mxu0 0
    %4314 = vmatprep.subr.bf16.mxu0 0
    %4315 = vmatpush1.bf16.msra.mxu0 0
    %4316 = vmatprep.subr.bf16.mxu0 0
    %4317 = vmatpush1.bf16.msra.mxu0 0
    %4318 = vmatprep.subr.bf16.mxu0 0
    %4319 = vmatpush1.bf16.msra.mxu0 0
    %4320 = vmatprep.subr.bf16.mxu0 0
    %4321 = vmatpush1.bf16.msra.mxu0 0
    %4322 = vmatprep.subr.bf16.mxu0 0
    %4323 = vmatpush1.bf16.msra.mxu0 0
    %4324 = vmatprep.subr.bf16.mxu0 0
    %4325 = vmatpush1.bf16.msra.mxu0 0
    %4326 = vmatprep.subr.bf16.mxu0 0
    %4327 = vmatpush1.bf16.msra.mxu0 0
    %4328 = vmatprep.subr.bf16.mxu0 0
    %4329 = vmatpush1.bf16.msra.mxu0 0
    %4330 = vmatprep.subr.bf16.mxu0 0
    %4331 = vmatpush1.bf16.msra.mxu0 0
    %4332 = vmatprep.subr.bf16.mxu0 0
    %4333 = vmatpush1.bf16.msra.mxu0 0
    %4334 = vmatprep.subr.bf16.mxu0 0
    %4335 = vmatpush1.bf16.msra.mxu0 0
    %4336 = vmatprep.subr.bf16.mxu0 0
    %4337 = vmatpush1.bf16.msra.mxu0 0
    %4338 = vmatprep.mubr.bf16.mxu0 0
    %4339 = vmatmul.mubr.bf16.gmra.mrb[0].mxu0 %v4304
    %v4340 = vpop.f32.mrb[0].mxu0
    %v4341 = vadd.f32 0.0, %v4340
    %v4342 = vpop.f32.mrb[0].mxu0
    %v4343 = vpop.f32.mrb[0].mxu0
    %v4344 = vpop.f32.mrb[0].mxu0
    %4345 = vdwg.mxu0
    %v4346 = vadd.f32 %v4281, %v4341
    %v4347 = vld [vmem:[%s49] sm:$0x1]
    %v4349 = vlaneseq
    %v4350 = vshrl.u32 %v4349, 7
    %v4351 = vsub.s32 0, %v4350
    %v4352 = vrot.slane %v4347, %v4351
    %v4354 = vadd.f32 %v4346, %v4352
    %v4355 = vld [vmem:[%s47] sm:$0xf]
    %v4356 = vld [vmem:[%s47 + $0x4] sm:$0xf]
    %v4357 = vld [vmem:[%s47 + $0x8] sm:$0xf]
    %v4358 = vld [vmem:[%s47 + $0xc] sm:$0xf]
    %v4363 = vunpack.c.l.b16 %v4355
    %v4364 = vunpack.c.l.b16 %v4356
    %v4365 = vunpack.c.l.b16 %v4357
    %v4366 = vunpack.c.l.b16 %v4358
    %v4367 = vpack.c.b16 %v4364, %v4363
    %v4368 = vpack.c.b16 %v4366, %v4365
    %4371 = vmatprep.subr.bf16.mxu0 0
    %4372 = vmatpush1.bf16.msra.mxu0 %v4367
    %4373 = vmatprep.subr.bf16.mxu0 0
    %4374 = vmatpush1.bf16.msra.mxu0 %v4368
    %4375 = vmatprep.subr.bf16.mxu0 0
    %4376 = vmatpush1.bf16.msra.mxu0 0
    %4377 = vmatprep.subr.bf16.mxu0 0
    %4378 = vmatpush1.bf16.msra.mxu0 0
    %4379 = vmatprep.subr.bf16.mxu0 0
    %4380 = vmatpush1.bf16.msra.mxu0 0
    %4381 = vmatprep.subr.bf16.mxu0 0
    %4382 = vmatpush1.bf16.msra.mxu0 0
    %4383 = vmatprep.subr.bf16.mxu0 0
    %4384 = vmatpush1.bf16.msra.mxu0 0
    %4385 = vmatprep.subr.bf16.mxu0 0
    %4386 = vmatpush1.bf16.msra.mxu0 0
    %4387 = vmatprep.subr.bf16.mxu0 0
    %4388 = vmatpush1.bf16.msra.mxu0 0
    %4389 = vmatprep.subr.bf16.mxu0 0
    %4390 = vmatpush1.bf16.msra.mxu0 0
    %4391 = vmatprep.subr.bf16.mxu0 0
    %4392 = vmatpush1.bf16.msra.mxu0 0
    %4393 = vmatprep.subr.bf16.mxu0 0
    %4394 = vmatpush1.bf16.msra.mxu0 0
    %4395 = vmatprep.subr.bf16.mxu0 0
    %4396 = vmatpush1.bf16.msra.mxu0 0
    %4397 = vmatprep.subr.bf16.mxu0 0
    %4398 = vmatpush1.bf16.msra.mxu0 0
    %4399 = vmatprep.subr.bf16.mxu0 0
    %4400 = vmatpush1.bf16.msra.mxu0 0
    %4401 = vmatprep.subr.bf16.mxu0 0
    %4402 = vmatpush1.bf16.msra.mxu0 0
    %4403 = vmatprep.mubr.bf16.mxu0 0
    %4404 = vmatmul.mubr.bf16.gmra.mrb[0].mxu0 %v4001
    %v4405 = vpop.f32.mrb[0].mxu0
    %v4406 = vadd.f32 0.0, %v4405
    %v4407 = vpop.f32.mrb[0].mxu0
    %v4408 = vpop.f32.mrb[0].mxu0
    %v4409 = vpop.f32.mrb[0].mxu0
    %4410 = vdwg.mxu0
    %v4411 = vadd.f32 %v4354, %v4406
    %v4412 = vxor.u32 %v4411, 2147483648
    %v4413 = vmul.f32 %v4412, 1.442695
    %v4414 = vpow.pop %v4413
    %v4415 = vadd.f32 %v4414, 1.0
    %v4416 = vrcp.pop %v4415
    %v4417 = vmul.f32 1.0, %v4416
    %v4418 = vld [vmem:[%s51] sm:$0x1]
    %v4420 = vlaneseq
    %v4421 = vshrl.u32 %v4420, 7
    %v4422 = vsub.s32 0, %v4421
    %v4423 = vrot.slane %v4418, %v4422
    %4424 = vrot.lane.b32.xlu0 %v4423, 64
    %v4425 = vpop.permute.xlu0 %4424
    %v4427 = vadd.f32 %v4406, %v4425
    %4429 = vrot.lane.b32.xlu0 %v4427, 64
    %v4430 = vpop.permute.xlu0 %4429
    %v4432 = vmul.f32 %v4417, %v4430
    %4434 = vrot.lane.b32.xlu0 %v4432, 64
    %v4435 = vpop.permute.xlu0 %4434
    %v4437 = vadd.f32 %v4354, %v4435
    %v4438 = vtanh.pop %v4437
    %v4439 = vsub.f32 1.0, %v4417
    %4441 = vrot.lane.b32.xlu0 %v4438, 96
    %v4442 = vpop.permute.xlu0 %4441
    %v4444 = vmul.f32 %v4439, %v4442
    %4446 = vrot.lane.b32.xlu0 %v3876, 32
    %v4447 = vpop.permute.xlu0 %4446
    %v4449 = vmul.f32 %v4417, %v4447
    %v4450 = vadd.f32 %v4444, %v4449
    %v4451 = vpack.c.bf16 %v4450, %v4450
    %v4452 = vld [vmem:[%s53] sm:$0xf]
    %v4453 = vld [vmem:[%s53 + $0x4] sm:$0xf]
    %v4454 = vld [vmem:[%s53 + $0x8] sm:$0xf]
    %v4455 = vld [vmem:[%s53 + $0xc] sm:$0xf]
    %v4456 = vld [vmem:[%s55] sm:$0xf]
    %v4457 = vld [vmem:[%s55 + $0x4] sm:$0xf]
    %v4458 = vld [vmem:[%s55 + $0x8] sm:$0xf]
    %v4459 = vld [vmem:[%s55 + $0xc] sm:$0xf]
    %v4464 = vunpack.c.l.b16 %v4456
    %v4465 = vunpack.c.l.b16 %v4457
    %v4466 = vunpack.c.l.b16 %v4458
    %v4467 = vunpack.c.l.b16 %v4459
    %v4468 = vpack.c.b16 %v4465, %v4464
    %v4469 = vpack.c.b16 %v4467, %v4466
    %4472 = vmatprep.subr.bf16.mxu0 0
    %4473 = vmatpush1.bf16.msra.mxu0 %v4468
    %4474 = vmatprep.subr.bf16.mxu0 0
    %4475 = vmatpush1.bf16.msra.mxu0 %v4469
    %4476 = vmatprep.subr.bf16.mxu0 0
    %4477 = vmatpush1.bf16.msra.mxu0 0
    %4478 = vmatprep.subr.bf16.mxu0 0
    %4479 = vmatpush1.bf16.msra.mxu0 0
    %4480 = vmatprep.subr.bf16.mxu0 0
    %4481 = vmatpush1.bf16.msra.mxu0 0
    %4482 = vmatprep.subr.bf16.mxu0 0
    %4483 = vmatpush1.bf16.msra.mxu0 0
    %4484 = vmatprep.subr.bf16.mxu0 0
    %4485 = vmatpush1.bf16.msra.mxu0 0
    %4486 = vmatprep.subr.bf16.mxu0 0
    %4487 = vmatpush1.bf16.msra.mxu0 0
    %4488 = vmatprep.subr.bf16.mxu0 0
    %4489 = vmatpush1.bf16.msra.mxu0 0
    %4490 = vmatprep.subr.bf16.mxu0 0
    %4491 = vmatpush1.bf16.msra.mxu0 0
    %4492 = vmatprep.subr.bf16.mxu0 0
    %4493 = vmatpush1.bf16.msra.mxu0 0
    %4494 = vmatprep.subr.bf16.mxu0 0
    %4495 = vmatpush1.bf16.msra.mxu0 0
    %4496 = vmatprep.subr.bf16.mxu0 0
    %4497 = vmatpush1.bf16.msra.mxu0 0
    %4498 = vmatprep.subr.bf16.mxu0 0
    %4499 = vmatpush1.bf16.msra.mxu0 0
    %4500 = vmatprep.subr.bf16.mxu0 0
    %4501 = vmatpush1.bf16.msra.mxu0 0
    %4502 = vmatprep.subr.bf16.mxu0 0
    %4503 = vmatpush1.bf16.msra.mxu0 0
    %4504 = vmatprep.mubr.bf16.mxu0 0
    %4505 = vmatmul.mubr.bf16.gmra.mrb[0].mxu0 %v4189
    %v4506 = vpop.f32.mrb[0].mxu0
    %v4507 = vadd.f32 0.0, %v4506
    %v4508 = vpop.f32.mrb[0].mxu0
    %v4509 = vpop.f32.mrb[0].mxu0
    %v4510 = vpop.f32.mrb[0].mxu0
    %4511 = vdwg.mxu0
    %4513 = vrot.lane.b32.xlu0 %v4451, 96
    %v4514 = vpop.permute.xlu0 %4513
    %v4519 = vunpack.c.l.b16 %v4452
    %v4520 = vunpack.c.l.b16 %v4453
    %v4521 = vunpack.c.l.b16 %v4454
    %v4522 = vunpack.c.l.b16 %v4455
    %v4523 = vpack.c.b16 %v4520, %v4519
    %v4524 = vpack.c.b16 %v4522, %v4521
    %v4528 = vsel %vm281, %v4514, 0
    %4530 = vmatprep.subr.bf16.mxu0 0
    %4531 = vmatpush1.bf16.msra.mxu0 %v4523
    %4532 = vmatprep.subr.bf16.mxu0 0
    %4533 = vmatpush1.bf16.msra.mxu0 %v4524
    %4534 = vmatprep.subr.bf16.mxu0 0
    %4535 = vmatpush1.bf16.msra.mxu0 0
    %4536 = vmatprep.subr.bf16.mxu0 0
    %4537 = vmatpush1.bf16.msra.mxu0 0
    %4538 = vmatprep.subr.bf16.mxu0 0
    %4539 = vmatpush1.bf16.msra.mxu0 0
    %4540 = vmatprep.subr.bf16.mxu0 0
    %4541 = vmatpush1.bf16.msra.mxu0 0
    %4542 = vmatprep.subr.bf16.mxu0 0
    %4543 = vmatpush1.bf16.msra.mxu0 0
    %4544 = vmatprep.subr.bf16.mxu0 0
    %4545 = vmatpush1.bf16.msra.mxu0 0
    %4546 = vmatprep.subr.bf16.mxu0 0
    %4547 = vmatpush1.bf16.msra.mxu0 0
    %4548 = vmatprep.subr.bf16.mxu0 0
    %4549 = vmatpush1.bf16.msra.mxu0 0
    %4550 = vmatprep.subr.bf16.mxu0 0
    %4551 = vmatpush1.bf16.msra.mxu0 0
    %4552 = vmatprep.subr.bf16.mxu0 0
    %4553 = vmatpush1.bf16.msra.mxu0 0
    %4554 = vmatprep.subr.bf16.mxu0 0
    %4555 = vmatpush1.bf16.msra.mxu0 0
    %4556 = vmatprep.subr.bf16.mxu0 0
    %4557 = vmatpush1.bf16.msra.mxu0 0
    %4558 = vmatprep.subr.bf16.mxu0 0
    %4559 = vmatpush1.bf16.msra.mxu0 0
    %4560 = vmatprep.subr.bf16.mxu0 0
    %4561 = vmatpush1.bf16.msra.mxu0 0
    %4562 = vmatprep.mubr.bf16.mxu0 0
    %4563 = vmatmul.mubr.bf16.gmra.mrb[0].mxu0 %v4528
    %v4564 = vpop.f32.mrb[0].mxu0
    %v4565 = vadd.f32 %v4507, %v4564
    %v4566 = vpop.f32.mrb[0].mxu0
    %v4567 = vpop.f32.mrb[0].mxu0
    %v4568 = vpop.f32.mrb[0].mxu0
    %4569 = vdwg.mxu0
    %v4570 = vld [vmem:[#allocation26] sm:$0xf]
    %v4571 = vld [vmem:[#allocation26 + $0x4] sm:$0xf]
    %v4572 = vld [vmem:[#allocation26 + $0x8] sm:$0xf]
    %v4573 = vld [vmem:[#allocation26 + $0xc] sm:$0xf]
    %v4578 = vunpack.c.l.b16 %v4570
    %v4579 = vunpack.c.l.b16 %v4571
    %v4580 = vunpack.c.l.b16 %v4572
    %v4581 = vunpack.c.l.b16 %v4573
    %v4582 = vpack.c.b16 %v4579, %v4578
    %v4583 = vpack.c.b16 %v4581, %v4580
    %4586 = vmatprep.subr.bf16.mxu0 0
    %4587 = vmatpush1.bf16.msra.mxu0 %v4582
    %4588 = vmatprep.subr.bf16.mxu0 0
    %4589 = vmatpush1.bf16.msra.mxu0 %v4583
    %4590 = vmatprep.subr.bf16.mxu0 0
    %4591 = vmatpush1.bf16.msra.mxu0 0
    %4592 = vmatprep.subr.bf16.mxu0 0
    %4593 = vmatpush1.bf16.msra.mxu0 0
    %4594 = vmatprep.subr.bf16.mxu0 0
    %4595 = vmatpush1.bf16.msra.mxu0 0
    %4596 = vmatprep.subr.bf16.mxu0 0
    %4597 = vmatpush1.bf16.msra.mxu0 0
    %4598 = vmatprep.subr.bf16.mxu0 0
    %4599 = vmatpush1.bf16.msra.mxu0 0
    %4600 = vmatprep.subr.bf16.mxu0 0
    %4601 = vmatpush1.bf16.msra.mxu0 0
    %4602 = vmatprep.subr.bf16.mxu0 0
    %4603 = vmatpush1.bf16.msra.mxu0 0
    %4604 = vmatprep.subr.bf16.mxu0 0
    %4605 = vmatpush1.bf16.msra.mxu0 0
    %4606 = vmatprep.subr.bf16.mxu0 0
    %4607 = vmatpush1.bf16.msra.mxu0 0
    %4608 = vmatprep.subr.bf16.mxu0 0
    %4609 = vmatpush1.bf16.msra.mxu0 0
    %4610 = vmatprep.subr.bf16.mxu0 0
    %4611 = vmatpush1.bf16.msra.mxu0 0
    %4612 = vmatprep.subr.bf16.mxu0 0
    %4613 = vmatpush1.bf16.msra.mxu0 0
    %4614 = vmatprep.subr.bf16.mxu0 0
    %4615 = vmatpush1.bf16.msra.mxu0 0
    %4616 = vmatprep.subr.bf16.mxu0 0
    %4617 = vmatpush1.bf16.msra.mxu0 0
    %4618 = vmatprep.mubr.bf16.mxu0 0
    %4619 = vmatmul.mubr.bf16.gmra.mrb[0].mxu0 %v4304
    %v4620 = vpop.f32.mrb[0].mxu0
    %v4621 = vadd.f32 0.0, %v4620
    %v4622 = vpop.f32.mrb[0].mxu0
    %v4623 = vpop.f32.mrb[0].mxu0
    %v4624 = vpop.f32.mrb[0].mxu0
    %4625 = vdwg.mxu0
    %v4626 = vadd.f32 %v4565, %v4621
    %v4627 = vld [vmem:[%s59] sm:$0xf]
    %v4628 = vld [vmem:[%s59 + $0x4] sm:$0xf]
    %v4629 = vld [vmem:[%s59 + $0x8] sm:$0xf]
    %v4630 = vld [vmem:[%s59 + $0xc] sm:$0xf]
    %v4635 = vunpack.c.l.b16 %v4627
    %v4636 = vunpack.c.l.b16 %v4628
    %v4637 = vunpack.c.l.b16 %v4629
    %v4638 = vunpack.c.l.b16 %v4630
    %v4639 = vpack.c.b16 %v4636, %v4635
    %v4640 = vpack.c.b16 %v4638, %v4637
    %4643 = vmatprep.subr.bf16.mxu0 0
    %4644 = vmatpush1.bf16.msra.mxu0 %v4639
    %4645 = vmatprep.subr.bf16.mxu0 0
    %4646 = vmatpush1.bf16.msra.mxu0 %v4640
    %4647 = vmatprep.subr.bf16.mxu0 0
    %4648 = vmatpush1.bf16.msra.mxu0 0
    %4649 = vmatprep.subr.bf16.mxu0 0
    %4650 = vmatpush1.bf16.msra.mxu0 0
    %4651 = vmatprep.subr.bf16.mxu0 0
    %4652 = vmatpush1.bf16.msra.mxu0 0
    %4653 = vmatprep.subr.bf16.mxu0 0
    %4654 = vmatpush1.bf16.msra.mxu0 0
    %4655 = vmatprep.subr.bf16.mxu0 0
    %4656 = vmatpush1.bf16.msra.mxu0 0
    %4657 = vmatprep.subr.bf16.mxu0 0
    %4658 = vmatpush1.bf16.msra.mxu0 0
    %4659 = vmatprep.subr.bf16.mxu0 0
    %4660 = vmatpush1.bf16.msra.mxu0 0
    %4661 = vmatprep.subr.bf16.mxu0 0
    %4662 = vmatpush1.bf16.msra.mxu0 0
    %4663 = vmatprep.subr.bf16.mxu0 0
    %4664 = vmatpush1.bf16.msra.mxu0 0
    %4665 = vmatprep.subr.bf16.mxu0 0
    %4666 = vmatpush1.bf16.msra.mxu0 0
    %4667 = vmatprep.subr.bf16.mxu0 0
    %4668 = vmatpush1.bf16.msra.mxu0 0
    %4669 = vmatprep.subr.bf16.mxu0 0
    %4670 = vmatpush1.bf16.msra.mxu0 0
    %4671 = vmatprep.subr.bf16.mxu0 0
    %4672 = vmatpush1.bf16.msra.mxu0 0
    %4673 = vmatprep.subr.bf16.mxu0 0
    %4674 = vmatpush1.bf16.msra.mxu0 0
    %4675 = vmatprep.mubr.bf16.mxu0 0
    %4676 = vmatmul.mubr.bf16.gmra.mrb[0].mxu0 %v4244
    %v4677 = vpop.f32.mrb[0].mxu0
    %v4678 = vadd.f32 0.0, %v4677
    %v4679 = vpop.f32.mrb[0].mxu0
    %v4680 = vpop.f32.mrb[0].mxu0
    %v4681 = vpop.f32.mrb[0].mxu0
    %4682 = vdwg.mxu0
    %v4683 = vadd.f32 %v4626, %v4678
    %v4684 = vld [vmem:[%s61] sm:$0x1]
    %v4686 = vlaneseq
    %v4687 = vshrl.u32 %v4686, 7
    %v4688 = vsub.s32 0, %v4687
    %v4689 = vrot.slane %v4684, %v4688
    %v4691 = vadd.f32 %v4683, %v4689
    %s4692 = sshll.u32 %s3814, 4
    %4693 = dma.done %s2940, %s4692
    %4694 = vst [vmem:[%s2937] sm:$0xff] %v4691
    %s4695 = scalar_lea.hbm %s63, 384
    // Predicated region
    $region190: #{tpu_custom_call.1} parent=1 // pred_check
      _
    $region191: #{tpu_custom_call.1} parent=1 // pred_check_branch
      %4697 = sbr.rel target = $region193
    $region192: #{tpu_custom_call.1} parent=1 // pred_region
      %4698 = sst [smem:[#allocation30]] [#allocation37]
      %4699 = sst [smem:[#allocation31]] [#allocation36]
    $region193: #{tpu_custom_call.1} parent=1 // pred_fallthru
      _
    %4701 = shalt.err (0)
    %s4703 = sshll.u32 %s2937, 4
    %s4704 = int_to_ptr.vmem [resolvable:$true] %s4703
    %4706 = dma.vmem_to_hbm [thread:$0]  %s4704, 128, %s4695, %s2940
    %s4707 = sld [smem:[#allocation13 + $0x3]]
    %p4708 = scmp.ne.s32.totalorder %s4707, 0
    // Predicated region
    $region194: #{tpu_custom_call.1} parent=1 // pred_check
      %p4709 = pneg %p4708
    $region195: #{tpu_custom_call.1} parent=1 // pred_check_branch
      %4711 = sbr.rel (%p4709) target = $region197
    $region196: #{tpu_custom_call.1} parent=1 // pred_region
      %s4712 = scalar_lea.vmem %s3, 24
      %v4713 = vld [vmem:[%s4712] sm:$0xff]
      %4714 = vset.pattern.permute.xlu0 0
      %4715 = vperm.xlu0 %4714, %v4713
      %v4716 = vpop.permute.xlu0 %4715
      %vm4717 = vcmp.eq.s32.totalorder %v2094, %v4716
      %v4718 = vsel %vm4717, 1, 0
      %v4719 = vcvt.s32.f32 %v4718
      %4720 = vst [vmem:[#allocation10] sm:$0xff] %v4719
    $region197: #{tpu_custom_call.1} parent=1 // pred_fallthru
      _
    %s4721 = sld [smem:[#allocation13 + $0x3]]
    %p4722 = scmp.eq.s32.totalorder %s4721, 0
    // Predicated region
    $region198: #{tpu_custom_call.1} parent=1 // pred_check
      %p4723 = pneg %p4722
    $region199: #{tpu_custom_call.1} parent=1 // pred_check_branch
      %4725 = sbr.rel (%p4723) target = $region201
    $region200: #{tpu_custom_call.1} parent=1 // pred_region
      %4726 = vmax.xlane.f32.xlu0 %v4691
      %v4727 = vpop.xlane.xlu0 %4726
      %vm4728 = vcmp.eq.f32.partialorder %v4691, %v4727
      %v4729 = vsel %vm4728, %v2094, 128
      %v4730 = vand.u32 %v4729, 65535
      %v4731 = vshra.s32 %v4729, 16
      %v4732 = vcvt.s32.f32 %v4730
      %v4733 = vcvt.s32.f32 %v4731
      %4734 = vmin.xlane.f32.xlu0 %v4733
      %v4735 = vpop.xlane.xlu0 %4734
      %vm4736 = vcmp.eq.f32.partialorder %v4733, %v4735
      %v4737 = vsel %vm4736, %v4732, inf
      %4738 = vmin.xlane.f32.xlu0 %v4737
      %v4739 = vpop.xlane.xlu0 %4738
      %v4740 = vcvt.f32.s32 %v4739
      %v4741 = vcvt.f32.s32 %v4735
      %v4742 = vshll.u32 %v4741, 16
      %v4743 = vadd.s32 %v4742, %v4740
      %vm4744 = vcmp.eq.s32.totalorder %v2094, %v4743
      %v4745 = vsel %vm4744, 1, 0
      %v4746 = vcvt.s32.f32 %v4745
      %4747 = vst [vmem:[#allocation10] sm:$0xff] %v4746
    $region201: #{tpu_custom_call.1} parent=1 // pred_fallthru
      _
    %4749 = vrot.lane.b32.xlu0 %v4450, 96
    %v4750 = vpop.permute.xlu0 %4749
    %4752 = vst.msk [vmem:[#allocation9] sm:$0xff] %vm281, %v4750
    %v4753 = vld [vmem:[#allocation9] sm:$0xff]
    %v4754 = vld [vmem:[#allocation10] sm:$0xff]
    %v4755 = vpack.c.bf16 %v4754, %v4754
    %v4756 = vld [vmem:[%s29] sm:$0xf]
    %v4757 = vld [vmem:[%s29 + $0x4] sm:$0xf]
    %v4758 = vld [vmem:[%s29 + $0x8] sm:$0xf]
    %v4759 = vld [vmem:[%s29 + $0xc] sm:$0xf]
    %v4760 = vld [vmem:[%s29 + $0x10] sm:$0xf]
    %v4761 = vld [vmem:[%s29 + $0x14] sm:$0xf]
    %v4762 = vld [vmem:[%s29 + $0x18] sm:$0xf]
    %v4763 = vld [vmem:[%s29 + $0x1c] sm:$0xf]
    %v4764 = vld [vmem:[%s29 + $0x20] sm:$0xf]
    %v4765 = vld [vmem:[%s29 + $0x24] sm:$0xf]
    %v4766 = vld [vmem:[%s29 + $0x28] sm:$0xf]
    %v4767 = vld [vmem:[%s29 + $0x2c] sm:$0xf]
    %v4768 = vld [vmem:[%s29 + $0x30] sm:$0xf]
    %v4769 = vld [vmem:[%s29 + $0x34] sm:$0xf]
    %v4770 = vld [vmem:[%s29 + $0x38] sm:$0xf]
    %v4771 = vld [vmem:[%s29 + $0x3c] sm:$0xf]
    %v4788 = vunpack.c.l.b16 %v4756
    %v4789 = vunpack.c.l.b16 %v4757
    %v4790 = vunpack.c.l.b16 %v4758
    %v4791 = vunpack.c.l.b16 %v4759
    %v4792 = vunpack.c.l.b16 %v4760
    %v4793 = vunpack.c.l.b16 %v4761
    %v4794 = vunpack.c.l.b16 %v4762
    %v4795 = vunpack.c.l.b16 %v4763
    %v4796 = vunpack.c.l.b16 %v4764
    %v4797 = vunpack.c.l.b16 %v4765
    %v4798 = vunpack.c.l.b16 %v4766
    %v4799 = vunpack.c.l.b16 %v4767
    %v4800 = vunpack.c.l.b16 %v4768
    %v4801 = vunpack.c.l.b16 %v4769
    %v4802 = vunpack.c.l.b16 %v4770
    %v4803 = vunpack.c.l.b16 %v4771
    %v4804 = vpack.c.b16 %v4789, %v4788
    %v4805 = vpack.c.b16 %v4791, %v4790
    %v4806 = vpack.c.b16 %v4793, %v4792
    %v4807 = vpack.c.b16 %v4795, %v4794
    %v4808 = vpack.c.b16 %v4797, %v4796
    %v4809 = vpack.c.b16 %v4799, %v4798
    %v4810 = vpack.c.b16 %v4801, %v4800
    %v4811 = vpack.c.b16 %v4803, %v4802
    %4820 = vmatprep.subr.bf16.mxu0 0
    %4821 = vmatpush1.bf16.msra.mxu0 %v4804
    %4822 = vmatprep.subr.bf16.mxu0 0
    %4823 = vmatpush1.bf16.msra.mxu0 %v4805
    %4824 = vmatprep.subr.bf16.mxu0 0
    %4825 = vmatpush1.bf16.msra.mxu0 %v4806
    %4826 = vmatprep.subr.bf16.mxu0 0
    %4827 = vmatpush1.bf16.msra.mxu0 %v4807
    %4828 = vmatprep.subr.bf16.mxu0 0
    %4829 = vmatpush1.bf16.msra.mxu0 %v4808
    %4830 = vmatprep.subr.bf16.mxu0 0
    %4831 = vmatpush1.bf16.msra.mxu0 %v4809
    %4832 = vmatprep.subr.bf16.mxu0 0
    %4833 = vmatpush1.bf16.msra.mxu0 %v4810
    %4834 = vmatprep.subr.bf16.mxu0 0
    %4835 = vmatpush1.bf16.msra.mxu0 %v4811
    %4836 = vmatprep.subr.bf16.mxu0 0
    %4837 = vmatpush1.bf16.msra.mxu0 0
    %4838 = vmatprep.subr.bf16.mxu0 0
    %4839 = vmatpush1.bf16.msra.mxu0 0
    %4840 = vmatprep.subr.bf16.mxu0 0
    %4841 = vmatpush1.bf16.msra.mxu0 0
    %4842 = vmatprep.subr.bf16.mxu0 0
    %4843 = vmatpush1.bf16.msra.mxu0 0
    %4844 = vmatprep.subr.bf16.mxu0 0
    %4845 = vmatpush1.bf16.msra.mxu0 0
    %4846 = vmatprep.subr.bf16.mxu0 0
    %4847 = vmatpush1.bf16.msra.mxu0 0
    %4848 = vmatprep.subr.bf16.mxu0 0
    %4849 = vmatpush1.bf16.msra.mxu0 0
    %4850 = vmatprep.subr.bf16.mxu0 0
    %4851 = vmatpush1.bf16.msra.mxu0 0
    %4852 = vmatprep.mubr.bf16.mxu0 0
    %4853 = vmatmul.mubr.bf16.gmra.mrb[0].mxu0 %v4755
    %v4854 = vpop.f32.mrb[0].mxu0
    %v4855 = vadd.f32 0.0, %v4854
    %v4856 = vpop.f32.mrb[0].mxu0
    %v4857 = vpop.f32.mrb[0].mxu0
    %v4858 = vpop.f32.mrb[0].mxu0
    %4859 = vdwg.mxu0
    %v4860 = vpack.c.bf16 %v4753, %v4753
    %v4861 = vld [vmem:[%s31] sm:$0xf]
    %v4862 = vld [vmem:[%s31 + $0x4] sm:$0xf]
    %v4863 = vld [vmem:[%s31 + $0x8] sm:$0xf]
    %v4864 = vld [vmem:[%s31 + $0xc] sm:$0xf]
    %v4869 = vunpack.c.l.b16 %v4861
    %v4870 = vunpack.c.l.b16 %v4862
    %v4871 = vunpack.c.l.b16 %v4863
    %v4872 = vunpack.c.l.b16 %v4864
    %v4873 = vpack.c.b16 %v4870, %v4869
    %v4874 = vpack.c.b16 %v4872, %v4871
    %v4878 = vsel %vm281, %v4860, 0
    %4880 = vmatprep.subr.bf16.mxu0 0
    %4881 = vmatpush1.bf16.msra.mxu0 %v4873
    %4882 = vmatprep.subr.bf16.mxu0 0
    %4883 = vmatpush1.bf16.msra.mxu0 %v4874
    %4884 = vmatprep.subr.bf16.mxu0 0
    %4885 = vmatpush1.bf16.msra.mxu0 0
    %4886 = vmatprep.subr.bf16.mxu0 0
    %4887 = vmatpush1.bf16.msra.mxu0 0
    %4888 = vmatprep.subr.bf16.mxu0 0
    %4889 = vmatpush1.bf16.msra.mxu0 0
    %4890 = vmatprep.subr.bf16.mxu0 0
    %4891 = vmatpush1.bf16.msra.mxu0 0
    %4892 = vmatprep.subr.bf16.mxu0 0
    %4893 = vmatpush1.bf16.msra.mxu0 0
    %4894 = vmatprep.subr.bf16.mxu0 0
    %4895 = vmatpush1.bf16.msra.mxu0 0
    %4896 = vmatprep.subr.bf16.mxu0 0
    %4897 = vmatpush1.bf16.msra.mxu0 0
    %4898 = vmatprep.subr.bf16.mxu0 0
    %4899 = vmatpush1.bf16.msra.mxu0 0
    %4900 = vmatprep.subr.bf16.mxu0 0
    %4901 = vmatpush1.bf16.msra.mxu0 0
    %4902 = vmatprep.subr.bf16.mxu0 0
    %4903 = vmatpush1.bf16.msra.mxu0 0
    %4904 = vmatprep.subr.bf16.mxu0 0
    %4905 = vmatpush1.bf16.msra.mxu0 0
    %4906 = vmatprep.subr.bf16.mxu0 0
    %4907 = vmatpush1.bf16.msra.mxu0 0
    %4908 = vmatprep.subr.bf16.mxu0 0
    %4909 = vmatpush1.bf16.msra.mxu0 0
    %4910 = vmatprep.subr.bf16.mxu0 0
    %4911 = vmatpush1.bf16.msra.mxu0 0
    %4912 = vmatprep.mubr.bf16.mxu0 0
    %4913 = vmatmul.mubr.bf16.gmra.mrb[0].mxu0 %v4878
    %v4914 = vpop.f32.mrb[0].mxu0
    %v4915 = vadd.f32 0.0, %v4914
    %v4916 = vpop.f32.mrb[0].mxu0
    %v4917 = vpop.f32.mrb[0].mxu0
    %v4918 = vpop.f32.mrb[0].mxu0
    %4919 = vdwg.mxu0
    %v4920 = vld [vmem:[#allocation8] sm:$0xff]
    %v4921 = vld [vmem:[#allocation8 + $0x8] sm:$0xff]
    %v4922 = vld [vmem:[#allocation8 + $0x10] sm:$0xff]
    %v4923 = vld [vmem:[#allocation8 + $0x18] sm:$0xff]
    %v4924 = vld [vmem:[#allocation8 + $0x20] sm:$0xff]
    %v4925 = vld [vmem:[#allocation8 + $0x28] sm:$0xff]
    %v4926 = vadd.f32 %v4915, %v4920
    %v4927 = vadd.f32 %v4915, %v4921
    %v4928 = vadd.f32 %v4915, %v4922
    %v4929 = vadd.f32 %v4915, %v4923
    %v4930 = vadd.f32 %v4915, %v4924
    %v4931 = vadd.f32 %v4915, %v4925
    %v4932 = vtanh.pop %v4926
    %v4933 = vtanh.pop %v4927
    %v4934 = vtanh.pop %v4928
    %v4935 = vtanh.pop %v4929
    %v4936 = vtanh.pop %v4930
    %v4937 = vtanh.pop %v4931
    %v4938 = vmul.f32 %v4932, %v2304
    %v4939 = vmul.f32 %v4933, %v2304
    %v4940 = vmul.f32 %v4934, %v2304
    %v4941 = vmul.f32 %v4935, %v2304
    %v4942 = vmul.f32 %v4936, %v2304
    %v4943 = vmul.f32 %v4937, %v2304
    %v4944 = vsel %vm281, %v4938, 0.0
    %4945 = vadd.xlane.f32.xlu0 %v4944
    %v4946 = vpop.xlane.xlu0 %4945
    %v4947 = vsel %vm281, %v4939, 0.0
    %4948 = vadd.xlane.f32.xlu0 %v4947
    %v4949 = vpop.xlane.xlu0 %4948
    %v4950 = vsel %vm281, %v4940, 0.0
    %4951 = vadd.xlane.f32.xlu0 %v4950
    %v4952 = vpop.xlane.xlu0 %4951
    %v4953 = vsel %vm281, %v4941, 0.0
    %4954 = vadd.xlane.f32.xlu0 %v4953
    %v4955 = vpop.xlane.xlu0 %4954
    %v4956 = vsel %vm281, %v4942, 0.0
    %4957 = vadd.xlane.f32.xlu0 %v4956
    %v4958 = vpop.xlane.xlu0 %4957
    %v4959 = vsel %vm281, %v4943, 0.0
    %4960 = vadd.xlane.f32.xlu0 %v4959
    %v4961 = vpop.xlane.xlu0 %4960
    %v4962 = vmax.f32 %v4946, %v4958
    %v4963 = vmax.f32 %v4949, %v4961
    %v4964 = vmax.f32 %v4962, %v4963
    %v4965 = vmax.f32 %v4952, %v4955
    %v4966 = vmax.f32 %v4964, %v4965
    %v4967 = vsub.f32 %v4946, %v4966
    %v4968 = vsub.f32 %v4949, %v4966
    %v4969 = vsub.f32 %v4952, %v4966
    %v4970 = vsub.f32 %v4955, %v4966
    %v4971 = vsub.f32 %v4958, %v4966
    %v4972 = vsub.f32 %v4961, %v4966
    %v4973 = vmul.f32 %v4967, 1.442695
    %v4974 = vpow.pop %v4973
    %v4975 = vmul.f32 %v4968, 1.442695
    %v4976 = vpow.pop %v4975
    %v4977 = vmul.f32 %v4969, 1.442695
    %v4978 = vpow.pop %v4977
    %v4979 = vmul.f32 %v4970, 1.442695
    %v4980 = vpow.pop %v4979
    %v4981 = vmul.f32 %v4971, 1.442695
    %v4982 = vpow.pop %v4981
    %v4983 = vmul.f32 %v4972, 1.442695
    %v4984 = vpow.pop %v4983
    %v4985 = vadd.f32 %v4974, %v4976
    %v4986 = vadd.f32 %v4985, %v4978
    %v4987 = vadd.f32 %v4986, %v4980
    %v4988 = vadd.f32 %v4987, %v4982
    %v4989 = vadd.f32 %v4988, %v4984
    %v4990 = vrcp.pop %v4989
    %v4991 = vmul.f32 %v4974, %v4990
    %v4992 = vmul.f32 %v4976, %v4990
    %v4993 = vmul.f32 %v4978, %v4990
    %v4994 = vmul.f32 %v4980, %v4990
    %v4995 = vmul.f32 %v4982, %v4990
    %v4996 = vmul.f32 %v4984, %v4990
    %v4997 = vld [vmem:[#allocation4] sm:$0xff]
    %v4998 = vld [vmem:[#allocation4 + $0x8] sm:$0xff]
    %v4999 = vld [vmem:[#allocation4 + $0x10] sm:$0xff]
    %v5000 = vld [vmem:[#allocation4 + $0x18] sm:$0xff]
    %v5001 = vld [vmem:[#allocation4 + $0x20] sm:$0xff]
    %v5002 = vld [vmem:[#allocation4 + $0x28] sm:$0xff]
    %v5003 = vmul.f32 %v4991, %v4997
    %v5004 = vmul.f32 %v4992, %v4998
    %v5005 = vmul.f32 %v4993, %v4999
    %v5006 = vmul.f32 %v4994, %v5000
    %v5007 = vmul.f32 %v4995, %v5001
    %v5008 = vmul.f32 %v4996, %v5002
    %v5009 = vsel %vm281, %v5003, 0.0
    %v5010 = vsel %vm281, %v5004, 0.0
    %v5011 = vadd.f32 %v5009, %v5010
    %v5012 = vsel %vm281, %v5005, 0.0
    %v5013 = vadd.f32 %v5011, %v5012
    %v5014 = vsel %vm281, %v5006, 0.0
    %v5015 = vadd.f32 %v5013, %v5014
    %v5016 = vsel %vm281, %v5007, 0.0
    %v5017 = vadd.f32 %v5015, %v5016
    %v5018 = vsel %vm281, %v5008, 0.0
    %v5019 = vadd.f32 %v5017, %v5018
    %v5020 = vld [vmem:[#allocation5] sm:$0xff]
    %v5021 = vld [vmem:[#allocation5 + $0x8] sm:$0xff]
    %v5022 = vld [vmem:[#allocation5 + $0x10] sm:$0xff]
    %v5023 = vld [vmem:[#allocation5 + $0x18] sm:$0xff]
    %v5024 = vld [vmem:[#allocation5 + $0x20] sm:$0xff]
    %v5025 = vld [vmem:[#allocation5 + $0x28] sm:$0xff]
    %v5026 = vmul.f32 %v4991, %v5020
    %v5027 = vmul.f32 %v4992, %v5021
    %v5028 = vmul.f32 %v4993, %v5022
    %v5029 = vmul.f32 %v4994, %v5023
    %v5030 = vmul.f32 %v4995, %v5024
    %v5031 = vmul.f32 %v4996, %v5025
    %v5032 = vsel %vm281, %v5026, 0.0
    %v5033 = vsel %vm281, %v5027, 0.0
    %v5034 = vadd.f32 %v5032, %v5033
    %v5035 = vsel %vm281, %v5028, 0.0
    %v5036 = vadd.f32 %v5034, %v5035
    %v5037 = vsel %vm281, %v5029, 0.0
    %v5038 = vadd.f32 %v5036, %v5037
    %v5039 = vsel %vm281, %v5030, 0.0
    %v5040 = vadd.f32 %v5038, %v5039
    %v5041 = vsel %vm281, %v5031, 0.0
    %v5042 = vadd.f32 %v5040, %v5041
    %v5043 = vpack.c.bf16 %v4855, %v4855
    %v5044 = vld [vmem:[%s41] sm:$0xf]
    %v5045 = vld [vmem:[%s41 + $0x4] sm:$0xf]
    %v5046 = vld [vmem:[%s41 + $0x8] sm:$0xf]
    %v5047 = vld [vmem:[%s41 + $0xc] sm:$0xf]
    %v5048 = vpack.c.bf16 %v5019, %v5019
    %v5049 = vld [vmem:[%s43] sm:$0xf]
    %v5050 = vld [vmem:[%s43 + $0x4] sm:$0xf]
    %v5051 = vld [vmem:[%s43 + $0x8] sm:$0xf]
    %v5052 = vld [vmem:[%s43 + $0xc] sm:$0xf]
    %v5057 = vunpack.c.l.b16 %v5049
    %v5058 = vunpack.c.l.b16 %v5050
    %v5059 = vunpack.c.l.b16 %v5051
    %v5060 = vunpack.c.l.b16 %v5052
    %v5061 = vpack.c.b16 %v5058, %v5057
    %v5062 = vpack.c.b16 %v5060, %v5059
    %v5066 = vsel %vm281, %v5048, 0
    %5068 = vmatprep.subr.bf16.mxu0 0
    %5069 = vmatpush1.bf16.msra.mxu0 %v5061
    %5070 = vmatprep.subr.bf16.mxu0 0
    %5071 = vmatpush1.bf16.msra.mxu0 %v5062
    %5072 = vmatprep.subr.bf16.mxu0 0
    %5073 = vmatpush1.bf16.msra.mxu0 0
    %5074 = vmatprep.subr.bf16.mxu0 0
    %5075 = vmatpush1.bf16.msra.mxu0 0
    %5076 = vmatprep.subr.bf16.mxu0 0
    %5077 = vmatpush1.bf16.msra.mxu0 0
    %5078 = vmatprep.subr.bf16.mxu0 0
    %5079 = vmatpush1.bf16.msra.mxu0 0
    %5080 = vmatprep.subr.bf16.mxu0 0
    %5081 = vmatpush1.bf16.msra.mxu0 0
    %5082 = vmatprep.subr.bf16.mxu0 0
    %5083 = vmatpush1.bf16.msra.mxu0 0
    %5084 = vmatprep.subr.bf16.mxu0 0
    %5085 = vmatpush1.bf16.msra.mxu0 0
    %5086 = vmatprep.subr.bf16.mxu0 0
    %5087 = vmatpush1.bf16.msra.mxu0 0
    %5088 = vmatprep.subr.bf16.mxu0 0
    %5089 = vmatpush1.bf16.msra.mxu0 0
    %5090 = vmatprep.subr.bf16.mxu0 0
    %5091 = vmatpush1.bf16.msra.mxu0 0
    %5092 = vmatprep.subr.bf16.mxu0 0
    %5093 = vmatpush1.bf16.msra.mxu0 0
    %5094 = vmatprep.subr.bf16.mxu0 0
    %5095 = vmatpush1.bf16.msra.mxu0 0
    %5096 = vmatprep.subr.bf16.mxu0 0
    %5097 = vmatpush1.bf16.msra.mxu0 0
    %5098 = vmatprep.subr.bf16.mxu0 0
    %5099 = vmatpush1.bf16.msra.mxu0 0
    %5100 = vmatprep.mubr.bf16.mxu0 0
    %5101 = vmatmul.mubr.bf16.gmra.mrb[0].mxu0 %v5066
    %v5102 = vpop.f32.mrb[0].mxu0
    %v5103 = vadd.f32 0.0, %v5102
    %v5104 = vpop.f32.mrb[0].mxu0
    %v5105 = vpop.f32.mrb[0].mxu0
    %v5106 = vpop.f32.mrb[0].mxu0
    %5107 = vdwg.mxu0
    %v5112 = vunpack.c.l.b16 %v5044
    %v5113 = vunpack.c.l.b16 %v5045
    %v5114 = vunpack.c.l.b16 %v5046
    %v5115 = vunpack.c.l.b16 %v5047
    %v5116 = vpack.c.b16 %v5113, %v5112
    %v5117 = vpack.c.b16 %v5115, %v5114
    %v5121 = vsel %vm281, %v5043, 0
    %5123 = vmatprep.subr.bf16.mxu0 0
    %5124 = vmatpush1.bf16.msra.mxu0 %v5116
    %5125 = vmatprep.subr.bf16.mxu0 0
    %5126 = vmatpush1.bf16.msra.mxu0 %v5117
    %5127 = vmatprep.subr.bf16.mxu0 0
    %5128 = vmatpush1.bf16.msra.mxu0 0
    %5129 = vmatprep.subr.bf16.mxu0 0
    %5130 = vmatpush1.bf16.msra.mxu0 0
    %5131 = vmatprep.subr.bf16.mxu0 0
    %5132 = vmatpush1.bf16.msra.mxu0 0
    %5133 = vmatprep.subr.bf16.mxu0 0
    %5134 = vmatpush1.bf16.msra.mxu0 0
    %5135 = vmatprep.subr.bf16.mxu0 0
    %5136 = vmatpush1.bf16.msra.mxu0 0
    %5137 = vmatprep.subr.bf16.mxu0 0
    %5138 = vmatpush1.bf16.msra.mxu0 0
    %5139 = vmatprep.subr.bf16.mxu0 0
    %5140 = vmatpush1.bf16.msra.mxu0 0
    %5141 = vmatprep.subr.bf16.mxu0 0
    %5142 = vmatpush1.bf16.msra.mxu0 0
    %5143 = vmatprep.subr.bf16.mxu0 0
    %5144 = vmatpush1.bf16.msra.mxu0 0
    %5145 = vmatprep.subr.bf16.mxu0 0
    %5146 = vmatpush1.bf16.msra.mxu0 0
    %5147 = vmatprep.subr.bf16.mxu0 0
    %5148 = vmatpush1.bf16.msra.mxu0 0
    %5149 = vmatprep.subr.bf16.mxu0 0
    %5150 = vmatpush1.bf16.msra.mxu0 0
    %5151 = vmatprep.subr.bf16.mxu0 0
    %5152 = vmatpush1.bf16.msra.mxu0 0
    %5153 = vmatprep.subr.bf16.mxu0 0
    %5154 = vmatpush1.bf16.msra.mxu0 0
    %5155 = vmatprep.mubr.bf16.mxu0 0
    %5156 = vmatmul.mubr.bf16.gmra.mrb[0].mxu0 %v5121
    %v5157 = vpop.f32.mrb[0].mxu0
    %v5158 = vadd.f32 %v5103, %v5157
    %v5159 = vpop.f32.mrb[0].mxu0
    %v5160 = vpop.f32.mrb[0].mxu0
    %v5161 = vpop.f32.mrb[0].mxu0
    %5162 = vdwg.mxu0
    %v5163 = vpack.c.bf16 %v5042, %v5042
    %v5164 = vld [vmem:[%s45] sm:$0xf]
    %v5165 = vld [vmem:[%s45 + $0x4] sm:$0xf]
    %v5166 = vld [vmem:[%s45 + $0x8] sm:$0xf]
    %v5167 = vld [vmem:[%s45 + $0xc] sm:$0xf]
    %v5172 = vunpack.c.l.b16 %v5164
    %v5173 = vunpack.c.l.b16 %v5165
    %v5174 = vunpack.c.l.b16 %v5166
    %v5175 = vunpack.c.l.b16 %v5167
    %v5176 = vpack.c.b16 %v5173, %v5172
    %v5177 = vpack.c.b16 %v5175, %v5174
    %v5181 = vsel %vm281, %v5163, 0
    %5183 = vmatprep.subr.bf16.mxu0 0
    %5184 = vmatpush1.bf16.msra.mxu0 %v5176
    %5185 = vmatprep.subr.bf16.mxu0 0
    %5186 = vmatpush1.bf16.msra.mxu0 %v5177
    %5187 = vmatprep.subr.bf16.mxu0 0
    %5188 = vmatpush1.bf16.msra.mxu0 0
    %5189 = vmatprep.subr.bf16.mxu0 0
    %5190 = vmatpush1.bf16.msra.mxu0 0
    %5191 = vmatprep.subr.bf16.mxu0 0
    %5192 = vmatpush1.bf16.msra.mxu0 0
    %5193 = vmatprep.subr.bf16.mxu0 0
    %5194 = vmatpush1.bf16.msra.mxu0 0
    %5195 = vmatprep.subr.bf16.mxu0 0
    %5196 = vmatpush1.bf16.msra.mxu0 0
    %5197 = vmatprep.subr.bf16.mxu0 0
    %5198 = vmatpush1.bf16.msra.mxu0 0
    %5199 = vmatprep.subr.bf16.mxu0 0
    %5200 = vmatpush1.bf16.msra.mxu0 0
    %5201 = vmatprep.subr.bf16.mxu0 0
    %5202 = vmatpush1.bf16.msra.mxu0 0
    %5203 = vmatprep.subr.bf16.mxu0 0
    %5204 = vmatpush1.bf16.msra.mxu0 0
    %5205 = vmatprep.subr.bf16.mxu0 0
    %5206 = vmatpush1.bf16.msra.mxu0 0
    %5207 = vmatprep.subr.bf16.mxu0 0
    %5208 = vmatpush1.bf16.msra.mxu0 0
    %5209 = vmatprep.subr.bf16.mxu0 0
    %5210 = vmatpush1.bf16.msra.mxu0 0
    %5211 = vmatprep.subr.bf16.mxu0 0
    %5212 = vmatpush1.bf16.msra.mxu0 0
    %5213 = vmatprep.subr.bf16.mxu0 0
    %5214 = vmatpush1.bf16.msra.mxu0 0
    %5215 = vmatprep.mubr.bf16.mxu0 0
    %5216 = vmatmul.mubr.bf16.gmra.mrb[0].mxu0 %v5181
    %v5217 = vpop.f32.mrb[0].mxu0
    %v5218 = vadd.f32 0.0, %v5217
    %v5219 = vpop.f32.mrb[0].mxu0
    %v5220 = vpop.f32.mrb[0].mxu0
    %v5221 = vpop.f32.mrb[0].mxu0
    %5222 = vdwg.mxu0
    %v5223 = vadd.f32 %v5158, %v5218
    %v5224 = vld [vmem:[%s49] sm:$0x1]
    %v5226 = vlaneseq
    %v5227 = vshrl.u32 %v5226, 7
    %v5228 = vsub.s32 0, %v5227
    %v5229 = vrot.slane %v5224, %v5228
    %v5231 = vadd.f32 %v5223, %v5229
    %v5232 = vld [vmem:[%s47] sm:$0xf]
    %v5233 = vld [vmem:[%s47 + $0x4] sm:$0xf]
    %v5234 = vld [vmem:[%s47 + $0x8] sm:$0xf]
    %v5235 = vld [vmem:[%s47 + $0xc] sm:$0xf]
    %v5240 = vunpack.c.l.b16 %v5232
    %v5241 = vunpack.c.l.b16 %v5233
    %v5242 = vunpack.c.l.b16 %v5234
    %v5243 = vunpack.c.l.b16 %v5235
    %v5244 = vpack.c.b16 %v5241, %v5240
    %v5245 = vpack.c.b16 %v5243, %v5242
    %5248 = vmatprep.subr.bf16.mxu0 0
    %5249 = vmatpush1.bf16.msra.mxu0 %v5244
    %5250 = vmatprep.subr.bf16.mxu0 0
    %5251 = vmatpush1.bf16.msra.mxu0 %v5245
    %5252 = vmatprep.subr.bf16.mxu0 0
    %5253 = vmatpush1.bf16.msra.mxu0 0
    %5254 = vmatprep.subr.bf16.mxu0 0
    %5255 = vmatpush1.bf16.msra.mxu0 0
    %5256 = vmatprep.subr.bf16.mxu0 0
    %5257 = vmatpush1.bf16.msra.mxu0 0
    %5258 = vmatprep.subr.bf16.mxu0 0
    %5259 = vmatpush1.bf16.msra.mxu0 0
    %5260 = vmatprep.subr.bf16.mxu0 0
    %5261 = vmatpush1.bf16.msra.mxu0 0
    %5262 = vmatprep.subr.bf16.mxu0 0
    %5263 = vmatpush1.bf16.msra.mxu0 0
    %5264 = vmatprep.subr.bf16.mxu0 0
    %5265 = vmatpush1.bf16.msra.mxu0 0
    %5266 = vmatprep.subr.bf16.mxu0 0
    %5267 = vmatpush1.bf16.msra.mxu0 0
    %5268 = vmatprep.subr.bf16.mxu0 0
    %5269 = vmatpush1.bf16.msra.mxu0 0
    %5270 = vmatprep.subr.bf16.mxu0 0
    %5271 = vmatpush1.bf16.msra.mxu0 0
    %5272 = vmatprep.subr.bf16.mxu0 0
    %5273 = vmatpush1.bf16.msra.mxu0 0
    %5274 = vmatprep.subr.bf16.mxu0 0
    %5275 = vmatpush1.bf16.msra.mxu0 0
    %5276 = vmatprep.subr.bf16.mxu0 0
    %5277 = vmatpush1.bf16.msra.mxu0 0
    %5278 = vmatprep.subr.bf16.mxu0 0
    %5279 = vmatpush1.bf16.msra.mxu0 0
    %5280 = vmatprep.mubr.bf16.mxu0 0
    %5281 = vmatmul.mubr.bf16.gmra.mrb[0].mxu0 %v4878
    %v5282 = vpop.f32.mrb[0].mxu0
    %v5283 = vadd.f32 0.0, %v5282
    %v5284 = vpop.f32.mrb[0].mxu0
    %v5285 = vpop.f32.mrb[0].mxu0
    %v5286 = vpop.f32.mrb[0].mxu0
    %5287 = vdwg.mxu0
    %v5288 = vadd.f32 %v5231, %v5283
    %v5289 = vxor.u32 %v5288, 2147483648
    %v5290 = vmul.f32 %v5289, 1.442695
    %v5291 = vpow.pop %v5290
    %v5292 = vadd.f32 %v5291, 1.0
    %v5293 = vrcp.pop %v5292
    %v5294 = vmul.f32 1.0, %v5293
    %v5295 = vld [vmem:[%s51] sm:$0x1]
    %v5297 = vlaneseq
    %v5298 = vshrl.u32 %v5297, 7
    %v5299 = vsub.s32 0, %v5298
    %v5300 = vrot.slane %v5295, %v5299
    %5301 = vrot.lane.b32.xlu0 %v5300, 64
    %v5302 = vpop.permute.xlu0 %5301
    %v5304 = vadd.f32 %v5283, %v5302
    %5306 = vrot.lane.b32.xlu0 %v5304, 64
    %v5307 = vpop.permute.xlu0 %5306
    %v5309 = vmul.f32 %v5294, %v5307
    %5311 = vrot.lane.b32.xlu0 %v5309, 64
    %v5312 = vpop.permute.xlu0 %5311
    %v5314 = vadd.f32 %v5231, %v5312
    %v5315 = vtanh.pop %v5314
    %v5316 = vsub.f32 1.0, %v5294
    %5318 = vrot.lane.b32.xlu0 %v5315, 96
    %v5319 = vpop.permute.xlu0 %5318
    %v5321 = vmul.f32 %v5316, %v5319
    %5323 = vrot.lane.b32.xlu0 %v4753, 32
    %v5324 = vpop.permute.xlu0 %5323
    %v5326 = vmul.f32 %v5294, %v5324
    %v5327 = vadd.f32 %v5321, %v5326
    %v5328 = vpack.c.bf16 %v5327, %v5327
    %v5329 = vld [vmem:[%s53] sm:$0xf]
    %v5330 = vld [vmem:[%s53 + $0x4] sm:$0xf]
    %v5331 = vld [vmem:[%s53 + $0x8] sm:$0xf]
    %v5332 = vld [vmem:[%s53 + $0xc] sm:$0xf]
    %v5333 = vld [vmem:[%s55] sm:$0xf]
    %v5334 = vld [vmem:[%s55 + $0x4] sm:$0xf]
    %v5335 = vld [vmem:[%s55 + $0x8] sm:$0xf]
    %v5336 = vld [vmem:[%s55 + $0xc] sm:$0xf]
    %v5341 = vunpack.c.l.b16 %v5333
    %v5342 = vunpack.c.l.b16 %v5334
    %v5343 = vunpack.c.l.b16 %v5335
    %v5344 = vunpack.c.l.b16 %v5336
    %v5345 = vpack.c.b16 %v5342, %v5341
    %v5346 = vpack.c.b16 %v5344, %v5343
    %5349 = vmatprep.subr.bf16.mxu0 0
    %5350 = vmatpush1.bf16.msra.mxu0 %v5345
    %5351 = vmatprep.subr.bf16.mxu0 0
    %5352 = vmatpush1.bf16.msra.mxu0 %v5346
    %5353 = vmatprep.subr.bf16.mxu0 0
    %5354 = vmatpush1.bf16.msra.mxu0 0
    %5355 = vmatprep.subr.bf16.mxu0 0
    %5356 = vmatpush1.bf16.msra.mxu0 0
    %5357 = vmatprep.subr.bf16.mxu0 0
    %5358 = vmatpush1.bf16.msra.mxu0 0
    %5359 = vmatprep.subr.bf16.mxu0 0
    %5360 = vmatpush1.bf16.msra.mxu0 0
    %5361 = vmatprep.subr.bf16.mxu0 0
    %5362 = vmatpush1.bf16.msra.mxu0 0
    %5363 = vmatprep.subr.bf16.mxu0 0
    %5364 = vmatpush1.bf16.msra.mxu0 0
    %5365 = vmatprep.subr.bf16.mxu0 0
    %5366 = vmatpush1.bf16.msra.mxu0 0
    %5367 = vmatprep.subr.bf16.mxu0 0
    %5368 = vmatpush1.bf16.msra.mxu0 0
    %5369 = vmatprep.subr.bf16.mxu0 0
    %5370 = vmatpush1.bf16.msra.mxu0 0
    %5371 = vmatprep.subr.bf16.mxu0 0
    %5372 = vmatpush1.bf16.msra.mxu0 0
    %5373 = vmatprep.subr.bf16.mxu0 0
    %5374 = vmatpush1.bf16.msra.mxu0 0
    %5375 = vmatprep.subr.bf16.mxu0 0
    %5376 = vmatpush1.bf16.msra.mxu0 0
    %5377 = vmatprep.subr.bf16.mxu0 0
    %5378 = vmatpush1.bf16.msra.mxu0 0
    %5379 = vmatprep.subr.bf16.mxu0 0
    %5380 = vmatpush1.bf16.msra.mxu0 0
    %5381 = vmatprep.mubr.bf16.mxu0 0
    %5382 = vmatmul.mubr.bf16.gmra.mrb[0].mxu0 %v5066
    %v5383 = vpop.f32.mrb[0].mxu0
    %v5384 = vadd.f32 0.0, %v5383
    %v5385 = vpop.f32.mrb[0].mxu0
    %v5386 = vpop.f32.mrb[0].mxu0
    %v5387 = vpop.f32.mrb[0].mxu0
    %5388 = vdwg.mxu0
    %5390 = vrot.lane.b32.xlu0 %v5328, 96
    %v5391 = vpop.permute.xlu0 %5390
    %v5396 = vunpack.c.l.b16 %v5329
    %v5397 = vunpack.c.l.b16 %v5330
    %v5398 = vunpack.c.l.b16 %v5331
    %v5399 = vunpack.c.l.b16 %v5332
    %v5400 = vpack.c.b16 %v5397, %v5396
    %v5401 = vpack.c.b16 %v5399, %v5398
    %v5405 = vsel %vm281, %v5391, 0
    %5407 = vmatprep.subr.bf16.mxu0 0
    %5408 = vmatpush1.bf16.msra.mxu0 %v5400
    %5409 = vmatprep.subr.bf16.mxu0 0
    %5410 = vmatpush1.bf16.msra.mxu0 %v5401
    %5411 = vmatprep.subr.bf16.mxu0 0
    %5412 = vmatpush1.bf16.msra.mxu0 0
    %5413 = vmatprep.subr.bf16.mxu0 0
    %5414 = vmatpush1.bf16.msra.mxu0 0
    %5415 = vmatprep.subr.bf16.mxu0 0
    %5416 = vmatpush1.bf16.msra.mxu0 0
    %5417 = vmatprep.subr.bf16.mxu0 0
    %5418 = vmatpush1.bf16.msra.mxu0 0
    %5419 = vmatprep.subr.bf16.mxu0 0
    %5420 = vmatpush1.bf16.msra.mxu0 0
    %5421 = vmatprep.subr.bf16.mxu0 0
    %5422 = vmatpush1.bf16.msra.mxu0 0
    %5423 = vmatprep.subr.bf16.mxu0 0
    %5424 = vmatpush1.bf16.msra.mxu0 0
    %5425 = vmatprep.subr.bf16.mxu0 0
    %5426 = vmatpush1.bf16.msra.mxu0 0
    %5427 = vmatprep.subr.bf16.mxu0 0
    %5428 = vmatpush1.bf16.msra.mxu0 0
    %5429 = vmatprep.subr.bf16.mxu0 0
    %5430 = vmatpush1.bf16.msra.mxu0 0
    %5431 = vmatprep.subr.bf16.mxu0 0
    %5432 = vmatpush1.bf16.msra.mxu0 0
    %5433 = vmatprep.subr.bf16.mxu0 0
    %5434 = vmatpush1.bf16.msra.mxu0 0
    %5435 = vmatprep.subr.bf16.mxu0 0
    %5436 = vmatpush1.bf16.msra.mxu0 0
    %5437 = vmatprep.subr.bf16.mxu0 0
    %5438 = vmatpush1.bf16.msra.mxu0 0
    %5439 = vmatprep.mubr.bf16.mxu0 0
    %5440 = vmatmul.mubr.bf16.gmra.mrb[0].mxu0 %v5405
    %v5441 = vpop.f32.mrb[0].mxu0
    %v5442 = vadd.f32 %v5384, %v5441
    %v5443 = vpop.f32.mrb[0].mxu0
    %v5444 = vpop.f32.mrb[0].mxu0
    %v5445 = vpop.f32.mrb[0].mxu0
    %5446 = vdwg.mxu0
    %v5447 = vld [vmem:[#allocation26] sm:$0xf]
    %v5448 = vld [vmem:[#allocation26 + $0x4] sm:$0xf]
    %v5449 = vld [vmem:[#allocation26 + $0x8] sm:$0xf]
    %v5450 = vld [vmem:[#allocation26 + $0xc] sm:$0xf]
    %v5455 = vunpack.c.l.b16 %v5447
    %v5456 = vunpack.c.l.b16 %v5448
    %v5457 = vunpack.c.l.b16 %v5449
    %v5458 = vunpack.c.l.b16 %v5450
    %v5459 = vpack.c.b16 %v5456, %v5455
    %v5460 = vpack.c.b16 %v5458, %v5457
    %5463 = vmatprep.subr.bf16.mxu0 0
    %5464 = vmatpush1.bf16.msra.mxu0 %v5459
    %5465 = vmatprep.subr.bf16.mxu0 0
    %5466 = vmatpush1.bf16.msra.mxu0 %v5460
    %5467 = vmatprep.subr.bf16.mxu0 0
    %5468 = vmatpush1.bf16.msra.mxu0 0
    %5469 = vmatprep.subr.bf16.mxu0 0
    %5470 = vmatpush1.bf16.msra.mxu0 0
    %5471 = vmatprep.subr.bf16.mxu0 0
    %5472 = vmatpush1.bf16.msra.mxu0 0
    %5473 = vmatprep.subr.bf16.mxu0 0
    %5474 = vmatpush1.bf16.msra.mxu0 0
    %5475 = vmatprep.subr.bf16.mxu0 0
    %5476 = vmatpush1.bf16.msra.mxu0 0
    %5477 = vmatprep.subr.bf16.mxu0 0
    %5478 = vmatpush1.bf16.msra.mxu0 0
    %5479 = vmatprep.subr.bf16.mxu0 0
    %5480 = vmatpush1.bf16.msra.mxu0 0
    %5481 = vmatprep.subr.bf16.mxu0 0
    %5482 = vmatpush1.bf16.msra.mxu0 0
    %5483 = vmatprep.subr.bf16.mxu0 0
    %5484 = vmatpush1.bf16.msra.mxu0 0
    %5485 = vmatprep.subr.bf16.mxu0 0
    %5486 = vmatpush1.bf16.msra.mxu0 0
    %5487 = vmatprep.subr.bf16.mxu0 0
    %5488 = vmatpush1.bf16.msra.mxu0 0
    %5489 = vmatprep.subr.bf16.mxu0 0
    %5490 = vmatpush1.bf16.msra.mxu0 0
    %5491 = vmatprep.subr.bf16.mxu0 0
    %5492 = vmatpush1.bf16.msra.mxu0 0
    %5493 = vmatprep.subr.bf16.mxu0 0
    %5494 = vmatpush1.bf16.msra.mxu0 0
    %5495 = vmatprep.mubr.bf16.mxu0 0
    %5496 = vmatmul.mubr.bf16.gmra.mrb[0].mxu0 %v5181
    %v5497 = vpop.f32.mrb[0].mxu0
    %v5498 = vadd.f32 0.0, %v5497
    %v5499 = vpop.f32.mrb[0].mxu0
    %v5500 = vpop.f32.mrb[0].mxu0
    %v5501 = vpop.f32.mrb[0].mxu0
    %5502 = vdwg.mxu0
    %v5503 = vadd.f32 %v5442, %v5498
    %v5504 = vld [vmem:[%s59] sm:$0xf]
    %v5505 = vld [vmem:[%s59 + $0x4] sm:$0xf]
    %v5506 = vld [vmem:[%s59 + $0x8] sm:$0xf]
    %v5507 = vld [vmem:[%s59 + $0xc] sm:$0xf]
    %v5512 = vunpack.c.l.b16 %v5504
    %v5513 = vunpack.c.l.b16 %v5505
    %v5514 = vunpack.c.l.b16 %v5506
    %v5515 = vunpack.c.l.b16 %v5507
    %v5516 = vpack.c.b16 %v5513, %v5512
    %v5517 = vpack.c.b16 %v5515, %v5514
    %5520 = vmatprep.subr.bf16.mxu0 0
    %5521 = vmatpush1.bf16.msra.mxu0 %v5516
    %5522 = vmatprep.subr.bf16.mxu0 0
    %5523 = vmatpush1.bf16.msra.mxu0 %v5517
    %5524 = vmatprep.subr.bf16.mxu0 0
    %5525 = vmatpush1.bf16.msra.mxu0 0
    %5526 = vmatprep.subr.bf16.mxu0 0
    %5527 = vmatpush1.bf16.msra.mxu0 0
    %5528 = vmatprep.subr.bf16.mxu0 0
    %5529 = vmatpush1.bf16.msra.mxu0 0
    %5530 = vmatprep.subr.bf16.mxu0 0
    %5531 = vmatpush1.bf16.msra.mxu0 0
    %5532 = vmatprep.subr.bf16.mxu0 0
    %5533 = vmatpush1.bf16.msra.mxu0 0
    %5534 = vmatprep.subr.bf16.mxu0 0
    %5535 = vmatpush1.bf16.msra.mxu0 0
    %5536 = vmatprep.subr.bf16.mxu0 0
    %5537 = vmatpush1.bf16.msra.mxu0 0
    %5538 = vmatprep.subr.bf16.mxu0 0
    %5539 = vmatpush1.bf16.msra.mxu0 0
    %5540 = vmatprep.subr.bf16.mxu0 0
    %5541 = vmatpush1.bf16.msra.mxu0 0
    %5542 = vmatprep.subr.bf16.mxu0 0
    %5543 = vmatpush1.bf16.msra.mxu0 0
    %5544 = vmatprep.subr.bf16.mxu0 0
    %5545 = vmatpush1.bf16.msra.mxu0 0
    %5546 = vmatprep.subr.bf16.mxu0 0
    %5547 = vmatpush1.bf16.msra.mxu0 0
    %5548 = vmatprep.subr.bf16.mxu0 0
    %5549 = vmatpush1.bf16.msra.mxu0 0
    %5550 = vmatprep.subr.bf16.mxu0 0
    %5551 = vmatpush1.bf16.msra.mxu0 0
    %5552 = vmatprep.mubr.bf16.mxu0 0
    %5553 = vmatmul.mubr.bf16.gmra.mrb[0].mxu0 %v5121
    %v5554 = vpop.f32.mrb[0].mxu0
    %v5555 = vadd.f32 0.0, %v5554
    %v5556 = vpop.f32.mrb[0].mxu0
    %v5557 = vpop.f32.mrb[0].mxu0
    %v5558 = vpop.f32.mrb[0].mxu0
    %5559 = vdwg.mxu0
    %v5560 = vadd.f32 %v5503, %v5555
    %v5561 = vld [vmem:[%s61] sm:$0x1]
    %v5563 = vlaneseq
    %v5564 = vshrl.u32 %v5563, 7
    %v5565 = vsub.s32 0, %v5564
    %v5566 = vrot.slane %v5561, %v5565
    %v5568 = vadd.f32 %v5560, %v5566
    %s5569 = sshll.u32 %s3814, 4
    %5570 = dma.done [#allocation12], %s5569
    %5571 = vst [vmem:[#allocation11] sm:$0xff] %v5568
    %s5572 = scalar_lea.hbm %s63, 512
    // Predicated region
    $region202: #{tpu_custom_call.1} parent=1 // pred_check
      _
    $region203: #{tpu_custom_call.1} parent=1 // pred_check_branch
      %5574 = sbr.rel target = $region205
    $region204: #{tpu_custom_call.1} parent=1 // pred_region
      %5575 = sst [smem:[#allocation30]] [#allocation39]
      %5576 = sst [smem:[#allocation31]] [#allocation38]
    $region205: #{tpu_custom_call.1} parent=1 // pred_fallthru
      _
    %5578 = shalt.err (0)
    %s5580 = sshll.u32 [#allocation11], 4
    %s5581 = int_to_ptr.vmem [resolvable:$true] %s5580
    %5583 = dma.vmem_to_hbm [thread:$0]  %s5581, 128, %s5572, [#allocation12]
    %s5584 = sld [smem:[#allocation13 + $0x4]]
    %p5585 = scmp.ne.s32.totalorder %s5584, 0
    // Predicated region
    $region206: #{tpu_custom_call.1} parent=1 // pred_check
      %p5586 = pneg %p5585
    $region207: #{tpu_custom_call.1} parent=1 // pred_check_branch
      %5588 = sbr.rel (%p5586) target = $region209
    $region208: #{tpu_custom_call.1} parent=1 // pred_region
      %s5589 = scalar_lea.vmem %s3, 32
      %v5590 = vld [vmem:[%s5589] sm:$0xff]
      %5591 = vset.pattern.permute.xlu0 0
      %5592 = vperm.xlu0 %5591, %v5590
      %v5593 = vpop.permute.xlu0 %5592
      %vm5594 = vcmp.eq.s32.totalorder %v2094, %v5593
      %v5595 = vsel %vm5594, 1, 0
      %v5596 = vcvt.s32.f32 %v5595
      %5597 = vst [vmem:[#allocation10] sm:$0xff] %v5596
    $region209: #{tpu_custom_call.1} parent=1 // pred_fallthru
      _
    %s5598 = sld [smem:[#allocation13 + $0x4]]
    %p5599 = scmp.eq.s32.totalorder %s5598, 0
    // Predicated region
    $region210: #{tpu_custom_call.1} parent=1 // pred_check
      %p5600 = pneg %p5599
    $region211: #{tpu_custom_call.1} parent=1 // pred_check_branch
      %5602 = sbr.rel (%p5600) target = $region213
    $region212: #{tpu_custom_call.1} parent=1 // pred_region
      %5603 = vmax.xlane.f32.xlu0 %v5568
      %v5604 = vpop.xlane.xlu0 %5603
      %vm5605 = vcmp.eq.f32.partialorder %v5568, %v5604
      %v5606 = vsel %vm5605, %v2094, 128
      %v5607 = vand.u32 %v5606, 65535
      %v5608 = vshra.s32 %v5606, 16
      %v5609 = vcvt.s32.f32 %v5607
      %v5610 = vcvt.s32.f32 %v5608
      %5611 = vmin.xlane.f32.xlu0 %v5610
      %v5612 = vpop.xlane.xlu0 %5611
      %vm5613 = vcmp.eq.f32.partialorder %v5610, %v5612
      %v5614 = vsel %vm5613, %v5609, inf
      %5615 = vmin.xlane.f32.xlu0 %v5614
      %v5616 = vpop.xlane.xlu0 %5615
      %v5617 = vcvt.f32.s32 %v5616
      %v5618 = vcvt.f32.s32 %v5612
      %v5619 = vshll.u32 %v5618, 16
      %v5620 = vadd.s32 %v5619, %v5617
      %vm5621 = vcmp.eq.s32.totalorder %v2094, %v5620
      %v5622 = vsel %vm5621, 1, 0
      %v5623 = vcvt.s32.f32 %v5622
      %5624 = vst [vmem:[#allocation10] sm:$0xff] %v5623
    $region213: #{tpu_custom_call.1} parent=1 // pred_fallthru
      _
    %5626 = vrot.lane.b32.xlu0 %v5327, 96
    %v5627 = vpop.permute.xlu0 %5626
    %5629 = vst.msk [vmem:[#allocation9] sm:$0xff] %vm281, %v5627
    %s5630 = sshll.u32 %s3814, 4
    %5631 = dma.done %s2940, %s5630
    %s5632 = sshll.u32 %s3814, 4
    %5633 = dma.done [#allocation12], %s5632
    %5634 = vsyncpa [#allocation14], 1
    %5635 = vsyncpa [#allocation18], 1
    %5636 = vsyncpa [#allocation21], 1
    %5637 = vsyncpa [#allocation24], 1
    %5638 = vsyncpa [#allocation27], 1
    %5639 = vsyncpa [#allocation15], 1
  %5640 = vsyncmov [#allocation12]
  %s5641 = vpop.sfrf %5640
  %p5642 = scmp.eq.s32.totalorder %s5641, 0
  %p5643 = pneg %p5642
  %5645 = shalt.err (%p5643)
  %s5646 = scalar_lea.sflag [#allocation12], 1
  %5647 = vsyncmov %s5646
  %s5648 = vpop.sfrf %5647
  %p5649 = scmp.eq.s32.totalorder %s5648, 0
  %p5650 = pneg %p5649
  %5652 = shalt.err (%p5650)

</llo_original>
